<compile_context>
chip_gen: v5e
topology: v5e:2x2
jax: 0.10.0
libtpu: 0.0.40
codegen_flags: <defaults>
</compile_context>

<pallas_src>
import jax
import jax.numpy as jnp
from jax import lax
from jax.experimental import pallas as pl
from jax.experimental.pallas import tpu as pltpu

# ----------------------------- problem sizes -------------------------------
B, C, H, W = 2, 4, 16, 16          # torch input x: (B, C, H, W)
HW = H * W                         # 256
M = B * HW                         # 512 rows: both batch elements folded
HC = 32                            # hidden channels of the synthetic UNet
TEMB = 32                          # sinusoidal timestep-embedding width
NUM_TRAIN_TIMESTEPS = 1000         # min_timestep=0, max_timestep=1000


# --------------------------- kernel definition -----------------------------
def _unet_density_kernel(x_ref, n_ref, sab_ref, s1m_ref, tp_ref,
                         w1_ref, b1_ref, w2_ref, b2_ref,
                         w3_ref, b3_ref, w4_ref, b4_ref,
                         out_ref):
    x = x_ref[...]                       # (M, C)  f32
    noise = n_ref[...]                   # (M, C)  f32

    # noise_scheduler.add_noise (per-row broadcast scalars built in wrapper)
    xt = sab_ref[...] * x + s1m_ref[...] * noise        # (M, C) f32

    # Boundary masks, hoisted once and shared by all 4 convs.
    rows = lax.broadcasted_iota(jnp.int32, (M, 1), 0)
    xx = rows % W                        # column index within an image row
    yy = rows % HW                       # row index within one image
    mask_l = xx >= 1                     # x-1 valid
    mask_r = xx <= W - 2                 # x+1 valid
    mask_u = yy >= W                     # y-1 valid (also blocks batch leak)
    mask_d = yy < HW - W                 # y+1 valid (also blocks batch leak)

    def conv3x3(img, w_ref, b_ref):
        # 'SAME' 3x3 conv on a (M, cin) flattened NHWC slab.
        # Column taps: 2 sublane rolls (XLU) + hoisted masks.
        left = jnp.where(mask_l, pltpu.roll(img, shift=1, axis=0), 0.0)
        right = jnp.where(mask_r, pltpu.roll(img, shift=M - 1, axis=0), 0.0)
        cols = jnp.concatenate([left, img, right], axis=-1).astype(jnp.bfloat16)
        # Three accumulating K = 3*cin matmuls (bf16 operands, f32 accumulate),
        # one per kernel row; w_ref is (3, 3*cin, cout) pre-split in the wrapper.
        mid = jnp.dot(cols, w_ref[1], preferred_element_type=jnp.float32)
        up = jnp.dot(cols, w_ref[0], preferred_element_type=jnp.float32)
        dn = jnp.dot(cols, w_ref[2], preferred_element_type=jnp.float32)
        # Row taps applied to the narrow (M, cout) partials: 2 rolls + masks
        # (masks also zero the cross-batch wrap rows of the fold).
        acc = (mid
               + jnp.where(mask_u, pltpu.roll(up, shift=W, axis=0), 0.0)
               + jnp.where(mask_d, pltpu.roll(dn, shift=M - W, axis=0), 0.0))
        return acc + b_ref[...]

    h1 = jnp.maximum(conv3x3(xt, w1_ref, b1_ref) + tp_ref[...], 0.0)
    h2 = jnp.maximum(conv3x3(h1, w2_ref, b2_ref), 0.0)
    h3 = jnp.maximum(conv3x3(h2, w3_ref, b3_ref) + h1, 0.0)        # skip
    pred = conv3x3(h3, w4_ref, b4_ref)                             # (M, C)

    diff = pred - noise
    # Sublane-only reduction: per-channel partial sums in lanes 0:C of a
    # lane-dense 128-wide block; the cross-lane sum finishes in the wrapper.
    sq = jnp.sum(diff * diff, axis=0, keepdims=True)               # (1, C)
    out_ref[...] = jnp.concatenate(
        [sq, jnp.zeros((1, 128 - C), jnp.float32)], axis=-1)


# ------------------------------ wrapper ------------------------------------
@jax.jit
def unet_density_forward(x_nchw, key, params, alphas_cumprod):
    """Returns -MSE(unet(add_noise(x)), noise), like the torch module."""
    k_t, k_n = jax.random.split(key)

    # torch.randint(0, 1000, (B,)) / torch.randn_like(x)
    timesteps = jax.random.randint(k_t, (B,), 0, NUM_TRAIN_TIMESTEPS)
    noise_nchw = jax.random.normal(k_n, x_nchw.shape, jnp.float32)

    # NCHW -> NHWC -> (B*H*W, C): both batch elements stacked along rows.
    x_rows = jnp.transpose(x_nchw, (0, 2, 3, 1)).reshape(M, C)
    n_rows = jnp.transpose(noise_nchw, (0, 2, 3, 1)).reshape(M, C)

    sab = jnp.sqrt(alphas_cumprod[timesteps]).astype(jnp.float32)        # (B,)
    s1m = jnp.sqrt(1.0 - alphas_cumprod[timesteps]).astype(jnp.float32)  # (B,)
    sab_rows = jnp.repeat(sab, HW)[:, None]                              # (M,1)
    s1m_rows = jnp.repeat(s1m, HW)[:, None]                              # (M,1)

    # Time-embedding projection + SiLU done outside the kernel.
    temb = time_embedding(timesteps, TEMB)                               # (B,TEMB)
    tp = temb @ params["wt"] + params["bt"]
    tp = tp * jax.nn.sigmoid(tp)
    tp_rows = jnp.repeat(tp, HW, axis=0)                                 # (M,HC)

    def pack_w(w):
        # (3,3,cin,cout) -> (3, 3*cin, cout): one K-slice per kernel row,
        # pre-cast to bf16 to halve the weight DMA (MXU operands are bf16).
        return w.reshape(3, 3 * w.shape[2], w.shape[3]).astype(jnp.bfloat16)

    # Single grid-free pallas_call: every operand is tiny, so full arrays go
    # straight to VMEM (default BlockSpec); no tiling / pipelining needed.
    out = pl.pallas_call(
        _unet_density_kernel,
        out_shape=jax.ShapeDtypeStruct((1, 128), jnp.float32),
    )(x_rows, n_rows, sab_rows, s1m_rows, tp_rows,
      pack_w(params["w1"]), params["b1"],
      pack_w(params["w2"]), params["b2"],
      pack_w(params["w3"]), params["b3"],
      pack_w(params["w4"]), params["b4"])

    sse_total = jnp.sum(out[0, :C])
    mse = sse_total / (B * H * W * C)
    return -1.0 * mse, timesteps, noise_nchw


# --------------------------- plain-JAX helpers ------------------------------
def time_embedding(t, dim):
    half = dim // 2
    freqs = jnp.exp(-jnp.log(10000.0) * jnp.arange(half, dtype=jnp.float32) / half)
    args = t.astype(jnp.float32)[:, None] * freqs[None, :]
    return jnp.concatenate([jnp.cos(args), jnp.sin(args)], axis=-1)


def make_params(key):
    ks = jax.random.split(key, 6)
    z = lambda *s: jnp.zeros(s, jnp.float32)
    n = lambda k, s, sc: sc * jax.random.normal(k, s, jnp.float32)
    return {
        "wt": n(ks[0], (TEMB, HC), 0.2), "bt": z(1, HC),
        "w1": n(ks[1], (3, 3, C, HC), 0.2), "b1": z(1, HC),
        "w2": n(ks[2], (3, 3, HC, HC), 0.1), "b2": z(1, HC),
        "w3": n(ks[3], (3, 3, HC, HC), 0.1), "b3": z(1, HC),
        "w4": n(ks[4], (3, 3, HC, C), 0.1), "b4": z(1, C),
    }


def make_scheduler():
    betas = jnp.linspace(1e-4, 0.02, NUM_TRAIN_TIMESTEPS, dtype=jnp.float32)
    return jnp.cumprod(1.0 - betas)


def reference_loss(x_nchw, noise_nchw, timesteps, params, alphas_cumprod,
                   matmul_dtype=jnp.float32):
    """Pure-JAX (XLA conv) reference of the same synthetic UNet.

    matmul_dtype=bfloat16 mirrors the kernel's MXU operand precision (with f32
    accumulation) for a tight structural check; float32 + HIGHEST gives the
    full-precision semantic reference.
    """
    x = jnp.transpose(x_nchw, (0, 2, 3, 1))
    noise = jnp.transpose(noise_nchw, (0, 2, 3, 1))
    sab = jnp.sqrt(alphas_cumprod[timesteps])[:, None, None, None]
    s1m = jnp.sqrt(1.0 - alphas_cumprod[timesteps])[:, None, None, None]
    xt = sab * x + s1m * noise

    prec = lax.Precision.HIGHEST if matmul_dtype == jnp.float32 else None

    def conv(img, w, b):
        return lax.conv_general_dilated(
            img.astype(matmul_dtype), w.astype(matmul_dtype), (1, 1), "SAME",
            dimension_numbers=("NHWC", "HWIO", "NHWC"),
            preferred_element_type=jnp.float32,
            precision=prec) + b

    temb = time_embedding(timesteps, TEMB)
    tp = temb @ params["wt"] + params["bt"]
    tp = tp * jax.nn.sigmoid(tp)
    h1 = jax.nn.relu(conv(xt, params["w1"], params["b1"]) + tp[:, None, None, :])
    h2 = jax.nn.relu(conv(h1, params["w2"], params["b2"]))
    h3 = jax.nn.relu(conv(h2, params["w3"], params["b3"]) + h1)
    pred = conv(h3, params["w4"], params["b4"])
    return -jnp.mean((pred - noise) ** 2)


# -------------------------------- main --------------------------------------
if __name__ == "__main__":
    root = jax.random.PRNGKey(0)
    k_x, k_p, k_fwd = jax.random.split(root, 3)

    # TODO(synk): the real module takes arbitrary `unet`/`noise_scheduler` and
    # `extra_kwargs`; here both are synthesized deterministically in-script.
    x_nchw = jax.random.normal(k_x, (B, C, H, W), jnp.float32)
    params = make_params(k_p)
    alphas_cumprod = make_scheduler()

    loss, timesteps, noise = unet_density_forward(x_nchw, k_fwd, params,
                                                  alphas_cumprod)
    loss = jax.block_until_ready(loss)

    # Tight check against a reference with matching (bf16-operand) matmul
    # precision, plus a looser semantic check against the f32 HIGHEST reference.
    ref_bf16 = jax.block_until_ready(
        reference_loss(x_nchw, noise, timesteps, params, alphas_cumprod,
                       matmul_dtype=jnp.bfloat16))
    ref_f32 = jax.block_until_ready(
        reference_loss(x_nchw, noise, timesteps, params, alphas_cumprod,
                       matmul_dtype=jnp.float32))

    assert jnp.isfinite(loss), "kernel produced non-finite loss"
    assert abs(float(loss) - float(ref_bf16)) < 5e-3 * (abs(float(ref_bf16)) + 1.0), (
        f"mismatch vs bf16 reference: kernel={float(loss)} ref={float(ref_bf16)}")
    assert abs(float(loss) - float(ref_f32)) < 5e-2 * (abs(float(ref_f32)) + 1.0), (
        f"mismatch vs f32 reference: kernel={float(loss)} ref={float(ref_f32)}")

    print("KERNEL_OK")
</pallas_src>

<mosaic_0001>
module attributes {stable_mosaic.version = 11 : i64} {
  func.func @_unet_density_kernel(%arg0: memref<512x4xf32, #tpu.memory_space<vmem>>, %arg1: memref<512x4xf32, #tpu.memory_space<vmem>>, %arg2: memref<512x1xf32, #tpu.memory_space<vmem>>, %arg3: memref<512x1xf32, #tpu.memory_space<vmem>>, %arg4: memref<512x32xf32, #tpu.memory_space<vmem>>, %arg5: memref<3x12x32xbf16, #tpu.memory_space<vmem>>, %arg6: memref<1x32xf32, #tpu.memory_space<vmem>>, %arg7: memref<3x96x32xbf16, #tpu.memory_space<vmem>>, %arg8: memref<1x32xf32, #tpu.memory_space<vmem>>, %arg9: memref<3x96x32xbf16, #tpu.memory_space<vmem>>, %arg10: memref<1x32xf32, #tpu.memory_space<vmem>>, %arg11: memref<3x96x4xbf16, #tpu.memory_space<vmem>>, %arg12: memref<1x4xf32, #tpu.memory_space<vmem>>, %arg13: memref<1x128xf32, #tpu.memory_space<vmem>>) attributes {dimension_semantics = [], scalar_prefetch = 0 : i64, scratch_operands = 0 : i64, tpu.core_type = #tpu.core_type<tc>} {
    %c0 = arith.constant 0 : index
    %c0_0 = arith.constant 0 : index
    %0 = vector.load %arg0[%c0, %c0_0] : memref<512x4xf32, #tpu.memory_space<vmem>>, vector<512x4xf32>
    %c0_1 = arith.constant 0 : index
    %c0_2 = arith.constant 0 : index
    %1 = vector.load %arg1[%c0_1, %c0_2] : memref<512x4xf32, #tpu.memory_space<vmem>>, vector<512x4xf32>
    %c0_3 = arith.constant 0 : index
    %c0_4 = arith.constant 0 : index
    %2 = vector.load %arg2[%c0_3, %c0_4] : memref<512x1xf32, #tpu.memory_space<vmem>>, vector<512x1xf32>
    %3 = vector.broadcast %2 : vector<512x1xf32> to vector<512x4xf32>
    %4 = arith.mulf %3, %0 : vector<512x4xf32>
    %c0_5 = arith.constant 0 : index
    %c0_6 = arith.constant 0 : index
    %5 = vector.load %arg3[%c0_5, %c0_6] : memref<512x1xf32, #tpu.memory_space<vmem>>, vector<512x1xf32>
    %6 = vector.broadcast %5 : vector<512x1xf32> to vector<512x4xf32>
    %7 = arith.mulf %6, %1 : vector<512x4xf32>
    %8 = arith.addf %4, %7 : vector<512x4xf32>
    %9 = tpu.iota {dimensions = array<i32: 0>} : vector<512x1xi32>
    %c16_i32 = arith.constant 16 : i32
    %c0_i32 = arith.constant 0 : i32
    %10 = arith.cmpi eq, %c16_i32, %c0_i32 : i32
    %c1_i32 = arith.constant 1 : i32
    %11 = arith.select %10, %c1_i32, %c16_i32 : i32
    %12 = vector.broadcast %11 : i32 to vector<512x1xi32>
    %13 = arith.remsi %9, %12 : vector<512x1xi32>
    %c0_i32_7 = arith.constant 0 : i32
    %14 = vector.broadcast %c0_i32_7 : i32 to vector<512x1xi32>
    %15 = arith.cmpi ne, %13, %14 : vector<512x1xi32>
    %c0_i32_8 = arith.constant 0 : i32
    %16 = vector.broadcast %c0_i32_8 : i32 to vector<512x1xi32>
    %17 = arith.cmpi slt, %13, %16 : vector<512x1xi32>
    %c0_i32_9 = arith.constant 0 : i32
    %18 = arith.cmpi slt, %11, %c0_i32_9 : i32
    %19 = vector.broadcast %18 : i1 to vector<512x1xi1>
    %20 = vector.broadcast %19 : vector<512x1xi1> to vector<512x1xi1>
    %21 = arith.xori %17, %20 : vector<512x1xi1>
    %22 = arith.andi %21, %15 : vector<512x1xi1>
    %23 = vector.broadcast %11 : i32 to vector<512x1xi32>
    %24 = arith.addi %13, %23 : vector<512x1xi32>
    %25 = arith.select %22, %24, %13 : vector<512x1xi1>, vector<512x1xi32>
    %c256_i32 = arith.constant 256 : i32
    %c0_i32_10 = arith.constant 0 : i32
    %26 = arith.cmpi eq, %c256_i32, %c0_i32_10 : i32
    %c1_i32_11 = arith.constant 1 : i32
    %27 = arith.select %26, %c1_i32_11, %c256_i32 : i32
    %28 = vector.broadcast %27 : i32 to vector<512x1xi32>
    %29 = arith.remsi %9, %28 : vector<512x1xi32>
    %c0_i32_12 = arith.constant 0 : i32
    %30 = vector.broadcast %c0_i32_12 : i32 to vector<512x1xi32>
    %31 = arith.cmpi ne, %29, %30 : vector<512x1xi32>
    %c0_i32_13 = arith.constant 0 : i32
    %32 = vector.broadcast %c0_i32_13 : i32 to vector<512x1xi32>
    %33 = arith.cmpi slt, %29, %32 : vector<512x1xi32>
    %c0_i32_14 = arith.constant 0 : i32
    %34 = arith.cmpi slt, %27, %c0_i32_14 : i32
    %35 = vector.broadcast %34 : i1 to vector<512x1xi1>
    %36 = vector.broadcast %35 : vector<512x1xi1> to vector<512x1xi1>
    %37 = arith.xori %33, %36 : vector<512x1xi1>
    %38 = arith.andi %37, %31 : vector<512x1xi1>
    %39 = vector.broadcast %27 : i32 to vector<512x1xi32>
    %40 = arith.addi %29, %39 : vector<512x1xi32>
    %41 = arith.select %38, %40, %29 : vector<512x1xi1>, vector<512x1xi32>
    %c1_i32_15 = arith.constant 1 : i32
    %42 = vector.broadcast %c1_i32_15 : i32 to vector<512x1xi32>
    %43 = arith.cmpi sge, %25, %42 : vector<512x1xi32>
    %c14_i32 = arith.constant 14 : i32
    %44 = vector.broadcast %c14_i32 : i32 to vector<512x1xi32>
    %45 = arith.cmpi sle, %25, %44 : vector<512x1xi32>
    %c16_i32_16 = arith.constant 16 : i32
    %46 = vector.broadcast %c16_i32_16 : i32 to vector<512x1xi32>
    %47 = arith.cmpi sge, %41, %46 : vector<512x1xi32>
    %c240_i32 = arith.constant 240 : i32
    %48 = vector.broadcast %c240_i32 : i32 to vector<512x1xi32>
    %49 = arith.cmpi slt, %41, %48 : vector<512x1xi32>
    %c1_i32_17 = arith.constant 1 : i32
    %50 = tpu.dynamic_rotate %8 by %c1_i32_17 dim 0 : vector<512x4xf32>, i32 -> vector<512x4xf32>
    %cst = arith.constant 0.000000e+00 : f32
    %51 = vector.shape_cast %43 : vector<512x1xi1> to vector<512x1xi1>
    %52 = vector.broadcast %51 : vector<512x1xi1> to vector<512x4xi1>
    %53 = vector.broadcast %cst : f32 to vector<512x4xf32>
    %54 = arith.select %52, %50, %53 : vector<512x4xi1>, vector<512x4xf32>
    %c511_i32 = arith.constant 511 : i32
    %55 = tpu.dynamic_rotate %8 by %c511_i32 dim 0 : vector<512x4xf32>, i32 -> vector<512x4xf32>
    %cst_18 = arith.constant 0.000000e+00 : f32
    %56 = vector.shape_cast %45 : vector<512x1xi1> to vector<512x1xi1>
    %57 = vector.broadcast %56 : vector<512x1xi1> to vector<512x4xi1>
    %58 = vector.broadcast %cst_18 : f32 to vector<512x4xf32>
    %59 = arith.select %57, %55, %58 : vector<512x4xi1>, vector<512x4xf32>
    %60 = tpu.concatenate %54, %8, %59 in 1 : vector<512x4xf32>, vector<512x4xf32>, vector<512x4xf32> -> vector<512x12xf32>
    %61 = arith.truncf %60 : vector<512x12xf32> to vector<512x12xbf16>
    %c1 = arith.constant 1 : index
    %c0_19 = arith.constant 0 : index
    %c0_20 = arith.constant 0 : index
    %62 = vector.load %arg5[%c1, %c0_19, %c0_20] : memref<3x12x32xbf16, #tpu.memory_space<vmem>>, vector<1x12x32xbf16>
    %63 = vector.shape_cast %62 : vector<1x12x32xbf16> to vector<12x32xbf16>
    %cst_21 = arith.constant dense<0.000000e+00> : vector<512x32xf32>
    %64 = tpu.matmul %61, %63, %cst_21 {dimension_numbers = #tpu.dot_dimension_numbers<[1], [0], [0], [1], [0, 0, 1, 1], [], []>} : vector<512x12xbf16>, vector<12x32xbf16>, vector<512x32xf32> -> vector<512x32xf32>
    %c0_22 = arith.constant 0 : index
    %c0_23 = arith.constant 0 : index
    %c0_24 = arith.constant 0 : index
    %65 = vector.load %arg5[%c0_22, %c0_23, %c0_24] : memref<3x12x32xbf16, #tpu.memory_space<vmem>>, vector<1x12x32xbf16>
    %66 = vector.shape_cast %65 : vector<1x12x32xbf16> to vector<12x32xbf16>
    %cst_25 = arith.constant dense<0.000000e+00> : vector<512x32xf32>
    %67 = tpu.matmul %61, %66, %cst_25 {dimension_numbers = #tpu.dot_dimension_numbers<[1], [0], [0], [1], [0, 0, 1, 1], [], []>} : vector<512x12xbf16>, vector<12x32xbf16>, vector<512x32xf32> -> vector<512x32xf32>
    %c2 = arith.constant 2 : index
    %c0_26 = arith.constant 0 : index
    %c0_27 = arith.constant 0 : index
    %68 = vector.load %arg5[%c2, %c0_26, %c0_27] : memref<3x12x32xbf16, #tpu.memory_space<vmem>>, vector<1x12x32xbf16>
    %69 = vector.shape_cast %68 : vector<1x12x32xbf16> to vector<12x32xbf16>
    %cst_28 = arith.constant dense<0.000000e+00> : vector<512x32xf32>
    %70 = tpu.matmul %61, %69, %cst_28 {dimension_numbers = #tpu.dot_dimension_numbers<[1], [0], [0], [1], [0, 0, 1, 1], [], []>} : vector<512x12xbf16>, vector<12x32xbf16>, vector<512x32xf32> -> vector<512x32xf32>
    %c16_i32_29 = arith.constant 16 : i32
    %71 = tpu.dynamic_rotate %67 by %c16_i32_29 dim 0 : vector<512x32xf32>, i32 -> vector<512x32xf32>
    %cst_30 = arith.constant 0.000000e+00 : f32
    %72 = vector.shape_cast %47 : vector<512x1xi1> to vector<512x1xi1>
    %73 = vector.broadcast %72 : vector<512x1xi1> to vector<512x32xi1>
    %74 = vector.broadcast %cst_30 : f32 to vector<512x32xf32>
    %75 = arith.select %73, %71, %74 : vector<512x32xi1>, vector<512x32xf32>
    %76 = arith.addf %64, %75 : vector<512x32xf32>
    %c496_i32 = arith.constant 496 : i32
    %77 = tpu.dynamic_rotate %70 by %c496_i32 dim 0 : vector<512x32xf32>, i32 -> vector<512x32xf32>
    %cst_31 = arith.constant 0.000000e+00 : f32
    %78 = vector.shape_cast %49 : vector<512x1xi1> to vector<512x1xi1>
    %79 = vector.broadcast %78 : vector<512x1xi1> to vector<512x32xi1>
    %80 = vector.broadcast %cst_31 : f32 to vector<512x32xf32>
    %81 = arith.select %79, %77, %80 : vector<512x32xi1>, vector<512x32xf32>
    %82 = arith.addf %76, %81 : vector<512x32xf32>
    %c0_32 = arith.constant 0 : index
    %c0_33 = arith.constant 0 : index
    %83 = vector.load %arg6[%c0_32, %c0_33] : memref<1x32xf32, #tpu.memory_space<vmem>>, vector<1x32xf32>
    %84 = vector.broadcast %83 : vector<1x32xf32> to vector<512x32xf32>
    %85 = arith.addf %82, %84 : vector<512x32xf32>
    %c0_34 = arith.constant 0 : index
    %c0_35 = arith.constant 0 : index
    %86 = vector.load %arg4[%c0_34, %c0_35] : memref<512x32xf32, #tpu.memory_space<vmem>>, vector<512x32xf32>
    %87 = arith.addf %85, %86 : vector<512x32xf32>
    %cst_36 = arith.constant 0.000000e+00 : f32
    %88 = vector.broadcast %cst_36 : f32 to vector<512x32xf32>
    %89 = arith.maximumf %87, %88 : vector<512x32xf32>
    %c1_i32_37 = arith.constant 1 : i32
    %90 = tpu.dynamic_rotate %89 by %c1_i32_37 dim 0 : vector<512x32xf32>, i32 -> vector<512x32xf32>
    %cst_38 = arith.constant 0.000000e+00 : f32
    %91 = vector.shape_cast %43 : vector<512x1xi1> to vector<512x1xi1>
    %92 = vector.broadcast %91 : vector<512x1xi1> to vector<512x32xi1>
    %93 = vector.broadcast %cst_38 : f32 to vector<512x32xf32>
    %94 = arith.select %92, %90, %93 : vector<512x32xi1>, vector<512x32xf32>
    %c511_i32_39 = arith.constant 511 : i32
    %95 = tpu.dynamic_rotate %89 by %c511_i32_39 dim 0 : vector<512x32xf32>, i32 -> vector<512x32xf32>
    %cst_40 = arith.constant 0.000000e+00 : f32
    %96 = vector.shape_cast %45 : vector<512x1xi1> to vector<512x1xi1>
    %97 = vector.broadcast %96 : vector<512x1xi1> to vector<512x32xi1>
    %98 = vector.broadcast %cst_40 : f32 to vector<512x32xf32>
    %99 = arith.select %97, %95, %98 : vector<512x32xi1>, vector<512x32xf32>
    %100 = tpu.concatenate %94, %89, %99 in 1 : vector<512x32xf32>, vector<512x32xf32>, vector<512x32xf32> -> vector<512x96xf32>
    %101 = arith.truncf %100 : vector<512x96xf32> to vector<512x96xbf16>
    %c1_41 = arith.constant 1 : index
    %c0_42 = arith.constant 0 : index
    %c0_43 = arith.constant 0 : index
    %102 = vector.load %arg7[%c1_41, %c0_42, %c0_43] : memref<3x96x32xbf16, #tpu.memory_space<vmem>>, vector<1x96x32xbf16>
    %103 = vector.shape_cast %102 : vector<1x96x32xbf16> to vector<96x32xbf16>
    %cst_44 = arith.constant dense<0.000000e+00> : vector<512x32xf32>
    %104 = tpu.matmul %101, %103, %cst_44 {dimension_numbers = #tpu.dot_dimension_numbers<[1], [0], [0], [1], [0, 0, 1, 1], [], []>} : vector<512x96xbf16>, vector<96x32xbf16>, vector<512x32xf32> -> vector<512x32xf32>
    %c0_45 = arith.constant 0 : index
    %c0_46 = arith.constant 0 : index
    %c0_47 = arith.constant 0 : index
    %105 = vector.load %arg7[%c0_45, %c0_46, %c0_47] : memref<3x96x32xbf16, #tpu.memory_space<vmem>>, vector<1x96x32xbf16>
    %106 = vector.shape_cast %105 : vector<1x96x32xbf16> to vector<96x32xbf16>
    %cst_48 = arith.constant dense<0.000000e+00> : vector<512x32xf32>
    %107 = tpu.matmul %101, %106, %cst_48 {dimension_numbers = #tpu.dot_dimension_numbers<[1], [0], [0], [1], [0, 0, 1, 1], [], []>} : vector<512x96xbf16>, vector<96x32xbf16>, vector<512x32xf32> -> vector<512x32xf32>
    %c2_49 = arith.constant 2 : index
    %c0_50 = arith.constant 0 : index
    %c0_51 = arith.constant 0 : index
    %108 = vector.load %arg7[%c2_49, %c0_50, %c0_51] : memref<3x96x32xbf16, #tpu.memory_space<vmem>>, vector<1x96x32xbf16>
    %109 = vector.shape_cast %108 : vector<1x96x32xbf16> to vector<96x32xbf16>
    %cst_52 = arith.constant dense<0.000000e+00> : vector<512x32xf32>
    %110 = tpu.matmul %101, %109, %cst_52 {dimension_numbers = #tpu.dot_dimension_numbers<[1], [0], [0], [1], [0, 0, 1, 1], [], []>} : vector<512x96xbf16>, vector<96x32xbf16>, vector<512x32xf32> -> vector<512x32xf32>
    %c16_i32_53 = arith.constant 16 : i32
    %111 = tpu.dynamic_rotate %107 by %c16_i32_53 dim 0 : vector<512x32xf32>, i32 -> vector<512x32xf32>
    %cst_54 = arith.constant 0.000000e+00 : f32
    %112 = vector.shape_cast %47 : vector<512x1xi1> to vector<512x1xi1>
    %113 = vector.broadcast %112 : vector<512x1xi1> to vector<512x32xi1>
    %114 = vector.broadcast %cst_54 : f32 to vector<512x32xf32>
    %115 = arith.select %113, %111, %114 : vector<512x32xi1>, vector<512x32xf32>
    %116 = arith.addf %104, %115 : vector<512x32xf32>
    %c496_i32_55 = arith.constant 496 : i32
    %117 = tpu.dynamic_rotate %110 by %c496_i32_55 dim 0 : vector<512x32xf32>, i32 -> vector<512x32xf32>
    %cst_56 = arith.constant 0.000000e+00 : f32
    %118 = vector.shape_cast %49 : vector<512x1xi1> to vector<512x1xi1>
    %119 = vector.broadcast %118 : vector<512x1xi1> to vector<512x32xi1>
    %120 = vector.broadcast %cst_56 : f32 to vector<512x32xf32>
    %121 = arith.select %119, %117, %120 : vector<512x32xi1>, vector<512x32xf32>
    %122 = arith.addf %116, %121 : vector<512x32xf32>
    %c0_57 = arith.constant 0 : index
    %c0_58 = arith.constant 0 : index
    %123 = vector.load %arg8[%c0_57, %c0_58] : memref<1x32xf32, #tpu.memory_space<vmem>>, vector<1x32xf32>
    %124 = vector.broadcast %123 : vector<1x32xf32> to vector<512x32xf32>
    %125 = arith.addf %122, %124 : vector<512x32xf32>
    %cst_59 = arith.constant 0.000000e+00 : f32
    %126 = vector.broadcast %cst_59 : f32 to vector<512x32xf32>
    %127 = arith.maximumf %125, %126 : vector<512x32xf32>
    %c1_i32_60 = arith.constant 1 : i32
    %128 = tpu.dynamic_rotate %127 by %c1_i32_60 dim 0 : vector<512x32xf32>, i32 -> vector<512x32xf32>
    %cst_61 = arith.constant 0.000000e+00 : f32
    %129 = vector.shape_cast %43 : vector<512x1xi1> to vector<512x1xi1>
    %130 = vector.broadcast %129 : vector<512x1xi1> to vector<512x32xi1>
    %131 = vector.broadcast %cst_61 : f32 to vector<512x32xf32>
    %132 = arith.select %130, %128, %131 : vector<512x32xi1>, vector<512x32xf32>
    %c511_i32_62 = arith.constant 511 : i32
    %133 = tpu.dynamic_rotate %127 by %c511_i32_62 dim 0 : vector<512x32xf32>, i32 -> vector<512x32xf32>
    %cst_63 = arith.constant 0.000000e+00 : f32
    %134 = vector.shape_cast %45 : vector<512x1xi1> to vector<512x1xi1>
    %135 = vector.broadcast %134 : vector<512x1xi1> to vector<512x32xi1>
    %136 = vector.broadcast %cst_63 : f32 to vector<512x32xf32>
    %137 = arith.select %135, %133, %136 : vector<512x32xi1>, vector<512x32xf32>
    %138 = tpu.concatenate %132, %127, %137 in 1 : vector<512x32xf32>, vector<512x32xf32>, vector<512x32xf32> -> vector<512x96xf32>
    %139 = arith.truncf %138 : vector<512x96xf32> to vector<512x96xbf16>
    %c1_64 = arith.constant 1 : index
    %c0_65 = arith.constant 0 : index
    %c0_66 = arith.constant 0 : index
    %140 = vector.load %arg9[%c1_64, %c0_65, %c0_66] : memref<3x96x32xbf16, #tpu.memory_space<vmem>>, vector<1x96x32xbf16>
    %141 = vector.shape_cast %140 : vector<1x96x32xbf16> to vector<96x32xbf16>
    %cst_67 = arith.constant dense<0.000000e+00> : vector<512x32xf32>
    %142 = tpu.matmul %139, %141, %cst_67 {dimension_numbers = #tpu.dot_dimension_numbers<[1], [0], [0], [1], [0, 0, 1, 1], [], []>} : vector<512x96xbf16>, vector<96x32xbf16>, vector<512x32xf32> -> vector<512x32xf32>
    %c0_68 = arith.constant 0 : index
    %c0_69 = arith.constant 0 : index
    %c0_70 = arith.constant 0 : index
    %143 = vector.load %arg9[%c0_68, %c0_69, %c0_70] : memref<3x96x32xbf16, #tpu.memory_space<vmem>>, vector<1x96x32xbf16>
    %144 = vector.shape_cast %143 : vector<1x96x32xbf16> to vector<96x32xbf16>
    %cst_71 = arith.constant dense<0.000000e+00> : vector<512x32xf32>
    %145 = tpu.matmul %139, %144, %cst_71 {dimension_numbers = #tpu.dot_dimension_numbers<[1], [0], [0], [1], [0, 0, 1, 1], [], []>} : vector<512x96xbf16>, vector<96x32xbf16>, vector<512x32xf32> -> vector<512x32xf32>
    %c2_72 = arith.constant 2 : index
    %c0_73 = arith.constant 0 : index
    %c0_74 = arith.constant 0 : index
    %146 = vector.load %arg9[%c2_72, %c0_73, %c0_74] : memref<3x96x32xbf16, #tpu.memory_space<vmem>>, vector<1x96x32xbf16>
    %147 = vector.shape_cast %146 : vector<1x96x32xbf16> to vector<96x32xbf16>
    %cst_75 = arith.constant dense<0.000000e+00> : vector<512x32xf32>
    %148 = tpu.matmul %139, %147, %cst_75 {dimension_numbers = #tpu.dot_dimension_numbers<[1], [0], [0], [1], [0, 0, 1, 1], [], []>} : vector<512x96xbf16>, vector<96x32xbf16>, vector<512x32xf32> -> vector<512x32xf32>
    %c16_i32_76 = arith.constant 16 : i32
    %149 = tpu.dynamic_rotate %145 by %c16_i32_76 dim 0 : vector<512x32xf32>, i32 -> vector<512x32xf32>
    %cst_77 = arith.constant 0.000000e+00 : f32
    %150 = vector.shape_cast %47 : vector<512x1xi1> to vector<512x1xi1>
    %151 = vector.broadcast %150 : vector<512x1xi1> to vector<512x32xi1>
    %152 = vector.broadcast %cst_77 : f32 to vector<512x32xf32>
    %153 = arith.select %151, %149, %152 : vector<512x32xi1>, vector<512x32xf32>
    %154 = arith.addf %142, %153 : vector<512x32xf32>
    %c496_i32_78 = arith.constant 496 : i32
    %155 = tpu.dynamic_rotate %148 by %c496_i32_78 dim 0 : vector<512x32xf32>, i32 -> vector<512x32xf32>
    %cst_79 = arith.constant 0.000000e+00 : f32
    %156 = vector.shape_cast %49 : vector<512x1xi1> to vector<512x1xi1>
    %157 = vector.broadcast %156 : vector<512x1xi1> to vector<512x32xi1>
    %158 = vector.broadcast %cst_79 : f32 to vector<512x32xf32>
    %159 = arith.select %157, %155, %158 : vector<512x32xi1>, vector<512x32xf32>
    %160 = arith.addf %154, %159 : vector<512x32xf32>
    %c0_80 = arith.constant 0 : index
    %c0_81 = arith.constant 0 : index
    %161 = vector.load %arg10[%c0_80, %c0_81] : memref<1x32xf32, #tpu.memory_space<vmem>>, vector<1x32xf32>
    %162 = vector.broadcast %161 : vector<1x32xf32> to vector<512x32xf32>
    %163 = arith.addf %160, %162 : vector<512x32xf32>
    %164 = arith.addf %163, %89 : vector<512x32xf32>
    %cst_82 = arith.constant 0.000000e+00 : f32
    %165 = vector.broadcast %cst_82 : f32 to vector<512x32xf32>
    %166 = arith.maximumf %164, %165 : vector<512x32xf32>
    %c1_i32_83 = arith.constant 1 : i32
    %167 = tpu.dynamic_rotate %166 by %c1_i32_83 dim 0 : vector<512x32xf32>, i32 -> vector<512x32xf32>
    %cst_84 = arith.constant 0.000000e+00 : f32
    %168 = vector.shape_cast %43 : vector<512x1xi1> to vector<512x1xi1>
    %169 = vector.broadcast %168 : vector<512x1xi1> to vector<512x32xi1>
    %170 = vector.broadcast %cst_84 : f32 to vector<512x32xf32>
    %171 = arith.select %169, %167, %170 : vector<512x32xi1>, vector<512x32xf32>
    %c511_i32_85 = arith.constant 511 : i32
    %172 = tpu.dynamic_rotate %166 by %c511_i32_85 dim 0 : vector<512x32xf32>, i32 -> vector<512x32xf32>
    %cst_86 = arith.constant 0.000000e+00 : f32
    %173 = vector.shape_cast %45 : vector<512x1xi1> to vector<512x1xi1>
    %174 = vector.broadcast %173 : vector<512x1xi1> to vector<512x32xi1>
    %175 = vector.broadcast %cst_86 : f32 to vector<512x32xf32>
    %176 = arith.select %174, %172, %175 : vector<512x32xi1>, vector<512x32xf32>
    %177 = tpu.concatenate %171, %166, %176 in 1 : vector<512x32xf32>, vector<512x32xf32>, vector<512x32xf32> -> vector<512x96xf32>
    %178 = arith.truncf %177 : vector<512x96xf32> to vector<512x96xbf16>
    %c1_87 = arith.constant 1 : index
    %c0_88 = arith.constant 0 : index
    %c0_89 = arith.constant 0 : index
    %179 = vector.load %arg11[%c1_87, %c0_88, %c0_89] : memref<3x96x4xbf16, #tpu.memory_space<vmem>>, vector<1x96x4xbf16>
    %180 = vector.shape_cast %179 : vector<1x96x4xbf16> to vector<96x4xbf16>
    %cst_90 = arith.constant dense<0.000000e+00> : vector<512x4xf32>
    %181 = tpu.matmul %178, %180, %cst_90 {dimension_numbers = #tpu.dot_dimension_numbers<[1], [0], [0], [1], [0, 0, 1, 1], [], []>} : vector<512x96xbf16>, vector<96x4xbf16>, vector<512x4xf32> -> vector<512x4xf32>
    %c0_91 = arith.constant 0 : index
    %c0_92 = arith.constant 0 : index
    %c0_93 = arith.constant 0 : index
    %182 = vector.load %arg11[%c0_91, %c0_92, %c0_93] : memref<3x96x4xbf16, #tpu.memory_space<vmem>>, vector<1x96x4xbf16>
    %183 = vector.shape_cast %182 : vector<1x96x4xbf16> to vector<96x4xbf16>
    %cst_94 = arith.constant dense<0.000000e+00> : vector<512x4xf32>
    %184 = tpu.matmul %178, %183, %cst_94 {dimension_numbers = #tpu.dot_dimension_numbers<[1], [0], [0], [1], [0, 0, 1, 1], [], []>} : vector<512x96xbf16>, vector<96x4xbf16>, vector<512x4xf32> -> vector<512x4xf32>
    %c2_95 = arith.constant 2 : index
    %c0_96 = arith.constant 0 : index
    %c0_97 = arith.constant 0 : index
    %185 = vector.load %arg11[%c2_95, %c0_96, %c0_97] : memref<3x96x4xbf16, #tpu.memory_space<vmem>>, vector<1x96x4xbf16>
    %186 = vector.shape_cast %185 : vector<1x96x4xbf16> to vector<96x4xbf16>
    %cst_98 = arith.constant dense<0.000000e+00> : vector<512x4xf32>
    %187 = tpu.matmul %178, %186, %cst_98 {dimension_numbers = #tpu.dot_dimension_numbers<[1], [0], [0], [1], [0, 0, 1, 1], [], []>} : vector<512x96xbf16>, vector<96x4xbf16>, vector<512x4xf32> -> vector<512x4xf32>
    %c16_i32_99 = arith.constant 16 : i32
    %188 = tpu.dynamic_rotate %184 by %c16_i32_99 dim 0 : vector<512x4xf32>, i32 -> vector<512x4xf32>
    %cst_100 = arith.constant 0.000000e+00 : f32
    %189 = vector.shape_cast %47 : vector<512x1xi1> to vector<512x1xi1>
    %190 = vector.broadcast %189 : vector<512x1xi1> to vector<512x4xi1>
    %191 = vector.broadcast %cst_100 : f32 to vector<512x4xf32>
    %192 = arith.select %190, %188, %191 : vector<512x4xi1>, vector<512x4xf32>
    %193 = arith.addf %181, %192 : vector<512x4xf32>
    %c496_i32_101 = arith.constant 496 : i32
    %194 = tpu.dynamic_rotate %187 by %c496_i32_101 dim 0 : vector<512x4xf32>, i32 -> vector<512x4xf32>
    %cst_102 = arith.constant 0.000000e+00 : f32
    %195 = vector.shape_cast %49 : vector<512x1xi1> to vector<512x1xi1>
    %196 = vector.broadcast %195 : vector<512x1xi1> to vector<512x4xi1>
    %197 = vector.broadcast %cst_102 : f32 to vector<512x4xf32>
    %198 = arith.select %196, %194, %197 : vector<512x4xi1>, vector<512x4xf32>
    %199 = arith.addf %193, %198 : vector<512x4xf32>
    %c0_103 = arith.constant 0 : index
    %c0_104 = arith.constant 0 : index
    %200 = vector.load %arg12[%c0_103, %c0_104] : memref<1x4xf32, #tpu.memory_space<vmem>>, vector<1x4xf32>
    %201 = vector.broadcast %200 : vector<1x4xf32> to vector<512x4xf32>
    %202 = arith.addf %199, %201 : vector<512x4xf32>
    %203 = arith.subf %202, %1 : vector<512x4xf32>
    %204 = arith.mulf %203, %203 : vector<512x4xf32>
    %cst_105 = arith.constant dense<0.000000e+00> : vector<4xf32>
    %205 = vector.multi_reduction <add>, %204, %cst_105 [0] : vector<512x4xf32> to vector<4xf32>
    %206 = vector.shape_cast %205 : vector<4xf32> to vector<1x4xf32>
    %cst_106 = arith.constant 0.000000e+00 : f32
    %207 = vector.broadcast %cst_106 : f32 to vector<1x124xf32>
    %208 = tpu.concatenate %206, %207 in 1 : vector<1x4xf32>, vector<1x124xf32> -> vector<1x128xf32>
    %c0_107 = arith.constant 0 : index
    %c0_108 = arith.constant 0 : index
    %209 = vector.load %arg13[%c0_107, %c0_108] : memref<1x128xf32, #tpu.memory_space<vmem>>, vector<1x128xf32>
    tpu.vector_store %arg13[%c0_107, %c0_108], %208 {strides = array<i32>} : memref<1x128xf32, #tpu.memory_space<vmem>>, vector<1x128xf32>,
    return
  }
}

</mosaic_0001>

<llo_original>
// kernel: unet_density_forward.21
$region0: #{unet_density_forward.21}
  #allocation0 [shape = 'u32[]', space=smem, size = 0x4, offset = 0x4, fixed_abs, tag = 'smem constant byte address 0x4 - core index']
  #allocation1 [shape = 'u32[72,128]{1,0:T(1,128)}', space=vmem, size = 0x9000, scoped, tag = 'internal scratch']
  %s0 = inlined_call_operand.vmem [shape: f32[512,4], index: 0, kind: input, shape index: {}]
  %s1 = inlined_call_operand.vmem [shape: f32[512,4], index: 1, kind: input, shape index: {}]
  %s2 = inlined_call_operand.vmem [shape: f32[512,1], index: 2, kind: input, shape index: {}]
  %s3 = inlined_call_operand.vmem [shape: f32[512,1], index: 3, kind: input, shape index: {}]
  %s4 = inlined_call_operand.vmem [shape: f32[512,32], index: 4, kind: input, shape index: {}]
  %s5 = inlined_call_operand.vmem [shape: bf16[3,12,32], index: 5, kind: input, shape index: {}]
  %s6 = inlined_call_operand.vmem [shape: f32[1,32], index: 6, kind: input, shape index: {}]
  %s7 = inlined_call_operand.vmem [shape: bf16[3,96,32], index: 7, kind: input, shape index: {}]
  %s8 = inlined_call_operand.vmem [shape: f32[1,32], index: 8, kind: input, shape index: {}]
  %s9 = inlined_call_operand.vmem [shape: bf16[3,96,32], index: 9, kind: input, shape index: {}]
  %s10 = inlined_call_operand.vmem [shape: f32[1,32], index: 10, kind: input, shape index: {}]
  %s11 = inlined_call_operand.vmem [shape: bf16[3,96,4], index: 11, kind: input, shape index: {}]
  %s12 = inlined_call_operand.vmem [shape: f32[1,4], index: 12, kind: input, shape index: {}]
  %s13 = inlined_call_operand.vmem [shape: f32[1,128], index: 13, kind: output, shape index: {}]
  %s14 = sld [smem:[#allocation0]]
  $region62: #{unet_density_forward.21} parent=0
    _
  %s16 = ssub.s32 1, %s14
  %s17 = scalar_select 0, %s16, %s14
  // Predicated region
  $region2: #{unet_density_forward.21} parent=0 // pred_check
    _
  $region3: #{unet_density_forward.21} parent=0 // pred_check_branch
    %19 = sbr.rel (0) target = $region5
  $region4: #{unet_density_forward.21} parent=0 // pred_region
    _
  $region5: #{unet_density_forward.21} parent=0 // pred_fallthru
    _
  // Predicated region
  $region6: #{unet_density_forward.21} parent=0 // pred_check
    _
  $region7: #{unet_density_forward.21} parent=0 // pred_check_branch
    %21 = sbr.rel (0) target = $region9
  $region8: #{unet_density_forward.21} parent=0 // pred_region
    _
  $region9: #{unet_density_forward.21} parent=0 // pred_fallthru
    _
  // Predicated region
  $region10: #{unet_density_forward.21} parent=0 // pred_check
    _
  $region11: #{unet_density_forward.21} parent=0 // pred_check_branch
    %23 = sbr.rel (0) target = $region13
  $region12: #{unet_density_forward.21} parent=0 // pred_region
    _
  $region13: #{unet_density_forward.21} parent=0 // pred_fallthru
    _
  // Predicated region
  $region14: #{unet_density_forward.21} parent=0 // pred_check
    _
  $region15: #{unet_density_forward.21} parent=0 // pred_check_branch
    %25 = sbr.rel (0) target = $region17
  $region16: #{unet_density_forward.21} parent=0 // pred_region
    _
  $region17: #{unet_density_forward.21} parent=0 // pred_fallthru
    _
  // Predicated region
  $region18: #{unet_density_forward.21} parent=0 // pred_check
    _
  $region19: #{unet_density_forward.21} parent=0 // pred_check_branch
    %27 = sbr.rel (0) target = $region21
  $region20: #{unet_density_forward.21} parent=0 // pred_region
    _
  $region21: #{unet_density_forward.21} parent=0 // pred_fallthru
    _
  // Predicated region
  $region22: #{unet_density_forward.21} parent=0 // pred_check
    _
  $region23: #{unet_density_forward.21} parent=0 // pred_check_branch
    %29 = sbr.rel (0) target = $region25
  $region24: #{unet_density_forward.21} parent=0 // pred_region
    _
  $region25: #{unet_density_forward.21} parent=0 // pred_fallthru
    _
  // Predicated region
  $region26: #{unet_density_forward.21} parent=0 // pred_check
    _
  $region27: #{unet_density_forward.21} parent=0 // pred_check_branch
    %31 = sbr.rel (0) target = $region29
  $region28: #{unet_density_forward.21} parent=0 // pred_region
    _
  $region29: #{unet_density_forward.21} parent=0 // pred_fallthru
    _
  // Predicated region
  $region30: #{unet_density_forward.21} parent=0 // pred_check
    _
  $region31: #{unet_density_forward.21} parent=0 // pred_check_branch
    %33 = sbr.rel (0) target = $region33
  $region32: #{unet_density_forward.21} parent=0 // pred_region
    _
  $region33: #{unet_density_forward.21} parent=0 // pred_fallthru
    _
  // Predicated region
  $region34: #{unet_density_forward.21} parent=0 // pred_check
    _
  $region35: #{unet_density_forward.21} parent=0 // pred_check_branch
    %35 = sbr.rel (0) target = $region37
  $region36: #{unet_density_forward.21} parent=0 // pred_region
    _
  $region37: #{unet_density_forward.21} parent=0 // pred_fallthru
    _
  // Predicated region
  $region38: #{unet_density_forward.21} parent=0 // pred_check
    _
  $region39: #{unet_density_forward.21} parent=0 // pred_check_branch
    %37 = sbr.rel (0) target = $region41
  $region40: #{unet_density_forward.21} parent=0 // pred_region
    _
  $region41: #{unet_density_forward.21} parent=0 // pred_fallthru
    _
  // Predicated region
  $region42: #{unet_density_forward.21} parent=0 // pred_check
    _
  $region43: #{unet_density_forward.21} parent=0 // pred_check_branch
    %39 = sbr.rel (0) target = $region45
  $region44: #{unet_density_forward.21} parent=0 // pred_region
    _
  $region45: #{unet_density_forward.21} parent=0 // pred_fallthru
    _
  // Predicated region
  $region46: #{unet_density_forward.21} parent=0 // pred_check
    _
  $region47: #{unet_density_forward.21} parent=0 // pred_check_branch
    %41 = sbr.rel (0) target = $region49
  $region48: #{unet_density_forward.21} parent=0 // pred_region
    _
  $region49: #{unet_density_forward.21} parent=0 // pred_fallthru
    _
  // Predicated region
  $region50: #{unet_density_forward.21} parent=0 // pred_check
    _
  $region51: #{unet_density_forward.21} parent=0 // pred_check_branch
    %43 = sbr.rel (0) target = $region53
  $region52: #{unet_density_forward.21} parent=0 // pred_region
    _
  $region53: #{unet_density_forward.21} parent=0 // pred_fallthru
    _
  %v45 = vld [vmem:[%s0] sm:$0xff]
  %v46 = vld [vmem:[%s0 + $0x8] sm:$0xff]
  %v47 = vld [vmem:[%s0 + $0x10] sm:$0xff]
  %v48 = vld [vmem:[%s0 + $0x18] sm:$0xff]
  %v49 = vld [vmem:[%s0 + $0x20] sm:$0xff]
  %v50 = vld [vmem:[%s0 + $0x28] sm:$0xff]
  %v51 = vld [vmem:[%s0 + $0x30] sm:$0xff]
  %v52 = vld [vmem:[%s0 + $0x38] sm:$0xff]
  %v53 = vld [vmem:[%s0 + $0x40] sm:$0xff]
  %v54 = vld [vmem:[%s0 + $0x48] sm:$0xff]
  %v55 = vld [vmem:[%s0 + $0x50] sm:$0xff]
  %v56 = vld [vmem:[%s0 + $0x58] sm:$0xff]
  %v57 = vld [vmem:[%s0 + $0x60] sm:$0xff]
  %v58 = vld [vmem:[%s0 + $0x68] sm:$0xff]
  %v59 = vld [vmem:[%s0 + $0x70] sm:$0xff]
  %v60 = vld [vmem:[%s0 + $0x78] sm:$0xff]
  %v61 = vld [vmem:[%s0 + $0x80] sm:$0xff]
  %v62 = vld [vmem:[%s0 + $0x88] sm:$0xff]
  %v63 = vld [vmem:[%s0 + $0x90] sm:$0xff]
  %v64 = vld [vmem:[%s0 + $0x98] sm:$0xff]
  %v65 = vld [vmem:[%s0 + $0xa0] sm:$0xff]
  %v66 = vld [vmem:[%s0 + $0xa8] sm:$0xff]
  %v67 = vld [vmem:[%s0 + $0xb0] sm:$0xff]
  %v68 = vld [vmem:[%s0 + $0xb8] sm:$0xff]
  %v69 = vld [vmem:[%s0 + $0xc0] sm:$0xff]
  %v70 = vld [vmem:[%s0 + $0xc8] sm:$0xff]
  %v71 = vld [vmem:[%s0 + $0xd0] sm:$0xff]
  %v72 = vld [vmem:[%s0 + $0xd8] sm:$0xff]
  %v73 = vld [vmem:[%s0 + $0xe0] sm:$0xff]
  %v74 = vld [vmem:[%s0 + $0xe8] sm:$0xff]
  %v75 = vld [vmem:[%s0 + $0xf0] sm:$0xff]
  %v76 = vld [vmem:[%s0 + $0xf8] sm:$0xff]
  %v77 = vld [vmem:[%s0 + $0x100] sm:$0xff]
  %v78 = vld [vmem:[%s0 + $0x108] sm:$0xff]
  %v79 = vld [vmem:[%s0 + $0x110] sm:$0xff]
  %v80 = vld [vmem:[%s0 + $0x118] sm:$0xff]
  %v81 = vld [vmem:[%s0 + $0x120] sm:$0xff]
  %v82 = vld [vmem:[%s0 + $0x128] sm:$0xff]
  %v83 = vld [vmem:[%s0 + $0x130] sm:$0xff]
  %v84 = vld [vmem:[%s0 + $0x138] sm:$0xff]
  %v85 = vld [vmem:[%s0 + $0x140] sm:$0xff]
  %v86 = vld [vmem:[%s0 + $0x148] sm:$0xff]
  %v87 = vld [vmem:[%s0 + $0x150] sm:$0xff]
  %v88 = vld [vmem:[%s0 + $0x158] sm:$0xff]
  %v89 = vld [vmem:[%s0 + $0x160] sm:$0xff]
  %v90 = vld [vmem:[%s0 + $0x168] sm:$0xff]
  %v91 = vld [vmem:[%s0 + $0x170] sm:$0xff]
  %v92 = vld [vmem:[%s0 + $0x178] sm:$0xff]
  %v93 = vld [vmem:[%s0 + $0x180] sm:$0xff]
  %v94 = vld [vmem:[%s0 + $0x188] sm:$0xff]
  %v95 = vld [vmem:[%s0 + $0x190] sm:$0xff]
  %v96 = vld [vmem:[%s0 + $0x198] sm:$0xff]
  %v97 = vld [vmem:[%s0 + $0x1a0] sm:$0xff]
  %v98 = vld [vmem:[%s0 + $0x1a8] sm:$0xff]
  %v99 = vld [vmem:[%s0 + $0x1b0] sm:$0xff]
  %v100 = vld [vmem:[%s0 + $0x1b8] sm:$0xff]
  %v101 = vld [vmem:[%s0 + $0x1c0] sm:$0xff]
  %v102 = vld [vmem:[%s0 + $0x1c8] sm:$0xff]
  %v103 = vld [vmem:[%s0 + $0x1d0] sm:$0xff]
  %v104 = vld [vmem:[%s0 + $0x1d8] sm:$0xff]
  %v105 = vld [vmem:[%s0 + $0x1e0] sm:$0xff]
  %v106 = vld [vmem:[%s0 + $0x1e8] sm:$0xff]
  %v107 = vld [vmem:[%s0 + $0x1f0] sm:$0xff]
  %v108 = vld [vmem:[%s0 + $0x1f8] sm:$0xff]
  %v109 = vld [vmem:[%s1] sm:$0xff]
  %v110 = vld [vmem:[%s1 + $0x8] sm:$0xff]
  %v111 = vld [vmem:[%s1 + $0x10] sm:$0xff]
  %v112 = vld [vmem:[%s1 + $0x18] sm:$0xff]
  %v113 = vld [vmem:[%s1 + $0x20] sm:$0xff]
  %v114 = vld [vmem:[%s1 + $0x28] sm:$0xff]
  %v115 = vld [vmem:[%s1 + $0x30] sm:$0xff]
  %v116 = vld [vmem:[%s1 + $0x38] sm:$0xff]
  %v117 = vld [vmem:[%s1 + $0x40] sm:$0xff]
  %v118 = vld [vmem:[%s1 + $0x48] sm:$0xff]
  %v119 = vld [vmem:[%s1 + $0x50] sm:$0xff]
  %v120 = vld [vmem:[%s1 + $0x58] sm:$0xff]
  %v121 = vld [vmem:[%s1 + $0x60] sm:$0xff]
  %v122 = vld [vmem:[%s1 + $0x68] sm:$0xff]
  %v123 = vld [vmem:[%s1 + $0x70] sm:$0xff]
  %v124 = vld [vmem:[%s1 + $0x78] sm:$0xff]
  %v125 = vld [vmem:[%s1 + $0x80] sm:$0xff]
  %v126 = vld [vmem:[%s1 + $0x88] sm:$0xff]
  %v127 = vld [vmem:[%s1 + $0x90] sm:$0xff]
  %v128 = vld [vmem:[%s1 + $0x98] sm:$0xff]
  %v129 = vld [vmem:[%s1 + $0xa0] sm:$0xff]
  %v130 = vld [vmem:[%s1 + $0xa8] sm:$0xff]
  %v131 = vld [vmem:[%s1 + $0xb0] sm:$0xff]
  %v132 = vld [vmem:[%s1 + $0xb8] sm:$0xff]
  %v133 = vld [vmem:[%s1 + $0xc0] sm:$0xff]
  %v134 = vld [vmem:[%s1 + $0xc8] sm:$0xff]
  %v135 = vld [vmem:[%s1 + $0xd0] sm:$0xff]
  %v136 = vld [vmem:[%s1 + $0xd8] sm:$0xff]
  %v137 = vld [vmem:[%s1 + $0xe0] sm:$0xff]
  %v138 = vld [vmem:[%s1 + $0xe8] sm:$0xff]
  %v139 = vld [vmem:[%s1 + $0xf0] sm:$0xff]
  %v140 = vld [vmem:[%s1 + $0xf8] sm:$0xff]
  %v141 = vld [vmem:[%s1 + $0x100] sm:$0xff]
  %v142 = vld [vmem:[%s1 + $0x108] sm:$0xff]
  %v143 = vld [vmem:[%s1 + $0x110] sm:$0xff]
  %v144 = vld [vmem:[%s1 + $0x118] sm:$0xff]
  %v145 = vld [vmem:[%s1 + $0x120] sm:$0xff]
  %v146 = vld [vmem:[%s1 + $0x128] sm:$0xff]
  %v147 = vld [vmem:[%s1 + $0x130] sm:$0xff]
  %v148 = vld [vmem:[%s1 + $0x138] sm:$0xff]
  %v149 = vld [vmem:[%s1 + $0x140] sm:$0xff]
  %v150 = vld [vmem:[%s1 + $0x148] sm:$0xff]
  %v151 = vld [vmem:[%s1 + $0x150] sm:$0xff]
  %v152 = vld [vmem:[%s1 + $0x158] sm:$0xff]
  %v153 = vld [vmem:[%s1 + $0x160] sm:$0xff]
  %v154 = vld [vmem:[%s1 + $0x168] sm:$0xff]
  %v155 = vld [vmem:[%s1 + $0x170] sm:$0xff]
  %v156 = vld [vmem:[%s1 + $0x178] sm:$0xff]
  %v157 = vld [vmem:[%s1 + $0x180] sm:$0xff]
  %v158 = vld [vmem:[%s1 + $0x188] sm:$0xff]
  %v159 = vld [vmem:[%s1 + $0x190] sm:$0xff]
  %v160 = vld [vmem:[%s1 + $0x198] sm:$0xff]
  %v161 = vld [vmem:[%s1 + $0x1a0] sm:$0xff]
  %v162 = vld [vmem:[%s1 + $0x1a8] sm:$0xff]
  %v163 = vld [vmem:[%s1 + $0x1b0] sm:$0xff]
  %v164 = vld [vmem:[%s1 + $0x1b8] sm:$0xff]
  %v165 = vld [vmem:[%s1 + $0x1c0] sm:$0xff]
  %v166 = vld [vmem:[%s1 + $0x1c8] sm:$0xff]
  %v167 = vld [vmem:[%s1 + $0x1d0] sm:$0xff]
  %v168 = vld [vmem:[%s1 + $0x1d8] sm:$0xff]
  %v169 = vld [vmem:[%s1 + $0x1e0] sm:$0xff]
  %v170 = vld [vmem:[%s1 + $0x1e8] sm:$0xff]
  %v171 = vld [vmem:[%s1 + $0x1f0] sm:$0xff]
  %v172 = vld [vmem:[%s1 + $0x1f8] sm:$0xff]
  %v173 = vld [vmem:[%s2] sm:$0xff]
  %v174 = vld [vmem:[%s2 + $0x8] sm:$0xff]
  %v175 = vld [vmem:[%s2 + $0x10] sm:$0xff]
  %v176 = vld [vmem:[%s2 + $0x18] sm:$0xff]
  %v177 = vld [vmem:[%s2 + $0x20] sm:$0xff]
  %v178 = vld [vmem:[%s2 + $0x28] sm:$0xff]
  %v179 = vld [vmem:[%s2 + $0x30] sm:$0xff]
  %v180 = vld [vmem:[%s2 + $0x38] sm:$0xff]
  %v181 = vld [vmem:[%s2 + $0x40] sm:$0xff]
  %v182 = vld [vmem:[%s2 + $0x48] sm:$0xff]
  %v183 = vld [vmem:[%s2 + $0x50] sm:$0xff]
  %v184 = vld [vmem:[%s2 + $0x58] sm:$0xff]
  %v185 = vld [vmem:[%s2 + $0x60] sm:$0xff]
  %v186 = vld [vmem:[%s2 + $0x68] sm:$0xff]
  %v187 = vld [vmem:[%s2 + $0x70] sm:$0xff]
  %v188 = vld [vmem:[%s2 + $0x78] sm:$0xff]
  %v189 = vld [vmem:[%s2 + $0x80] sm:$0xff]
  %v190 = vld [vmem:[%s2 + $0x88] sm:$0xff]
  %v191 = vld [vmem:[%s2 + $0x90] sm:$0xff]
  %v192 = vld [vmem:[%s2 + $0x98] sm:$0xff]
  %v193 = vld [vmem:[%s2 + $0xa0] sm:$0xff]
  %v194 = vld [vmem:[%s2 + $0xa8] sm:$0xff]
  %v195 = vld [vmem:[%s2 + $0xb0] sm:$0xff]
  %v196 = vld [vmem:[%s2 + $0xb8] sm:$0xff]
  %v197 = vld [vmem:[%s2 + $0xc0] sm:$0xff]
  %v198 = vld [vmem:[%s2 + $0xc8] sm:$0xff]
  %v199 = vld [vmem:[%s2 + $0xd0] sm:$0xff]
  %v200 = vld [vmem:[%s2 + $0xd8] sm:$0xff]
  %v201 = vld [vmem:[%s2 + $0xe0] sm:$0xff]
  %v202 = vld [vmem:[%s2 + $0xe8] sm:$0xff]
  %v203 = vld [vmem:[%s2 + $0xf0] sm:$0xff]
  %v204 = vld [vmem:[%s2 + $0xf8] sm:$0xff]
  %v205 = vld [vmem:[%s2 + $0x100] sm:$0xff]
  %v206 = vld [vmem:[%s2 + $0x108] sm:$0xff]
  %v207 = vld [vmem:[%s2 + $0x110] sm:$0xff]
  %v208 = vld [vmem:[%s2 + $0x118] sm:$0xff]
  %v209 = vld [vmem:[%s2 + $0x120] sm:$0xff]
  %v210 = vld [vmem:[%s2 + $0x128] sm:$0xff]
  %v211 = vld [vmem:[%s2 + $0x130] sm:$0xff]
  %v212 = vld [vmem:[%s2 + $0x138] sm:$0xff]
  %v213 = vld [vmem:[%s2 + $0x140] sm:$0xff]
  %v214 = vld [vmem:[%s2 + $0x148] sm:$0xff]
  %v215 = vld [vmem:[%s2 + $0x150] sm:$0xff]
  %v216 = vld [vmem:[%s2 + $0x158] sm:$0xff]
  %v217 = vld [vmem:[%s2 + $0x160] sm:$0xff]
  %v218 = vld [vmem:[%s2 + $0x168] sm:$0xff]
  %v219 = vld [vmem:[%s2 + $0x170] sm:$0xff]
  %v220 = vld [vmem:[%s2 + $0x178] sm:$0xff]
  %v221 = vld [vmem:[%s2 + $0x180] sm:$0xff]
  %v222 = vld [vmem:[%s2 + $0x188] sm:$0xff]
  %v223 = vld [vmem:[%s2 + $0x190] sm:$0xff]
  %v224 = vld [vmem:[%s2 + $0x198] sm:$0xff]
  %v225 = vld [vmem:[%s2 + $0x1a0] sm:$0xff]
  %v226 = vld [vmem:[%s2 + $0x1a8] sm:$0xff]
  %v227 = vld [vmem:[%s2 + $0x1b0] sm:$0xff]
  %v228 = vld [vmem:[%s2 + $0x1b8] sm:$0xff]
  %v229 = vld [vmem:[%s2 + $0x1c0] sm:$0xff]
  %v230 = vld [vmem:[%s2 + $0x1c8] sm:$0xff]
  %v231 = vld [vmem:[%s2 + $0x1d0] sm:$0xff]
  %v232 = vld [vmem:[%s2 + $0x1d8] sm:$0xff]
  %v233 = vld [vmem:[%s2 + $0x1e0] sm:$0xff]
  %v234 = vld [vmem:[%s2 + $0x1e8] sm:$0xff]
  %v235 = vld [vmem:[%s2 + $0x1f0] sm:$0xff]
  %v236 = vld [vmem:[%s2 + $0x1f8] sm:$0xff]
  %238 = vset.pattern.permute.xlu0 0
  %239 = vperm.xlu0 %238, %v173
  %v240 = vpop.permute.xlu0 %239
  %243 = vset.pattern.permute.xlu0 0
  %244 = vperm.xlu0 %243, %v174
  %v245 = vpop.permute.xlu0 %244
  %248 = vset.pattern.permute.xlu0 0
  %249 = vperm.xlu0 %248, %v175
  %v250 = vpop.permute.xlu0 %249
  %253 = vset.pattern.permute.xlu0 0
  %254 = vperm.xlu0 %253, %v176
  %v255 = vpop.permute.xlu0 %254
  %258 = vset.pattern.permute.xlu0 0
  %259 = vperm.xlu0 %258, %v177
  %v260 = vpop.permute.xlu0 %259
  %263 = vset.pattern.permute.xlu0 0
  %264 = vperm.xlu0 %263, %v178
  %v265 = vpop.permute.xlu0 %264
  %268 = vset.pattern.permute.xlu0 0
  %269 = vperm.xlu0 %268, %v179
  %v270 = vpop.permute.xlu0 %269
  %273 = vset.pattern.permute.xlu0 0
  %274 = vperm.xlu0 %273, %v180
  %v275 = vpop.permute.xlu0 %274
  %278 = vset.pattern.permute.xlu0 0
  %279 = vperm.xlu0 %278, %v181
  %v280 = vpop.permute.xlu0 %279
  %283 = vset.pattern.permute.xlu0 0
  %284 = vperm.xlu0 %283, %v182
  %v285 = vpop.permute.xlu0 %284
  %288 = vset.pattern.permute.xlu0 0
  %289 = vperm.xlu0 %288, %v183
  %v290 = vpop.permute.xlu0 %289
  %293 = vset.pattern.permute.xlu0 0
  %294 = vperm.xlu0 %293, %v184
  %v295 = vpop.permute.xlu0 %294
  %298 = vset.pattern.permute.xlu0 0
  %299 = vperm.xlu0 %298, %v185
  %v300 = vpop.permute.xlu0 %299
  %303 = vset.pattern.permute.xlu0 0
  %304 = vperm.xlu0 %303, %v186
  %v305 = vpop.permute.xlu0 %304
  %308 = vset.pattern.permute.xlu0 0
  %309 = vperm.xlu0 %308, %v187
  %v310 = vpop.permute.xlu0 %309
  %313 = vset.pattern.permute.xlu0 0
  %314 = vperm.xlu0 %313, %v188
  %v315 = vpop.permute.xlu0 %314
  %318 = vset.pattern.permute.xlu0 0
  %319 = vperm.xlu0 %318, %v189
  %v320 = vpop.permute.xlu0 %319
  %323 = vset.pattern.permute.xlu0 0
  %324 = vperm.xlu0 %323, %v190
  %v325 = vpop.permute.xlu0 %324
  %328 = vset.pattern.permute.xlu0 0
  %329 = vperm.xlu0 %328, %v191
  %v330 = vpop.permute.xlu0 %329
  %333 = vset.pattern.permute.xlu0 0
  %334 = vperm.xlu0 %333, %v192
  %v335 = vpop.permute.xlu0 %334
  %338 = vset.pattern.permute.xlu0 0
  %339 = vperm.xlu0 %338, %v193
  %v340 = vpop.permute.xlu0 %339
  %343 = vset.pattern.permute.xlu0 0
  %344 = vperm.xlu0 %343, %v194
  %v345 = vpop.permute.xlu0 %344
  %348 = vset.pattern.permute.xlu0 0
  %349 = vperm.xlu0 %348, %v195
  %v350 = vpop.permute.xlu0 %349
  %353 = vset.pattern.permute.xlu0 0
  %354 = vperm.xlu0 %353, %v196
  %v355 = vpop.permute.xlu0 %354
  %358 = vset.pattern.permute.xlu0 0
  %359 = vperm.xlu0 %358, %v197
  %v360 = vpop.permute.xlu0 %359
  %363 = vset.pattern.permute.xlu0 0
  %364 = vperm.xlu0 %363, %v198
  %v365 = vpop.permute.xlu0 %364
  %368 = vset.pattern.permute.xlu0 0
  %369 = vperm.xlu0 %368, %v199
  %v370 = vpop.permute.xlu0 %369
  %373 = vset.pattern.permute.xlu0 0
  %374 = vperm.xlu0 %373, %v200
  %v375 = vpop.permute.xlu0 %374
  %378 = vset.pattern.permute.xlu0 0
  %379 = vperm.xlu0 %378, %v201
  %v380 = vpop.permute.xlu0 %379
  %383 = vset.pattern.permute.xlu0 0
  %384 = vperm.xlu0 %383, %v202
  %v385 = vpop.permute.xlu0 %384
  %388 = vset.pattern.permute.xlu0 0
  %389 = vperm.xlu0 %388, %v203
  %v390 = vpop.permute.xlu0 %389
  %393 = vset.pattern.permute.xlu0 0
  %394 = vperm.xlu0 %393, %v204
  %v395 = vpop.permute.xlu0 %394
  %398 = vset.pattern.permute.xlu0 0
  %399 = vperm.xlu0 %398, %v205
  %v400 = vpop.permute.xlu0 %399
  %403 = vset.pattern.permute.xlu0 0
  %404 = vperm.xlu0 %403, %v206
  %v405 = vpop.permute.xlu0 %404
  %408 = vset.pattern.permute.xlu0 0
  %409 = vperm.xlu0 %408, %v207
  %v410 = vpop.permute.xlu0 %409
  %413 = vset.pattern.permute.xlu0 0
  %414 = vperm.xlu0 %413, %v208
  %v415 = vpop.permute.xlu0 %414
  %418 = vset.pattern.permute.xlu0 0
  %419 = vperm.xlu0 %418, %v209
  %v420 = vpop.permute.xlu0 %419
  %423 = vset.pattern.permute.xlu0 0
  %424 = vperm.xlu0 %423, %v210
  %v425 = vpop.permute.xlu0 %424
  %428 = vset.pattern.permute.xlu0 0
  %429 = vperm.xlu0 %428, %v211
  %v430 = vpop.permute.xlu0 %429
  %433 = vset.pattern.permute.xlu0 0
  %434 = vperm.xlu0 %433, %v212
  %v435 = vpop.permute.xlu0 %434
  %438 = vset.pattern.permute.xlu0 0
  %439 = vperm.xlu0 %438, %v213
  %v440 = vpop.permute.xlu0 %439
  %443 = vset.pattern.permute.xlu0 0
  %444 = vperm.xlu0 %443, %v214
  %v445 = vpop.permute.xlu0 %444
  %448 = vset.pattern.permute.xlu0 0
  %449 = vperm.xlu0 %448, %v215
  %v450 = vpop.permute.xlu0 %449
  %453 = vset.pattern.permute.xlu0 0
  %454 = vperm.xlu0 %453, %v216
  %v455 = vpop.permute.xlu0 %454
  %458 = vset.pattern.permute.xlu0 0
  %459 = vperm.xlu0 %458, %v217
  %v460 = vpop.permute.xlu0 %459
  %463 = vset.pattern.permute.xlu0 0
  %464 = vperm.xlu0 %463, %v218
  %v465 = vpop.permute.xlu0 %464
  %468 = vset.pattern.permute.xlu0 0
  %469 = vperm.xlu0 %468, %v219
  %v470 = vpop.permute.xlu0 %469
  %473 = vset.pattern.permute.xlu0 0
  %474 = vperm.xlu0 %473, %v220
  %v475 = vpop.permute.xlu0 %474
  %478 = vset.pattern.permute.xlu0 0
  %479 = vperm.xlu0 %478, %v221
  %v480 = vpop.permute.xlu0 %479
  %483 = vset.pattern.permute.xlu0 0
  %484 = vperm.xlu0 %483, %v222
  %v485 = vpop.permute.xlu0 %484
  %488 = vset.pattern.permute.xlu0 0
  %489 = vperm.xlu0 %488, %v223
  %v490 = vpop.permute.xlu0 %489
  %493 = vset.pattern.permute.xlu0 0
  %494 = vperm.xlu0 %493, %v224
  %v495 = vpop.permute.xlu0 %494
  %498 = vset.pattern.permute.xlu0 0
  %499 = vperm.xlu0 %498, %v225
  %v500 = vpop.permute.xlu0 %499
  %503 = vset.pattern.permute.xlu0 0
  %504 = vperm.xlu0 %503, %v226
  %v505 = vpop.permute.xlu0 %504
  %508 = vset.pattern.permute.xlu0 0
  %509 = vperm.xlu0 %508, %v227
  %v510 = vpop.permute.xlu0 %509
  %513 = vset.pattern.permute.xlu0 0
  %514 = vperm.xlu0 %513, %v228
  %v515 = vpop.permute.xlu0 %514
  %518 = vset.pattern.permute.xlu0 0
  %519 = vperm.xlu0 %518, %v229
  %v520 = vpop.permute.xlu0 %519
  %523 = vset.pattern.permute.xlu0 0
  %524 = vperm.xlu0 %523, %v230
  %v525 = vpop.permute.xlu0 %524
  %528 = vset.pattern.permute.xlu0 0
  %529 = vperm.xlu0 %528, %v231
  %v530 = vpop.permute.xlu0 %529
  %533 = vset.pattern.permute.xlu0 0
  %534 = vperm.xlu0 %533, %v232
  %v535 = vpop.permute.xlu0 %534
  %538 = vset.pattern.permute.xlu0 0
  %539 = vperm.xlu0 %538, %v233
  %v540 = vpop.permute.xlu0 %539
  %543 = vset.pattern.permute.xlu0 0
  %544 = vperm.xlu0 %543, %v234
  %v545 = vpop.permute.xlu0 %544
  %548 = vset.pattern.permute.xlu0 0
  %549 = vperm.xlu0 %548, %v235
  %v550 = vpop.permute.xlu0 %549
  %553 = vset.pattern.permute.xlu0 0
  %554 = vperm.xlu0 %553, %v236
  %v555 = vpop.permute.xlu0 %554
  %v557 = vmul.f32 %v240, %v45
  %v558 = vmul.f32 %v245, %v46
  %v559 = vmul.f32 %v250, %v47
  %v560 = vmul.f32 %v255, %v48
  %v561 = vmul.f32 %v260, %v49
  %v562 = vmul.f32 %v265, %v50
  %v563 = vmul.f32 %v270, %v51
  %v564 = vmul.f32 %v275, %v52
  %v565 = vmul.f32 %v280, %v53
  %v566 = vmul.f32 %v285, %v54
  %v567 = vmul.f32 %v290, %v55
  %v568 = vmul.f32 %v295, %v56
  %v569 = vmul.f32 %v300, %v57
  %v570 = vmul.f32 %v305, %v58
  %v571 = vmul.f32 %v310, %v59
  %v572 = vmul.f32 %v315, %v60
  %v573 = vmul.f32 %v320, %v61
  %v574 = vmul.f32 %v325, %v62
  %v575 = vmul.f32 %v330, %v63
  %v576 = vmul.f32 %v335, %v64
  %v577 = vmul.f32 %v340, %v65
  %v578 = vmul.f32 %v345, %v66
  %v579 = vmul.f32 %v350, %v67
  %v580 = vmul.f32 %v355, %v68
  %v581 = vmul.f32 %v360, %v69
  %v582 = vmul.f32 %v365, %v70
  %v583 = vmul.f32 %v370, %v71
  %v584 = vmul.f32 %v375, %v72
  %v585 = vmul.f32 %v380, %v73
  %v586 = vmul.f32 %v385, %v74
  %v587 = vmul.f32 %v390, %v75
  %v588 = vmul.f32 %v395, %v76
  %v589 = vmul.f32 %v400, %v77
  %v590 = vmul.f32 %v405, %v78
  %v591 = vmul.f32 %v410, %v79
  %v592 = vmul.f32 %v415, %v80
  %v593 = vmul.f32 %v420, %v81
  %v594 = vmul.f32 %v425, %v82
  %v595 = vmul.f32 %v430, %v83
  %v596 = vmul.f32 %v435, %v84
  %v597 = vmul.f32 %v440, %v85
  %v598 = vmul.f32 %v445, %v86
  %v599 = vmul.f32 %v450, %v87
  %v600 = vmul.f32 %v455, %v88
  %v601 = vmul.f32 %v460, %v89
  %v602 = vmul.f32 %v465, %v90
  %v603 = vmul.f32 %v470, %v91
  %v604 = vmul.f32 %v475, %v92
  %v605 = vmul.f32 %v480, %v93
  %v606 = vmul.f32 %v485, %v94
  %v607 = vmul.f32 %v490, %v95
  %v608 = vmul.f32 %v495, %v96
  %v609 = vmul.f32 %v500, %v97
  %v610 = vmul.f32 %v505, %v98
  %v611 = vmul.f32 %v510, %v99
  %v612 = vmul.f32 %v515, %v100
  %v613 = vmul.f32 %v520, %v101
  %v614 = vmul.f32 %v525, %v102
  %v615 = vmul.f32 %v530, %v103
  %v616 = vmul.f32 %v535, %v104
  %v617 = vmul.f32 %v540, %v105
  %v618 = vmul.f32 %v545, %v106
  %v619 = vmul.f32 %v550, %v107
  %v620 = vmul.f32 %v555, %v108
  %v621 = vld [vmem:[%s3] sm:$0xff]
  %v622 = vld [vmem:[%s3 + $0x8] sm:$0xff]
  %v623 = vld [vmem:[%s3 + $0x10] sm:$0xff]
  %v624 = vld [vmem:[%s3 + $0x18] sm:$0xff]
  %v625 = vld [vmem:[%s3 + $0x20] sm:$0xff]
  %v626 = vld [vmem:[%s3 + $0x28] sm:$0xff]
  %v627 = vld [vmem:[%s3 + $0x30] sm:$0xff]
  %v628 = vld [vmem:[%s3 + $0x38] sm:$0xff]
  %v629 = vld [vmem:[%s3 + $0x40] sm:$0xff]
  %v630 = vld [vmem:[%s3 + $0x48] sm:$0xff]
  %v631 = vld [vmem:[%s3 + $0x50] sm:$0xff]
  %v632 = vld [vmem:[%s3 + $0x58] sm:$0xff]
  %v633 = vld [vmem:[%s3 + $0x60] sm:$0xff]
  %v634 = vld [vmem:[%s3 + $0x68] sm:$0xff]
  %v635 = vld [vmem:[%s3 + $0x70] sm:$0xff]
  %v636 = vld [vmem:[%s3 + $0x78] sm:$0xff]
  %v637 = vld [vmem:[%s3 + $0x80] sm:$0xff]
  %v638 = vld [vmem:[%s3 + $0x88] sm:$0xff]
  %v639 = vld [vmem:[%s3 + $0x90] sm:$0xff]
  %v640 = vld [vmem:[%s3 + $0x98] sm:$0xff]
  %v641 = vld [vmem:[%s3 + $0xa0] sm:$0xff]
  %v642 = vld [vmem:[%s3 + $0xa8] sm:$0xff]
  %v643 = vld [vmem:[%s3 + $0xb0] sm:$0xff]
  %v644 = vld [vmem:[%s3 + $0xb8] sm:$0xff]
  %v645 = vld [vmem:[%s3 + $0xc0] sm:$0xff]
  %v646 = vld [vmem:[%s3 + $0xc8] sm:$0xff]
  %v647 = vld [vmem:[%s3 + $0xd0] sm:$0xff]
  %v648 = vld [vmem:[%s3 + $0xd8] sm:$0xff]
  %v649 = vld [vmem:[%s3 + $0xe0] sm:$0xff]
  %v650 = vld [vmem:[%s3 + $0xe8] sm:$0xff]
  %v651 = vld [vmem:[%s3 + $0xf0] sm:$0xff]
  %v652 = vld [vmem:[%s3 + $0xf8] sm:$0xff]
  %v653 = vld [vmem:[%s3 + $0x100] sm:$0xff]
  %v654 = vld [vmem:[%s3 + $0x108] sm:$0xff]
  %v655 = vld [vmem:[%s3 + $0x110] sm:$0xff]
  %v656 = vld [vmem:[%s3 + $0x118] sm:$0xff]
  %v657 = vld [vmem:[%s3 + $0x120] sm:$0xff]
  %v658 = vld [vmem:[%s3 + $0x128] sm:$0xff]
  %v659 = vld [vmem:[%s3 + $0x130] sm:$0xff]
  %v660 = vld [vmem:[%s3 + $0x138] sm:$0xff]
  %v661 = vld [vmem:[%s3 + $0x140] sm:$0xff]
  %v662 = vld [vmem:[%s3 + $0x148] sm:$0xff]
  %v663 = vld [vmem:[%s3 + $0x150] sm:$0xff]
  %v664 = vld [vmem:[%s3 + $0x158] sm:$0xff]
  %v665 = vld [vmem:[%s3 + $0x160] sm:$0xff]
  %v666 = vld [vmem:[%s3 + $0x168] sm:$0xff]
  %v667 = vld [vmem:[%s3 + $0x170] sm:$0xff]
  %v668 = vld [vmem:[%s3 + $0x178] sm:$0xff]
  %v669 = vld [vmem:[%s3 + $0x180] sm:$0xff]
  %v670 = vld [vmem:[%s3 + $0x188] sm:$0xff]
  %v671 = vld [vmem:[%s3 + $0x190] sm:$0xff]
  %v672 = vld [vmem:[%s3 + $0x198] sm:$0xff]
  %v673 = vld [vmem:[%s3 + $0x1a0] sm:$0xff]
  %v674 = vld [vmem:[%s3 + $0x1a8] sm:$0xff]
  %v675 = vld [vmem:[%s3 + $0x1b0] sm:$0xff]
  %v676 = vld [vmem:[%s3 + $0x1b8] sm:$0xff]
  %v677 = vld [vmem:[%s3 + $0x1c0] sm:$0xff]
  %v678 = vld [vmem:[%s3 + $0x1c8] sm:$0xff]
  %v679 = vld [vmem:[%s3 + $0x1d0] sm:$0xff]
  %v680 = vld [vmem:[%s3 + $0x1d8] sm:$0xff]
  %v681 = vld [vmem:[%s3 + $0x1e0] sm:$0xff]
  %v682 = vld [vmem:[%s3 + $0x1e8] sm:$0xff]
  %v683 = vld [vmem:[%s3 + $0x1f0] sm:$0xff]
  %v684 = vld [vmem:[%s3 + $0x1f8] sm:$0xff]
  %686 = vset.pattern.permute.xlu0 0
  %687 = vperm.xlu0 %686, %v621
  %v688 = vpop.permute.xlu0 %687
  %691 = vset.pattern.permute.xlu0 0
  %692 = vperm.xlu0 %691, %v622
  %v693 = vpop.permute.xlu0 %692
  %696 = vset.pattern.permute.xlu0 0
  %697 = vperm.xlu0 %696, %v623
  %v698 = vpop.permute.xlu0 %697
  %701 = vset.pattern.permute.xlu0 0
  %702 = vperm.xlu0 %701, %v624
  %v703 = vpop.permute.xlu0 %702
  %706 = vset.pattern.permute.xlu0 0
  %707 = vperm.xlu0 %706, %v625
  %v708 = vpop.permute.xlu0 %707
  %711 = vset.pattern.permute.xlu0 0
  %712 = vperm.xlu0 %711, %v626
  %v713 = vpop.permute.xlu0 %712
  %716 = vset.pattern.permute.xlu0 0
  %717 = vperm.xlu0 %716, %v627
  %v718 = vpop.permute.xlu0 %717
  %721 = vset.pattern.permute.xlu0 0
  %722 = vperm.xlu0 %721, %v628
  %v723 = vpop.permute.xlu0 %722
  %726 = vset.pattern.permute.xlu0 0
  %727 = vperm.xlu0 %726, %v629
  %v728 = vpop.permute.xlu0 %727
  %731 = vset.pattern.permute.xlu0 0
  %732 = vperm.xlu0 %731, %v630
  %v733 = vpop.permute.xlu0 %732
  %736 = vset.pattern.permute.xlu0 0
  %737 = vperm.xlu0 %736, %v631
  %v738 = vpop.permute.xlu0 %737
  %741 = vset.pattern.permute.xlu0 0
  %742 = vperm.xlu0 %741, %v632
  %v743 = vpop.permute.xlu0 %742
  %746 = vset.pattern.permute.xlu0 0
  %747 = vperm.xlu0 %746, %v633
  %v748 = vpop.permute.xlu0 %747
  %751 = vset.pattern.permute.xlu0 0
  %752 = vperm.xlu0 %751, %v634
  %v753 = vpop.permute.xlu0 %752
  %756 = vset.pattern.permute.xlu0 0
  %757 = vperm.xlu0 %756, %v635
  %v758 = vpop.permute.xlu0 %757
  %761 = vset.pattern.permute.xlu0 0
  %762 = vperm.xlu0 %761, %v636
  %v763 = vpop.permute.xlu0 %762
  %766 = vset.pattern.permute.xlu0 0
  %767 = vperm.xlu0 %766, %v637
  %v768 = vpop.permute.xlu0 %767
  %771 = vset.pattern.permute.xlu0 0
  %772 = vperm.xlu0 %771, %v638
  %v773 = vpop.permute.xlu0 %772
  %776 = vset.pattern.permute.xlu0 0
  %777 = vperm.xlu0 %776, %v639
  %v778 = vpop.permute.xlu0 %777
  %781 = vset.pattern.permute.xlu0 0
  %782 = vperm.xlu0 %781, %v640
  %v783 = vpop.permute.xlu0 %782
  %786 = vset.pattern.permute.xlu0 0
  %787 = vperm.xlu0 %786, %v641
  %v788 = vpop.permute.xlu0 %787
  %791 = vset.pattern.permute.xlu0 0
  %792 = vperm.xlu0 %791, %v642
  %v793 = vpop.permute.xlu0 %792
  %796 = vset.pattern.permute.xlu0 0
  %797 = vperm.xlu0 %796, %v643
  %v798 = vpop.permute.xlu0 %797
  %801 = vset.pattern.permute.xlu0 0
  %802 = vperm.xlu0 %801, %v644
  %v803 = vpop.permute.xlu0 %802
  %806 = vset.pattern.permute.xlu0 0
  %807 = vperm.xlu0 %806, %v645
  %v808 = vpop.permute.xlu0 %807
  %811 = vset.pattern.permute.xlu0 0
  %812 = vperm.xlu0 %811, %v646
  %v813 = vpop.permute.xlu0 %812
  %816 = vset.pattern.permute.xlu0 0
  %817 = vperm.xlu0 %816, %v647
  %v818 = vpop.permute.xlu0 %817
  %821 = vset.pattern.permute.xlu0 0
  %822 = vperm.xlu0 %821, %v648
  %v823 = vpop.permute.xlu0 %822
  %826 = vset.pattern.permute.xlu0 0
  %827 = vperm.xlu0 %826, %v649
  %v828 = vpop.permute.xlu0 %827
  %831 = vset.pattern.permute.xlu0 0
  %832 = vperm.xlu0 %831, %v650
  %v833 = vpop.permute.xlu0 %832
  %836 = vset.pattern.permute.xlu0 0
  %837 = vperm.xlu0 %836, %v651
  %v838 = vpop.permute.xlu0 %837
  %841 = vset.pattern.permute.xlu0 0
  %842 = vperm.xlu0 %841, %v652
  %v843 = vpop.permute.xlu0 %842
  %846 = vset.pattern.permute.xlu0 0
  %847 = vperm.xlu0 %846, %v653
  %v848 = vpop.permute.xlu0 %847
  %851 = vset.pattern.permute.xlu0 0
  %852 = vperm.xlu0 %851, %v654
  %v853 = vpop.permute.xlu0 %852
  %856 = vset.pattern.permute.xlu0 0
  %857 = vperm.xlu0 %856, %v655
  %v858 = vpop.permute.xlu0 %857
  %861 = vset.pattern.permute.xlu0 0
  %862 = vperm.xlu0 %861, %v656
  %v863 = vpop.permute.xlu0 %862
  %866 = vset.pattern.permute.xlu0 0
  %867 = vperm.xlu0 %866, %v657
  %v868 = vpop.permute.xlu0 %867
  %871 = vset.pattern.permute.xlu0 0
  %872 = vperm.xlu0 %871, %v658
  %v873 = vpop.permute.xlu0 %872
  %876 = vset.pattern.permute.xlu0 0
  %877 = vperm.xlu0 %876, %v659
  %v878 = vpop.permute.xlu0 %877
  %881 = vset.pattern.permute.xlu0 0
  %882 = vperm.xlu0 %881, %v660
  %v883 = vpop.permute.xlu0 %882
  %886 = vset.pattern.permute.xlu0 0
  %887 = vperm.xlu0 %886, %v661
  %v888 = vpop.permute.xlu0 %887
  %891 = vset.pattern.permute.xlu0 0
  %892 = vperm.xlu0 %891, %v662
  %v893 = vpop.permute.xlu0 %892
  %896 = vset.pattern.permute.xlu0 0
  %897 = vperm.xlu0 %896, %v663
  %v898 = vpop.permute.xlu0 %897
  %901 = vset.pattern.permute.xlu0 0
  %902 = vperm.xlu0 %901, %v664
  %v903 = vpop.permute.xlu0 %902
  %906 = vset.pattern.permute.xlu0 0
  %907 = vperm.xlu0 %906, %v665
  %v908 = vpop.permute.xlu0 %907
  %911 = vset.pattern.permute.xlu0 0
  %912 = vperm.xlu0 %911, %v666
  %v913 = vpop.permute.xlu0 %912
  %916 = vset.pattern.permute.xlu0 0
  %917 = vperm.xlu0 %916, %v667
  %v918 = vpop.permute.xlu0 %917
  %921 = vset.pattern.permute.xlu0 0
  %922 = vperm.xlu0 %921, %v668
  %v923 = vpop.permute.xlu0 %922
  %926 = vset.pattern.permute.xlu0 0
  %927 = vperm.xlu0 %926, %v669
  %v928 = vpop.permute.xlu0 %927
  %931 = vset.pattern.permute.xlu0 0
  %932 = vperm.xlu0 %931, %v670
  %v933 = vpop.permute.xlu0 %932
  %936 = vset.pattern.permute.xlu0 0
  %937 = vperm.xlu0 %936, %v671
  %v938 = vpop.permute.xlu0 %937
  %941 = vset.pattern.permute.xlu0 0
  %942 = vperm.xlu0 %941, %v672
  %v943 = vpop.permute.xlu0 %942
  %946 = vset.pattern.permute.xlu0 0
  %947 = vperm.xlu0 %946, %v673
  %v948 = vpop.permute.xlu0 %947
  %951 = vset.pattern.permute.xlu0 0
  %952 = vperm.xlu0 %951, %v674
  %v953 = vpop.permute.xlu0 %952
  %956 = vset.pattern.permute.xlu0 0
  %957 = vperm.xlu0 %956, %v675
  %v958 = vpop.permute.xlu0 %957
  %961 = vset.pattern.permute.xlu0 0
  %962 = vperm.xlu0 %961, %v676
  %v963 = vpop.permute.xlu0 %962
  %966 = vset.pattern.permute.xlu0 0
  %967 = vperm.xlu0 %966, %v677
  %v968 = vpop.permute.xlu0 %967
  %971 = vset.pattern.permute.xlu0 0
  %972 = vperm.xlu0 %971, %v678
  %v973 = vpop.permute.xlu0 %972
  %976 = vset.pattern.permute.xlu0 0
  %977 = vperm.xlu0 %976, %v679
  %v978 = vpop.permute.xlu0 %977
  %981 = vset.pattern.permute.xlu0 0
  %982 = vperm.xlu0 %981, %v680
  %v983 = vpop.permute.xlu0 %982
  %986 = vset.pattern.permute.xlu0 0
  %987 = vperm.xlu0 %986, %v681
  %v988 = vpop.permute.xlu0 %987
  %991 = vset.pattern.permute.xlu0 0
  %992 = vperm.xlu0 %991, %v682
  %v993 = vpop.permute.xlu0 %992
  %996 = vset.pattern.permute.xlu0 0
  %997 = vperm.xlu0 %996, %v683
  %v998 = vpop.permute.xlu0 %997
  %1001 = vset.pattern.permute.xlu0 0
  %1002 = vperm.xlu0 %1001, %v684
  %v1003 = vpop.permute.xlu0 %1002
  %v1005 = vmul.f32 %v688, %v109
  %v1006 = vmul.f32 %v693, %v110
  %v1007 = vmul.f32 %v698, %v111
  %v1008 = vmul.f32 %v703, %v112
  %v1009 = vmul.f32 %v708, %v113
  %v1010 = vmul.f32 %v713, %v114
  %v1011 = vmul.f32 %v718, %v115
  %v1012 = vmul.f32 %v723, %v116
  %v1013 = vmul.f32 %v728, %v117
  %v1014 = vmul.f32 %v733, %v118
  %v1015 = vmul.f32 %v738, %v119
  %v1016 = vmul.f32 %v743, %v120
  %v1017 = vmul.f32 %v748, %v121
  %v1018 = vmul.f32 %v753, %v122
  %v1019 = vmul.f32 %v758, %v123
  %v1020 = vmul.f32 %v763, %v124
  %v1021 = vmul.f32 %v768, %v125
  %v1022 = vmul.f32 %v773, %v126
  %v1023 = vmul.f32 %v778, %v127
  %v1024 = vmul.f32 %v783, %v128
  %v1025 = vmul.f32 %v788, %v129
  %v1026 = vmul.f32 %v793, %v130
  %v1027 = vmul.f32 %v798, %v131
  %v1028 = vmul.f32 %v803, %v132
  %v1029 = vmul.f32 %v808, %v133
  %v1030 = vmul.f32 %v813, %v134
  %v1031 = vmul.f32 %v818, %v135
  %v1032 = vmul.f32 %v823, %v136
  %v1033 = vmul.f32 %v828, %v137
  %v1034 = vmul.f32 %v833, %v138
  %v1035 = vmul.f32 %v838, %v139
  %v1036 = vmul.f32 %v843, %v140
  %v1037 = vmul.f32 %v848, %v141
  %v1038 = vmul.f32 %v853, %v142
  %v1039 = vmul.f32 %v858, %v143
  %v1040 = vmul.f32 %v863, %v144
  %v1041 = vmul.f32 %v868, %v145
  %v1042 = vmul.f32 %v873, %v146
  %v1043 = vmul.f32 %v878, %v147
  %v1044 = vmul.f32 %v883, %v148
  %v1045 = vmul.f32 %v888, %v149
  %v1046 = vmul.f32 %v893, %v150
  %v1047 = vmul.f32 %v898, %v151
  %v1048 = vmul.f32 %v903, %v152
  %v1049 = vmul.f32 %v908, %v153
  %v1050 = vmul.f32 %v913, %v154
  %v1051 = vmul.f32 %v918, %v155
  %v1052 = vmul.f32 %v923, %v156
  %v1053 = vmul.f32 %v928, %v157
  %v1054 = vmul.f32 %v933, %v158
  %v1055 = vmul.f32 %v938, %v159
  %v1056 = vmul.f32 %v943, %v160
  %v1057 = vmul.f32 %v948, %v161
  %v1058 = vmul.f32 %v953, %v162
  %v1059 = vmul.f32 %v958, %v163
  %v1060 = vmul.f32 %v963, %v164
  %v1061 = vmul.f32 %v968, %v165
  %v1062 = vmul.f32 %v973, %v166
  %v1063 = vmul.f32 %v978, %v167
  %v1064 = vmul.f32 %v983, %v168
  %v1065 = vmul.f32 %v988, %v169
  %v1066 = vmul.f32 %v993, %v170
  %v1067 = vmul.f32 %v998, %v171
  %v1068 = vmul.f32 %v1003, %v172
  %v1069 = vadd.f32 %v557, %v1005
  %v1070 = vadd.f32 %v558, %v1006
  %v1071 = vadd.f32 %v559, %v1007
  %v1072 = vadd.f32 %v560, %v1008
  %v1073 = vadd.f32 %v561, %v1009
  %v1074 = vadd.f32 %v562, %v1010
  %v1075 = vadd.f32 %v563, %v1011
  %v1076 = vadd.f32 %v564, %v1012
  %v1077 = vadd.f32 %v565, %v1013
  %v1078 = vadd.f32 %v566, %v1014
  %v1079 = vadd.f32 %v567, %v1015
  %v1080 = vadd.f32 %v568, %v1016
  %v1081 = vadd.f32 %v569, %v1017
  %v1082 = vadd.f32 %v570, %v1018
  %v1083 = vadd.f32 %v571, %v1019
  %v1084 = vadd.f32 %v572, %v1020
  %v1085 = vadd.f32 %v573, %v1021
  %v1086 = vadd.f32 %v574, %v1022
  %v1087 = vadd.f32 %v575, %v1023
  %v1088 = vadd.f32 %v576, %v1024
  %v1089 = vadd.f32 %v577, %v1025
  %v1090 = vadd.f32 %v578, %v1026
  %v1091 = vadd.f32 %v579, %v1027
  %v1092 = vadd.f32 %v580, %v1028
  %v1093 = vadd.f32 %v581, %v1029
  %v1094 = vadd.f32 %v582, %v1030
  %v1095 = vadd.f32 %v583, %v1031
  %v1096 = vadd.f32 %v584, %v1032
  %v1097 = vadd.f32 %v585, %v1033
  %v1098 = vadd.f32 %v586, %v1034
  %v1099 = vadd.f32 %v587, %v1035
  %v1100 = vadd.f32 %v588, %v1036
  %v1101 = vadd.f32 %v589, %v1037
  %v1102 = vadd.f32 %v590, %v1038
  %v1103 = vadd.f32 %v591, %v1039
  %v1104 = vadd.f32 %v592, %v1040
  %v1105 = vadd.f32 %v593, %v1041
  %v1106 = vadd.f32 %v594, %v1042
  %v1107 = vadd.f32 %v595, %v1043
  %v1108 = vadd.f32 %v596, %v1044
  %v1109 = vadd.f32 %v597, %v1045
  %v1110 = vadd.f32 %v598, %v1046
  %v1111 = vadd.f32 %v599, %v1047
  %v1112 = vadd.f32 %v600, %v1048
  %v1113 = vadd.f32 %v601, %v1049
  %v1114 = vadd.f32 %v602, %v1050
  %v1115 = vadd.f32 %v603, %v1051
  %v1116 = vadd.f32 %v604, %v1052
  %v1117 = vadd.f32 %v605, %v1053
  %v1118 = vadd.f32 %v606, %v1054
  %v1119 = vadd.f32 %v607, %v1055
  %v1120 = vadd.f32 %v608, %v1056
  %v1121 = vadd.f32 %v609, %v1057
  %v1122 = vadd.f32 %v610, %v1058
  %v1123 = vadd.f32 %v611, %v1059
  %v1124 = vadd.f32 %v612, %v1060
  %v1125 = vadd.f32 %v613, %v1061
  %v1126 = vadd.f32 %v614, %v1062
  %v1127 = vadd.f32 %v615, %v1063
  %v1128 = vadd.f32 %v616, %v1064
  %v1129 = vadd.f32 %v617, %v1065
  %v1130 = vadd.f32 %v618, %v1066
  %v1131 = vadd.f32 %v619, %v1067
  %v1132 = vadd.f32 %v620, %v1068
  %v1133 = vlaneseq
  %v1134 = vshrl.u32 %v1133, 7
  %v1135 = vadd.s32 %v1134, 8
  %v1136 = vadd.s32 %v1134, 16
  %v1137 = vadd.s32 %v1134, 24
  %v1138 = vadd.s32 %v1134, 32
  %v1139 = vadd.s32 %v1134, 40
  %v1140 = vadd.s32 %v1134, 48
  %v1141 = vadd.s32 %v1134, 56
  %v1142 = vadd.s32 %v1134, 64
  %v1143 = vadd.s32 %v1134, 72
  %v1144 = vadd.s32 %v1134, 80
  %v1145 = vadd.s32 %v1134, 88
  %v1146 = vadd.s32 %v1134, 96
  %v1147 = vadd.s32 %v1134, 104
  %v1148 = vadd.s32 %v1134, 112
  %v1149 = vadd.s32 %v1134, 120
  %v1150 = vadd.s32 %v1134, 128
  %v1151 = vadd.s32 %v1134, 136
  %v1152 = vadd.s32 %v1134, 144
  %v1153 = vadd.s32 %v1134, 152
  %v1154 = vadd.s32 %v1134, 160
  %v1155 = vadd.s32 %v1134, 168
  %v1156 = vadd.s32 %v1134, 176
  %v1157 = vadd.s32 %v1134, 184
  %v1158 = vadd.s32 %v1134, 192
  %v1159 = vadd.s32 %v1134, 200
  %v1160 = vadd.s32 %v1134, 208
  %v1161 = vadd.s32 %v1134, 216
  %v1162 = vadd.s32 %v1134, 224
  %v1163 = vadd.s32 %v1134, 232
  %v1164 = vadd.s32 %v1134, 240
  %v1165 = vadd.s32 %v1134, 248
  %v1166 = vadd.s32 %v1134, 256
  %v1167 = vadd.s32 %v1134, 264
  %v1168 = vadd.s32 %v1134, 272
  %v1169 = vadd.s32 %v1134, 280
  %v1170 = vadd.s32 %v1134, 288
  %v1171 = vadd.s32 %v1134, 296
  %v1172 = vadd.s32 %v1134, 304
  %v1173 = vadd.s32 %v1134, 312
  %v1174 = vadd.s32 %v1134, 320
  %v1175 = vadd.s32 %v1134, 328
  %v1176 = vadd.s32 %v1134, 336
  %v1177 = vadd.s32 %v1134, 344
  %v1178 = vadd.s32 %v1134, 352
  %v1179 = vadd.s32 %v1134, 360
  %v1180 = vadd.s32 %v1134, 368
  %v1181 = vadd.s32 %v1134, 376
  %v1182 = vadd.s32 %v1134, 384
  %v1183 = vadd.s32 %v1134, 392
  %v1184 = vadd.s32 %v1134, 400
  %v1185 = vadd.s32 %v1134, 408
  %v1186 = vadd.s32 %v1134, 416
  %v1187 = vadd.s32 %v1134, 424
  %v1188 = vadd.s32 %v1134, 432
  %v1189 = vadd.s32 %v1134, 440
  %v1190 = vadd.s32 %v1134, 448
  %v1191 = vadd.s32 %v1134, 456
  %v1192 = vadd.s32 %v1134, 464
  %v1193 = vadd.s32 %v1134, 472
  %v1194 = vadd.s32 %v1134, 480
  %v1195 = vadd.s32 %v1134, 488
  %v1196 = vadd.s32 %v1134, 496
  %v1197 = vadd.s32 %v1134, 504
  %vm1198 = vcmp.lt.s32.totalorder %v1134, 0
  %v1199 = vsub.s32 0, %v1134
  %v1200 = vsel %vm1198, %v1199, %v1134
  %v1201 = vshrl.u32 %v1200, 4
  %v1202 = vand.u32 %v1200, 15
  %v1203 = vsub.s32 0, %v1202
  %v1204 = vsel %vm1198, %v1203, %v1202
  %vm1205 = vcmp.lt.s32.totalorder %v1135, 0
  %v1206 = vsub.s32 0, %v1135
  %v1207 = vsel %vm1205, %v1206, %v1135
  %v1208 = vshrl.u32 %v1207, 4
  %v1209 = vand.u32 %v1207, 15
  %v1210 = vsub.s32 0, %v1209
  %v1211 = vsel %vm1205, %v1210, %v1209
  %vm1212 = vcmp.lt.s32.totalorder %v1136, 0
  %v1213 = vsub.s32 0, %v1136
  %v1214 = vsel %vm1212, %v1213, %v1136
  %v1215 = vshrl.u32 %v1214, 4
  %v1216 = vand.u32 %v1214, 15
  %v1217 = vsub.s32 0, %v1216
  %v1218 = vsel %vm1212, %v1217, %v1216
  %vm1219 = vcmp.lt.s32.totalorder %v1137, 0
  %v1220 = vsub.s32 0, %v1137
  %v1221 = vsel %vm1219, %v1220, %v1137
  %v1222 = vshrl.u32 %v1221, 4
  %v1223 = vand.u32 %v1221, 15
  %v1224 = vsub.s32 0, %v1223
  %v1225 = vsel %vm1219, %v1224, %v1223
  %vm1226 = vcmp.lt.s32.totalorder %v1138, 0
  %v1227 = vsub.s32 0, %v1138
  %v1228 = vsel %vm1226, %v1227, %v1138
  %v1229 = vshrl.u32 %v1228, 4
  %v1230 = vand.u32 %v1228, 15
  %v1231 = vsub.s32 0, %v1230
  %v1232 = vsel %vm1226, %v1231, %v1230
  %vm1233 = vcmp.lt.s32.totalorder %v1139, 0
  %v1234 = vsub.s32 0, %v1139
  %v1235 = vsel %vm1233, %v1234, %v1139
  %v1236 = vshrl.u32 %v1235, 4
  %v1237 = vand.u32 %v1235, 15
  %v1238 = vsub.s32 0, %v1237
  %v1239 = vsel %vm1233, %v1238, %v1237
  %vm1240 = vcmp.lt.s32.totalorder %v1140, 0
  %v1241 = vsub.s32 0, %v1140
  %v1242 = vsel %vm1240, %v1241, %v1140
  %v1243 = vshrl.u32 %v1242, 4
  %v1244 = vand.u32 %v1242, 15
  %v1245 = vsub.s32 0, %v1244
  %v1246 = vsel %vm1240, %v1245, %v1244
  %vm1247 = vcmp.lt.s32.totalorder %v1141, 0
  %v1248 = vsub.s32 0, %v1141
  %v1249 = vsel %vm1247, %v1248, %v1141
  %v1250 = vshrl.u32 %v1249, 4
  %v1251 = vand.u32 %v1249, 15
  %v1252 = vsub.s32 0, %v1251
  %v1253 = vsel %vm1247, %v1252, %v1251
  %vm1254 = vcmp.lt.s32.totalorder %v1142, 0
  %v1255 = vsub.s32 0, %v1142
  %v1256 = vsel %vm1254, %v1255, %v1142
  %v1257 = vshrl.u32 %v1256, 4
  %v1258 = vand.u32 %v1256, 15
  %v1259 = vsub.s32 0, %v1258
  %v1260 = vsel %vm1254, %v1259, %v1258
  %vm1261 = vcmp.lt.s32.totalorder %v1143, 0
  %v1262 = vsub.s32 0, %v1143
  %v1263 = vsel %vm1261, %v1262, %v1143
  %v1264 = vshrl.u32 %v1263, 4
  %v1265 = vand.u32 %v1263, 15
  %v1266 = vsub.s32 0, %v1265
  %v1267 = vsel %vm1261, %v1266, %v1265
  %vm1268 = vcmp.lt.s32.totalorder %v1144, 0
  %v1269 = vsub.s32 0, %v1144
  %v1270 = vsel %vm1268, %v1269, %v1144
  %v1271 = vshrl.u32 %v1270, 4
  %v1272 = vand.u32 %v1270, 15
  %v1273 = vsub.s32 0, %v1272
  %v1274 = vsel %vm1268, %v1273, %v1272
  %vm1275 = vcmp.lt.s32.totalorder %v1145, 0
  %v1276 = vsub.s32 0, %v1145
  %v1277 = vsel %vm1275, %v1276, %v1145
  %v1278 = vshrl.u32 %v1277, 4
  %v1279 = vand.u32 %v1277, 15
  %v1280 = vsub.s32 0, %v1279
  %v1281 = vsel %vm1275, %v1280, %v1279
  %vm1282 = vcmp.lt.s32.totalorder %v1146, 0
  %v1283 = vsub.s32 0, %v1146
  %v1284 = vsel %vm1282, %v1283, %v1146
  %v1285 = vshrl.u32 %v1284, 4
  %v1286 = vand.u32 %v1284, 15
  %v1287 = vsub.s32 0, %v1286
  %v1288 = vsel %vm1282, %v1287, %v1286
  %vm1289 = vcmp.lt.s32.totalorder %v1147, 0
  %v1290 = vsub.s32 0, %v1147
  %v1291 = vsel %vm1289, %v1290, %v1147
  %v1292 = vshrl.u32 %v1291, 4
  %v1293 = vand.u32 %v1291, 15
  %v1294 = vsub.s32 0, %v1293
  %v1295 = vsel %vm1289, %v1294, %v1293
  %vm1296 = vcmp.lt.s32.totalorder %v1148, 0
  %v1297 = vsub.s32 0, %v1148
  %v1298 = vsel %vm1296, %v1297, %v1148
  %v1299 = vshrl.u32 %v1298, 4
  %v1300 = vand.u32 %v1298, 15
  %v1301 = vsub.s32 0, %v1300
  %v1302 = vsel %vm1296, %v1301, %v1300
  %vm1303 = vcmp.lt.s32.totalorder %v1149, 0
  %v1304 = vsub.s32 0, %v1149
  %v1305 = vsel %vm1303, %v1304, %v1149
  %v1306 = vshrl.u32 %v1305, 4
  %v1307 = vand.u32 %v1305, 15
  %v1308 = vsub.s32 0, %v1307
  %v1309 = vsel %vm1303, %v1308, %v1307
  %vm1310 = vcmp.lt.s32.totalorder %v1150, 0
  %v1311 = vsub.s32 0, %v1150
  %v1312 = vsel %vm1310, %v1311, %v1150
  %v1313 = vshrl.u32 %v1312, 4
  %v1314 = vand.u32 %v1312, 15
  %v1315 = vsub.s32 0, %v1314
  %v1316 = vsel %vm1310, %v1315, %v1314
  %vm1317 = vcmp.lt.s32.totalorder %v1151, 0
  %v1318 = vsub.s32 0, %v1151
  %v1319 = vsel %vm1317, %v1318, %v1151
  %v1320 = vshrl.u32 %v1319, 4
  %v1321 = vand.u32 %v1319, 15
  %v1322 = vsub.s32 0, %v1321
  %v1323 = vsel %vm1317, %v1322, %v1321
  %vm1324 = vcmp.lt.s32.totalorder %v1152, 0
  %v1325 = vsub.s32 0, %v1152
  %v1326 = vsel %vm1324, %v1325, %v1152
  %v1327 = vshrl.u32 %v1326, 4
  %v1328 = vand.u32 %v1326, 15
  %v1329 = vsub.s32 0, %v1328
  %v1330 = vsel %vm1324, %v1329, %v1328
  %vm1331 = vcmp.lt.s32.totalorder %v1153, 0
  %v1332 = vsub.s32 0, %v1153
  %v1333 = vsel %vm1331, %v1332, %v1153
  %v1334 = vshrl.u32 %v1333, 4
  %v1335 = vand.u32 %v1333, 15
  %v1336 = vsub.s32 0, %v1335
  %v1337 = vsel %vm1331, %v1336, %v1335
  %vm1338 = vcmp.lt.s32.totalorder %v1154, 0
  %v1339 = vsub.s32 0, %v1154
  %v1340 = vsel %vm1338, %v1339, %v1154
  %v1341 = vshrl.u32 %v1340, 4
  %v1342 = vand.u32 %v1340, 15
  %v1343 = vsub.s32 0, %v1342
  %v1344 = vsel %vm1338, %v1343, %v1342
  %vm1345 = vcmp.lt.s32.totalorder %v1155, 0
  %v1346 = vsub.s32 0, %v1155
  %v1347 = vsel %vm1345, %v1346, %v1155
  %v1348 = vshrl.u32 %v1347, 4
  %v1349 = vand.u32 %v1347, 15
  %v1350 = vsub.s32 0, %v1349
  %v1351 = vsel %vm1345, %v1350, %v1349
  %vm1352 = vcmp.lt.s32.totalorder %v1156, 0
  %v1353 = vsub.s32 0, %v1156
  %v1354 = vsel %vm1352, %v1353, %v1156
  %v1355 = vshrl.u32 %v1354, 4
  %v1356 = vand.u32 %v1354, 15
  %v1357 = vsub.s32 0, %v1356
  %v1358 = vsel %vm1352, %v1357, %v1356
  %vm1359 = vcmp.lt.s32.totalorder %v1157, 0
  %v1360 = vsub.s32 0, %v1157
  %v1361 = vsel %vm1359, %v1360, %v1157
  %v1362 = vshrl.u32 %v1361, 4
  %v1363 = vand.u32 %v1361, 15
  %v1364 = vsub.s32 0, %v1363
  %v1365 = vsel %vm1359, %v1364, %v1363
  %vm1366 = vcmp.lt.s32.totalorder %v1158, 0
  %v1367 = vsub.s32 0, %v1158
  %v1368 = vsel %vm1366, %v1367, %v1158
  %v1369 = vshrl.u32 %v1368, 4
  %v1370 = vand.u32 %v1368, 15
  %v1371 = vsub.s32 0, %v1370
  %v1372 = vsel %vm1366, %v1371, %v1370
  %vm1373 = vcmp.lt.s32.totalorder %v1159, 0
  %v1374 = vsub.s32 0, %v1159
  %v1375 = vsel %vm1373, %v1374, %v1159
  %v1376 = vshrl.u32 %v1375, 4
  %v1377 = vand.u32 %v1375, 15
  %v1378 = vsub.s32 0, %v1377
  %v1379 = vsel %vm1373, %v1378, %v1377
  %vm1380 = vcmp.lt.s32.totalorder %v1160, 0
  %v1381 = vsub.s32 0, %v1160
  %v1382 = vsel %vm1380, %v1381, %v1160
  %v1383 = vshrl.u32 %v1382, 4
  %v1384 = vand.u32 %v1382, 15
  %v1385 = vsub.s32 0, %v1384
  %v1386 = vsel %vm1380, %v1385, %v1384
  %vm1387 = vcmp.lt.s32.totalorder %v1161, 0
  %v1388 = vsub.s32 0, %v1161
  %v1389 = vsel %vm1387, %v1388, %v1161
  %v1390 = vshrl.u32 %v1389, 4
  %v1391 = vand.u32 %v1389, 15
  %v1392 = vsub.s32 0, %v1391
  %v1393 = vsel %vm1387, %v1392, %v1391
  %vm1394 = vcmp.lt.s32.totalorder %v1162, 0
  %v1395 = vsub.s32 0, %v1162
  %v1396 = vsel %vm1394, %v1395, %v1162
  %v1397 = vshrl.u32 %v1396, 4
  %v1398 = vand.u32 %v1396, 15
  %v1399 = vsub.s32 0, %v1398
  %v1400 = vsel %vm1394, %v1399, %v1398
  %vm1401 = vcmp.lt.s32.totalorder %v1163, 0
  %v1402 = vsub.s32 0, %v1163
  %v1403 = vsel %vm1401, %v1402, %v1163
  %v1404 = vshrl.u32 %v1403, 4
  %v1405 = vand.u32 %v1403, 15
  %v1406 = vsub.s32 0, %v1405
  %v1407 = vsel %vm1401, %v1406, %v1405
  %vm1408 = vcmp.lt.s32.totalorder %v1164, 0
  %v1409 = vsub.s32 0, %v1164
  %v1410 = vsel %vm1408, %v1409, %v1164
  %v1411 = vshrl.u32 %v1410, 4
  %v1412 = vand.u32 %v1410, 15
  %v1413 = vsub.s32 0, %v1412
  %v1414 = vsel %vm1408, %v1413, %v1412
  %vm1415 = vcmp.lt.s32.totalorder %v1165, 0
  %v1416 = vsub.s32 0, %v1165
  %v1417 = vsel %vm1415, %v1416, %v1165
  %v1418 = vshrl.u32 %v1417, 4
  %v1419 = vand.u32 %v1417, 15
  %v1420 = vsub.s32 0, %v1419
  %v1421 = vsel %vm1415, %v1420, %v1419
  %vm1422 = vcmp.lt.s32.totalorder %v1166, 0
  %v1423 = vsub.s32 0, %v1166
  %v1424 = vsel %vm1422, %v1423, %v1166
  %v1425 = vshrl.u32 %v1424, 4
  %v1426 = vand.u32 %v1424, 15
  %v1427 = vsub.s32 0, %v1426
  %v1428 = vsel %vm1422, %v1427, %v1426
  %vm1429 = vcmp.lt.s32.totalorder %v1167, 0
  %v1430 = vsub.s32 0, %v1167
  %v1431 = vsel %vm1429, %v1430, %v1167
  %v1432 = vshrl.u32 %v1431, 4
  %v1433 = vand.u32 %v1431, 15
  %v1434 = vsub.s32 0, %v1433
  %v1435 = vsel %vm1429, %v1434, %v1433
  %vm1436 = vcmp.lt.s32.totalorder %v1168, 0
  %v1437 = vsub.s32 0, %v1168
  %v1438 = vsel %vm1436, %v1437, %v1168
  %v1439 = vshrl.u32 %v1438, 4
  %v1440 = vand.u32 %v1438, 15
  %v1441 = vsub.s32 0, %v1440
  %v1442 = vsel %vm1436, %v1441, %v1440
  %vm1443 = vcmp.lt.s32.totalorder %v1169, 0
  %v1444 = vsub.s32 0, %v1169
  %v1445 = vsel %vm1443, %v1444, %v1169
  %v1446 = vshrl.u32 %v1445, 4
  %v1447 = vand.u32 %v1445, 15
  %v1448 = vsub.s32 0, %v1447
  %v1449 = vsel %vm1443, %v1448, %v1447
  %vm1450 = vcmp.lt.s32.totalorder %v1170, 0
  %v1451 = vsub.s32 0, %v1170
  %v1452 = vsel %vm1450, %v1451, %v1170
  %v1453 = vshrl.u32 %v1452, 4
  %v1454 = vand.u32 %v1452, 15
  %v1455 = vsub.s32 0, %v1454
  %v1456 = vsel %vm1450, %v1455, %v1454
  %vm1457 = vcmp.lt.s32.totalorder %v1171, 0
  %v1458 = vsub.s32 0, %v1171
  %v1459 = vsel %vm1457, %v1458, %v1171
  %v1460 = vshrl.u32 %v1459, 4
  %v1461 = vand.u32 %v1459, 15
  %v1462 = vsub.s32 0, %v1461
  %v1463 = vsel %vm1457, %v1462, %v1461
  %vm1464 = vcmp.lt.s32.totalorder %v1172, 0
  %v1465 = vsub.s32 0, %v1172
  %v1466 = vsel %vm1464, %v1465, %v1172
  %v1467 = vshrl.u32 %v1466, 4
  %v1468 = vand.u32 %v1466, 15
  %v1469 = vsub.s32 0, %v1468
  %v1470 = vsel %vm1464, %v1469, %v1468
  %vm1471 = vcmp.lt.s32.totalorder %v1173, 0
  %v1472 = vsub.s32 0, %v1173
  %v1473 = vsel %vm1471, %v1472, %v1173
  %v1474 = vshrl.u32 %v1473, 4
  %v1475 = vand.u32 %v1473, 15
  %v1476 = vsub.s32 0, %v1475
  %v1477 = vsel %vm1471, %v1476, %v1475
  %vm1478 = vcmp.lt.s32.totalorder %v1174, 0
  %v1479 = vsub.s32 0, %v1174
  %v1480 = vsel %vm1478, %v1479, %v1174
  %v1481 = vshrl.u32 %v1480, 4
  %v1482 = vand.u32 %v1480, 15
  %v1483 = vsub.s32 0, %v1482
  %v1484 = vsel %vm1478, %v1483, %v1482
  %vm1485 = vcmp.lt.s32.totalorder %v1175, 0
  %v1486 = vsub.s32 0, %v1175
  %v1487 = vsel %vm1485, %v1486, %v1175
  %v1488 = vshrl.u32 %v1487, 4
  %v1489 = vand.u32 %v1487, 15
  %v1490 = vsub.s32 0, %v1489
  %v1491 = vsel %vm1485, %v1490, %v1489
  %vm1492 = vcmp.lt.s32.totalorder %v1176, 0
  %v1493 = vsub.s32 0, %v1176
  %v1494 = vsel %vm1492, %v1493, %v1176
  %v1495 = vshrl.u32 %v1494, 4
  %v1496 = vand.u32 %v1494, 15
  %v1497 = vsub.s32 0, %v1496
  %v1498 = vsel %vm1492, %v1497, %v1496
  %vm1499 = vcmp.lt.s32.totalorder %v1177, 0
  %v1500 = vsub.s32 0, %v1177
  %v1501 = vsel %vm1499, %v1500, %v1177
  %v1502 = vshrl.u32 %v1501, 4
  %v1503 = vand.u32 %v1501, 15
  %v1504 = vsub.s32 0, %v1503
  %v1505 = vsel %vm1499, %v1504, %v1503
  %vm1506 = vcmp.lt.s32.totalorder %v1178, 0
  %v1507 = vsub.s32 0, %v1178
  %v1508 = vsel %vm1506, %v1507, %v1178
  %v1509 = vshrl.u32 %v1508, 4
  %v1510 = vand.u32 %v1508, 15
  %v1511 = vsub.s32 0, %v1510
  %v1512 = vsel %vm1506, %v1511, %v1510
  %vm1513 = vcmp.lt.s32.totalorder %v1179, 0
  %v1514 = vsub.s32 0, %v1179
  %v1515 = vsel %vm1513, %v1514, %v1179
  %v1516 = vshrl.u32 %v1515, 4
  %v1517 = vand.u32 %v1515, 15
  %v1518 = vsub.s32 0, %v1517
  %v1519 = vsel %vm1513, %v1518, %v1517
  %vm1520 = vcmp.lt.s32.totalorder %v1180, 0
  %v1521 = vsub.s32 0, %v1180
  %v1522 = vsel %vm1520, %v1521, %v1180
  %v1523 = vshrl.u32 %v1522, 4
  %v1524 = vand.u32 %v1522, 15
  %v1525 = vsub.s32 0, %v1524
  %v1526 = vsel %vm1520, %v1525, %v1524
  %vm1527 = vcmp.lt.s32.totalorder %v1181, 0
  %v1528 = vsub.s32 0, %v1181
  %v1529 = vsel %vm1527, %v1528, %v1181
  %v1530 = vshrl.u32 %v1529, 4
  %v1531 = vand.u32 %v1529, 15
  %v1532 = vsub.s32 0, %v1531
  %v1533 = vsel %vm1527, %v1532, %v1531
  %vm1534 = vcmp.lt.s32.totalorder %v1182, 0
  %v1535 = vsub.s32 0, %v1182
  %v1536 = vsel %vm1534, %v1535, %v1182
  %v1537 = vshrl.u32 %v1536, 4
  %v1538 = vand.u32 %v1536, 15
  %v1539 = vsub.s32 0, %v1538
  %v1540 = vsel %vm1534, %v1539, %v1538
  %vm1541 = vcmp.lt.s32.totalorder %v1183, 0
  %v1542 = vsub.s32 0, %v1183
  %v1543 = vsel %vm1541, %v1542, %v1183
  %v1544 = vshrl.u32 %v1543, 4
  %v1545 = vand.u32 %v1543, 15
  %v1546 = vsub.s32 0, %v1545
  %v1547 = vsel %vm1541, %v1546, %v1545
  %vm1548 = vcmp.lt.s32.totalorder %v1184, 0
  %v1549 = vsub.s32 0, %v1184
  %v1550 = vsel %vm1548, %v1549, %v1184
  %v1551 = vshrl.u32 %v1550, 4
  %v1552 = vand.u32 %v1550, 15
  %v1553 = vsub.s32 0, %v1552
  %v1554 = vsel %vm1548, %v1553, %v1552
  %vm1555 = vcmp.lt.s32.totalorder %v1185, 0
  %v1556 = vsub.s32 0, %v1185
  %v1557 = vsel %vm1555, %v1556, %v1185
  %v1558 = vshrl.u32 %v1557, 4
  %v1559 = vand.u32 %v1557, 15
  %v1560 = vsub.s32 0, %v1559
  %v1561 = vsel %vm1555, %v1560, %v1559
  %vm1562 = vcmp.lt.s32.totalorder %v1186, 0
  %v1563 = vsub.s32 0, %v1186
  %v1564 = vsel %vm1562, %v1563, %v1186
  %v1565 = vshrl.u32 %v1564, 4
  %v1566 = vand.u32 %v1564, 15
  %v1567 = vsub.s32 0, %v1566
  %v1568 = vsel %vm1562, %v1567, %v1566
  %vm1569 = vcmp.lt.s32.totalorder %v1187, 0
  %v1570 = vsub.s32 0, %v1187
  %v1571 = vsel %vm1569, %v1570, %v1187
  %v1572 = vshrl.u32 %v1571, 4
  %v1573 = vand.u32 %v1571, 15
  %v1574 = vsub.s32 0, %v1573
  %v1575 = vsel %vm1569, %v1574, %v1573
  %vm1576 = vcmp.lt.s32.totalorder %v1188, 0
  %v1577 = vsub.s32 0, %v1188
  %v1578 = vsel %vm1576, %v1577, %v1188
  %v1579 = vshrl.u32 %v1578, 4
  %v1580 = vand.u32 %v1578, 15
  %v1581 = vsub.s32 0, %v1580
  %v1582 = vsel %vm1576, %v1581, %v1580
  %vm1583 = vcmp.lt.s32.totalorder %v1189, 0
  %v1584 = vsub.s32 0, %v1189
  %v1585 = vsel %vm1583, %v1584, %v1189
  %v1586 = vshrl.u32 %v1585, 4
  %v1587 = vand.u32 %v1585, 15
  %v1588 = vsub.s32 0, %v1587
  %v1589 = vsel %vm1583, %v1588, %v1587
  %vm1590 = vcmp.lt.s32.totalorder %v1190, 0
  %v1591 = vsub.s32 0, %v1190
  %v1592 = vsel %vm1590, %v1591, %v1190
  %v1593 = vshrl.u32 %v1592, 4
  %v1594 = vand.u32 %v1592, 15
  %v1595 = vsub.s32 0, %v1594
  %v1596 = vsel %vm1590, %v1595, %v1594
  %vm1597 = vcmp.lt.s32.totalorder %v1191, 0
  %v1598 = vsub.s32 0, %v1191
  %v1599 = vsel %vm1597, %v1598, %v1191
  %v1600 = vshrl.u32 %v1599, 4
  %v1601 = vand.u32 %v1599, 15
  %v1602 = vsub.s32 0, %v1601
  %v1603 = vsel %vm1597, %v1602, %v1601
  %vm1604 = vcmp.lt.s32.totalorder %v1192, 0
  %v1605 = vsub.s32 0, %v1192
  %v1606 = vsel %vm1604, %v1605, %v1192
  %v1607 = vshrl.u32 %v1606, 4
  %v1608 = vand.u32 %v1606, 15
  %v1609 = vsub.s32 0, %v1608
  %v1610 = vsel %vm1604, %v1609, %v1608
  %vm1611 = vcmp.lt.s32.totalorder %v1193, 0
  %v1612 = vsub.s32 0, %v1193
  %v1613 = vsel %vm1611, %v1612, %v1193
  %v1614 = vshrl.u32 %v1613, 4
  %v1615 = vand.u32 %v1613, 15
  %v1616 = vsub.s32 0, %v1615
  %v1617 = vsel %vm1611, %v1616, %v1615
  %vm1618 = vcmp.lt.s32.totalorder %v1194, 0
  %v1619 = vsub.s32 0, %v1194
  %v1620 = vsel %vm1618, %v1619, %v1194
  %v1621 = vshrl.u32 %v1620, 4
  %v1622 = vand.u32 %v1620, 15
  %v1623 = vsub.s32 0, %v1622
  %v1624 = vsel %vm1618, %v1623, %v1622
  %vm1625 = vcmp.lt.s32.totalorder %v1195, 0
  %v1626 = vsub.s32 0, %v1195
  %v1627 = vsel %vm1625, %v1626, %v1195
  %v1628 = vshrl.u32 %v1627, 4
  %v1629 = vand.u32 %v1627, 15
  %v1630 = vsub.s32 0, %v1629
  %v1631 = vsel %vm1625, %v1630, %v1629
  %vm1632 = vcmp.lt.s32.totalorder %v1196, 0
  %v1633 = vsub.s32 0, %v1196
  %v1634 = vsel %vm1632, %v1633, %v1196
  %v1635 = vshrl.u32 %v1634, 4
  %v1636 = vand.u32 %v1634, 15
  %v1637 = vsub.s32 0, %v1636
  %v1638 = vsel %vm1632, %v1637, %v1636
  %vm1639 = vcmp.lt.s32.totalorder %v1197, 0
  %v1640 = vsub.s32 0, %v1197
  %v1641 = vsel %vm1639, %v1640, %v1197
  %v1642 = vshrl.u32 %v1641, 4
  %v1643 = vand.u32 %v1641, 15
  %v1644 = vsub.s32 0, %v1643
  %v1645 = vsel %vm1639, %v1644, %v1643
  %vm1646 = vcmp.ne.s32.totalorder %v1204, 0
  %vm1647 = vcmp.ne.s32.totalorder %v1211, 0
  %vm1648 = vcmp.ne.s32.totalorder %v1218, 0
  %vm1649 = vcmp.ne.s32.totalorder %v1225, 0
  %vm1650 = vcmp.ne.s32.totalorder %v1232, 0
  %vm1651 = vcmp.ne.s32.totalorder %v1239, 0
  %vm1652 = vcmp.ne.s32.totalorder %v1246, 0
  %vm1653 = vcmp.ne.s32.totalorder %v1253, 0
  %vm1654 = vcmp.ne.s32.totalorder %v1260, 0
  %vm1655 = vcmp.ne.s32.totalorder %v1267, 0
  %vm1656 = vcmp.ne.s32.totalorder %v1274, 0
  %vm1657 = vcmp.ne.s32.totalorder %v1281, 0
  %vm1658 = vcmp.ne.s32.totalorder %v1288, 0
  %vm1659 = vcmp.ne.s32.totalorder %v1295, 0
  %vm1660 = vcmp.ne.s32.totalorder %v1302, 0
  %vm1661 = vcmp.ne.s32.totalorder %v1309, 0
  %vm1662 = vcmp.ne.s32.totalorder %v1316, 0
  %vm1663 = vcmp.ne.s32.totalorder %v1323, 0
  %vm1664 = vcmp.ne.s32.totalorder %v1330, 0
  %vm1665 = vcmp.ne.s32.totalorder %v1337, 0
  %vm1666 = vcmp.ne.s32.totalorder %v1344, 0
  %vm1667 = vcmp.ne.s32.totalorder %v1351, 0
  %vm1668 = vcmp.ne.s32.totalorder %v1358, 0
  %vm1669 = vcmp.ne.s32.totalorder %v1365, 0
  %vm1670 = vcmp.ne.s32.totalorder %v1372, 0
  %vm1671 = vcmp.ne.s32.totalorder %v1379, 0
  %vm1672 = vcmp.ne.s32.totalorder %v1386, 0
  %vm1673 = vcmp.ne.s32.totalorder %v1393, 0
  %vm1674 = vcmp.ne.s32.totalorder %v1400, 0
  %vm1675 = vcmp.ne.s32.totalorder %v1407, 0
  %vm1676 = vcmp.ne.s32.totalorder %v1414, 0
  %vm1677 = vcmp.ne.s32.totalorder %v1421, 0
  %vm1678 = vcmp.ne.s32.totalorder %v1428, 0
  %vm1679 = vcmp.ne.s32.totalorder %v1435, 0
  %vm1680 = vcmp.ne.s32.totalorder %v1442, 0
  %vm1681 = vcmp.ne.s32.totalorder %v1449, 0
  %vm1682 = vcmp.ne.s32.totalorder %v1456, 0
  %vm1683 = vcmp.ne.s32.totalorder %v1463, 0
  %vm1684 = vcmp.ne.s32.totalorder %v1470, 0
  %vm1685 = vcmp.ne.s32.totalorder %v1477, 0
  %vm1686 = vcmp.ne.s32.totalorder %v1484, 0
  %vm1687 = vcmp.ne.s32.totalorder %v1491, 0
  %vm1688 = vcmp.ne.s32.totalorder %v1498, 0
  %vm1689 = vcmp.ne.s32.totalorder %v1505, 0
  %vm1690 = vcmp.ne.s32.totalorder %v1512, 0
  %vm1691 = vcmp.ne.s32.totalorder %v1519, 0
  %vm1692 = vcmp.ne.s32.totalorder %v1526, 0
  %vm1693 = vcmp.ne.s32.totalorder %v1533, 0
  %vm1694 = vcmp.ne.s32.totalorder %v1540, 0
  %vm1695 = vcmp.ne.s32.totalorder %v1547, 0
  %vm1696 = vcmp.ne.s32.totalorder %v1554, 0
  %vm1697 = vcmp.ne.s32.totalorder %v1561, 0
  %vm1698 = vcmp.ne.s32.totalorder %v1568, 0
  %vm1699 = vcmp.ne.s32.totalorder %v1575, 0
  %vm1700 = vcmp.ne.s32.totalorder %v1582, 0
  %vm1701 = vcmp.ne.s32.totalorder %v1589, 0
  %vm1702 = vcmp.ne.s32.totalorder %v1596, 0
  %vm1703 = vcmp.ne.s32.totalorder %v1603, 0
  %vm1704 = vcmp.ne.s32.totalorder %v1610, 0
  %vm1705 = vcmp.ne.s32.totalorder %v1617, 0
  %vm1706 = vcmp.ne.s32.totalorder %v1624, 0
  %vm1707 = vcmp.ne.s32.totalorder %v1631, 0
  %vm1708 = vcmp.ne.s32.totalorder %v1638, 0
  %vm1709 = vcmp.ne.s32.totalorder %v1645, 0
  %vm1710 = vcmp.lt.s32.totalorder %v1204, 0
  %vm1711 = vcmp.lt.s32.totalorder %v1211, 0
  %vm1712 = vcmp.lt.s32.totalorder %v1218, 0
  %vm1713 = vcmp.lt.s32.totalorder %v1225, 0
  %vm1714 = vcmp.lt.s32.totalorder %v1232, 0
  %vm1715 = vcmp.lt.s32.totalorder %v1239, 0
  %vm1716 = vcmp.lt.s32.totalorder %v1246, 0
  %vm1717 = vcmp.lt.s32.totalorder %v1253, 0
  %vm1718 = vcmp.lt.s32.totalorder %v1260, 0
  %vm1719 = vcmp.lt.s32.totalorder %v1267, 0
  %vm1720 = vcmp.lt.s32.totalorder %v1274, 0
  %vm1721 = vcmp.lt.s32.totalorder %v1281, 0
  %vm1722 = vcmp.lt.s32.totalorder %v1288, 0
  %vm1723 = vcmp.lt.s32.totalorder %v1295, 0
  %vm1724 = vcmp.lt.s32.totalorder %v1302, 0
  %vm1725 = vcmp.lt.s32.totalorder %v1309, 0
  %vm1726 = vcmp.lt.s32.totalorder %v1316, 0
  %vm1727 = vcmp.lt.s32.totalorder %v1323, 0
  %vm1728 = vcmp.lt.s32.totalorder %v1330, 0
  %vm1729 = vcmp.lt.s32.totalorder %v1337, 0
  %vm1730 = vcmp.lt.s32.totalorder %v1344, 0
  %vm1731 = vcmp.lt.s32.totalorder %v1351, 0
  %vm1732 = vcmp.lt.s32.totalorder %v1358, 0
  %vm1733 = vcmp.lt.s32.totalorder %v1365, 0
  %vm1734 = vcmp.lt.s32.totalorder %v1372, 0
  %vm1735 = vcmp.lt.s32.totalorder %v1379, 0
  %vm1736 = vcmp.lt.s32.totalorder %v1386, 0
  %vm1737 = vcmp.lt.s32.totalorder %v1393, 0
  %vm1738 = vcmp.lt.s32.totalorder %v1400, 0
  %vm1739 = vcmp.lt.s32.totalorder %v1407, 0
  %vm1740 = vcmp.lt.s32.totalorder %v1414, 0
  %vm1741 = vcmp.lt.s32.totalorder %v1421, 0
  %vm1742 = vcmp.lt.s32.totalorder %v1428, 0
  %vm1743 = vcmp.lt.s32.totalorder %v1435, 0
  %vm1744 = vcmp.lt.s32.totalorder %v1442, 0
  %vm1745 = vcmp.lt.s32.totalorder %v1449, 0
  %vm1746 = vcmp.lt.s32.totalorder %v1456, 0
  %vm1747 = vcmp.lt.s32.totalorder %v1463, 0
  %vm1748 = vcmp.lt.s32.totalorder %v1470, 0
  %vm1749 = vcmp.lt.s32.totalorder %v1477, 0
  %vm1750 = vcmp.lt.s32.totalorder %v1484, 0
  %vm1751 = vcmp.lt.s32.totalorder %v1491, 0
  %vm1752 = vcmp.lt.s32.totalorder %v1498, 0
  %vm1753 = vcmp.lt.s32.totalorder %v1505, 0
  %vm1754 = vcmp.lt.s32.totalorder %v1512, 0
  %vm1755 = vcmp.lt.s32.totalorder %v1519, 0
  %vm1756 = vcmp.lt.s32.totalorder %v1526, 0
  %vm1757 = vcmp.lt.s32.totalorder %v1533, 0
  %vm1758 = vcmp.lt.s32.totalorder %v1540, 0
  %vm1759 = vcmp.lt.s32.totalorder %v1547, 0
  %vm1760 = vcmp.lt.s32.totalorder %v1554, 0
  %vm1761 = vcmp.lt.s32.totalorder %v1561, 0
  %vm1762 = vcmp.lt.s32.totalorder %v1568, 0
  %vm1763 = vcmp.lt.s32.totalorder %v1575, 0
  %vm1764 = vcmp.lt.s32.totalorder %v1582, 0
  %vm1765 = vcmp.lt.s32.totalorder %v1589, 0
  %vm1766 = vcmp.lt.s32.totalorder %v1596, 0
  %vm1767 = vcmp.lt.s32.totalorder %v1603, 0
  %vm1768 = vcmp.lt.s32.totalorder %v1610, 0
  %vm1769 = vcmp.lt.s32.totalorder %v1617, 0
  %vm1770 = vcmp.lt.s32.totalorder %v1624, 0
  %vm1771 = vcmp.lt.s32.totalorder %v1631, 0
  %vm1772 = vcmp.lt.s32.totalorder %v1638, 0
  %vm1773 = vcmp.lt.s32.totalorder %v1645, 0
  %vm1774 = vmand %vm1710, %vm1646
  %vm1775 = vmand %vm1711, %vm1647
  %vm1776 = vmand %vm1712, %vm1648
  %vm1777 = vmand %vm1713, %vm1649
  %vm1778 = vmand %vm1714, %vm1650
  %vm1779 = vmand %vm1715, %vm1651
  %vm1780 = vmand %vm1716, %vm1652
  %vm1781 = vmand %vm1717, %vm1653
  %vm1782 = vmand %vm1718, %vm1654
  %vm1783 = vmand %vm1719, %vm1655
  %vm1784 = vmand %vm1720, %vm1656
  %vm1785 = vmand %vm1721, %vm1657
  %vm1786 = vmand %vm1722, %vm1658
  %vm1787 = vmand %vm1723, %vm1659
  %vm1788 = vmand %vm1724, %vm1660
  %vm1789 = vmand %vm1725, %vm1661
  %vm1790 = vmand %vm1726, %vm1662
  %vm1791 = vmand %vm1727, %vm1663
  %vm1792 = vmand %vm1728, %vm1664
  %vm1793 = vmand %vm1729, %vm1665
  %vm1794 = vmand %vm1730, %vm1666
  %vm1795 = vmand %vm1731, %vm1667
  %vm1796 = vmand %vm1732, %vm1668
  %vm1797 = vmand %vm1733, %vm1669
  %vm1798 = vmand %vm1734, %vm1670
  %vm1799 = vmand %vm1735, %vm1671
  %vm1800 = vmand %vm1736, %vm1672
  %vm1801 = vmand %vm1737, %vm1673
  %vm1802 = vmand %vm1738, %vm1674
  %vm1803 = vmand %vm1739, %vm1675
  %vm1804 = vmand %vm1740, %vm1676
  %vm1805 = vmand %vm1741, %vm1677
  %vm1806 = vmand %vm1742, %vm1678
  %vm1807 = vmand %vm1743, %vm1679
  %vm1808 = vmand %vm1744, %vm1680
  %vm1809 = vmand %vm1745, %vm1681
  %vm1810 = vmand %vm1746, %vm1682
  %vm1811 = vmand %vm1747, %vm1683
  %vm1812 = vmand %vm1748, %vm1684
  %vm1813 = vmand %vm1749, %vm1685
  %vm1814 = vmand %vm1750, %vm1686
  %vm1815 = vmand %vm1751, %vm1687
  %vm1816 = vmand %vm1752, %vm1688
  %vm1817 = vmand %vm1753, %vm1689
  %vm1818 = vmand %vm1754, %vm1690
  %vm1819 = vmand %vm1755, %vm1691
  %vm1820 = vmand %vm1756, %vm1692
  %vm1821 = vmand %vm1757, %vm1693
  %vm1822 = vmand %vm1758, %vm1694
  %vm1823 = vmand %vm1759, %vm1695
  %vm1824 = vmand %vm1760, %vm1696
  %vm1825 = vmand %vm1761, %vm1697
  %vm1826 = vmand %vm1762, %vm1698
  %vm1827 = vmand %vm1763, %vm1699
  %vm1828 = vmand %vm1764, %vm1700
  %vm1829 = vmand %vm1765, %vm1701
  %vm1830 = vmand %vm1766, %vm1702
  %vm1831 = vmand %vm1767, %vm1703
  %vm1832 = vmand %vm1768, %vm1704
  %vm1833 = vmand %vm1769, %vm1705
  %vm1834 = vmand %vm1770, %vm1706
  %vm1835 = vmand %vm1771, %vm1707
  %vm1836 = vmand %vm1772, %vm1708
  %vm1837 = vmand %vm1773, %vm1709
  %v1838 = vadd.s32 %v1204, 16
  %v1839 = vadd.s32 %v1211, 16
  %v1840 = vadd.s32 %v1218, 16
  %v1841 = vadd.s32 %v1225, 16
  %v1842 = vadd.s32 %v1232, 16
  %v1843 = vadd.s32 %v1239, 16
  %v1844 = vadd.s32 %v1246, 16
  %v1845 = vadd.s32 %v1253, 16
  %v1846 = vadd.s32 %v1260, 16
  %v1847 = vadd.s32 %v1267, 16
  %v1848 = vadd.s32 %v1274, 16
  %v1849 = vadd.s32 %v1281, 16
  %v1850 = vadd.s32 %v1288, 16
  %v1851 = vadd.s32 %v1295, 16
  %v1852 = vadd.s32 %v1302, 16
  %v1853 = vadd.s32 %v1309, 16
  %v1854 = vadd.s32 %v1316, 16
  %v1855 = vadd.s32 %v1323, 16
  %v1856 = vadd.s32 %v1330, 16
  %v1857 = vadd.s32 %v1337, 16
  %v1858 = vadd.s32 %v1344, 16
  %v1859 = vadd.s32 %v1351, 16
  %v1860 = vadd.s32 %v1358, 16
  %v1861 = vadd.s32 %v1365, 16
  %v1862 = vadd.s32 %v1372, 16
  %v1863 = vadd.s32 %v1379, 16
  %v1864 = vadd.s32 %v1386, 16
  %v1865 = vadd.s32 %v1393, 16
  %v1866 = vadd.s32 %v1400, 16
  %v1867 = vadd.s32 %v1407, 16
  %v1868 = vadd.s32 %v1414, 16
  %v1869 = vadd.s32 %v1421, 16
  %v1870 = vadd.s32 %v1428, 16
  %v1871 = vadd.s32 %v1435, 16
  %v1872 = vadd.s32 %v1442, 16
  %v1873 = vadd.s32 %v1449, 16
  %v1874 = vadd.s32 %v1456, 16
  %v1875 = vadd.s32 %v1463, 16
  %v1876 = vadd.s32 %v1470, 16
  %v1877 = vadd.s32 %v1477, 16
  %v1878 = vadd.s32 %v1484, 16
  %v1879 = vadd.s32 %v1491, 16
  %v1880 = vadd.s32 %v1498, 16
  %v1881 = vadd.s32 %v1505, 16
  %v1882 = vadd.s32 %v1512, 16
  %v1883 = vadd.s32 %v1519, 16
  %v1884 = vadd.s32 %v1526, 16
  %v1885 = vadd.s32 %v1533, 16
  %v1886 = vadd.s32 %v1540, 16
  %v1887 = vadd.s32 %v1547, 16
  %v1888 = vadd.s32 %v1554, 16
  %v1889 = vadd.s32 %v1561, 16
  %v1890 = vadd.s32 %v1568, 16
  %v1891 = vadd.s32 %v1575, 16
  %v1892 = vadd.s32 %v1582, 16
  %v1893 = vadd.s32 %v1589, 16
  %v1894 = vadd.s32 %v1596, 16
  %v1895 = vadd.s32 %v1603, 16
  %v1896 = vadd.s32 %v1610, 16
  %v1897 = vadd.s32 %v1617, 16
  %v1898 = vadd.s32 %v1624, 16
  %v1899 = vadd.s32 %v1631, 16
  %v1900 = vadd.s32 %v1638, 16
  %v1901 = vadd.s32 %v1645, 16
  %v1902 = vsel %vm1774, %v1838, %v1204
  %v1903 = vsel %vm1775, %v1839, %v1211
  %v1904 = vsel %vm1776, %v1840, %v1218
  %v1905 = vsel %vm1777, %v1841, %v1225
  %v1906 = vsel %vm1778, %v1842, %v1232
  %v1907 = vsel %vm1779, %v1843, %v1239
  %v1908 = vsel %vm1780, %v1844, %v1246
  %v1909 = vsel %vm1781, %v1845, %v1253
  %v1910 = vsel %vm1782, %v1846, %v1260
  %v1911 = vsel %vm1783, %v1847, %v1267
  %v1912 = vsel %vm1784, %v1848, %v1274
  %v1913 = vsel %vm1785, %v1849, %v1281
  %v1914 = vsel %vm1786, %v1850, %v1288
  %v1915 = vsel %vm1787, %v1851, %v1295
  %v1916 = vsel %vm1788, %v1852, %v1302
  %v1917 = vsel %vm1789, %v1853, %v1309
  %v1918 = vsel %vm1790, %v1854, %v1316
  %v1919 = vsel %vm1791, %v1855, %v1323
  %v1920 = vsel %vm1792, %v1856, %v1330
  %v1921 = vsel %vm1793, %v1857, %v1337
  %v1922 = vsel %vm1794, %v1858, %v1344
  %v1923 = vsel %vm1795, %v1859, %v1351
  %v1924 = vsel %vm1796, %v1860, %v1358
  %v1925 = vsel %vm1797, %v1861, %v1365
  %v1926 = vsel %vm1798, %v1862, %v1372
  %v1927 = vsel %vm1799, %v1863, %v1379
  %v1928 = vsel %vm1800, %v1864, %v1386
  %v1929 = vsel %vm1801, %v1865, %v1393
  %v1930 = vsel %vm1802, %v1866, %v1400
  %v1931 = vsel %vm1803, %v1867, %v1407
  %v1932 = vsel %vm1804, %v1868, %v1414
  %v1933 = vsel %vm1805, %v1869, %v1421
  %v1934 = vsel %vm1806, %v1870, %v1428
  %v1935 = vsel %vm1807, %v1871, %v1435
  %v1936 = vsel %vm1808, %v1872, %v1442
  %v1937 = vsel %vm1809, %v1873, %v1449
  %v1938 = vsel %vm1810, %v1874, %v1456
  %v1939 = vsel %vm1811, %v1875, %v1463
  %v1940 = vsel %vm1812, %v1876, %v1470
  %v1941 = vsel %vm1813, %v1877, %v1477
  %v1942 = vsel %vm1814, %v1878, %v1484
  %v1943 = vsel %vm1815, %v1879, %v1491
  %v1944 = vsel %vm1816, %v1880, %v1498
  %v1945 = vsel %vm1817, %v1881, %v1505
  %v1946 = vsel %vm1818, %v1882, %v1512
  %v1947 = vsel %vm1819, %v1883, %v1519
  %v1948 = vsel %vm1820, %v1884, %v1526
  %v1949 = vsel %vm1821, %v1885, %v1533
  %v1950 = vsel %vm1822, %v1886, %v1540
  %v1951 = vsel %vm1823, %v1887, %v1547
  %v1952 = vsel %vm1824, %v1888, %v1554
  %v1953 = vsel %vm1825, %v1889, %v1561
  %v1954 = vsel %vm1826, %v1890, %v1568
  %v1955 = vsel %vm1827, %v1891, %v1575
  %v1956 = vsel %vm1828, %v1892, %v1582
  %v1957 = vsel %vm1829, %v1893, %v1589
  %v1958 = vsel %vm1830, %v1894, %v1596
  %v1959 = vsel %vm1831, %v1895, %v1603
  %v1960 = vsel %vm1832, %v1896, %v1610
  %v1961 = vsel %vm1833, %v1897, %v1617
  %v1962 = vsel %vm1834, %v1898, %v1624
  %v1963 = vsel %vm1835, %v1899, %v1631
  %v1964 = vsel %vm1836, %v1900, %v1638
  %v1965 = vsel %vm1837, %v1901, %v1645
  %vm1966 = vcmp.lt.s32.totalorder %v1134, 0
  %v1967 = vsub.s32 0, %v1134
  %v1968 = vsel %vm1966, %v1967, %v1134
  %v1969 = vshrl.u32 %v1968, 8
  %v1970 = vand.u32 %v1968, 255
  %v1971 = vsub.s32 0, %v1970
  %v1972 = vsel %vm1966, %v1971, %v1970
  %vm1973 = vcmp.lt.s32.totalorder %v1135, 0
  %v1974 = vsub.s32 0, %v1135
  %v1975 = vsel %vm1973, %v1974, %v1135
  %v1976 = vshrl.u32 %v1975, 8
  %v1977 = vand.u32 %v1975, 255
  %v1978 = vsub.s32 0, %v1977
  %v1979 = vsel %vm1973, %v1978, %v1977
  %vm1980 = vcmp.lt.s32.totalorder %v1136, 0
  %v1981 = vsub.s32 0, %v1136
  %v1982 = vsel %vm1980, %v1981, %v1136
  %v1983 = vshrl.u32 %v1982, 8
  %v1984 = vand.u32 %v1982, 255
  %v1985 = vsub.s32 0, %v1984
  %v1986 = vsel %vm1980, %v1985, %v1984
  %vm1987 = vcmp.lt.s32.totalorder %v1137, 0
  %v1988 = vsub.s32 0, %v1137
  %v1989 = vsel %vm1987, %v1988, %v1137
  %v1990 = vshrl.u32 %v1989, 8
  %v1991 = vand.u32 %v1989, 255
  %v1992 = vsub.s32 0, %v1991
  %v1993 = vsel %vm1987, %v1992, %v1991
  %vm1994 = vcmp.lt.s32.totalorder %v1138, 0
  %v1995 = vsub.s32 0, %v1138
  %v1996 = vsel %vm1994, %v1995, %v1138
  %v1997 = vshrl.u32 %v1996, 8
  %v1998 = vand.u32 %v1996, 255
  %v1999 = vsub.s32 0, %v1998
  %v2000 = vsel %vm1994, %v1999, %v1998
  %vm2001 = vcmp.lt.s32.totalorder %v1139, 0
  %v2002 = vsub.s32 0, %v1139
  %v2003 = vsel %vm2001, %v2002, %v1139
  %v2004 = vshrl.u32 %v2003, 8
  %v2005 = vand.u32 %v2003, 255
  %v2006 = vsub.s32 0, %v2005
  %v2007 = vsel %vm2001, %v2006, %v2005
  %vm2008 = vcmp.lt.s32.totalorder %v1140, 0
  %v2009 = vsub.s32 0, %v1140
  %v2010 = vsel %vm2008, %v2009, %v1140
  %v2011 = vshrl.u32 %v2010, 8
  %v2012 = vand.u32 %v2010, 255
  %v2013 = vsub.s32 0, %v2012
  %v2014 = vsel %vm2008, %v2013, %v2012
  %vm2015 = vcmp.lt.s32.totalorder %v1141, 0
  %v2016 = vsub.s32 0, %v1141
  %v2017 = vsel %vm2015, %v2016, %v1141
  %v2018 = vshrl.u32 %v2017, 8
  %v2019 = vand.u32 %v2017, 255
  %v2020 = vsub.s32 0, %v2019
  %v2021 = vsel %vm2015, %v2020, %v2019
  %vm2022 = vcmp.lt.s32.totalorder %v1142, 0
  %v2023 = vsub.s32 0, %v1142
  %v2024 = vsel %vm2022, %v2023, %v1142
  %v2025 = vshrl.u32 %v2024, 8
  %v2026 = vand.u32 %v2024, 255
  %v2027 = vsub.s32 0, %v2026
  %v2028 = vsel %vm2022, %v2027, %v2026
  %vm2029 = vcmp.lt.s32.totalorder %v1143, 0
  %v2030 = vsub.s32 0, %v1143
  %v2031 = vsel %vm2029, %v2030, %v1143
  %v2032 = vshrl.u32 %v2031, 8
  %v2033 = vand.u32 %v2031, 255
  %v2034 = vsub.s32 0, %v2033
  %v2035 = vsel %vm2029, %v2034, %v2033
  %vm2036 = vcmp.lt.s32.totalorder %v1144, 0
  %v2037 = vsub.s32 0, %v1144
  %v2038 = vsel %vm2036, %v2037, %v1144
  %v2039 = vshrl.u32 %v2038, 8
  %v2040 = vand.u32 %v2038, 255
  %v2041 = vsub.s32 0, %v2040
  %v2042 = vsel %vm2036, %v2041, %v2040
  %vm2043 = vcmp.lt.s32.totalorder %v1145, 0
  %v2044 = vsub.s32 0, %v1145
  %v2045 = vsel %vm2043, %v2044, %v1145
  %v2046 = vshrl.u32 %v2045, 8
  %v2047 = vand.u32 %v2045, 255
  %v2048 = vsub.s32 0, %v2047
  %v2049 = vsel %vm2043, %v2048, %v2047
  %vm2050 = vcmp.lt.s32.totalorder %v1146, 0
  %v2051 = vsub.s32 0, %v1146
  %v2052 = vsel %vm2050, %v2051, %v1146
  %v2053 = vshrl.u32 %v2052, 8
  %v2054 = vand.u32 %v2052, 255
  %v2055 = vsub.s32 0, %v2054
  %v2056 = vsel %vm2050, %v2055, %v2054
  %vm2057 = vcmp.lt.s32.totalorder %v1147, 0
  %v2058 = vsub.s32 0, %v1147
  %v2059 = vsel %vm2057, %v2058, %v1147
  %v2060 = vshrl.u32 %v2059, 8
  %v2061 = vand.u32 %v2059, 255
  %v2062 = vsub.s32 0, %v2061
  %v2063 = vsel %vm2057, %v2062, %v2061
  %vm2064 = vcmp.lt.s32.totalorder %v1148, 0
  %v2065 = vsub.s32 0, %v1148
  %v2066 = vsel %vm2064, %v2065, %v1148
  %v2067 = vshrl.u32 %v2066, 8
  %v2068 = vand.u32 %v2066, 255
  %v2069 = vsub.s32 0, %v2068
  %v2070 = vsel %vm2064, %v2069, %v2068
  %vm2071 = vcmp.lt.s32.totalorder %v1149, 0
  %v2072 = vsub.s32 0, %v1149
  %v2073 = vsel %vm2071, %v2072, %v1149
  %v2074 = vshrl.u32 %v2073, 8
  %v2075 = vand.u32 %v2073, 255
  %v2076 = vsub.s32 0, %v2075
  %v2077 = vsel %vm2071, %v2076, %v2075
  %vm2078 = vcmp.lt.s32.totalorder %v1150, 0
  %v2079 = vsub.s32 0, %v1150
  %v2080 = vsel %vm2078, %v2079, %v1150
  %v2081 = vshrl.u32 %v2080, 8
  %v2082 = vand.u32 %v2080, 255
  %v2083 = vsub.s32 0, %v2082
  %v2084 = vsel %vm2078, %v2083, %v2082
  %vm2085 = vcmp.lt.s32.totalorder %v1151, 0
  %v2086 = vsub.s32 0, %v1151
  %v2087 = vsel %vm2085, %v2086, %v1151
  %v2088 = vshrl.u32 %v2087, 8
  %v2089 = vand.u32 %v2087, 255
  %v2090 = vsub.s32 0, %v2089
  %v2091 = vsel %vm2085, %v2090, %v2089
  %vm2092 = vcmp.lt.s32.totalorder %v1152, 0
  %v2093 = vsub.s32 0, %v1152
  %v2094 = vsel %vm2092, %v2093, %v1152
  %v2095 = vshrl.u32 %v2094, 8
  %v2096 = vand.u32 %v2094, 255
  %v2097 = vsub.s32 0, %v2096
  %v2098 = vsel %vm2092, %v2097, %v2096
  %vm2099 = vcmp.lt.s32.totalorder %v1153, 0
  %v2100 = vsub.s32 0, %v1153
  %v2101 = vsel %vm2099, %v2100, %v1153
  %v2102 = vshrl.u32 %v2101, 8
  %v2103 = vand.u32 %v2101, 255
  %v2104 = vsub.s32 0, %v2103
  %v2105 = vsel %vm2099, %v2104, %v2103
  %vm2106 = vcmp.lt.s32.totalorder %v1154, 0
  %v2107 = vsub.s32 0, %v1154
  %v2108 = vsel %vm2106, %v2107, %v1154
  %v2109 = vshrl.u32 %v2108, 8
  %v2110 = vand.u32 %v2108, 255
  %v2111 = vsub.s32 0, %v2110
  %v2112 = vsel %vm2106, %v2111, %v2110
  %vm2113 = vcmp.lt.s32.totalorder %v1155, 0
  %v2114 = vsub.s32 0, %v1155
  %v2115 = vsel %vm2113, %v2114, %v1155
  %v2116 = vshrl.u32 %v2115, 8
  %v2117 = vand.u32 %v2115, 255
  %v2118 = vsub.s32 0, %v2117
  %v2119 = vsel %vm2113, %v2118, %v2117
  %vm2120 = vcmp.lt.s32.totalorder %v1156, 0
  %v2121 = vsub.s32 0, %v1156
  %v2122 = vsel %vm2120, %v2121, %v1156
  %v2123 = vshrl.u32 %v2122, 8
  %v2124 = vand.u32 %v2122, 255
  %v2125 = vsub.s32 0, %v2124
  %v2126 = vsel %vm2120, %v2125, %v2124
  %vm2127 = vcmp.lt.s32.totalorder %v1157, 0
  %v2128 = vsub.s32 0, %v1157
  %v2129 = vsel %vm2127, %v2128, %v1157
  %v2130 = vshrl.u32 %v2129, 8
  %v2131 = vand.u32 %v2129, 255
  %v2132 = vsub.s32 0, %v2131
  %v2133 = vsel %vm2127, %v2132, %v2131
  %vm2134 = vcmp.lt.s32.totalorder %v1158, 0
  %v2135 = vsub.s32 0, %v1158
  %v2136 = vsel %vm2134, %v2135, %v1158
  %v2137 = vshrl.u32 %v2136, 8
  %v2138 = vand.u32 %v2136, 255
  %v2139 = vsub.s32 0, %v2138
  %v2140 = vsel %vm2134, %v2139, %v2138
  %vm2141 = vcmp.lt.s32.totalorder %v1159, 0
  %v2142 = vsub.s32 0, %v1159
  %v2143 = vsel %vm2141, %v2142, %v1159
  %v2144 = vshrl.u32 %v2143, 8
  %v2145 = vand.u32 %v2143, 255
  %v2146 = vsub.s32 0, %v2145
  %v2147 = vsel %vm2141, %v2146, %v2145
  %vm2148 = vcmp.lt.s32.totalorder %v1160, 0
  %v2149 = vsub.s32 0, %v1160
  %v2150 = vsel %vm2148, %v2149, %v1160
  %v2151 = vshrl.u32 %v2150, 8
  %v2152 = vand.u32 %v2150, 255
  %v2153 = vsub.s32 0, %v2152
  %v2154 = vsel %vm2148, %v2153, %v2152
  %vm2155 = vcmp.lt.s32.totalorder %v1161, 0
  %v2156 = vsub.s32 0, %v1161
  %v2157 = vsel %vm2155, %v2156, %v1161
  %v2158 = vshrl.u32 %v2157, 8
  %v2159 = vand.u32 %v2157, 255
  %v2160 = vsub.s32 0, %v2159
  %v2161 = vsel %vm2155, %v2160, %v2159
  %vm2162 = vcmp.lt.s32.totalorder %v1162, 0
  %v2163 = vsub.s32 0, %v1162
  %v2164 = vsel %vm2162, %v2163, %v1162
  %v2165 = vshrl.u32 %v2164, 8
  %v2166 = vand.u32 %v2164, 255
  %v2167 = vsub.s32 0, %v2166
  %v2168 = vsel %vm2162, %v2167, %v2166
  %vm2169 = vcmp.lt.s32.totalorder %v1163, 0
  %v2170 = vsub.s32 0, %v1163
  %v2171 = vsel %vm2169, %v2170, %v1163
  %v2172 = vshrl.u32 %v2171, 8
  %v2173 = vand.u32 %v2171, 255
  %v2174 = vsub.s32 0, %v2173
  %v2175 = vsel %vm2169, %v2174, %v2173
  %vm2176 = vcmp.lt.s32.totalorder %v1164, 0
  %v2177 = vsub.s32 0, %v1164
  %v2178 = vsel %vm2176, %v2177, %v1164
  %v2179 = vshrl.u32 %v2178, 8
  %v2180 = vand.u32 %v2178, 255
  %v2181 = vsub.s32 0, %v2180
  %v2182 = vsel %vm2176, %v2181, %v2180
  %vm2183 = vcmp.lt.s32.totalorder %v1165, 0
  %v2184 = vsub.s32 0, %v1165
  %v2185 = vsel %vm2183, %v2184, %v1165
  %v2186 = vshrl.u32 %v2185, 8
  %v2187 = vand.u32 %v2185, 255
  %v2188 = vsub.s32 0, %v2187
  %v2189 = vsel %vm2183, %v2188, %v2187
  %vm2190 = vcmp.lt.s32.totalorder %v1166, 0
  %v2191 = vsub.s32 0, %v1166
  %v2192 = vsel %vm2190, %v2191, %v1166
  %v2193 = vshrl.u32 %v2192, 8
  %v2194 = vand.u32 %v2192, 255
  %v2195 = vsub.s32 0, %v2194
  %v2196 = vsel %vm2190, %v2195, %v2194
  %vm2197 = vcmp.lt.s32.totalorder %v1167, 0
  %v2198 = vsub.s32 0, %v1167
  %v2199 = vsel %vm2197, %v2198, %v1167
  %v2200 = vshrl.u32 %v2199, 8
  %v2201 = vand.u32 %v2199, 255
  %v2202 = vsub.s32 0, %v2201
  %v2203 = vsel %vm2197, %v2202, %v2201
  %vm2204 = vcmp.lt.s32.totalorder %v1168, 0
  %v2205 = vsub.s32 0, %v1168
  %v2206 = vsel %vm2204, %v2205, %v1168
  %v2207 = vshrl.u32 %v2206, 8
  %v2208 = vand.u32 %v2206, 255
  %v2209 = vsub.s32 0, %v2208
  %v2210 = vsel %vm2204, %v2209, %v2208
  %vm2211 = vcmp.lt.s32.totalorder %v1169, 0
  %v2212 = vsub.s32 0, %v1169
  %v2213 = vsel %vm2211, %v2212, %v1169
  %v2214 = vshrl.u32 %v2213, 8
  %v2215 = vand.u32 %v2213, 255
  %v2216 = vsub.s32 0, %v2215
  %v2217 = vsel %vm2211, %v2216, %v2215
  %vm2218 = vcmp.lt.s32.totalorder %v1170, 0
  %v2219 = vsub.s32 0, %v1170
  %v2220 = vsel %vm2218, %v2219, %v1170
  %v2221 = vshrl.u32 %v2220, 8
  %v2222 = vand.u32 %v2220, 255
  %v2223 = vsub.s32 0, %v2222
  %v2224 = vsel %vm2218, %v2223, %v2222
  %vm2225 = vcmp.lt.s32.totalorder %v1171, 0
  %v2226 = vsub.s32 0, %v1171
  %v2227 = vsel %vm2225, %v2226, %v1171
  %v2228 = vshrl.u32 %v2227, 8
  %v2229 = vand.u32 %v2227, 255
  %v2230 = vsub.s32 0, %v2229
  %v2231 = vsel %vm2225, %v2230, %v2229
  %vm2232 = vcmp.lt.s32.totalorder %v1172, 0
  %v2233 = vsub.s32 0, %v1172
  %v2234 = vsel %vm2232, %v2233, %v1172
  %v2235 = vshrl.u32 %v2234, 8
  %v2236 = vand.u32 %v2234, 255
  %v2237 = vsub.s32 0, %v2236
  %v2238 = vsel %vm2232, %v2237, %v2236
  %vm2239 = vcmp.lt.s32.totalorder %v1173, 0
  %v2240 = vsub.s32 0, %v1173
  %v2241 = vsel %vm2239, %v2240, %v1173
  %v2242 = vshrl.u32 %v2241, 8
  %v2243 = vand.u32 %v2241, 255
  %v2244 = vsub.s32 0, %v2243
  %v2245 = vsel %vm2239, %v2244, %v2243
  %vm2246 = vcmp.lt.s32.totalorder %v1174, 0
  %v2247 = vsub.s32 0, %v1174
  %v2248 = vsel %vm2246, %v2247, %v1174
  %v2249 = vshrl.u32 %v2248, 8
  %v2250 = vand.u32 %v2248, 255
  %v2251 = vsub.s32 0, %v2250
  %v2252 = vsel %vm2246, %v2251, %v2250
  %vm2253 = vcmp.lt.s32.totalorder %v1175, 0
  %v2254 = vsub.s32 0, %v1175
  %v2255 = vsel %vm2253, %v2254, %v1175
  %v2256 = vshrl.u32 %v2255, 8
  %v2257 = vand.u32 %v2255, 255
  %v2258 = vsub.s32 0, %v2257
  %v2259 = vsel %vm2253, %v2258, %v2257
  %vm2260 = vcmp.lt.s32.totalorder %v1176, 0
  %v2261 = vsub.s32 0, %v1176
  %v2262 = vsel %vm2260, %v2261, %v1176
  %v2263 = vshrl.u32 %v2262, 8
  %v2264 = vand.u32 %v2262, 255
  %v2265 = vsub.s32 0, %v2264
  %v2266 = vsel %vm2260, %v2265, %v2264
  %vm2267 = vcmp.lt.s32.totalorder %v1177, 0
  %v2268 = vsub.s32 0, %v1177
  %v2269 = vsel %vm2267, %v2268, %v1177
  %v2270 = vshrl.u32 %v2269, 8
  %v2271 = vand.u32 %v2269, 255
  %v2272 = vsub.s32 0, %v2271
  %v2273 = vsel %vm2267, %v2272, %v2271
  %vm2274 = vcmp.lt.s32.totalorder %v1178, 0
  %v2275 = vsub.s32 0, %v1178
  %v2276 = vsel %vm2274, %v2275, %v1178
  %v2277 = vshrl.u32 %v2276, 8
  %v2278 = vand.u32 %v2276, 255
  %v2279 = vsub.s32 0, %v2278
  %v2280 = vsel %vm2274, %v2279, %v2278
  %vm2281 = vcmp.lt.s32.totalorder %v1179, 0
  %v2282 = vsub.s32 0, %v1179
  %v2283 = vsel %vm2281, %v2282, %v1179
  %v2284 = vshrl.u32 %v2283, 8
  %v2285 = vand.u32 %v2283, 255
  %v2286 = vsub.s32 0, %v2285
  %v2287 = vsel %vm2281, %v2286, %v2285
  %vm2288 = vcmp.lt.s32.totalorder %v1180, 0
  %v2289 = vsub.s32 0, %v1180
  %v2290 = vsel %vm2288, %v2289, %v1180
  %v2291 = vshrl.u32 %v2290, 8
  %v2292 = vand.u32 %v2290, 255
  %v2293 = vsub.s32 0, %v2292
  %v2294 = vsel %vm2288, %v2293, %v2292
  %vm2295 = vcmp.lt.s32.totalorder %v1181, 0
  %v2296 = vsub.s32 0, %v1181
  %v2297 = vsel %vm2295, %v2296, %v1181
  %v2298 = vshrl.u32 %v2297, 8
  %v2299 = vand.u32 %v2297, 255
  %v2300 = vsub.s32 0, %v2299
  %v2301 = vsel %vm2295, %v2300, %v2299
  %vm2302 = vcmp.lt.s32.totalorder %v1182, 0
  %v2303 = vsub.s32 0, %v1182
  %v2304 = vsel %vm2302, %v2303, %v1182
  %v2305 = vshrl.u32 %v2304, 8
  %v2306 = vand.u32 %v2304, 255
  %v2307 = vsub.s32 0, %v2306
  %v2308 = vsel %vm2302, %v2307, %v2306
  %vm2309 = vcmp.lt.s32.totalorder %v1183, 0
  %v2310 = vsub.s32 0, %v1183
  %v2311 = vsel %vm2309, %v2310, %v1183
  %v2312 = vshrl.u32 %v2311, 8
  %v2313 = vand.u32 %v2311, 255
  %v2314 = vsub.s32 0, %v2313
  %v2315 = vsel %vm2309, %v2314, %v2313
  %vm2316 = vcmp.lt.s32.totalorder %v1184, 0
  %v2317 = vsub.s32 0, %v1184
  %v2318 = vsel %vm2316, %v2317, %v1184
  %v2319 = vshrl.u32 %v2318, 8
  %v2320 = vand.u32 %v2318, 255
  %v2321 = vsub.s32 0, %v2320
  %v2322 = vsel %vm2316, %v2321, %v2320
  %vm2323 = vcmp.lt.s32.totalorder %v1185, 0
  %v2324 = vsub.s32 0, %v1185
  %v2325 = vsel %vm2323, %v2324, %v1185
  %v2326 = vshrl.u32 %v2325, 8
  %v2327 = vand.u32 %v2325, 255
  %v2328 = vsub.s32 0, %v2327
  %v2329 = vsel %vm2323, %v2328, %v2327
  %vm2330 = vcmp.lt.s32.totalorder %v1186, 0
  %v2331 = vsub.s32 0, %v1186
  %v2332 = vsel %vm2330, %v2331, %v1186
  %v2333 = vshrl.u32 %v2332, 8
  %v2334 = vand.u32 %v2332, 255
  %v2335 = vsub.s32 0, %v2334
  %v2336 = vsel %vm2330, %v2335, %v2334
  %vm2337 = vcmp.lt.s32.totalorder %v1187, 0
  %v2338 = vsub.s32 0, %v1187
  %v2339 = vsel %vm2337, %v2338, %v1187
  %v2340 = vshrl.u32 %v2339, 8
  %v2341 = vand.u32 %v2339, 255
  %v2342 = vsub.s32 0, %v2341
  %v2343 = vsel %vm2337, %v2342, %v2341
  %vm2344 = vcmp.lt.s32.totalorder %v1188, 0
  %v2345 = vsub.s32 0, %v1188
  %v2346 = vsel %vm2344, %v2345, %v1188
  %v2347 = vshrl.u32 %v2346, 8
  %v2348 = vand.u32 %v2346, 255
  %v2349 = vsub.s32 0, %v2348
  %v2350 = vsel %vm2344, %v2349, %v2348
  %vm2351 = vcmp.lt.s32.totalorder %v1189, 0
  %v2352 = vsub.s32 0, %v1189
  %v2353 = vsel %vm2351, %v2352, %v1189
  %v2354 = vshrl.u32 %v2353, 8
  %v2355 = vand.u32 %v2353, 255
  %v2356 = vsub.s32 0, %v2355
  %v2357 = vsel %vm2351, %v2356, %v2355
  %vm2358 = vcmp.lt.s32.totalorder %v1190, 0
  %v2359 = vsub.s32 0, %v1190
  %v2360 = vsel %vm2358, %v2359, %v1190
  %v2361 = vshrl.u32 %v2360, 8
  %v2362 = vand.u32 %v2360, 255
  %v2363 = vsub.s32 0, %v2362
  %v2364 = vsel %vm2358, %v2363, %v2362
  %vm2365 = vcmp.lt.s32.totalorder %v1191, 0
  %v2366 = vsub.s32 0, %v1191
  %v2367 = vsel %vm2365, %v2366, %v1191
  %v2368 = vshrl.u32 %v2367, 8
  %v2369 = vand.u32 %v2367, 255
  %v2370 = vsub.s32 0, %v2369
  %v2371 = vsel %vm2365, %v2370, %v2369
  %vm2372 = vcmp.lt.s32.totalorder %v1192, 0
  %v2373 = vsub.s32 0, %v1192
  %v2374 = vsel %vm2372, %v2373, %v1192
  %v2375 = vshrl.u32 %v2374, 8
  %v2376 = vand.u32 %v2374, 255
  %v2377 = vsub.s32 0, %v2376
  %v2378 = vsel %vm2372, %v2377, %v2376
  %vm2379 = vcmp.lt.s32.totalorder %v1193, 0
  %v2380 = vsub.s32 0, %v1193
  %v2381 = vsel %vm2379, %v2380, %v1193
  %v2382 = vshrl.u32 %v2381, 8
  %v2383 = vand.u32 %v2381, 255
  %v2384 = vsub.s32 0, %v2383
  %v2385 = vsel %vm2379, %v2384, %v2383
  %vm2386 = vcmp.lt.s32.totalorder %v1194, 0
  %v2387 = vsub.s32 0, %v1194
  %v2388 = vsel %vm2386, %v2387, %v1194
  %v2389 = vshrl.u32 %v2388, 8
  %v2390 = vand.u32 %v2388, 255
  %v2391 = vsub.s32 0, %v2390
  %v2392 = vsel %vm2386, %v2391, %v2390
  %vm2393 = vcmp.lt.s32.totalorder %v1195, 0
  %v2394 = vsub.s32 0, %v1195
  %v2395 = vsel %vm2393, %v2394, %v1195
  %v2396 = vshrl.u32 %v2395, 8
  %v2397 = vand.u32 %v2395, 255
  %v2398 = vsub.s32 0, %v2397
  %v2399 = vsel %vm2393, %v2398, %v2397
  %vm2400 = vcmp.lt.s32.totalorder %v1196, 0
  %v2401 = vsub.s32 0, %v1196
  %v2402 = vsel %vm2400, %v2401, %v1196
  %v2403 = vshrl.u32 %v2402, 8
  %v2404 = vand.u32 %v2402, 255
  %v2405 = vsub.s32 0, %v2404
  %v2406 = vsel %vm2400, %v2405, %v2404
  %vm2407 = vcmp.lt.s32.totalorder %v1197, 0
  %v2408 = vsub.s32 0, %v1197
  %v2409 = vsel %vm2407, %v2408, %v1197
  %v2410 = vshrl.u32 %v2409, 8
  %v2411 = vand.u32 %v2409, 255
  %v2412 = vsub.s32 0, %v2411
  %v2413 = vsel %vm2407, %v2412, %v2411
  %vm2414 = vcmp.ne.s32.totalorder %v1972, 0
  %vm2415 = vcmp.ne.s32.totalorder %v1979, 0
  %vm2416 = vcmp.ne.s32.totalorder %v1986, 0
  %vm2417 = vcmp.ne.s32.totalorder %v1993, 0
  %vm2418 = vcmp.ne.s32.totalorder %v2000, 0
  %vm2419 = vcmp.ne.s32.totalorder %v2007, 0
  %vm2420 = vcmp.ne.s32.totalorder %v2014, 0
  %vm2421 = vcmp.ne.s32.totalorder %v2021, 0
  %vm2422 = vcmp.ne.s32.totalorder %v2028, 0
  %vm2423 = vcmp.ne.s32.totalorder %v2035, 0
  %vm2424 = vcmp.ne.s32.totalorder %v2042, 0
  %vm2425 = vcmp.ne.s32.totalorder %v2049, 0
  %vm2426 = vcmp.ne.s32.totalorder %v2056, 0
  %vm2427 = vcmp.ne.s32.totalorder %v2063, 0
  %vm2428 = vcmp.ne.s32.totalorder %v2070, 0
  %vm2429 = vcmp.ne.s32.totalorder %v2077, 0
  %vm2430 = vcmp.ne.s32.totalorder %v2084, 0
  %vm2431 = vcmp.ne.s32.totalorder %v2091, 0
  %vm2432 = vcmp.ne.s32.totalorder %v2098, 0
  %vm2433 = vcmp.ne.s32.totalorder %v2105, 0
  %vm2434 = vcmp.ne.s32.totalorder %v2112, 0
  %vm2435 = vcmp.ne.s32.totalorder %v2119, 0
  %vm2436 = vcmp.ne.s32.totalorder %v2126, 0
  %vm2437 = vcmp.ne.s32.totalorder %v2133, 0
  %vm2438 = vcmp.ne.s32.totalorder %v2140, 0
  %vm2439 = vcmp.ne.s32.totalorder %v2147, 0
  %vm2440 = vcmp.ne.s32.totalorder %v2154, 0
  %vm2441 = vcmp.ne.s32.totalorder %v2161, 0
  %vm2442 = vcmp.ne.s32.totalorder %v2168, 0
  %vm2443 = vcmp.ne.s32.totalorder %v2175, 0
  %vm2444 = vcmp.ne.s32.totalorder %v2182, 0
  %vm2445 = vcmp.ne.s32.totalorder %v2189, 0
  %vm2446 = vcmp.ne.s32.totalorder %v2196, 0
  %vm2447 = vcmp.ne.s32.totalorder %v2203, 0
  %vm2448 = vcmp.ne.s32.totalorder %v2210, 0
  %vm2449 = vcmp.ne.s32.totalorder %v2217, 0
  %vm2450 = vcmp.ne.s32.totalorder %v2224, 0
  %vm2451 = vcmp.ne.s32.totalorder %v2231, 0
  %vm2452 = vcmp.ne.s32.totalorder %v2238, 0
  %vm2453 = vcmp.ne.s32.totalorder %v2245, 0
  %vm2454 = vcmp.ne.s32.totalorder %v2252, 0
  %vm2455 = vcmp.ne.s32.totalorder %v2259, 0
  %vm2456 = vcmp.ne.s32.totalorder %v2266, 0
  %vm2457 = vcmp.ne.s32.totalorder %v2273, 0
  %vm2458 = vcmp.ne.s32.totalorder %v2280, 0
  %vm2459 = vcmp.ne.s32.totalorder %v2287, 0
  %vm2460 = vcmp.ne.s32.totalorder %v2294, 0
  %vm2461 = vcmp.ne.s32.totalorder %v2301, 0
  %vm2462 = vcmp.ne.s32.totalorder %v2308, 0
  %vm2463 = vcmp.ne.s32.totalorder %v2315, 0
  %vm2464 = vcmp.ne.s32.totalorder %v2322, 0
  %vm2465 = vcmp.ne.s32.totalorder %v2329, 0
  %vm2466 = vcmp.ne.s32.totalorder %v2336, 0
  %vm2467 = vcmp.ne.s32.totalorder %v2343, 0
  %vm2468 = vcmp.ne.s32.totalorder %v2350, 0
  %vm2469 = vcmp.ne.s32.totalorder %v2357, 0
  %vm2470 = vcmp.ne.s32.totalorder %v2364, 0
  %vm2471 = vcmp.ne.s32.totalorder %v2371, 0
  %vm2472 = vcmp.ne.s32.totalorder %v2378, 0
  %vm2473 = vcmp.ne.s32.totalorder %v2385, 0
  %vm2474 = vcmp.ne.s32.totalorder %v2392, 0
  %vm2475 = vcmp.ne.s32.totalorder %v2399, 0
  %vm2476 = vcmp.ne.s32.totalorder %v2406, 0
  %vm2477 = vcmp.ne.s32.totalorder %v2413, 0
  %vm2478 = vcmp.lt.s32.totalorder %v1972, 0
  %vm2479 = vcmp.lt.s32.totalorder %v1979, 0
  %vm2480 = vcmp.lt.s32.totalorder %v1986, 0
  %vm2481 = vcmp.lt.s32.totalorder %v1993, 0
  %vm2482 = vcmp.lt.s32.totalorder %v2000, 0
  %vm2483 = vcmp.lt.s32.totalorder %v2007, 0
  %vm2484 = vcmp.lt.s32.totalorder %v2014, 0
  %vm2485 = vcmp.lt.s32.totalorder %v2021, 0
  %vm2486 = vcmp.lt.s32.totalorder %v2028, 0
  %vm2487 = vcmp.lt.s32.totalorder %v2035, 0
  %vm2488 = vcmp.lt.s32.totalorder %v2042, 0
  %vm2489 = vcmp.lt.s32.totalorder %v2049, 0
  %vm2490 = vcmp.lt.s32.totalorder %v2056, 0
  %vm2491 = vcmp.lt.s32.totalorder %v2063, 0
  %vm2492 = vcmp.lt.s32.totalorder %v2070, 0
  %vm2493 = vcmp.lt.s32.totalorder %v2077, 0
  %vm2494 = vcmp.lt.s32.totalorder %v2084, 0
  %vm2495 = vcmp.lt.s32.totalorder %v2091, 0
  %vm2496 = vcmp.lt.s32.totalorder %v2098, 0
  %vm2497 = vcmp.lt.s32.totalorder %v2105, 0
  %vm2498 = vcmp.lt.s32.totalorder %v2112, 0
  %vm2499 = vcmp.lt.s32.totalorder %v2119, 0
  %vm2500 = vcmp.lt.s32.totalorder %v2126, 0
  %vm2501 = vcmp.lt.s32.totalorder %v2133, 0
  %vm2502 = vcmp.lt.s32.totalorder %v2140, 0
  %vm2503 = vcmp.lt.s32.totalorder %v2147, 0
  %vm2504 = vcmp.lt.s32.totalorder %v2154, 0
  %vm2505 = vcmp.lt.s32.totalorder %v2161, 0
  %vm2506 = vcmp.lt.s32.totalorder %v2168, 0
  %vm2507 = vcmp.lt.s32.totalorder %v2175, 0
  %vm2508 = vcmp.lt.s32.totalorder %v2182, 0
  %vm2509 = vcmp.lt.s32.totalorder %v2189, 0
  %vm2510 = vcmp.lt.s32.totalorder %v2196, 0
  %vm2511 = vcmp.lt.s32.totalorder %v2203, 0
  %vm2512 = vcmp.lt.s32.totalorder %v2210, 0
  %vm2513 = vcmp.lt.s32.totalorder %v2217, 0
  %vm2514 = vcmp.lt.s32.totalorder %v2224, 0
  %vm2515 = vcmp.lt.s32.totalorder %v2231, 0
  %vm2516 = vcmp.lt.s32.totalorder %v2238, 0
  %vm2517 = vcmp.lt.s32.totalorder %v2245, 0
  %vm2518 = vcmp.lt.s32.totalorder %v2252, 0
  %vm2519 = vcmp.lt.s32.totalorder %v2259, 0
  %vm2520 = vcmp.lt.s32.totalorder %v2266, 0
  %vm2521 = vcmp.lt.s32.totalorder %v2273, 0
  %vm2522 = vcmp.lt.s32.totalorder %v2280, 0
  %vm2523 = vcmp.lt.s32.totalorder %v2287, 0
  %vm2524 = vcmp.lt.s32.totalorder %v2294, 0
  %vm2525 = vcmp.lt.s32.totalorder %v2301, 0
  %vm2526 = vcmp.lt.s32.totalorder %v2308, 0
  %vm2527 = vcmp.lt.s32.totalorder %v2315, 0
  %vm2528 = vcmp.lt.s32.totalorder %v2322, 0
  %vm2529 = vcmp.lt.s32.totalorder %v2329, 0
  %vm2530 = vcmp.lt.s32.totalorder %v2336, 0
  %vm2531 = vcmp.lt.s32.totalorder %v2343, 0
  %vm2532 = vcmp.lt.s32.totalorder %v2350, 0
  %vm2533 = vcmp.lt.s32.totalorder %v2357, 0
  %vm2534 = vcmp.lt.s32.totalorder %v2364, 0
  %vm2535 = vcmp.lt.s32.totalorder %v2371, 0
  %vm2536 = vcmp.lt.s32.totalorder %v2378, 0
  %vm2537 = vcmp.lt.s32.totalorder %v2385, 0
  %vm2538 = vcmp.lt.s32.totalorder %v2392, 0
  %vm2539 = vcmp.lt.s32.totalorder %v2399, 0
  %vm2540 = vcmp.lt.s32.totalorder %v2406, 0
  %vm2541 = vcmp.lt.s32.totalorder %v2413, 0
  %vm2542 = vmand %vm2478, %vm2414
  %vm2543 = vmand %vm2479, %vm2415
  %vm2544 = vmand %vm2480, %vm2416
  %vm2545 = vmand %vm2481, %vm2417
  %vm2546 = vmand %vm2482, %vm2418
  %vm2547 = vmand %vm2483, %vm2419
  %vm2548 = vmand %vm2484, %vm2420
  %vm2549 = vmand %vm2485, %vm2421
  %vm2550 = vmand %vm2486, %vm2422
  %vm2551 = vmand %vm2487, %vm2423
  %vm2552 = vmand %vm2488, %vm2424
  %vm2553 = vmand %vm2489, %vm2425
  %vm2554 = vmand %vm2490, %vm2426
  %vm2555 = vmand %vm2491, %vm2427
  %vm2556 = vmand %vm2492, %vm2428
  %vm2557 = vmand %vm2493, %vm2429
  %vm2558 = vmand %vm2494, %vm2430
  %vm2559 = vmand %vm2495, %vm2431
  %vm2560 = vmand %vm2496, %vm2432
  %vm2561 = vmand %vm2497, %vm2433
  %vm2562 = vmand %vm2498, %vm2434
  %vm2563 = vmand %vm2499, %vm2435
  %vm2564 = vmand %vm2500, %vm2436
  %vm2565 = vmand %vm2501, %vm2437
  %vm2566 = vmand %vm2502, %vm2438
  %vm2567 = vmand %vm2503, %vm2439
  %vm2568 = vmand %vm2504, %vm2440
  %vm2569 = vmand %vm2505, %vm2441
  %vm2570 = vmand %vm2506, %vm2442
  %vm2571 = vmand %vm2507, %vm2443
  %vm2572 = vmand %vm2508, %vm2444
  %vm2573 = vmand %vm2509, %vm2445
  %vm2574 = vmand %vm2510, %vm2446
  %vm2575 = vmand %vm2511, %vm2447
  %vm2576 = vmand %vm2512, %vm2448
  %vm2577 = vmand %vm2513, %vm2449
  %vm2578 = vmand %vm2514, %vm2450
  %vm2579 = vmand %vm2515, %vm2451
  %vm2580 = vmand %vm2516, %vm2452
  %vm2581 = vmand %vm2517, %vm2453
  %vm2582 = vmand %vm2518, %vm2454
  %vm2583 = vmand %vm2519, %vm2455
  %vm2584 = vmand %vm2520, %vm2456
  %vm2585 = vmand %vm2521, %vm2457
  %vm2586 = vmand %vm2522, %vm2458
  %vm2587 = vmand %vm2523, %vm2459
  %vm2588 = vmand %vm2524, %vm2460
  %vm2589 = vmand %vm2525, %vm2461
  %vm2590 = vmand %vm2526, %vm2462
  %vm2591 = vmand %vm2527, %vm2463
  %vm2592 = vmand %vm2528, %vm2464
  %vm2593 = vmand %vm2529, %vm2465
  %vm2594 = vmand %vm2530, %vm2466
  %vm2595 = vmand %vm2531, %vm2467
  %vm2596 = vmand %vm2532, %vm2468
  %vm2597 = vmand %vm2533, %vm2469
  %vm2598 = vmand %vm2534, %vm2470
  %vm2599 = vmand %vm2535, %vm2471
  %vm2600 = vmand %vm2536, %vm2472
  %vm2601 = vmand %vm2537, %vm2473
  %vm2602 = vmand %vm2538, %vm2474
  %vm2603 = vmand %vm2539, %vm2475
  %vm2604 = vmand %vm2540, %vm2476
  %vm2605 = vmand %vm2541, %vm2477
  %v2606 = vadd.s32 %v1972, 256
  %v2607 = vadd.s32 %v1979, 256
  %v2608 = vadd.s32 %v1986, 256
  %v2609 = vadd.s32 %v1993, 256
  %v2610 = vadd.s32 %v2000, 256
  %v2611 = vadd.s32 %v2007, 256
  %v2612 = vadd.s32 %v2014, 256
  %v2613 = vadd.s32 %v2021, 256
  %v2614 = vadd.s32 %v2028, 256
  %v2615 = vadd.s32 %v2035, 256
  %v2616 = vadd.s32 %v2042, 256
  %v2617 = vadd.s32 %v2049, 256
  %v2618 = vadd.s32 %v2056, 256
  %v2619 = vadd.s32 %v2063, 256
  %v2620 = vadd.s32 %v2070, 256
  %v2621 = vadd.s32 %v2077, 256
  %v2622 = vadd.s32 %v2084, 256
  %v2623 = vadd.s32 %v2091, 256
  %v2624 = vadd.s32 %v2098, 256
  %v2625 = vadd.s32 %v2105, 256
  %v2626 = vadd.s32 %v2112, 256
  %v2627 = vadd.s32 %v2119, 256
  %v2628 = vadd.s32 %v2126, 256
  %v2629 = vadd.s32 %v2133, 256
  %v2630 = vadd.s32 %v2140, 256
  %v2631 = vadd.s32 %v2147, 256
  %v2632 = vadd.s32 %v2154, 256
  %v2633 = vadd.s32 %v2161, 256
  %v2634 = vadd.s32 %v2168, 256
  %v2635 = vadd.s32 %v2175, 256
  %v2636 = vadd.s32 %v2182, 256
  %v2637 = vadd.s32 %v2189, 256
  %v2638 = vadd.s32 %v2196, 256
  %v2639 = vadd.s32 %v2203, 256
  %v2640 = vadd.s32 %v2210, 256
  %v2641 = vadd.s32 %v2217, 256
  %v2642 = vadd.s32 %v2224, 256
  %v2643 = vadd.s32 %v2231, 256
  %v2644 = vadd.s32 %v2238, 256
  %v2645 = vadd.s32 %v2245, 256
  %v2646 = vadd.s32 %v2252, 256
  %v2647 = vadd.s32 %v2259, 256
  %v2648 = vadd.s32 %v2266, 256
  %v2649 = vadd.s32 %v2273, 256
  %v2650 = vadd.s32 %v2280, 256
  %v2651 = vadd.s32 %v2287, 256
  %v2652 = vadd.s32 %v2294, 256
  %v2653 = vadd.s32 %v2301, 256
  %v2654 = vadd.s32 %v2308, 256
  %v2655 = vadd.s32 %v2315, 256
  %v2656 = vadd.s32 %v2322, 256
  %v2657 = vadd.s32 %v2329, 256
  %v2658 = vadd.s32 %v2336, 256
  %v2659 = vadd.s32 %v2343, 256
  %v2660 = vadd.s32 %v2350, 256
  %v2661 = vadd.s32 %v2357, 256
  %v2662 = vadd.s32 %v2364, 256
  %v2663 = vadd.s32 %v2371, 256
  %v2664 = vadd.s32 %v2378, 256
  %v2665 = vadd.s32 %v2385, 256
  %v2666 = vadd.s32 %v2392, 256
  %v2667 = vadd.s32 %v2399, 256
  %v2668 = vadd.s32 %v2406, 256
  %v2669 = vadd.s32 %v2413, 256
  %v2670 = vsel %vm2542, %v2606, %v1972
  %v2671 = vsel %vm2543, %v2607, %v1979
  %v2672 = vsel %vm2544, %v2608, %v1986
  %v2673 = vsel %vm2545, %v2609, %v1993
  %v2674 = vsel %vm2546, %v2610, %v2000
  %v2675 = vsel %vm2547, %v2611, %v2007
  %v2676 = vsel %vm2548, %v2612, %v2014
  %v2677 = vsel %vm2549, %v2613, %v2021
  %v2678 = vsel %vm2550, %v2614, %v2028
  %v2679 = vsel %vm2551, %v2615, %v2035
  %v2680 = vsel %vm2552, %v2616, %v2042
  %v2681 = vsel %vm2553, %v2617, %v2049
  %v2682 = vsel %vm2554, %v2618, %v2056
  %v2683 = vsel %vm2555, %v2619, %v2063
  %v2684 = vsel %vm2556, %v2620, %v2070
  %v2685 = vsel %vm2557, %v2621, %v2077
  %v2686 = vsel %vm2558, %v2622, %v2084
  %v2687 = vsel %vm2559, %v2623, %v2091
  %v2688 = vsel %vm2560, %v2624, %v2098
  %v2689 = vsel %vm2561, %v2625, %v2105
  %v2690 = vsel %vm2562, %v2626, %v2112
  %v2691 = vsel %vm2563, %v2627, %v2119
  %v2692 = vsel %vm2564, %v2628, %v2126
  %v2693 = vsel %vm2565, %v2629, %v2133
  %v2694 = vsel %vm2566, %v2630, %v2140
  %v2695 = vsel %vm2567, %v2631, %v2147
  %v2696 = vsel %vm2568, %v2632, %v2154
  %v2697 = vsel %vm2569, %v2633, %v2161
  %v2698 = vsel %vm2570, %v2634, %v2168
  %v2699 = vsel %vm2571, %v2635, %v2175
  %v2700 = vsel %vm2572, %v2636, %v2182
  %v2701 = vsel %vm2573, %v2637, %v2189
  %v2702 = vsel %vm2574, %v2638, %v2196
  %v2703 = vsel %vm2575, %v2639, %v2203
  %v2704 = vsel %vm2576, %v2640, %v2210
  %v2705 = vsel %vm2577, %v2641, %v2217
  %v2706 = vsel %vm2578, %v2642, %v2224
  %v2707 = vsel %vm2579, %v2643, %v2231
  %v2708 = vsel %vm2580, %v2644, %v2238
  %v2709 = vsel %vm2581, %v2645, %v2245
  %v2710 = vsel %vm2582, %v2646, %v2252
  %v2711 = vsel %vm2583, %v2647, %v2259
  %v2712 = vsel %vm2584, %v2648, %v2266
  %v2713 = vsel %vm2585, %v2649, %v2273
  %v2714 = vsel %vm2586, %v2650, %v2280
  %v2715 = vsel %vm2587, %v2651, %v2287
  %v2716 = vsel %vm2588, %v2652, %v2294
  %v2717 = vsel %vm2589, %v2653, %v2301
  %v2718 = vsel %vm2590, %v2654, %v2308
  %v2719 = vsel %vm2591, %v2655, %v2315
  %v2720 = vsel %vm2592, %v2656, %v2322
  %v2721 = vsel %vm2593, %v2657, %v2329
  %v2722 = vsel %vm2594, %v2658, %v2336
  %v2723 = vsel %vm2595, %v2659, %v2343
  %v2724 = vsel %vm2596, %v2660, %v2350
  %v2725 = vsel %vm2597, %v2661, %v2357
  %v2726 = vsel %vm2598, %v2662, %v2364
  %v2727 = vsel %vm2599, %v2663, %v2371
  %v2728 = vsel %vm2600, %v2664, %v2378
  %v2729 = vsel %vm2601, %v2665, %v2385
  %v2730 = vsel %vm2602, %v2666, %v2392
  %v2731 = vsel %vm2603, %v2667, %v2399
  %v2732 = vsel %vm2604, %v2668, %v2406
  %v2733 = vsel %vm2605, %v2669, %v2413
  %vm2734 = vcmp.ge.s32.totalorder %v1902, 1
  %vm2735 = vcmp.ge.s32.totalorder %v1903, 1
  %vm2736 = vcmp.ge.s32.totalorder %v1904, 1
  %vm2737 = vcmp.ge.s32.totalorder %v1905, 1
  %vm2738 = vcmp.ge.s32.totalorder %v1906, 1
  %vm2739 = vcmp.ge.s32.totalorder %v1907, 1
  %vm2740 = vcmp.ge.s32.totalorder %v1908, 1
  %vm2741 = vcmp.ge.s32.totalorder %v1909, 1
  %vm2742 = vcmp.ge.s32.totalorder %v1910, 1
  %vm2743 = vcmp.ge.s32.totalorder %v1911, 1
  %vm2744 = vcmp.ge.s32.totalorder %v1912, 1
  %vm2745 = vcmp.ge.s32.totalorder %v1913, 1
  %vm2746 = vcmp.ge.s32.totalorder %v1914, 1
  %vm2747 = vcmp.ge.s32.totalorder %v1915, 1
  %vm2748 = vcmp.ge.s32.totalorder %v1916, 1
  %vm2749 = vcmp.ge.s32.totalorder %v1917, 1
  %vm2750 = vcmp.ge.s32.totalorder %v1918, 1
  %vm2751 = vcmp.ge.s32.totalorder %v1919, 1
  %vm2752 = vcmp.ge.s32.totalorder %v1920, 1
  %vm2753 = vcmp.ge.s32.totalorder %v1921, 1
  %vm2754 = vcmp.ge.s32.totalorder %v1922, 1
  %vm2755 = vcmp.ge.s32.totalorder %v1923, 1
  %vm2756 = vcmp.ge.s32.totalorder %v1924, 1
  %vm2757 = vcmp.ge.s32.totalorder %v1925, 1
  %vm2758 = vcmp.ge.s32.totalorder %v1926, 1
  %vm2759 = vcmp.ge.s32.totalorder %v1927, 1
  %vm2760 = vcmp.ge.s32.totalorder %v1928, 1
  %vm2761 = vcmp.ge.s32.totalorder %v1929, 1
  %vm2762 = vcmp.ge.s32.totalorder %v1930, 1
  %vm2763 = vcmp.ge.s32.totalorder %v1931, 1
  %vm2764 = vcmp.ge.s32.totalorder %v1932, 1
  %vm2765 = vcmp.ge.s32.totalorder %v1933, 1
  %vm2766 = vcmp.ge.s32.totalorder %v1934, 1
  %vm2767 = vcmp.ge.s32.totalorder %v1935, 1
  %vm2768 = vcmp.ge.s32.totalorder %v1936, 1
  %vm2769 = vcmp.ge.s32.totalorder %v1937, 1
  %vm2770 = vcmp.ge.s32.totalorder %v1938, 1
  %vm2771 = vcmp.ge.s32.totalorder %v1939, 1
  %vm2772 = vcmp.ge.s32.totalorder %v1940, 1
  %vm2773 = vcmp.ge.s32.totalorder %v1941, 1
  %vm2774 = vcmp.ge.s32.totalorder %v1942, 1
  %vm2775 = vcmp.ge.s32.totalorder %v1943, 1
  %vm2776 = vcmp.ge.s32.totalorder %v1944, 1
  %vm2777 = vcmp.ge.s32.totalorder %v1945, 1
  %vm2778 = vcmp.ge.s32.totalorder %v1946, 1
  %vm2779 = vcmp.ge.s32.totalorder %v1947, 1
  %vm2780 = vcmp.ge.s32.totalorder %v1948, 1
  %vm2781 = vcmp.ge.s32.totalorder %v1949, 1
  %vm2782 = vcmp.ge.s32.totalorder %v1950, 1
  %vm2783 = vcmp.ge.s32.totalorder %v1951, 1
  %vm2784 = vcmp.ge.s32.totalorder %v1952, 1
  %vm2785 = vcmp.ge.s32.totalorder %v1953, 1
  %vm2786 = vcmp.ge.s32.totalorder %v1954, 1
  %vm2787 = vcmp.ge.s32.totalorder %v1955, 1
  %vm2788 = vcmp.ge.s32.totalorder %v1956, 1
  %vm2789 = vcmp.ge.s32.totalorder %v1957, 1
  %vm2790 = vcmp.ge.s32.totalorder %v1958, 1
  %vm2791 = vcmp.ge.s32.totalorder %v1959, 1
  %vm2792 = vcmp.ge.s32.totalorder %v1960, 1
  %vm2793 = vcmp.ge.s32.totalorder %v1961, 1
  %vm2794 = vcmp.ge.s32.totalorder %v1962, 1
  %vm2795 = vcmp.ge.s32.totalorder %v1963, 1
  %vm2796 = vcmp.ge.s32.totalorder %v1964, 1
  %vm2797 = vcmp.ge.s32.totalorder %v1965, 1
  %vm2798 = vcmp.le.s32.totalorder %v1902, 14
  %vm2799 = vcmp.le.s32.totalorder %v1903, 14
  %vm2800 = vcmp.le.s32.totalorder %v1904, 14
  %vm2801 = vcmp.le.s32.totalorder %v1905, 14
  %vm2802 = vcmp.le.s32.totalorder %v1906, 14
  %vm2803 = vcmp.le.s32.totalorder %v1907, 14
  %vm2804 = vcmp.le.s32.totalorder %v1908, 14
  %vm2805 = vcmp.le.s32.totalorder %v1909, 14
  %vm2806 = vcmp.le.s32.totalorder %v1910, 14
  %vm2807 = vcmp.le.s32.totalorder %v1911, 14
  %vm2808 = vcmp.le.s32.totalorder %v1912, 14
  %vm2809 = vcmp.le.s32.totalorder %v1913, 14
  %vm2810 = vcmp.le.s32.totalorder %v1914, 14
  %vm2811 = vcmp.le.s32.totalorder %v1915, 14
  %vm2812 = vcmp.le.s32.totalorder %v1916, 14
  %vm2813 = vcmp.le.s32.totalorder %v1917, 14
  %vm2814 = vcmp.le.s32.totalorder %v1918, 14
  %vm2815 = vcmp.le.s32.totalorder %v1919, 14
  %vm2816 = vcmp.le.s32.totalorder %v1920, 14
  %vm2817 = vcmp.le.s32.totalorder %v1921, 14
  %vm2818 = vcmp.le.s32.totalorder %v1922, 14
  %vm2819 = vcmp.le.s32.totalorder %v1923, 14
  %vm2820 = vcmp.le.s32.totalorder %v1924, 14
  %vm2821 = vcmp.le.s32.totalorder %v1925, 14
  %vm2822 = vcmp.le.s32.totalorder %v1926, 14
  %vm2823 = vcmp.le.s32.totalorder %v1927, 14
  %vm2824 = vcmp.le.s32.totalorder %v1928, 14
  %vm2825 = vcmp.le.s32.totalorder %v1929, 14
  %vm2826 = vcmp.le.s32.totalorder %v1930, 14
  %vm2827 = vcmp.le.s32.totalorder %v1931, 14
  %vm2828 = vcmp.le.s32.totalorder %v1932, 14
  %vm2829 = vcmp.le.s32.totalorder %v1933, 14
  %vm2830 = vcmp.le.s32.totalorder %v1934, 14
  %vm2831 = vcmp.le.s32.totalorder %v1935, 14
  %vm2832 = vcmp.le.s32.totalorder %v1936, 14
  %vm2833 = vcmp.le.s32.totalorder %v1937, 14
  %vm2834 = vcmp.le.s32.totalorder %v1938, 14
  %vm2835 = vcmp.le.s32.totalorder %v1939, 14
  %vm2836 = vcmp.le.s32.totalorder %v1940, 14
  %vm2837 = vcmp.le.s32.totalorder %v1941, 14
  %vm2838 = vcmp.le.s32.totalorder %v1942, 14
  %vm2839 = vcmp.le.s32.totalorder %v1943, 14
  %vm2840 = vcmp.le.s32.totalorder %v1944, 14
  %vm2841 = vcmp.le.s32.totalorder %v1945, 14
  %vm2842 = vcmp.le.s32.totalorder %v1946, 14
  %vm2843 = vcmp.le.s32.totalorder %v1947, 14
  %vm2844 = vcmp.le.s32.totalorder %v1948, 14
  %vm2845 = vcmp.le.s32.totalorder %v1949, 14
  %vm2846 = vcmp.le.s32.totalorder %v1950, 14
  %vm2847 = vcmp.le.s32.totalorder %v1951, 14
  %vm2848 = vcmp.le.s32.totalorder %v1952, 14
  %vm2849 = vcmp.le.s32.totalorder %v1953, 14
  %vm2850 = vcmp.le.s32.totalorder %v1954, 14
  %vm2851 = vcmp.le.s32.totalorder %v1955, 14
  %vm2852 = vcmp.le.s32.totalorder %v1956, 14
  %vm2853 = vcmp.le.s32.totalorder %v1957, 14
  %vm2854 = vcmp.le.s32.totalorder %v1958, 14
  %vm2855 = vcmp.le.s32.totalorder %v1959, 14
  %vm2856 = vcmp.le.s32.totalorder %v1960, 14
  %vm2857 = vcmp.le.s32.totalorder %v1961, 14
  %vm2858 = vcmp.le.s32.totalorder %v1962, 14
  %vm2859 = vcmp.le.s32.totalorder %v1963, 14
  %vm2860 = vcmp.le.s32.totalorder %v1964, 14
  %vm2861 = vcmp.le.s32.totalorder %v1965, 14
  %vm2862 = vcmp.ge.s32.totalorder %v2670, 16
  %vm2863 = vcmp.ge.s32.totalorder %v2671, 16
  %vm2864 = vcmp.ge.s32.totalorder %v2672, 16
  %vm2865 = vcmp.ge.s32.totalorder %v2673, 16
  %vm2866 = vcmp.ge.s32.totalorder %v2674, 16
  %vm2867 = vcmp.ge.s32.totalorder %v2675, 16
  %vm2868 = vcmp.ge.s32.totalorder %v2676, 16
  %vm2869 = vcmp.ge.s32.totalorder %v2677, 16
  %vm2870 = vcmp.ge.s32.totalorder %v2678, 16
  %vm2871 = vcmp.ge.s32.totalorder %v2679, 16
  %vm2872 = vcmp.ge.s32.totalorder %v2680, 16
  %vm2873 = vcmp.ge.s32.totalorder %v2681, 16
  %vm2874 = vcmp.ge.s32.totalorder %v2682, 16
  %vm2875 = vcmp.ge.s32.totalorder %v2683, 16
  %vm2876 = vcmp.ge.s32.totalorder %v2684, 16
  %vm2877 = vcmp.ge.s32.totalorder %v2685, 16
  %vm2878 = vcmp.ge.s32.totalorder %v2686, 16
  %vm2879 = vcmp.ge.s32.totalorder %v2687, 16
  %vm2880 = vcmp.ge.s32.totalorder %v2688, 16
  %vm2881 = vcmp.ge.s32.totalorder %v2689, 16
  %vm2882 = vcmp.ge.s32.totalorder %v2690, 16
  %vm2883 = vcmp.ge.s32.totalorder %v2691, 16
  %vm2884 = vcmp.ge.s32.totalorder %v2692, 16
  %vm2885 = vcmp.ge.s32.totalorder %v2693, 16
  %vm2886 = vcmp.ge.s32.totalorder %v2694, 16
  %vm2887 = vcmp.ge.s32.totalorder %v2695, 16
  %vm2888 = vcmp.ge.s32.totalorder %v2696, 16
  %vm2889 = vcmp.ge.s32.totalorder %v2697, 16
  %vm2890 = vcmp.ge.s32.totalorder %v2698, 16
  %vm2891 = vcmp.ge.s32.totalorder %v2699, 16
  %vm2892 = vcmp.ge.s32.totalorder %v2700, 16
  %vm2893 = vcmp.ge.s32.totalorder %v2701, 16
  %vm2894 = vcmp.ge.s32.totalorder %v2702, 16
  %vm2895 = vcmp.ge.s32.totalorder %v2703, 16
  %vm2896 = vcmp.ge.s32.totalorder %v2704, 16
  %vm2897 = vcmp.ge.s32.totalorder %v2705, 16
  %vm2898 = vcmp.ge.s32.totalorder %v2706, 16
  %vm2899 = vcmp.ge.s32.totalorder %v2707, 16
  %vm2900 = vcmp.ge.s32.totalorder %v2708, 16
  %vm2901 = vcmp.ge.s32.totalorder %v2709, 16
  %vm2902 = vcmp.ge.s32.totalorder %v2710, 16
  %vm2903 = vcmp.ge.s32.totalorder %v2711, 16
  %vm2904 = vcmp.ge.s32.totalorder %v2712, 16
  %vm2905 = vcmp.ge.s32.totalorder %v2713, 16
  %vm2906 = vcmp.ge.s32.totalorder %v2714, 16
  %vm2907 = vcmp.ge.s32.totalorder %v2715, 16
  %vm2908 = vcmp.ge.s32.totalorder %v2716, 16
  %vm2909 = vcmp.ge.s32.totalorder %v2717, 16
  %vm2910 = vcmp.ge.s32.totalorder %v2718, 16
  %vm2911 = vcmp.ge.s32.totalorder %v2719, 16
  %vm2912 = vcmp.ge.s32.totalorder %v2720, 16
  %vm2913 = vcmp.ge.s32.totalorder %v2721, 16
  %vm2914 = vcmp.ge.s32.totalorder %v2722, 16
  %vm2915 = vcmp.ge.s32.totalorder %v2723, 16
  %vm2916 = vcmp.ge.s32.totalorder %v2724, 16
  %vm2917 = vcmp.ge.s32.totalorder %v2725, 16
  %vm2918 = vcmp.ge.s32.totalorder %v2726, 16
  %vm2919 = vcmp.ge.s32.totalorder %v2727, 16
  %vm2920 = vcmp.ge.s32.totalorder %v2728, 16
  %vm2921 = vcmp.ge.s32.totalorder %v2729, 16
  %vm2922 = vcmp.ge.s32.totalorder %v2730, 16
  %vm2923 = vcmp.ge.s32.totalorder %v2731, 16
  %vm2924 = vcmp.ge.s32.totalorder %v2732, 16
  %vm2925 = vcmp.ge.s32.totalorder %v2733, 16
  %vm2926 = vcmp.lt.s32.totalorder %v2670, 240
  %vm2927 = vcmp.lt.s32.totalorder %v2671, 240
  %vm2928 = vcmp.lt.s32.totalorder %v2672, 240
  %vm2929 = vcmp.lt.s32.totalorder %v2673, 240
  %vm2930 = vcmp.lt.s32.totalorder %v2674, 240
  %vm2931 = vcmp.lt.s32.totalorder %v2675, 240
  %vm2932 = vcmp.lt.s32.totalorder %v2676, 240
  %vm2933 = vcmp.lt.s32.totalorder %v2677, 240
  %vm2934 = vcmp.lt.s32.totalorder %v2678, 240
  %vm2935 = vcmp.lt.s32.totalorder %v2679, 240
  %vm2936 = vcmp.lt.s32.totalorder %v2680, 240
  %vm2937 = vcmp.lt.s32.totalorder %v2681, 240
  %vm2938 = vcmp.lt.s32.totalorder %v2682, 240
  %vm2939 = vcmp.lt.s32.totalorder %v2683, 240
  %vm2940 = vcmp.lt.s32.totalorder %v2684, 240
  %vm2941 = vcmp.lt.s32.totalorder %v2685, 240
  %vm2942 = vcmp.lt.s32.totalorder %v2686, 240
  %vm2943 = vcmp.lt.s32.totalorder %v2687, 240
  %vm2944 = vcmp.lt.s32.totalorder %v2688, 240
  %vm2945 = vcmp.lt.s32.totalorder %v2689, 240
  %vm2946 = vcmp.lt.s32.totalorder %v2690, 240
  %vm2947 = vcmp.lt.s32.totalorder %v2691, 240
  %vm2948 = vcmp.lt.s32.totalorder %v2692, 240
  %vm2949 = vcmp.lt.s32.totalorder %v2693, 240
  %vm2950 = vcmp.lt.s32.totalorder %v2694, 240
  %vm2951 = vcmp.lt.s32.totalorder %v2695, 240
  %vm2952 = vcmp.lt.s32.totalorder %v2696, 240
  %vm2953 = vcmp.lt.s32.totalorder %v2697, 240
  %vm2954 = vcmp.lt.s32.totalorder %v2698, 240
  %vm2955 = vcmp.lt.s32.totalorder %v2699, 240
  %vm2956 = vcmp.lt.s32.totalorder %v2700, 240
  %vm2957 = vcmp.lt.s32.totalorder %v2701, 240
  %vm2958 = vcmp.lt.s32.totalorder %v2702, 240
  %vm2959 = vcmp.lt.s32.totalorder %v2703, 240
  %vm2960 = vcmp.lt.s32.totalorder %v2704, 240
  %vm2961 = vcmp.lt.s32.totalorder %v2705, 240
  %vm2962 = vcmp.lt.s32.totalorder %v2706, 240
  %vm2963 = vcmp.lt.s32.totalorder %v2707, 240
  %vm2964 = vcmp.lt.s32.totalorder %v2708, 240
  %vm2965 = vcmp.lt.s32.totalorder %v2709, 240
  %vm2966 = vcmp.lt.s32.totalorder %v2710, 240
  %vm2967 = vcmp.lt.s32.totalorder %v2711, 240
  %vm2968 = vcmp.lt.s32.totalorder %v2712, 240
  %vm2969 = vcmp.lt.s32.totalorder %v2713, 240
  %vm2970 = vcmp.lt.s32.totalorder %v2714, 240
  %vm2971 = vcmp.lt.s32.totalorder %v2715, 240
  %vm2972 = vcmp.lt.s32.totalorder %v2716, 240
  %vm2973 = vcmp.lt.s32.totalorder %v2717, 240
  %vm2974 = vcmp.lt.s32.totalorder %v2718, 240
  %vm2975 = vcmp.lt.s32.totalorder %v2719, 240
  %vm2976 = vcmp.lt.s32.totalorder %v2720, 240
  %vm2977 = vcmp.lt.s32.totalorder %v2721, 240
  %vm2978 = vcmp.lt.s32.totalorder %v2722, 240
  %vm2979 = vcmp.lt.s32.totalorder %v2723, 240
  %vm2980 = vcmp.lt.s32.totalorder %v2724, 240
  %vm2981 = vcmp.lt.s32.totalorder %v2725, 240
  %vm2982 = vcmp.lt.s32.totalorder %v2726, 240
  %vm2983 = vcmp.lt.s32.totalorder %v2727, 240
  %vm2984 = vcmp.lt.s32.totalorder %v2728, 240
  %vm2985 = vcmp.lt.s32.totalorder %v2729, 240
  %vm2986 = vcmp.lt.s32.totalorder %v2730, 240
  %vm2987 = vcmp.lt.s32.totalorder %v2731, 240
  %vm2988 = vcmp.lt.s32.totalorder %v2732, 240
  %vm2989 = vcmp.lt.s32.totalorder %v2733, 240
  %v2990 = vrot.slane %v1069, 7
  %v2991 = vrot.slane %v1070, 7
  %v2992 = vrot.slane %v1071, 7
  %v2993 = vrot.slane %v1072, 7
  %v2994 = vrot.slane %v1073, 7
  %v2995 = vrot.slane %v1074, 7
  %v2996 = vrot.slane %v1075, 7
  %v2997 = vrot.slane %v1076, 7
  %v2998 = vrot.slane %v1077, 7
  %v2999 = vrot.slane %v1078, 7
  %v3000 = vrot.slane %v1079, 7
  %v3001 = vrot.slane %v1080, 7
  %v3002 = vrot.slane %v1081, 7
  %v3003 = vrot.slane %v1082, 7
  %v3004 = vrot.slane %v1083, 7
  %v3005 = vrot.slane %v1084, 7
  %v3006 = vrot.slane %v1085, 7
  %v3007 = vrot.slane %v1086, 7
  %v3008 = vrot.slane %v1087, 7
  %v3009 = vrot.slane %v1088, 7
  %v3010 = vrot.slane %v1089, 7
  %v3011 = vrot.slane %v1090, 7
  %v3012 = vrot.slane %v1091, 7
  %v3013 = vrot.slane %v1092, 7
  %v3014 = vrot.slane %v1093, 7
  %v3015 = vrot.slane %v1094, 7
  %v3016 = vrot.slane %v1095, 7
  %v3017 = vrot.slane %v1096, 7
  %v3018 = vrot.slane %v1097, 7
  %v3019 = vrot.slane %v1098, 7
  %v3020 = vrot.slane %v1099, 7
  %v3021 = vrot.slane %v1100, 7
  %v3022 = vrot.slane %v1101, 7
  %v3023 = vrot.slane %v1102, 7
  %v3024 = vrot.slane %v1103, 7
  %v3025 = vrot.slane %v1104, 7
  %v3026 = vrot.slane %v1105, 7
  %v3027 = vrot.slane %v1106, 7
  %v3028 = vrot.slane %v1107, 7
  %v3029 = vrot.slane %v1108, 7
  %v3030 = vrot.slane %v1109, 7
  %v3031 = vrot.slane %v1110, 7
  %v3032 = vrot.slane %v1111, 7
  %v3033 = vrot.slane %v1112, 7
  %v3034 = vrot.slane %v1113, 7
  %v3035 = vrot.slane %v1114, 7
  %v3036 = vrot.slane %v1115, 7
  %v3037 = vrot.slane %v1116, 7
  %v3038 = vrot.slane %v1117, 7
  %v3039 = vrot.slane %v1118, 7
  %v3040 = vrot.slane %v1119, 7
  %v3041 = vrot.slane %v1120, 7
  %v3042 = vrot.slane %v1121, 7
  %v3043 = vrot.slane %v1122, 7
  %v3044 = vrot.slane %v1123, 7
  %v3045 = vrot.slane %v1124, 7
  %v3046 = vrot.slane %v1125, 7
  %v3047 = vrot.slane %v1126, 7
  %v3048 = vrot.slane %v1127, 7
  %v3049 = vrot.slane %v1128, 7
  %v3050 = vrot.slane %v1129, 7
  %v3051 = vrot.slane %v1130, 7
  %v3052 = vrot.slane %v1131, 7
  %v3053 = vrot.slane %v1132, 7
  %vm3054 = vcmp.lt.s32.totalorder %v1134, 1
  %v3055 = vsel %vm3054, %v3052, %v3053
  %v3056 = vsel %vm3054, %v3051, %v3052
  %v3057 = vsel %vm3054, %v3050, %v3051
  %v3058 = vsel %vm3054, %v3049, %v3050
  %v3059 = vsel %vm3054, %v3048, %v3049
  %v3060 = vsel %vm3054, %v3047, %v3048
  %v3061 = vsel %vm3054, %v3046, %v3047
  %v3062 = vsel %vm3054, %v3045, %v3046
  %v3063 = vsel %vm3054, %v3044, %v3045
  %v3064 = vsel %vm3054, %v3043, %v3044
  %v3065 = vsel %vm3054, %v3042, %v3043
  %v3066 = vsel %vm3054, %v3041, %v3042
  %v3067 = vsel %vm3054, %v3040, %v3041
  %v3068 = vsel %vm3054, %v3039, %v3040
  %v3069 = vsel %vm3054, %v3038, %v3039
  %v3070 = vsel %vm3054, %v3037, %v3038
  %v3071 = vsel %vm3054, %v3036, %v3037
  %v3072 = vsel %vm3054, %v3035, %v3036
  %v3073 = vsel %vm3054, %v3034, %v3035
  %v3074 = vsel %vm3054, %v3033, %v3034
  %v3075 = vsel %vm3054, %v3032, %v3033
  %v3076 = vsel %vm3054, %v3031, %v3032
  %v3077 = vsel %vm3054, %v3030, %v3031
  %v3078 = vsel %vm3054, %v3029, %v3030
  %v3079 = vsel %vm3054, %v3028, %v3029
  %v3080 = vsel %vm3054, %v3027, %v3028
  %v3081 = vsel %vm3054, %v3026, %v3027
  %v3082 = vsel %vm3054, %v3025, %v3026
  %v3083 = vsel %vm3054, %v3024, %v3025
  %v3084 = vsel %vm3054, %v3023, %v3024
  %v3085 = vsel %vm3054, %v3022, %v3023
  %v3086 = vsel %vm3054, %v3021, %v3022
  %v3087 = vsel %vm3054, %v3020, %v3021
  %v3088 = vsel %vm3054, %v3019, %v3020
  %v3089 = vsel %vm3054, %v3018, %v3019
  %v3090 = vsel %vm3054, %v3017, %v3018
  %v3091 = vsel %vm3054, %v3016, %v3017
  %v3092 = vsel %vm3054, %v3015, %v3016
  %v3093 = vsel %vm3054, %v3014, %v3015
  %v3094 = vsel %vm3054, %v3013, %v3014
  %v3095 = vsel %vm3054, %v3012, %v3013
  %v3096 = vsel %vm3054, %v3011, %v3012
  %v3097 = vsel %vm3054, %v3010, %v3011
  %v3098 = vsel %vm3054, %v3009, %v3010
  %v3099 = vsel %vm3054, %v3008, %v3009
  %v3100 = vsel %vm3054, %v3007, %v3008
  %v3101 = vsel %vm3054, %v3006, %v3007
  %v3102 = vsel %vm3054, %v3005, %v3006
  %v3103 = vsel %vm3054, %v3004, %v3005
  %v3104 = vsel %vm3054, %v3003, %v3004
  %v3105 = vsel %vm3054, %v3002, %v3003
  %v3106 = vsel %vm3054, %v3001, %v3002
  %v3107 = vsel %vm3054, %v3000, %v3001
  %v3108 = vsel %vm3054, %v2999, %v3000
  %v3109 = vsel %vm3054, %v2998, %v2999
  %v3110 = vsel %vm3054, %v2997, %v2998
  %v3111 = vsel %vm3054, %v2996, %v2997
  %v3112 = vsel %vm3054, %v2995, %v2996
  %v3113 = vsel %vm3054, %v2994, %v2995
  %v3114 = vsel %vm3054, %v2993, %v2994
  %v3115 = vsel %vm3054, %v2992, %v2993
  %v3116 = vsel %vm3054, %v2991, %v2992
  %v3117 = vsel %vm3054, %v2990, %v2991
  %v3118 = vsel %vm3054, %v3053, %v2990
  %v3119 = vsel %vm2734, 1, 0
  %v3120 = vsel %vm2735, 1, 0
  %v3121 = vsel %vm2736, 1, 0
  %v3122 = vsel %vm2737, 1, 0
  %v3123 = vsel %vm2738, 1, 0
  %v3124 = vsel %vm2739, 1, 0
  %v3125 = vsel %vm2740, 1, 0
  %v3126 = vsel %vm2741, 1, 0
  %v3127 = vsel %vm2742, 1, 0
  %v3128 = vsel %vm2743, 1, 0
  %v3129 = vsel %vm2744, 1, 0
  %v3130 = vsel %vm2745, 1, 0
  %v3131 = vsel %vm2746, 1, 0
  %v3132 = vsel %vm2747, 1, 0
  %v3133 = vsel %vm2748, 1, 0
  %v3134 = vsel %vm2749, 1, 0
  %v3135 = vsel %vm2750, 1, 0
  %v3136 = vsel %vm2751, 1, 0
  %v3137 = vsel %vm2752, 1, 0
  %v3138 = vsel %vm2753, 1, 0
  %v3139 = vsel %vm2754, 1, 0
  %v3140 = vsel %vm2755, 1, 0
  %v3141 = vsel %vm2756, 1, 0
  %v3142 = vsel %vm2757, 1, 0
  %v3143 = vsel %vm2758, 1, 0
  %v3144 = vsel %vm2759, 1, 0
  %v3145 = vsel %vm2760, 1, 0
  %v3146 = vsel %vm2761, 1, 0
  %v3147 = vsel %vm2762, 1, 0
  %v3148 = vsel %vm2763, 1, 0
  %v3149 = vsel %vm2764, 1, 0
  %v3150 = vsel %vm2765, 1, 0
  %v3151 = vsel %vm2766, 1, 0
  %v3152 = vsel %vm2767, 1, 0
  %v3153 = vsel %vm2768, 1, 0
  %v3154 = vsel %vm2769, 1, 0
  %v3155 = vsel %vm2770, 1, 0
  %v3156 = vsel %vm2771, 1, 0
  %v3157 = vsel %vm2772, 1, 0
  %v3158 = vsel %vm2773, 1, 0
  %v3159 = vsel %vm2774, 1, 0
  %v3160 = vsel %vm2775, 1, 0
  %v3161 = vsel %vm2776, 1, 0
  %v3162 = vsel %vm2777, 1, 0
  %v3163 = vsel %vm2778, 1, 0
  %v3164 = vsel %vm2779, 1, 0
  %v3165 = vsel %vm2780, 1, 0
  %v3166 = vsel %vm2781, 1, 0
  %v3167 = vsel %vm2782, 1, 0
  %v3168 = vsel %vm2783, 1, 0
  %v3169 = vsel %vm2784, 1, 0
  %v3170 = vsel %vm2785, 1, 0
  %v3171 = vsel %vm2786, 1, 0
  %v3172 = vsel %vm2787, 1, 0
  %v3173 = vsel %vm2788, 1, 0
  %v3174 = vsel %vm2789, 1, 0
  %v3175 = vsel %vm2790, 1, 0
  %v3176 = vsel %vm2791, 1, 0
  %v3177 = vsel %vm2792, 1, 0
  %v3178 = vsel %vm2793, 1, 0
  %v3179 = vsel %vm2794, 1, 0
  %v3180 = vsel %vm2795, 1, 0
  %v3181 = vsel %vm2796, 1, 0
  %v3182 = vsel %vm2797, 1, 0
  %vm3183 = vcmp.eq.s32.totalorder %v3119, 1
  %vm3184 = vcmp.eq.s32.totalorder %v3120, 1
  %vm3185 = vcmp.eq.s32.totalorder %v3121, 1
  %vm3186 = vcmp.eq.s32.totalorder %v3122, 1
  %vm3187 = vcmp.eq.s32.totalorder %v3123, 1
  %vm3188 = vcmp.eq.s32.totalorder %v3124, 1
  %vm3189 = vcmp.eq.s32.totalorder %v3125, 1
  %vm3190 = vcmp.eq.s32.totalorder %v3126, 1
  %vm3191 = vcmp.eq.s32.totalorder %v3127, 1
  %vm3192 = vcmp.eq.s32.totalorder %v3128, 1
  %vm3193 = vcmp.eq.s32.totalorder %v3129, 1
  %vm3194 = vcmp.eq.s32.totalorder %v3130, 1
  %vm3195 = vcmp.eq.s32.totalorder %v3131, 1
  %vm3196 = vcmp.eq.s32.totalorder %v3132, 1
  %vm3197 = vcmp.eq.s32.totalorder %v3133, 1
  %vm3198 = vcmp.eq.s32.totalorder %v3134, 1
  %vm3199 = vcmp.eq.s32.totalorder %v3135, 1
  %vm3200 = vcmp.eq.s32.totalorder %v3136, 1
  %vm3201 = vcmp.eq.s32.totalorder %v3137, 1
  %vm3202 = vcmp.eq.s32.totalorder %v3138, 1
  %vm3203 = vcmp.eq.s32.totalorder %v3139, 1
  %vm3204 = vcmp.eq.s32.totalorder %v3140, 1
  %vm3205 = vcmp.eq.s32.totalorder %v3141, 1
  %vm3206 = vcmp.eq.s32.totalorder %v3142, 1
  %vm3207 = vcmp.eq.s32.totalorder %v3143, 1
  %vm3208 = vcmp.eq.s32.totalorder %v3144, 1
  %vm3209 = vcmp.eq.s32.totalorder %v3145, 1
  %vm3210 = vcmp.eq.s32.totalorder %v3146, 1
  %vm3211 = vcmp.eq.s32.totalorder %v3147, 1
  %vm3212 = vcmp.eq.s32.totalorder %v3148, 1
  %vm3213 = vcmp.eq.s32.totalorder %v3149, 1
  %vm3214 = vcmp.eq.s32.totalorder %v3150, 1
  %vm3215 = vcmp.eq.s32.totalorder %v3151, 1
  %vm3216 = vcmp.eq.s32.totalorder %v3152, 1
  %vm3217 = vcmp.eq.s32.totalorder %v3153, 1
  %vm3218 = vcmp.eq.s32.totalorder %v3154, 1
  %vm3219 = vcmp.eq.s32.totalorder %v3155, 1
  %vm3220 = vcmp.eq.s32.totalorder %v3156, 1
  %vm3221 = vcmp.eq.s32.totalorder %v3157, 1
  %vm3222 = vcmp.eq.s32.totalorder %v3158, 1
  %vm3223 = vcmp.eq.s32.totalorder %v3159, 1
  %vm3224 = vcmp.eq.s32.totalorder %v3160, 1
  %vm3225 = vcmp.eq.s32.totalorder %v3161, 1
  %vm3226 = vcmp.eq.s32.totalorder %v3162, 1
  %vm3227 = vcmp.eq.s32.totalorder %v3163, 1
  %vm3228 = vcmp.eq.s32.totalorder %v3164, 1
  %vm3229 = vcmp.eq.s32.totalorder %v3165, 1
  %vm3230 = vcmp.eq.s32.totalorder %v3166, 1
  %vm3231 = vcmp.eq.s32.totalorder %v3167, 1
  %vm3232 = vcmp.eq.s32.totalorder %v3168, 1
  %vm3233 = vcmp.eq.s32.totalorder %v3169, 1
  %vm3234 = vcmp.eq.s32.totalorder %v3170, 1
  %vm3235 = vcmp.eq.s32.totalorder %v3171, 1
  %vm3236 = vcmp.eq.s32.totalorder %v3172, 1
  %vm3237 = vcmp.eq.s32.totalorder %v3173, 1
  %vm3238 = vcmp.eq.s32.totalorder %v3174, 1
  %vm3239 = vcmp.eq.s32.totalorder %v3175, 1
  %vm3240 = vcmp.eq.s32.totalorder %v3176, 1
  %vm3241 = vcmp.eq.s32.totalorder %v3177, 1
  %vm3242 = vcmp.eq.s32.totalorder %v3178, 1
  %vm3243 = vcmp.eq.s32.totalorder %v3179, 1
  %vm3244 = vcmp.eq.s32.totalorder %v3180, 1
  %vm3245 = vcmp.eq.s32.totalorder %v3181, 1
  %vm3246 = vcmp.eq.s32.totalorder %v3182, 1
  %v3247 = vsel %vm3183, %v3118, 0.0
  %v3248 = vsel %vm3184, %v3117, 0.0
  %v3249 = vsel %vm3185, %v3116, 0.0
  %v3250 = vsel %vm3186, %v3115, 0.0
  %v3251 = vsel %vm3187, %v3114, 0.0
  %v3252 = vsel %vm3188, %v3113, 0.0
  %v3253 = vsel %vm3189, %v3112, 0.0
  %v3254 = vsel %vm3190, %v3111, 0.0
  %v3255 = vsel %vm3191, %v3110, 0.0
  %v3256 = vsel %vm3192, %v3109, 0.0
  %v3257 = vsel %vm3193, %v3108, 0.0
  %v3258 = vsel %vm3194, %v3107, 0.0
  %v3259 = vsel %vm3195, %v3106, 0.0
  %v3260 = vsel %vm3196, %v3105, 0.0
  %v3261 = vsel %vm3197, %v3104, 0.0
  %v3262 = vsel %vm3198, %v3103, 0.0
  %v3263 = vsel %vm3199, %v3102, 0.0
  %v3264 = vsel %vm3200, %v3101, 0.0
  %v3265 = vsel %vm3201, %v3100, 0.0
  %v3266 = vsel %vm3202, %v3099, 0.0
  %v3267 = vsel %vm3203, %v3098, 0.0
  %v3268 = vsel %vm3204, %v3097, 0.0
  %v3269 = vsel %vm3205, %v3096, 0.0
  %v3270 = vsel %vm3206, %v3095, 0.0
  %v3271 = vsel %vm3207, %v3094, 0.0
  %v3272 = vsel %vm3208, %v3093, 0.0
  %v3273 = vsel %vm3209, %v3092, 0.0
  %v3274 = vsel %vm3210, %v3091, 0.0
  %v3275 = vsel %vm3211, %v3090, 0.0
  %v3276 = vsel %vm3212, %v3089, 0.0
  %v3277 = vsel %vm3213, %v3088, 0.0
  %v3278 = vsel %vm3214, %v3087, 0.0
  %v3279 = vsel %vm3215, %v3086, 0.0
  %v3280 = vsel %vm3216, %v3085, 0.0
  %v3281 = vsel %vm3217, %v3084, 0.0
  %v3282 = vsel %vm3218, %v3083, 0.0
  %v3283 = vsel %vm3219, %v3082, 0.0
  %v3284 = vsel %vm3220, %v3081, 0.0
  %v3285 = vsel %vm3221, %v3080, 0.0
  %v3286 = vsel %vm3222, %v3079, 0.0
  %v3287 = vsel %vm3223, %v3078, 0.0
  %v3288 = vsel %vm3224, %v3077, 0.0
  %v3289 = vsel %vm3225, %v3076, 0.0
  %v3290 = vsel %vm3226, %v3075, 0.0
  %v3291 = vsel %vm3227, %v3074, 0.0
  %v3292 = vsel %vm3228, %v3073, 0.0
  %v3293 = vsel %vm3229, %v3072, 0.0
  %v3294 = vsel %vm3230, %v3071, 0.0
  %v3295 = vsel %vm3231, %v3070, 0.0
  %v3296 = vsel %vm3232, %v3069, 0.0
  %v3297 = vsel %vm3233, %v3068, 0.0
  %v3298 = vsel %vm3234, %v3067, 0.0
  %v3299 = vsel %vm3235, %v3066, 0.0
  %v3300 = vsel %vm3236, %v3065, 0.0
  %v3301 = vsel %vm3237, %v3064, 0.0
  %v3302 = vsel %vm3238, %v3063, 0.0
  %v3303 = vsel %vm3239, %v3062, 0.0
  %v3304 = vsel %vm3240, %v3061, 0.0
  %v3305 = vsel %vm3241, %v3060, 0.0
  %v3306 = vsel %vm3242, %v3059, 0.0
  %v3307 = vsel %vm3243, %v3058, 0.0
  %v3308 = vsel %vm3244, %v3057, 0.0
  %v3309 = vsel %vm3245, %v3056, 0.0
  %v3310 = vsel %vm3246, %v3055, 0.0
  %v3311 = vrot.slane %v1069, 1
  %v3312 = vrot.slane %v1070, 1
  %v3313 = vrot.slane %v1071, 1
  %v3314 = vrot.slane %v1072, 1
  %v3315 = vrot.slane %v1073, 1
  %v3316 = vrot.slane %v1074, 1
  %v3317 = vrot.slane %v1075, 1
  %v3318 = vrot.slane %v1076, 1
  %v3319 = vrot.slane %v1077, 1
  %v3320 = vrot.slane %v1078, 1
  %v3321 = vrot.slane %v1079, 1
  %v3322 = vrot.slane %v1080, 1
  %v3323 = vrot.slane %v1081, 1
  %v3324 = vrot.slane %v1082, 1
  %v3325 = vrot.slane %v1083, 1
  %v3326 = vrot.slane %v1084, 1
  %v3327 = vrot.slane %v1085, 1
  %v3328 = vrot.slane %v1086, 1
  %v3329 = vrot.slane %v1087, 1
  %v3330 = vrot.slane %v1088, 1
  %v3331 = vrot.slane %v1089, 1
  %v3332 = vrot.slane %v1090, 1
  %v3333 = vrot.slane %v1091, 1
  %v3334 = vrot.slane %v1092, 1
  %v3335 = vrot.slane %v1093, 1
  %v3336 = vrot.slane %v1094, 1
  %v3337 = vrot.slane %v1095, 1
  %v3338 = vrot.slane %v1096, 1
  %v3339 = vrot.slane %v1097, 1
  %v3340 = vrot.slane %v1098, 1
  %v3341 = vrot.slane %v1099, 1
  %v3342 = vrot.slane %v1100, 1
  %v3343 = vrot.slane %v1101, 1
  %v3344 = vrot.slane %v1102, 1
  %v3345 = vrot.slane %v1103, 1
  %v3346 = vrot.slane %v1104, 1
  %v3347 = vrot.slane %v1105, 1
  %v3348 = vrot.slane %v1106, 1
  %v3349 = vrot.slane %v1107, 1
  %v3350 = vrot.slane %v1108, 1
  %v3351 = vrot.slane %v1109, 1
  %v3352 = vrot.slane %v1110, 1
  %v3353 = vrot.slane %v1111, 1
  %v3354 = vrot.slane %v1112, 1
  %v3355 = vrot.slane %v1113, 1
  %v3356 = vrot.slane %v1114, 1
  %v3357 = vrot.slane %v1115, 1
  %v3358 = vrot.slane %v1116, 1
  %v3359 = vrot.slane %v1117, 1
  %v3360 = vrot.slane %v1118, 1
  %v3361 = vrot.slane %v1119, 1
  %v3362 = vrot.slane %v1120, 1
  %v3363 = vrot.slane %v1121, 1
  %v3364 = vrot.slane %v1122, 1
  %v3365 = vrot.slane %v1123, 1
  %v3366 = vrot.slane %v1124, 1
  %v3367 = vrot.slane %v1125, 1
  %v3368 = vrot.slane %v1126, 1
  %v3369 = vrot.slane %v1127, 1
  %v3370 = vrot.slane %v1128, 1
  %v3371 = vrot.slane %v1129, 1
  %v3372 = vrot.slane %v1130, 1
  %v3373 = vrot.slane %v1131, 1
  %v3374 = vrot.slane %v1132, 1
  %vm3375 = vcmp.lt.s32.totalorder %v1134, 7
  %v3376 = vsel %vm3375, %v3373, %v3374
  %v3377 = vsel %vm3375, %v3372, %v3373
  %v3378 = vsel %vm3375, %v3371, %v3372
  %v3379 = vsel %vm3375, %v3370, %v3371
  %v3380 = vsel %vm3375, %v3369, %v3370
  %v3381 = vsel %vm3375, %v3368, %v3369
  %v3382 = vsel %vm3375, %v3367, %v3368
  %v3383 = vsel %vm3375, %v3366, %v3367
  %v3384 = vsel %vm3375, %v3365, %v3366
  %v3385 = vsel %vm3375, %v3364, %v3365
  %v3386 = vsel %vm3375, %v3363, %v3364
  %v3387 = vsel %vm3375, %v3362, %v3363
  %v3388 = vsel %vm3375, %v3361, %v3362
  %v3389 = vsel %vm3375, %v3360, %v3361
  %v3390 = vsel %vm3375, %v3359, %v3360
  %v3391 = vsel %vm3375, %v3358, %v3359
  %v3392 = vsel %vm3375, %v3357, %v3358
  %v3393 = vsel %vm3375, %v3356, %v3357
  %v3394 = vsel %vm3375, %v3355, %v3356
  %v3395 = vsel %vm3375, %v3354, %v3355
  %v3396 = vsel %vm3375, %v3353, %v3354
  %v3397 = vsel %vm3375, %v3352, %v3353
  %v3398 = vsel %vm3375, %v3351, %v3352
  %v3399 = vsel %vm3375, %v3350, %v3351
  %v3400 = vsel %vm3375, %v3349, %v3350
  %v3401 = vsel %vm3375, %v3348, %v3349
  %v3402 = vsel %vm3375, %v3347, %v3348
  %v3403 = vsel %vm3375, %v3346, %v3347
  %v3404 = vsel %vm3375, %v3345, %v3346
  %v3405 = vsel %vm3375, %v3344, %v3345
  %v3406 = vsel %vm3375, %v3343, %v3344
  %v3407 = vsel %vm3375, %v3342, %v3343
  %v3408 = vsel %vm3375, %v3341, %v3342
  %v3409 = vsel %vm3375, %v3340, %v3341
  %v3410 = vsel %vm3375, %v3339, %v3340
  %v3411 = vsel %vm3375, %v3338, %v3339
  %v3412 = vsel %vm3375, %v3337, %v3338
  %v3413 = vsel %vm3375, %v3336, %v3337
  %v3414 = vsel %vm3375, %v3335, %v3336
  %v3415 = vsel %vm3375, %v3334, %v3335
  %v3416 = vsel %vm3375, %v3333, %v3334
  %v3417 = vsel %vm3375, %v3332, %v3333
  %v3418 = vsel %vm3375, %v3331, %v3332
  %v3419 = vsel %vm3375, %v3330, %v3331
  %v3420 = vsel %vm3375, %v3329, %v3330
  %v3421 = vsel %vm3375, %v3328, %v3329
  %v3422 = vsel %vm3375, %v3327, %v3328
  %v3423 = vsel %vm3375, %v3326, %v3327
  %v3424 = vsel %vm3375, %v3325, %v3326
  %v3425 = vsel %vm3375, %v3324, %v3325
  %v3426 = vsel %vm3375, %v3323, %v3324
  %v3427 = vsel %vm3375, %v3322, %v3323
  %v3428 = vsel %vm3375, %v3321, %v3322
  %v3429 = vsel %vm3375, %v3320, %v3321
  %v3430 = vsel %vm3375, %v3319, %v3320
  %v3431 = vsel %vm3375, %v3318, %v3319
  %v3432 = vsel %vm3375, %v3317, %v3318
  %v3433 = vsel %vm3375, %v3316, %v3317
  %v3434 = vsel %vm3375, %v3315, %v3316
  %v3435 = vsel %vm3375, %v3314, %v3315
  %v3436 = vsel %vm3375, %v3313, %v3314
  %v3437 = vsel %vm3375, %v3312, %v3313
  %v3438 = vsel %vm3375, %v3311, %v3312
  %v3439 = vsel %vm3375, %v3374, %v3311
  %v3440 = vsel %vm2798, 1, 0
  %v3441 = vsel %vm2799, 1, 0
  %v3442 = vsel %vm2800, 1, 0
  %v3443 = vsel %vm2801, 1, 0
  %v3444 = vsel %vm2802, 1, 0
  %v3445 = vsel %vm2803, 1, 0
  %v3446 = vsel %vm2804, 1, 0
  %v3447 = vsel %vm2805, 1, 0
  %v3448 = vsel %vm2806, 1, 0
  %v3449 = vsel %vm2807, 1, 0
  %v3450 = vsel %vm2808, 1, 0
  %v3451 = vsel %vm2809, 1, 0
  %v3452 = vsel %vm2810, 1, 0
  %v3453 = vsel %vm2811, 1, 0
  %v3454 = vsel %vm2812, 1, 0
  %v3455 = vsel %vm2813, 1, 0
  %v3456 = vsel %vm2814, 1, 0
  %v3457 = vsel %vm2815, 1, 0
  %v3458 = vsel %vm2816, 1, 0
  %v3459 = vsel %vm2817, 1, 0
  %v3460 = vsel %vm2818, 1, 0
  %v3461 = vsel %vm2819, 1, 0
  %v3462 = vsel %vm2820, 1, 0
  %v3463 = vsel %vm2821, 1, 0
  %v3464 = vsel %vm2822, 1, 0
  %v3465 = vsel %vm2823, 1, 0
  %v3466 = vsel %vm2824, 1, 0
  %v3467 = vsel %vm2825, 1, 0
  %v3468 = vsel %vm2826, 1, 0
  %v3469 = vsel %vm2827, 1, 0
  %v3470 = vsel %vm2828, 1, 0
  %v3471 = vsel %vm2829, 1, 0
  %v3472 = vsel %vm2830, 1, 0
  %v3473 = vsel %vm2831, 1, 0
  %v3474 = vsel %vm2832, 1, 0
  %v3475 = vsel %vm2833, 1, 0
  %v3476 = vsel %vm2834, 1, 0
  %v3477 = vsel %vm2835, 1, 0
  %v3478 = vsel %vm2836, 1, 0
  %v3479 = vsel %vm2837, 1, 0
  %v3480 = vsel %vm2838, 1, 0
  %v3481 = vsel %vm2839, 1, 0
  %v3482 = vsel %vm2840, 1, 0
  %v3483 = vsel %vm2841, 1, 0
  %v3484 = vsel %vm2842, 1, 0
  %v3485 = vsel %vm2843, 1, 0
  %v3486 = vsel %vm2844, 1, 0
  %v3487 = vsel %vm2845, 1, 0
  %v3488 = vsel %vm2846, 1, 0
  %v3489 = vsel %vm2847, 1, 0
  %v3490 = vsel %vm2848, 1, 0
  %v3491 = vsel %vm2849, 1, 0
  %v3492 = vsel %vm2850, 1, 0
  %v3493 = vsel %vm2851, 1, 0
  %v3494 = vsel %vm2852, 1, 0
  %v3495 = vsel %vm2853, 1, 0
  %v3496 = vsel %vm2854, 1, 0
  %v3497 = vsel %vm2855, 1, 0
  %v3498 = vsel %vm2856, 1, 0
  %v3499 = vsel %vm2857, 1, 0
  %v3500 = vsel %vm2858, 1, 0
  %v3501 = vsel %vm2859, 1, 0
  %v3502 = vsel %vm2860, 1, 0
  %v3503 = vsel %vm2861, 1, 0
  %vm3504 = vcmp.eq.s32.totalorder %v3440, 1
  %vm3505 = vcmp.eq.s32.totalorder %v3441, 1
  %vm3506 = vcmp.eq.s32.totalorder %v3442, 1
  %vm3507 = vcmp.eq.s32.totalorder %v3443, 1
  %vm3508 = vcmp.eq.s32.totalorder %v3444, 1
  %vm3509 = vcmp.eq.s32.totalorder %v3445, 1
  %vm3510 = vcmp.eq.s32.totalorder %v3446, 1
  %vm3511 = vcmp.eq.s32.totalorder %v3447, 1
  %vm3512 = vcmp.eq.s32.totalorder %v3448, 1
  %vm3513 = vcmp.eq.s32.totalorder %v3449, 1
  %vm3514 = vcmp.eq.s32.totalorder %v3450, 1
  %vm3515 = vcmp.eq.s32.totalorder %v3451, 1
  %vm3516 = vcmp.eq.s32.totalorder %v3452, 1
  %vm3517 = vcmp.eq.s32.totalorder %v3453, 1
  %vm3518 = vcmp.eq.s32.totalorder %v3454, 1
  %vm3519 = vcmp.eq.s32.totalorder %v3455, 1
  %vm3520 = vcmp.eq.s32.totalorder %v3456, 1
  %vm3521 = vcmp.eq.s32.totalorder %v3457, 1
  %vm3522 = vcmp.eq.s32.totalorder %v3458, 1
  %vm3523 = vcmp.eq.s32.totalorder %v3459, 1
  %vm3524 = vcmp.eq.s32.totalorder %v3460, 1
  %vm3525 = vcmp.eq.s32.totalorder %v3461, 1
  %vm3526 = vcmp.eq.s32.totalorder %v3462, 1
  %vm3527 = vcmp.eq.s32.totalorder %v3463, 1
  %vm3528 = vcmp.eq.s32.totalorder %v3464, 1
  %vm3529 = vcmp.eq.s32.totalorder %v3465, 1
  %vm3530 = vcmp.eq.s32.totalorder %v3466, 1
  %vm3531 = vcmp.eq.s32.totalorder %v3467, 1
  %vm3532 = vcmp.eq.s32.totalorder %v3468, 1
  %vm3533 = vcmp.eq.s32.totalorder %v3469, 1
  %vm3534 = vcmp.eq.s32.totalorder %v3470, 1
  %vm3535 = vcmp.eq.s32.totalorder %v3471, 1
  %vm3536 = vcmp.eq.s32.totalorder %v3472, 1
  %vm3537 = vcmp.eq.s32.totalorder %v3473, 1
  %vm3538 = vcmp.eq.s32.totalorder %v3474, 1
  %vm3539 = vcmp.eq.s32.totalorder %v3475, 1
  %vm3540 = vcmp.eq.s32.totalorder %v3476, 1
  %vm3541 = vcmp.eq.s32.totalorder %v3477, 1
  %vm3542 = vcmp.eq.s32.totalorder %v3478, 1
  %vm3543 = vcmp.eq.s32.totalorder %v3479, 1
  %vm3544 = vcmp.eq.s32.totalorder %v3480, 1
  %vm3545 = vcmp.eq.s32.totalorder %v3481, 1
  %vm3546 = vcmp.eq.s32.totalorder %v3482, 1
  %vm3547 = vcmp.eq.s32.totalorder %v3483, 1
  %vm3548 = vcmp.eq.s32.totalorder %v3484, 1
  %vm3549 = vcmp.eq.s32.totalorder %v3485, 1
  %vm3550 = vcmp.eq.s32.totalorder %v3486, 1
  %vm3551 = vcmp.eq.s32.totalorder %v3487, 1
  %vm3552 = vcmp.eq.s32.totalorder %v3488, 1
  %vm3553 = vcmp.eq.s32.totalorder %v3489, 1
  %vm3554 = vcmp.eq.s32.totalorder %v3490, 1
  %vm3555 = vcmp.eq.s32.totalorder %v3491, 1
  %vm3556 = vcmp.eq.s32.totalorder %v3492, 1
  %vm3557 = vcmp.eq.s32.totalorder %v3493, 1
  %vm3558 = vcmp.eq.s32.totalorder %v3494, 1
  %vm3559 = vcmp.eq.s32.totalorder %v3495, 1
  %vm3560 = vcmp.eq.s32.totalorder %v3496, 1
  %vm3561 = vcmp.eq.s32.totalorder %v3497, 1
  %vm3562 = vcmp.eq.s32.totalorder %v3498, 1
  %vm3563 = vcmp.eq.s32.totalorder %v3499, 1
  %vm3564 = vcmp.eq.s32.totalorder %v3500, 1
  %vm3565 = vcmp.eq.s32.totalorder %v3501, 1
  %vm3566 = vcmp.eq.s32.totalorder %v3502, 1
  %vm3567 = vcmp.eq.s32.totalorder %v3503, 1
  %v3568 = vsel %vm3504, %v3438, 0.0
  %v3569 = vsel %vm3505, %v3437, 0.0
  %v3570 = vsel %vm3506, %v3436, 0.0
  %v3571 = vsel %vm3507, %v3435, 0.0
  %v3572 = vsel %vm3508, %v3434, 0.0
  %v3573 = vsel %vm3509, %v3433, 0.0
  %v3574 = vsel %vm3510, %v3432, 0.0
  %v3575 = vsel %vm3511, %v3431, 0.0
  %v3576 = vsel %vm3512, %v3430, 0.0
  %v3577 = vsel %vm3513, %v3429, 0.0
  %v3578 = vsel %vm3514, %v3428, 0.0
  %v3579 = vsel %vm3515, %v3427, 0.0
  %v3580 = vsel %vm3516, %v3426, 0.0
  %v3581 = vsel %vm3517, %v3425, 0.0
  %v3582 = vsel %vm3518, %v3424, 0.0
  %v3583 = vsel %vm3519, %v3423, 0.0
  %v3584 = vsel %vm3520, %v3422, 0.0
  %v3585 = vsel %vm3521, %v3421, 0.0
  %v3586 = vsel %vm3522, %v3420, 0.0
  %v3587 = vsel %vm3523, %v3419, 0.0
  %v3588 = vsel %vm3524, %v3418, 0.0
  %v3589 = vsel %vm3525, %v3417, 0.0
  %v3590 = vsel %vm3526, %v3416, 0.0
  %v3591 = vsel %vm3527, %v3415, 0.0
  %v3592 = vsel %vm3528, %v3414, 0.0
  %v3593 = vsel %vm3529, %v3413, 0.0
  %v3594 = vsel %vm3530, %v3412, 0.0
  %v3595 = vsel %vm3531, %v3411, 0.0
  %v3596 = vsel %vm3532, %v3410, 0.0
  %v3597 = vsel %vm3533, %v3409, 0.0
  %v3598 = vsel %vm3534, %v3408, 0.0
  %v3599 = vsel %vm3535, %v3407, 0.0
  %v3600 = vsel %vm3536, %v3406, 0.0
  %v3601 = vsel %vm3537, %v3405, 0.0
  %v3602 = vsel %vm3538, %v3404, 0.0
  %v3603 = vsel %vm3539, %v3403, 0.0
  %v3604 = vsel %vm3540, %v3402, 0.0
  %v3605 = vsel %vm3541, %v3401, 0.0
  %v3606 = vsel %vm3542, %v3400, 0.0
  %v3607 = vsel %vm3543, %v3399, 0.0
  %v3608 = vsel %vm3544, %v3398, 0.0
  %v3609 = vsel %vm3545, %v3397, 0.0
  %v3610 = vsel %vm3546, %v3396, 0.0
  %v3611 = vsel %vm3547, %v3395, 0.0
  %v3612 = vsel %vm3548, %v3394, 0.0
  %v3613 = vsel %vm3549, %v3393, 0.0
  %v3614 = vsel %vm3550, %v3392, 0.0
  %v3615 = vsel %vm3551, %v3391, 0.0
  %v3616 = vsel %vm3552, %v3390, 0.0
  %v3617 = vsel %vm3553, %v3389, 0.0
  %v3618 = vsel %vm3554, %v3388, 0.0
  %v3619 = vsel %vm3555, %v3387, 0.0
  %v3620 = vsel %vm3556, %v3386, 0.0
  %v3621 = vsel %vm3557, %v3385, 0.0
  %v3622 = vsel %vm3558, %v3384, 0.0
  %v3623 = vsel %vm3559, %v3383, 0.0
  %v3624 = vsel %vm3560, %v3382, 0.0
  %v3625 = vsel %vm3561, %v3381, 0.0
  %v3626 = vsel %vm3562, %v3380, 0.0
  %v3627 = vsel %vm3563, %v3379, 0.0
  %v3628 = vsel %vm3564, %v3378, 0.0
  %v3629 = vsel %vm3565, %v3377, 0.0
  %v3630 = vsel %vm3566, %v3376, 0.0
  %v3631 = vsel %vm3567, %v3439, 0.0
  %3696 = vrot.lane.b32.xlu0 %v1069, 4
  %v3697 = vpop.permute.xlu0 %3696
  %3698 = vrot.lane.b32.xlu0 %v1070, 4
  %v3699 = vpop.permute.xlu0 %3698
  %3700 = vrot.lane.b32.xlu0 %v1071, 4
  %v3701 = vpop.permute.xlu0 %3700
  %3702 = vrot.lane.b32.xlu0 %v1072, 4
  %v3703 = vpop.permute.xlu0 %3702
  %3704 = vrot.lane.b32.xlu0 %v1073, 4
  %v3705 = vpop.permute.xlu0 %3704
  %3706 = vrot.lane.b32.xlu0 %v1074, 4
  %v3707 = vpop.permute.xlu0 %3706
  %3708 = vrot.lane.b32.xlu0 %v1075, 4
  %v3709 = vpop.permute.xlu0 %3708
  %3710 = vrot.lane.b32.xlu0 %v1076, 4
  %v3711 = vpop.permute.xlu0 %3710
  %3712 = vrot.lane.b32.xlu0 %v1077, 4
  %v3713 = vpop.permute.xlu0 %3712
  %3714 = vrot.lane.b32.xlu0 %v1078, 4
  %v3715 = vpop.permute.xlu0 %3714
  %3716 = vrot.lane.b32.xlu0 %v1079, 4
  %v3717 = vpop.permute.xlu0 %3716
  %3718 = vrot.lane.b32.xlu0 %v1080, 4
  %v3719 = vpop.permute.xlu0 %3718
  %3720 = vrot.lane.b32.xlu0 %v1081, 4
  %v3721 = vpop.permute.xlu0 %3720
  %3722 = vrot.lane.b32.xlu0 %v1082, 4
  %v3723 = vpop.permute.xlu0 %3722
  %3724 = vrot.lane.b32.xlu0 %v1083, 4
  %v3725 = vpop.permute.xlu0 %3724
  %3726 = vrot.lane.b32.xlu0 %v1084, 4
  %v3727 = vpop.permute.xlu0 %3726
  %3728 = vrot.lane.b32.xlu0 %v1085, 4
  %v3729 = vpop.permute.xlu0 %3728
  %3730 = vrot.lane.b32.xlu0 %v1086, 4
  %v3731 = vpop.permute.xlu0 %3730
  %3732 = vrot.lane.b32.xlu0 %v1087, 4
  %v3733 = vpop.permute.xlu0 %3732
  %3734 = vrot.lane.b32.xlu0 %v1088, 4
  %v3735 = vpop.permute.xlu0 %3734
  %3736 = vrot.lane.b32.xlu0 %v1089, 4
  %v3737 = vpop.permute.xlu0 %3736
  %3738 = vrot.lane.b32.xlu0 %v1090, 4
  %v3739 = vpop.permute.xlu0 %3738
  %3740 = vrot.lane.b32.xlu0 %v1091, 4
  %v3741 = vpop.permute.xlu0 %3740
  %3742 = vrot.lane.b32.xlu0 %v1092, 4
  %v3743 = vpop.permute.xlu0 %3742
  %3744 = vrot.lane.b32.xlu0 %v1093, 4
  %v3745 = vpop.permute.xlu0 %3744
  %3746 = vrot.lane.b32.xlu0 %v1094, 4
  %v3747 = vpop.permute.xlu0 %3746
  %3748 = vrot.lane.b32.xlu0 %v1095, 4
  %v3749 = vpop.permute.xlu0 %3748
  %3750 = vrot.lane.b32.xlu0 %v1096, 4
  %v3751 = vpop.permute.xlu0 %3750
  %3752 = vrot.lane.b32.xlu0 %v1097, 4
  %v3753 = vpop.permute.xlu0 %3752
  %3754 = vrot.lane.b32.xlu0 %v1098, 4
  %v3755 = vpop.permute.xlu0 %3754
  %3756 = vrot.lane.b32.xlu0 %v1099, 4
  %v3757 = vpop.permute.xlu0 %3756
  %3758 = vrot.lane.b32.xlu0 %v1100, 4
  %v3759 = vpop.permute.xlu0 %3758
  %3760 = vrot.lane.b32.xlu0 %v1101, 4
  %v3761 = vpop.permute.xlu0 %3760
  %3762 = vrot.lane.b32.xlu0 %v1102, 4
  %v3763 = vpop.permute.xlu0 %3762
  %3764 = vrot.lane.b32.xlu0 %v1103, 4
  %v3765 = vpop.permute.xlu0 %3764
  %3766 = vrot.lane.b32.xlu0 %v1104, 4
  %v3767 = vpop.permute.xlu0 %3766
  %3768 = vrot.lane.b32.xlu0 %v1105, 4
  %v3769 = vpop.permute.xlu0 %3768
  %3770 = vrot.lane.b32.xlu0 %v1106, 4
  %v3771 = vpop.permute.xlu0 %3770
  %3772 = vrot.lane.b32.xlu0 %v1107, 4
  %v3773 = vpop.permute.xlu0 %3772
  %3774 = vrot.lane.b32.xlu0 %v1108, 4
  %v3775 = vpop.permute.xlu0 %3774
  %3776 = vrot.lane.b32.xlu0 %v1109, 4
  %v3777 = vpop.permute.xlu0 %3776
  %3778 = vrot.lane.b32.xlu0 %v1110, 4
  %v3779 = vpop.permute.xlu0 %3778
  %3780 = vrot.lane.b32.xlu0 %v1111, 4
  %v3781 = vpop.permute.xlu0 %3780
  %3782 = vrot.lane.b32.xlu0 %v1112, 4
  %v3783 = vpop.permute.xlu0 %3782
  %3784 = vrot.lane.b32.xlu0 %v1113, 4
  %v3785 = vpop.permute.xlu0 %3784
  %3786 = vrot.lane.b32.xlu0 %v1114, 4
  %v3787 = vpop.permute.xlu0 %3786
  %3788 = vrot.lane.b32.xlu0 %v1115, 4
  %v3789 = vpop.permute.xlu0 %3788
  %3790 = vrot.lane.b32.xlu0 %v1116, 4
  %v3791 = vpop.permute.xlu0 %3790
  %3792 = vrot.lane.b32.xlu0 %v1117, 4
  %v3793 = vpop.permute.xlu0 %3792
  %3794 = vrot.lane.b32.xlu0 %v1118, 4
  %v3795 = vpop.permute.xlu0 %3794
  %3796 = vrot.lane.b32.xlu0 %v1119, 4
  %v3797 = vpop.permute.xlu0 %3796
  %3798 = vrot.lane.b32.xlu0 %v1120, 4
  %v3799 = vpop.permute.xlu0 %3798
  %3800 = vrot.lane.b32.xlu0 %v1121, 4
  %v3801 = vpop.permute.xlu0 %3800
  %3802 = vrot.lane.b32.xlu0 %v1122, 4
  %v3803 = vpop.permute.xlu0 %3802
  %3804 = vrot.lane.b32.xlu0 %v1123, 4
  %v3805 = vpop.permute.xlu0 %3804
  %3806 = vrot.lane.b32.xlu0 %v1124, 4
  %v3807 = vpop.permute.xlu0 %3806
  %3808 = vrot.lane.b32.xlu0 %v1125, 4
  %v3809 = vpop.permute.xlu0 %3808
  %3810 = vrot.lane.b32.xlu0 %v1126, 4
  %v3811 = vpop.permute.xlu0 %3810
  %3812 = vrot.lane.b32.xlu0 %v1127, 4
  %v3813 = vpop.permute.xlu0 %3812
  %3814 = vrot.lane.b32.xlu0 %v1128, 4
  %v3815 = vpop.permute.xlu0 %3814
  %3816 = vrot.lane.b32.xlu0 %v1129, 4
  %v3817 = vpop.permute.xlu0 %3816
  %3818 = vrot.lane.b32.xlu0 %v1130, 4
  %v3819 = vpop.permute.xlu0 %3818
  %3820 = vrot.lane.b32.xlu0 %v1131, 4
  %v3821 = vpop.permute.xlu0 %3820
  %3822 = vrot.lane.b32.xlu0 %v1132, 4
  %v3823 = vpop.permute.xlu0 %3822
  %3952 = vrot.lane.b32.xlu0 %v3568, 8
  %v3953 = vpop.permute.xlu0 %3952
  %3954 = vrot.lane.b32.xlu0 %v3569, 8
  %v3955 = vpop.permute.xlu0 %3954
  %3956 = vrot.lane.b32.xlu0 %v3570, 8
  %v3957 = vpop.permute.xlu0 %3956
  %3958 = vrot.lane.b32.xlu0 %v3571, 8
  %v3959 = vpop.permute.xlu0 %3958
  %3960 = vrot.lane.b32.xlu0 %v3572, 8
  %v3961 = vpop.permute.xlu0 %3960
  %3962 = vrot.lane.b32.xlu0 %v3573, 8
  %v3963 = vpop.permute.xlu0 %3962
  %3964 = vrot.lane.b32.xlu0 %v3574, 8
  %v3965 = vpop.permute.xlu0 %3964
  %3966 = vrot.lane.b32.xlu0 %v3575, 8
  %v3967 = vpop.permute.xlu0 %3966
  %3968 = vrot.lane.b32.xlu0 %v3576, 8
  %v3969 = vpop.permute.xlu0 %3968
  %3970 = vrot.lane.b32.xlu0 %v3577, 8
  %v3971 = vpop.permute.xlu0 %3970
  %3972 = vrot.lane.b32.xlu0 %v3578, 8
  %v3973 = vpop.permute.xlu0 %3972
  %3974 = vrot.lane.b32.xlu0 %v3579, 8
  %v3975 = vpop.permute.xlu0 %3974
  %3976 = vrot.lane.b32.xlu0 %v3580, 8
  %v3977 = vpop.permute.xlu0 %3976
  %3978 = vrot.lane.b32.xlu0 %v3581, 8
  %v3979 = vpop.permute.xlu0 %3978
  %3980 = vrot.lane.b32.xlu0 %v3582, 8
  %v3981 = vpop.permute.xlu0 %3980
  %3982 = vrot.lane.b32.xlu0 %v3583, 8
  %v3983 = vpop.permute.xlu0 %3982
  %3984 = vrot.lane.b32.xlu0 %v3584, 8
  %v3985 = vpop.permute.xlu0 %3984
  %3986 = vrot.lane.b32.xlu0 %v3585, 8
  %v3987 = vpop.permute.xlu0 %3986
  %3988 = vrot.lane.b32.xlu0 %v3586, 8
  %v3989 = vpop.permute.xlu0 %3988
  %3990 = vrot.lane.b32.xlu0 %v3587, 8
  %v3991 = vpop.permute.xlu0 %3990
  %3992 = vrot.lane.b32.xlu0 %v3588, 8
  %v3993 = vpop.permute.xlu0 %3992
  %3994 = vrot.lane.b32.xlu0 %v3589, 8
  %v3995 = vpop.permute.xlu0 %3994
  %3996 = vrot.lane.b32.xlu0 %v3590, 8
  %v3997 = vpop.permute.xlu0 %3996
  %3998 = vrot.lane.b32.xlu0 %v3591, 8
  %v3999 = vpop.permute.xlu0 %3998
  %4000 = vrot.lane.b32.xlu0 %v3592, 8
  %v4001 = vpop.permute.xlu0 %4000
  %4002 = vrot.lane.b32.xlu0 %v3593, 8
  %v4003 = vpop.permute.xlu0 %4002
  %4004 = vrot.lane.b32.xlu0 %v3594, 8
  %v4005 = vpop.permute.xlu0 %4004
  %4006 = vrot.lane.b32.xlu0 %v3595, 8
  %v4007 = vpop.permute.xlu0 %4006
  %4008 = vrot.lane.b32.xlu0 %v3596, 8
  %v4009 = vpop.permute.xlu0 %4008
  %4010 = vrot.lane.b32.xlu0 %v3597, 8
  %v4011 = vpop.permute.xlu0 %4010
  %4012 = vrot.lane.b32.xlu0 %v3598, 8
  %v4013 = vpop.permute.xlu0 %4012
  %4014 = vrot.lane.b32.xlu0 %v3599, 8
  %v4015 = vpop.permute.xlu0 %4014
  %4016 = vrot.lane.b32.xlu0 %v3600, 8
  %v4017 = vpop.permute.xlu0 %4016
  %4018 = vrot.lane.b32.xlu0 %v3601, 8
  %v4019 = vpop.permute.xlu0 %4018
  %4020 = vrot.lane.b32.xlu0 %v3602, 8
  %v4021 = vpop.permute.xlu0 %4020
  %4022 = vrot.lane.b32.xlu0 %v3603, 8
  %v4023 = vpop.permute.xlu0 %4022
  %4024 = vrot.lane.b32.xlu0 %v3604, 8
  %v4025 = vpop.permute.xlu0 %4024
  %4026 = vrot.lane.b32.xlu0 %v3605, 8
  %v4027 = vpop.permute.xlu0 %4026
  %4028 = vrot.lane.b32.xlu0 %v3606, 8
  %v4029 = vpop.permute.xlu0 %4028
  %4030 = vrot.lane.b32.xlu0 %v3607, 8
  %v4031 = vpop.permute.xlu0 %4030
  %4032 = vrot.lane.b32.xlu0 %v3608, 8
  %v4033 = vpop.permute.xlu0 %4032
  %4034 = vrot.lane.b32.xlu0 %v3609, 8
  %v4035 = vpop.permute.xlu0 %4034
  %4036 = vrot.lane.b32.xlu0 %v3610, 8
  %v4037 = vpop.permute.xlu0 %4036
  %4038 = vrot.lane.b32.xlu0 %v3611, 8
  %v4039 = vpop.permute.xlu0 %4038
  %4040 = vrot.lane.b32.xlu0 %v3612, 8
  %v4041 = vpop.permute.xlu0 %4040
  %4042 = vrot.lane.b32.xlu0 %v3613, 8
  %v4043 = vpop.permute.xlu0 %4042
  %4044 = vrot.lane.b32.xlu0 %v3614, 8
  %v4045 = vpop.permute.xlu0 %4044
  %4046 = vrot.lane.b32.xlu0 %v3615, 8
  %v4047 = vpop.permute.xlu0 %4046
  %4048 = vrot.lane.b32.xlu0 %v3616, 8
  %v4049 = vpop.permute.xlu0 %4048
  %4050 = vrot.lane.b32.xlu0 %v3617, 8
  %v4051 = vpop.permute.xlu0 %4050
  %4052 = vrot.lane.b32.xlu0 %v3618, 8
  %v4053 = vpop.permute.xlu0 %4052
  %4054 = vrot.lane.b32.xlu0 %v3619, 8
  %v4055 = vpop.permute.xlu0 %4054
  %4056 = vrot.lane.b32.xlu0 %v3620, 8
  %v4057 = vpop.permute.xlu0 %4056
  %4058 = vrot.lane.b32.xlu0 %v3621, 8
  %v4059 = vpop.permute.xlu0 %4058
  %4060 = vrot.lane.b32.xlu0 %v3622, 8
  %v4061 = vpop.permute.xlu0 %4060
  %4062 = vrot.lane.b32.xlu0 %v3623, 8
  %v4063 = vpop.permute.xlu0 %4062
  %4064 = vrot.lane.b32.xlu0 %v3624, 8
  %v4065 = vpop.permute.xlu0 %4064
  %4066 = vrot.lane.b32.xlu0 %v3625, 8
  %v4067 = vpop.permute.xlu0 %4066
  %4068 = vrot.lane.b32.xlu0 %v3626, 8
  %v4069 = vpop.permute.xlu0 %4068
  %4070 = vrot.lane.b32.xlu0 %v3627, 8
  %v4071 = vpop.permute.xlu0 %4070
  %4072 = vrot.lane.b32.xlu0 %v3628, 8
  %v4073 = vpop.permute.xlu0 %4072
  %4074 = vrot.lane.b32.xlu0 %v3629, 8
  %v4075 = vpop.permute.xlu0 %4074
  %4076 = vrot.lane.b32.xlu0 %v3630, 8
  %v4077 = vpop.permute.xlu0 %4076
  %4078 = vrot.lane.b32.xlu0 %v3631, 8
  %v4079 = vpop.permute.xlu0 %4078
  %vm4144 = vcmask 31744
  %v4145 = vsel %vm4144, %v3247, %v3697
  %v4146 = vsel %vm4144, %v3248, %v3699
  %v4147 = vsel %vm4144, %v3249, %v3701
  %v4148 = vsel %vm4144, %v3250, %v3703
  %v4149 = vsel %vm4144, %v3251, %v3705
  %v4150 = vsel %vm4144, %v3252, %v3707
  %v4151 = vsel %vm4144, %v3253, %v3709
  %v4152 = vsel %vm4144, %v3254, %v3711
  %v4153 = vsel %vm4144, %v3255, %v3713
  %v4154 = vsel %vm4144, %v3256, %v3715
  %v4155 = vsel %vm4144, %v3257, %v3717
  %v4156 = vsel %vm4144, %v3258, %v3719
  %v4157 = vsel %vm4144, %v3259, %v3721
  %v4158 = vsel %vm4144, %v3260, %v3723
  %v4159 = vsel %vm4144, %v3261, %v3725
  %v4160 = vsel %vm4144, %v3262, %v3727
  %v4161 = vsel %vm4144, %v3263, %v3729
  %v4162 = vsel %vm4144, %v3264, %v3731
  %v4163 = vsel %vm4144, %v3265, %v3733
  %v4164 = vsel %vm4144, %v3266, %v3735
  %v4165 = vsel %vm4144, %v3267, %v3737
  %v4166 = vsel %vm4144, %v3268, %v3739
  %v4167 = vsel %vm4144, %v3269, %v3741
  %v4168 = vsel %vm4144, %v3270, %v3743
  %v4169 = vsel %vm4144, %v3271, %v3745
  %v4170 = vsel %vm4144, %v3272, %v3747
  %v4171 = vsel %vm4144, %v3273, %v3749
  %v4172 = vsel %vm4144, %v3274, %v3751
  %v4173 = vsel %vm4144, %v3275, %v3753
  %v4174 = vsel %vm4144, %v3276, %v3755
  %v4175 = vsel %vm4144, %v3277, %v3757
  %v4176 = vsel %vm4144, %v3278, %v3759
  %v4177 = vsel %vm4144, %v3279, %v3761
  %v4178 = vsel %vm4144, %v3280, %v3763
  %v4179 = vsel %vm4144, %v3281, %v3765
  %v4180 = vsel %vm4144, %v3282, %v3767
  %v4181 = vsel %vm4144, %v3283, %v3769
  %v4182 = vsel %vm4144, %v3284, %v3771
  %v4183 = vsel %vm4144, %v3285, %v3773
  %v4184 = vsel %vm4144, %v3286, %v3775
  %v4185 = vsel %vm4144, %v3287, %v3777
  %v4186 = vsel %vm4144, %v3288, %v3779
  %v4187 = vsel %vm4144, %v3289, %v3781
  %v4188 = vsel %vm4144, %v3290, %v3783
  %v4189 = vsel %vm4144, %v3291, %v3785
  %v4190 = vsel %vm4144, %v3292, %v3787
  %v4191 = vsel %vm4144, %v3293, %v3789
  %v4192 = vsel %vm4144, %v3294, %v3791
  %v4193 = vsel %vm4144, %v3295, %v3793
  %v4194 = vsel %vm4144, %v3296, %v3795
  %v4195 = vsel %vm4144, %v3297, %v3797
  %v4196 = vsel %vm4144, %v3298, %v3799
  %v4197 = vsel %vm4144, %v3299, %v3801
  %v4198 = vsel %vm4144, %v3300, %v3803
  %v4199 = vsel %vm4144, %v3301, %v3805
  %v4200 = vsel %vm4144, %v3302, %v3807
  %v4201 = vsel %vm4144, %v3303, %v3809
  %v4202 = vsel %vm4144, %v3304, %v3811
  %v4203 = vsel %vm4144, %v3305, %v3813
  %v4204 = vsel %vm4144, %v3306, %v3815
  %v4205 = vsel %vm4144, %v3307, %v3817
  %v4206 = vsel %vm4144, %v3308, %v3819
  %v4207 = vsel %vm4144, %v3309, %v3821
  %v4208 = vsel %vm4144, %v3310, %v3823
  %vm4209 = vcmask 64512
  %v4210 = vsel %vm4209, %v4145, %v3953
  %v4211 = vsel %vm4209, %v4146, %v3955
  %v4212 = vsel %vm4209, %v4147, %v3957
  %v4213 = vsel %vm4209, %v4148, %v3959
  %v4214 = vsel %vm4209, %v4149, %v3961
  %v4215 = vsel %vm4209, %v4150, %v3963
  %v4216 = vsel %vm4209, %v4151, %v3965
  %v4217 = vsel %vm4209, %v4152, %v3967
  %v4218 = vsel %vm4209, %v4153, %v3969
  %v4219 = vsel %vm4209, %v4154, %v3971
  %v4220 = vsel %vm4209, %v4155, %v3973
  %v4221 = vsel %vm4209, %v4156, %v3975
  %v4222 = vsel %vm4209, %v4157, %v3977
  %v4223 = vsel %vm4209, %v4158, %v3979
  %v4224 = vsel %vm4209, %v4159, %v3981
  %v4225 = vsel %vm4209, %v4160, %v3983
  %v4226 = vsel %vm4209, %v4161, %v3985
  %v4227 = vsel %vm4209, %v4162, %v3987
  %v4228 = vsel %vm4209, %v4163, %v3989
  %v4229 = vsel %vm4209, %v4164, %v3991
  %v4230 = vsel %vm4209, %v4165, %v3993
  %v4231 = vsel %vm4209, %v4166, %v3995
  %v4232 = vsel %vm4209, %v4167, %v3997
  %v4233 = vsel %vm4209, %v4168, %v3999
  %v4234 = vsel %vm4209, %v4169, %v4001
  %v4235 = vsel %vm4209, %v4170, %v4003
  %v4236 = vsel %vm4209, %v4171, %v4005
  %v4237 = vsel %vm4209, %v4172, %v4007
  %v4238 = vsel %vm4209, %v4173, %v4009
  %v4239 = vsel %vm4209, %v4174, %v4011
  %v4240 = vsel %vm4209, %v4175, %v4013
  %v4241 = vsel %vm4209, %v4176, %v4015
  %v4242 = vsel %vm4209, %v4177, %v4017
  %v4243 = vsel %vm4209, %v4178, %v4019
  %v4244 = vsel %vm4209, %v4179, %v4021
  %v4245 = vsel %vm4209, %v4180, %v4023
  %v4246 = vsel %vm4209, %v4181, %v4025
  %v4247 = vsel %vm4209, %v4182, %v4027
  %v4248 = vsel %vm4209, %v4183, %v4029
  %v4249 = vsel %vm4209, %v4184, %v4031
  %v4250 = vsel %vm4209, %v4185, %v4033
  %v4251 = vsel %vm4209, %v4186, %v4035
  %v4252 = vsel %vm4209, %v4187, %v4037
  %v4253 = vsel %vm4209, %v4188, %v4039
  %v4254 = vsel %vm4209, %v4189, %v4041
  %v4255 = vsel %vm4209, %v4190, %v4043
  %v4256 = vsel %vm4209, %v4191, %v4045
  %v4257 = vsel %vm4209, %v4192, %v4047
  %v4258 = vsel %vm4209, %v4193, %v4049
  %v4259 = vsel %vm4209, %v4194, %v4051
  %v4260 = vsel %vm4209, %v4195, %v4053
  %v4261 = vsel %vm4209, %v4196, %v4055
  %v4262 = vsel %vm4209, %v4197, %v4057
  %v4263 = vsel %vm4209, %v4198, %v4059
  %v4264 = vsel %vm4209, %v4199, %v4061
  %v4265 = vsel %vm4209, %v4200, %v4063
  %v4266 = vsel %vm4209, %v4201, %v4065
  %v4267 = vsel %vm4209, %v4202, %v4067
  %v4268 = vsel %vm4209, %v4203, %v4069
  %v4269 = vsel %vm4209, %v4204, %v4071
  %v4270 = vsel %vm4209, %v4205, %v4073
  %v4271 = vsel %vm4209, %v4206, %v4075
  %v4272 = vsel %vm4209, %v4207, %v4077
  %v4273 = vsel %vm4209, %v4208, %v4079
  %v4274 = vpack.c.bf16 %v4211, %v4210
  %v4275 = vpack.c.bf16 %v4213, %v4212
  %v4276 = vpack.c.bf16 %v4215, %v4214
  %v4277 = vpack.c.bf16 %v4217, %v4216
  %v4278 = vpack.c.bf16 %v4219, %v4218
  %v4279 = vpack.c.bf16 %v4221, %v4220
  %v4280 = vpack.c.bf16 %v4223, %v4222
  %v4281 = vpack.c.bf16 %v4225, %v4224
  %v4282 = vpack.c.bf16 %v4227, %v4226
  %v4283 = vpack.c.bf16 %v4229, %v4228
  %v4284 = vpack.c.bf16 %v4231, %v4230
  %v4285 = vpack.c.bf16 %v4233, %v4232
  %v4286 = vpack.c.bf16 %v4235, %v4234
  %v4287 = vpack.c.bf16 %v4237, %v4236
  %v4288 = vpack.c.bf16 %v4239, %v4238
  %v4289 = vpack.c.bf16 %v4241, %v4240
  %v4290 = vpack.c.bf16 %v4243, %v4242
  %v4291 = vpack.c.bf16 %v4245, %v4244
  %v4292 = vpack.c.bf16 %v4247, %v4246
  %v4293 = vpack.c.bf16 %v4249, %v4248
  %v4294 = vpack.c.bf16 %v4251, %v4250
  %v4295 = vpack.c.bf16 %v4253, %v4252
  %v4296 = vpack.c.bf16 %v4255, %v4254
  %v4297 = vpack.c.bf16 %v4257, %v4256
  %v4298 = vpack.c.bf16 %v4259, %v4258
  %v4299 = vpack.c.bf16 %v4261, %v4260
  %v4300 = vpack.c.bf16 %v4263, %v4262
  %v4301 = vpack.c.bf16 %v4265, %v4264
  %v4302 = vpack.c.bf16 %v4267, %v4266
  %v4303 = vpack.c.bf16 %v4269, %v4268
  %v4304 = vpack.c.bf16 %v4271, %v4270
  %v4305 = vpack.c.bf16 %v4273, %v4272
  %s4306 = scalar_lea.vmem %s5, 8
  %v4307 = vld [vmem:[%s4306] sm:$0xf]
  %v4308 = vld [vmem:[%s4306 + $0x4] sm:$0x3]
  %v4309 = vld [vmem:[%s5] sm:$0xf]
  %v4310 = vld [vmem:[%s5 + $0x4] sm:$0x3]
  %v4313 = vunpack.c.l.b16 %v4309
  %v4314 = vunpack.c.l.b16 %v4310
  %v4315 = vpack.c.b16 %v4314, %v4313
  %vm4316 = vcmask 97280
  %v4318 = vsel %vm4316, %v4274, 0
  %v4321 = vsel %vm4316, %v4275, 0
  %v4324 = vsel %vm4316, %v4276, 0
  %v4327 = vsel %vm4316, %v4277, 0
  %v4330 = vsel %vm4316, %v4278, 0
  %v4333 = vsel %vm4316, %v4279, 0
  %v4336 = vsel %vm4316, %v4280, 0
  %v4339 = vsel %vm4316, %v4281, 0
  %v4342 = vsel %vm4316, %v4282, 0
  %v4345 = vsel %vm4316, %v4283, 0
  %v4348 = vsel %vm4316, %v4284, 0
  %v4351 = vsel %vm4316, %v4285, 0
  %v4354 = vsel %vm4316, %v4286, 0
  %v4357 = vsel %vm4316, %v4287, 0
  %v4360 = vsel %vm4316, %v4288, 0
  %v4363 = vsel %vm4316, %v4289, 0
  %v4366 = vsel %vm4316, %v4290, 0
  %v4369 = vsel %vm4316, %v4291, 0
  %v4372 = vsel %vm4316, %v4292, 0
  %v4375 = vsel %vm4316, %v4293, 0
  %v4378 = vsel %vm4316, %v4294, 0
  %v4381 = vsel %vm4316, %v4295, 0
  %v4384 = vsel %vm4316, %v4296, 0
  %v4387 = vsel %vm4316, %v4297, 0
  %v4390 = vsel %vm4316, %v4298, 0
  %v4393 = vsel %vm4316, %v4299, 0
  %v4396 = vsel %vm4316, %v4300, 0
  %v4399 = vsel %vm4316, %v4301, 0
  %v4402 = vsel %vm4316, %v4302, 0
  %v4405 = vsel %vm4316, %v4303, 0
  %v4408 = vsel %vm4316, %v4304, 0
  %v4411 = vsel %vm4316, %v4305, 0
  %vm4413 = vcmask 1045504
  %v4415 = vsel %vm4413, %v4315, 0
  %4417 = vmatpush.bf16.msra.mxu0 0
  %4418 = vmatpush.bf16.msra.mxu0 0
  %4419 = vmatpush.bf16.msra.mxu0 0
  %4420 = vmatpush.bf16.msra.mxu0 0
  %4421 = vmatpush.bf16.msra.mxu0 0
  %4422 = vmatpush.bf16.msra.mxu0 0
  %4423 = vmatpush.bf16.msra.mxu0 0
  %4424 = vmatpush.bf16.msra.mxu0 %v4415
  %4425 = vmatmul.bf16.gmra.mxu0 %v4318
  %v4426 = vpop.f32.mrf.mxu0
  %v4427 = vadd.f32 0.0, %v4426
  %v4428 = vpop.f32.mrf.mxu0
  %v4429 = vadd.f32 0.0, %v4428
  %4430 = vmatmul.bf16.gmra.mxu0 %v4321
  %v4431 = vpop.f32.mrf.mxu0
  %v4432 = vadd.f32 0.0, %v4431
  %v4433 = vpop.f32.mrf.mxu0
  %v4434 = vadd.f32 0.0, %v4433
  %4435 = vmatmul.bf16.gmra.mxu0 %v4324
  %v4436 = vpop.f32.mrf.mxu0
  %v4437 = vadd.f32 0.0, %v4436
  %v4438 = vpop.f32.mrf.mxu0
  %v4439 = vadd.f32 0.0, %v4438
  %4440 = vmatmul.bf16.gmra.mxu0 %v4327
  %v4441 = vpop.f32.mrf.mxu0
  %v4442 = vadd.f32 0.0, %v4441
  %v4443 = vpop.f32.mrf.mxu0
  %v4444 = vadd.f32 0.0, %v4443
  %4445 = vmatmul.bf16.gmra.mxu0 %v4330
  %v4446 = vpop.f32.mrf.mxu0
  %v4447 = vadd.f32 0.0, %v4446
  %v4448 = vpop.f32.mrf.mxu0
  %v4449 = vadd.f32 0.0, %v4448
  %4450 = vmatmul.bf16.gmra.mxu0 %v4333
  %v4451 = vpop.f32.mrf.mxu0
  %v4452 = vadd.f32 0.0, %v4451
  %v4453 = vpop.f32.mrf.mxu0
  %v4454 = vadd.f32 0.0, %v4453
  %4455 = vmatmul.bf16.gmra.mxu0 %v4336
  %v4456 = vpop.f32.mrf.mxu0
  %v4457 = vadd.f32 0.0, %v4456
  %v4458 = vpop.f32.mrf.mxu0
  %v4459 = vadd.f32 0.0, %v4458
  %4460 = vmatmul.bf16.gmra.mxu0 %v4339
  %v4461 = vpop.f32.mrf.mxu0
  %v4462 = vadd.f32 0.0, %v4461
  %v4463 = vpop.f32.mrf.mxu0
  %v4464 = vadd.f32 0.0, %v4463
  %4465 = vmatmul.bf16.gmra.mxu0 %v4342
  %v4466 = vpop.f32.mrf.mxu0
  %v4467 = vadd.f32 0.0, %v4466
  %v4468 = vpop.f32.mrf.mxu0
  %v4469 = vadd.f32 0.0, %v4468
  %4470 = vmatmul.bf16.gmra.mxu0 %v4345
  %v4471 = vpop.f32.mrf.mxu0
  %v4472 = vadd.f32 0.0, %v4471
  %v4473 = vpop.f32.mrf.mxu0
  %v4474 = vadd.f32 0.0, %v4473
  %4475 = vmatmul.bf16.gmra.mxu0 %v4348
  %v4476 = vpop.f32.mrf.mxu0
  %v4477 = vadd.f32 0.0, %v4476
  %v4478 = vpop.f32.mrf.mxu0
  %v4479 = vadd.f32 0.0, %v4478
  %4480 = vmatmul.bf16.gmra.mxu0 %v4351
  %v4481 = vpop.f32.mrf.mxu0
  %v4482 = vadd.f32 0.0, %v4481
  %v4483 = vpop.f32.mrf.mxu0
  %v4484 = vadd.f32 0.0, %v4483
  %4485 = vmatmul.bf16.gmra.mxu0 %v4354
  %v4486 = vpop.f32.mrf.mxu0
  %v4487 = vadd.f32 0.0, %v4486
  %v4488 = vpop.f32.mrf.mxu0
  %v4489 = vadd.f32 0.0, %v4488
  %4490 = vmatmul.bf16.gmra.mxu0 %v4357
  %v4491 = vpop.f32.mrf.mxu0
  %v4492 = vadd.f32 0.0, %v4491
  %v4493 = vpop.f32.mrf.mxu0
  %v4494 = vadd.f32 0.0, %v4493
  %4495 = vmatmul.bf16.gmra.mxu0 %v4360
  %v4496 = vpop.f32.mrf.mxu0
  %v4497 = vadd.f32 0.0, %v4496
  %v4498 = vpop.f32.mrf.mxu0
  %v4499 = vadd.f32 0.0, %v4498
  %4500 = vmatmul.bf16.gmra.mxu0 %v4363
  %v4501 = vpop.f32.mrf.mxu0
  %v4502 = vadd.f32 0.0, %v4501
  %v4503 = vpop.f32.mrf.mxu0
  %v4504 = vadd.f32 0.0, %v4503
  %4505 = vmatmul.bf16.gmra.mxu0 %v4366
  %v4506 = vpop.f32.mrf.mxu0
  %v4507 = vadd.f32 0.0, %v4506
  %v4508 = vpop.f32.mrf.mxu0
  %v4509 = vadd.f32 0.0, %v4508
  %4510 = vmatmul.bf16.gmra.mxu0 %v4369
  %v4511 = vpop.f32.mrf.mxu0
  %v4512 = vadd.f32 0.0, %v4511
  %v4513 = vpop.f32.mrf.mxu0
  %v4514 = vadd.f32 0.0, %v4513
  %4515 = vmatmul.bf16.gmra.mxu0 %v4372
  %v4516 = vpop.f32.mrf.mxu0
  %v4517 = vadd.f32 0.0, %v4516
  %v4518 = vpop.f32.mrf.mxu0
  %v4519 = vadd.f32 0.0, %v4518
  %4520 = vmatmul.bf16.gmra.mxu0 %v4375
  %v4521 = vpop.f32.mrf.mxu0
  %v4522 = vadd.f32 0.0, %v4521
  %v4523 = vpop.f32.mrf.mxu0
  %v4524 = vadd.f32 0.0, %v4523
  %4525 = vmatmul.bf16.gmra.mxu0 %v4378
  %v4526 = vpop.f32.mrf.mxu0
  %v4527 = vadd.f32 0.0, %v4526
  %v4528 = vpop.f32.mrf.mxu0
  %v4529 = vadd.f32 0.0, %v4528
  %4530 = vmatmul.bf16.gmra.mxu0 %v4381
  %v4531 = vpop.f32.mrf.mxu0
  %v4532 = vadd.f32 0.0, %v4531
  %v4533 = vpop.f32.mrf.mxu0
  %v4534 = vadd.f32 0.0, %v4533
  %4535 = vmatmul.bf16.gmra.mxu0 %v4384
  %v4536 = vpop.f32.mrf.mxu0
  %v4537 = vadd.f32 0.0, %v4536
  %v4538 = vpop.f32.mrf.mxu0
  %v4539 = vadd.f32 0.0, %v4538
  %4540 = vmatmul.bf16.gmra.mxu0 %v4387
  %v4541 = vpop.f32.mrf.mxu0
  %v4542 = vadd.f32 0.0, %v4541
  %v4543 = vpop.f32.mrf.mxu0
  %v4544 = vadd.f32 0.0, %v4543
  %4545 = vmatmul.bf16.gmra.mxu0 %v4390
  %v4546 = vpop.f32.mrf.mxu0
  %v4547 = vadd.f32 0.0, %v4546
  %v4548 = vpop.f32.mrf.mxu0
  %v4549 = vadd.f32 0.0, %v4548
  %4550 = vmatmul.bf16.gmra.mxu0 %v4393
  %v4551 = vpop.f32.mrf.mxu0
  %v4552 = vadd.f32 0.0, %v4551
  %v4553 = vpop.f32.mrf.mxu0
  %v4554 = vadd.f32 0.0, %v4553
  %4555 = vmatmul.bf16.gmra.mxu0 %v4396
  %v4556 = vpop.f32.mrf.mxu0
  %v4557 = vadd.f32 0.0, %v4556
  %v4558 = vpop.f32.mrf.mxu0
  %v4559 = vadd.f32 0.0, %v4558
  %4560 = vmatmul.bf16.gmra.mxu0 %v4399
  %v4561 = vpop.f32.mrf.mxu0
  %v4562 = vadd.f32 0.0, %v4561
  %v4563 = vpop.f32.mrf.mxu0
  %v4564 = vadd.f32 0.0, %v4563
  %4565 = vmatmul.bf16.gmra.mxu0 %v4402
  %v4566 = vpop.f32.mrf.mxu0
  %v4567 = vadd.f32 0.0, %v4566
  %v4568 = vpop.f32.mrf.mxu0
  %v4569 = vadd.f32 0.0, %v4568
  %4570 = vmatmul.bf16.gmra.mxu0 %v4405
  %v4571 = vpop.f32.mrf.mxu0
  %v4572 = vadd.f32 0.0, %v4571
  %v4573 = vpop.f32.mrf.mxu0
  %v4574 = vadd.f32 0.0, %v4573
  %4575 = vmatmul.bf16.gmra.mxu0 %v4408
  %v4576 = vpop.f32.mrf.mxu0
  %v4577 = vadd.f32 0.0, %v4576
  %v4578 = vpop.f32.mrf.mxu0
  %v4579 = vadd.f32 0.0, %v4578
  %4580 = vmatmul.bf16.gmra.mxu0 %v4411
  %v4581 = vpop.f32.mrf.mxu0
  %v4582 = vadd.f32 0.0, %v4581
  %v4583 = vpop.f32.mrf.mxu0
  %v4584 = vadd.f32 0.0, %v4583
  %4585 = vdwg.mxu0
  %s4586 = scalar_lea.vmem %s5, 16
  %v4587 = vld [vmem:[%s4586] sm:$0xf]
  %v4588 = vld [vmem:[%s4586 + $0x4] sm:$0x3]
  %v4591 = vunpack.c.l.b16 %v4587
  %v4592 = vunpack.c.l.b16 %v4588
  %v4593 = vpack.c.b16 %v4592, %v4591
  %v4595 = vsel %vm4413, %v4593, 0
  %4597 = vmatpush.bf16.msra.mxu0 0
  %4598 = vmatpush.bf16.msra.mxu0 0
  %4599 = vmatpush.bf16.msra.mxu0 0
  %4600 = vmatpush.bf16.msra.mxu0 0
  %4601 = vmatpush.bf16.msra.mxu0 0
  %4602 = vmatpush.bf16.msra.mxu0 0
  %4603 = vmatpush.bf16.msra.mxu0 0
  %4604 = vmatpush.bf16.msra.mxu0 %v4595
  %4605 = vmatmul.bf16.gmra.mxu0 %v4318
  %v4606 = vpop.f32.mrf.mxu0
  %v4607 = vadd.f32 0.0, %v4606
  %v4608 = vpop.f32.mrf.mxu0
  %v4609 = vadd.f32 0.0, %v4608
  %4610 = vmatmul.bf16.gmra.mxu0 %v4321
  %v4611 = vpop.f32.mrf.mxu0
  %v4612 = vadd.f32 0.0, %v4611
  %v4613 = vpop.f32.mrf.mxu0
  %v4614 = vadd.f32 0.0, %v4613
  %4615 = vmatmul.bf16.gmra.mxu0 %v4324
  %v4616 = vpop.f32.mrf.mxu0
  %v4617 = vadd.f32 0.0, %v4616
  %v4618 = vpop.f32.mrf.mxu0
  %v4619 = vadd.f32 0.0, %v4618
  %4620 = vmatmul.bf16.gmra.mxu0 %v4327
  %v4621 = vpop.f32.mrf.mxu0
  %v4622 = vadd.f32 0.0, %v4621
  %v4623 = vpop.f32.mrf.mxu0
  %v4624 = vadd.f32 0.0, %v4623
  %4625 = vmatmul.bf16.gmra.mxu0 %v4330
  %v4626 = vpop.f32.mrf.mxu0
  %v4627 = vadd.f32 0.0, %v4626
  %v4628 = vpop.f32.mrf.mxu0
  %v4629 = vadd.f32 0.0, %v4628
  %4630 = vmatmul.bf16.gmra.mxu0 %v4333
  %v4631 = vpop.f32.mrf.mxu0
  %v4632 = vadd.f32 0.0, %v4631
  %v4633 = vpop.f32.mrf.mxu0
  %v4634 = vadd.f32 0.0, %v4633
  %4635 = vmatmul.bf16.gmra.mxu0 %v4336
  %v4636 = vpop.f32.mrf.mxu0
  %v4637 = vadd.f32 0.0, %v4636
  %v4638 = vpop.f32.mrf.mxu0
  %v4639 = vadd.f32 0.0, %v4638
  %4640 = vmatmul.bf16.gmra.mxu0 %v4339
  %v4641 = vpop.f32.mrf.mxu0
  %v4642 = vadd.f32 0.0, %v4641
  %v4643 = vpop.f32.mrf.mxu0
  %v4644 = vadd.f32 0.0, %v4643
  %4645 = vmatmul.bf16.gmra.mxu0 %v4342
  %v4646 = vpop.f32.mrf.mxu0
  %v4647 = vadd.f32 0.0, %v4646
  %v4648 = vpop.f32.mrf.mxu0
  %v4649 = vadd.f32 0.0, %v4648
  %4650 = vmatmul.bf16.gmra.mxu0 %v4345
  %v4651 = vpop.f32.mrf.mxu0
  %v4652 = vadd.f32 0.0, %v4651
  %v4653 = vpop.f32.mrf.mxu0
  %v4654 = vadd.f32 0.0, %v4653
  %4655 = vmatmul.bf16.gmra.mxu0 %v4348
  %v4656 = vpop.f32.mrf.mxu0
  %v4657 = vadd.f32 0.0, %v4656
  %v4658 = vpop.f32.mrf.mxu0
  %v4659 = vadd.f32 0.0, %v4658
  %4660 = vmatmul.bf16.gmra.mxu0 %v4351
  %v4661 = vpop.f32.mrf.mxu0
  %v4662 = vadd.f32 0.0, %v4661
  %v4663 = vpop.f32.mrf.mxu0
  %v4664 = vadd.f32 0.0, %v4663
  %4665 = vmatmul.bf16.gmra.mxu0 %v4354
  %v4666 = vpop.f32.mrf.mxu0
  %v4667 = vadd.f32 0.0, %v4666
  %v4668 = vpop.f32.mrf.mxu0
  %v4669 = vadd.f32 0.0, %v4668
  %4670 = vmatmul.bf16.gmra.mxu0 %v4357
  %v4671 = vpop.f32.mrf.mxu0
  %v4672 = vadd.f32 0.0, %v4671
  %v4673 = vpop.f32.mrf.mxu0
  %v4674 = vadd.f32 0.0, %v4673
  %4675 = vmatmul.bf16.gmra.mxu0 %v4360
  %v4676 = vpop.f32.mrf.mxu0
  %v4677 = vadd.f32 0.0, %v4676
  %v4678 = vpop.f32.mrf.mxu0
  %v4679 = vadd.f32 0.0, %v4678
  %4680 = vmatmul.bf16.gmra.mxu0 %v4363
  %v4681 = vpop.f32.mrf.mxu0
  %v4682 = vadd.f32 0.0, %v4681
  %v4683 = vpop.f32.mrf.mxu0
  %v4684 = vadd.f32 0.0, %v4683
  %4685 = vmatmul.bf16.gmra.mxu0 %v4366
  %v4686 = vpop.f32.mrf.mxu0
  %v4687 = vadd.f32 0.0, %v4686
  %v4688 = vpop.f32.mrf.mxu0
  %v4689 = vadd.f32 0.0, %v4688
  %4690 = vmatmul.bf16.gmra.mxu0 %v4369
  %v4691 = vpop.f32.mrf.mxu0
  %v4692 = vadd.f32 0.0, %v4691
  %v4693 = vpop.f32.mrf.mxu0
  %v4694 = vadd.f32 0.0, %v4693
  %4695 = vmatmul.bf16.gmra.mxu0 %v4372
  %v4696 = vpop.f32.mrf.mxu0
  %v4697 = vadd.f32 0.0, %v4696
  %v4698 = vpop.f32.mrf.mxu0
  %v4699 = vadd.f32 0.0, %v4698
  %4700 = vmatmul.bf16.gmra.mxu0 %v4375
  %v4701 = vpop.f32.mrf.mxu0
  %v4702 = vadd.f32 0.0, %v4701
  %v4703 = vpop.f32.mrf.mxu0
  %v4704 = vadd.f32 0.0, %v4703
  %4705 = vmatmul.bf16.gmra.mxu0 %v4378
  %v4706 = vpop.f32.mrf.mxu0
  %v4707 = vadd.f32 0.0, %v4706
  %v4708 = vpop.f32.mrf.mxu0
  %v4709 = vadd.f32 0.0, %v4708
  %4710 = vmatmul.bf16.gmra.mxu0 %v4381
  %v4711 = vpop.f32.mrf.mxu0
  %v4712 = vadd.f32 0.0, %v4711
  %v4713 = vpop.f32.mrf.mxu0
  %v4714 = vadd.f32 0.0, %v4713
  %4715 = vmatmul.bf16.gmra.mxu0 %v4384
  %v4716 = vpop.f32.mrf.mxu0
  %v4717 = vadd.f32 0.0, %v4716
  %v4718 = vpop.f32.mrf.mxu0
  %v4719 = vadd.f32 0.0, %v4718
  %4720 = vmatmul.bf16.gmra.mxu0 %v4387
  %v4721 = vpop.f32.mrf.mxu0
  %v4722 = vadd.f32 0.0, %v4721
  %v4723 = vpop.f32.mrf.mxu0
  %v4724 = vadd.f32 0.0, %v4723
  %4725 = vmatmul.bf16.gmra.mxu0 %v4390
  %v4726 = vpop.f32.mrf.mxu0
  %v4727 = vadd.f32 0.0, %v4726
  %v4728 = vpop.f32.mrf.mxu0
  %v4729 = vadd.f32 0.0, %v4728
  %4730 = vmatmul.bf16.gmra.mxu0 %v4393
  %v4731 = vpop.f32.mrf.mxu0
  %v4732 = vadd.f32 0.0, %v4731
  %v4733 = vpop.f32.mrf.mxu0
  %v4734 = vadd.f32 0.0, %v4733
  %4735 = vmatmul.bf16.gmra.mxu0 %v4396
  %v4736 = vpop.f32.mrf.mxu0
  %v4737 = vadd.f32 0.0, %v4736
  %v4738 = vpop.f32.mrf.mxu0
  %v4739 = vadd.f32 0.0, %v4738
  %4740 = vmatmul.bf16.gmra.mxu0 %v4399
  %v4741 = vpop.f32.mrf.mxu0
  %v4742 = vadd.f32 0.0, %v4741
  %v4743 = vpop.f32.mrf.mxu0
  %v4744 = vadd.f32 0.0, %v4743
  %4745 = vmatmul.bf16.gmra.mxu0 %v4402
  %v4746 = vpop.f32.mrf.mxu0
  %v4747 = vadd.f32 0.0, %v4746
  %v4748 = vpop.f32.mrf.mxu0
  %v4749 = vadd.f32 0.0, %v4748
  %4750 = vmatmul.bf16.gmra.mxu0 %v4405
  %v4751 = vpop.f32.mrf.mxu0
  %v4752 = vadd.f32 0.0, %v4751
  %v4753 = vpop.f32.mrf.mxu0
  %v4754 = vadd.f32 0.0, %v4753
  %4755 = vmatmul.bf16.gmra.mxu0 %v4408
  %v4756 = vpop.f32.mrf.mxu0
  %v4757 = vadd.f32 0.0, %v4756
  %v4758 = vpop.f32.mrf.mxu0
  %v4759 = vadd.f32 0.0, %v4758
  %4760 = vmatmul.bf16.gmra.mxu0 %v4411
  %v4761 = vpop.f32.mrf.mxu0
  %v4762 = vadd.f32 0.0, %v4761
  %v4763 = vpop.f32.mrf.mxu0
  %v4764 = vadd.f32 0.0, %v4763
  %4765 = vdwg.mxu0
  %v4766 = vsel %vm2862, 1, 0
  %v4767 = vsel %vm2863, 1, 0
  %v4768 = vsel %vm2864, 1, 0
  %v4769 = vsel %vm2865, 1, 0
  %v4770 = vsel %vm2866, 1, 0
  %v4771 = vsel %vm2867, 1, 0
  %v4772 = vsel %vm2868, 1, 0
  %v4773 = vsel %vm2869, 1, 0
  %v4774 = vsel %vm2870, 1, 0
  %v4775 = vsel %vm2871, 1, 0
  %v4776 = vsel %vm2872, 1, 0
  %v4777 = vsel %vm2873, 1, 0
  %v4778 = vsel %vm2874, 1, 0
  %v4779 = vsel %vm2875, 1, 0
  %v4780 = vsel %vm2876, 1, 0
  %v4781 = vsel %vm2877, 1, 0
  %v4782 = vsel %vm2878, 1, 0
  %v4783 = vsel %vm2879, 1, 0
  %v4784 = vsel %vm2880, 1, 0
  %v4785 = vsel %vm2881, 1, 0
  %v4786 = vsel %vm2882, 1, 0
  %v4787 = vsel %vm2883, 1, 0
  %v4788 = vsel %vm2884, 1, 0
  %v4789 = vsel %vm2885, 1, 0
  %v4790 = vsel %vm2886, 1, 0
  %v4791 = vsel %vm2887, 1, 0
  %v4792 = vsel %vm2888, 1, 0
  %v4793 = vsel %vm2889, 1, 0
  %v4794 = vsel %vm2890, 1, 0
  %v4795 = vsel %vm2891, 1, 0
  %v4796 = vsel %vm2892, 1, 0
  %v4797 = vsel %vm2893, 1, 0
  %v4798 = vsel %vm2894, 1, 0
  %v4799 = vsel %vm2895, 1, 0
  %v4800 = vsel %vm2896, 1, 0
  %v4801 = vsel %vm2897, 1, 0
  %v4802 = vsel %vm2898, 1, 0
  %v4803 = vsel %vm2899, 1, 0
  %v4804 = vsel %vm2900, 1, 0
  %v4805 = vsel %vm2901, 1, 0
  %v4806 = vsel %vm2902, 1, 0
  %v4807 = vsel %vm2903, 1, 0
  %v4808 = vsel %vm2904, 1, 0
  %v4809 = vsel %vm2905, 1, 0
  %v4810 = vsel %vm2906, 1, 0
  %v4811 = vsel %vm2907, 1, 0
  %v4812 = vsel %vm2908, 1, 0
  %v4813 = vsel %vm2909, 1, 0
  %v4814 = vsel %vm2910, 1, 0
  %v4815 = vsel %vm2911, 1, 0
  %v4816 = vsel %vm2912, 1, 0
  %v4817 = vsel %vm2913, 1, 0
  %v4818 = vsel %vm2914, 1, 0
  %v4819 = vsel %vm2915, 1, 0
  %v4820 = vsel %vm2916, 1, 0
  %v4821 = vsel %vm2917, 1, 0
  %v4822 = vsel %vm2918, 1, 0
  %v4823 = vsel %vm2919, 1, 0
  %v4824 = vsel %vm2920, 1, 0
  %v4825 = vsel %vm2921, 1, 0
  %v4826 = vsel %vm2922, 1, 0
  %v4827 = vsel %vm2923, 1, 0
  %v4828 = vsel %vm2924, 1, 0
  %v4829 = vsel %vm2925, 1, 0
  %vm4830 = vcmp.eq.s32.totalorder %v4766, 1
  %vm4831 = vcmp.eq.s32.totalorder %v4767, 1
  %vm4832 = vcmp.eq.s32.totalorder %v4768, 1
  %vm4833 = vcmp.eq.s32.totalorder %v4769, 1
  %vm4834 = vcmp.eq.s32.totalorder %v4770, 1
  %vm4835 = vcmp.eq.s32.totalorder %v4771, 1
  %vm4836 = vcmp.eq.s32.totalorder %v4772, 1
  %vm4837 = vcmp.eq.s32.totalorder %v4773, 1
  %vm4838 = vcmp.eq.s32.totalorder %v4774, 1
  %vm4839 = vcmp.eq.s32.totalorder %v4775, 1
  %vm4840 = vcmp.eq.s32.totalorder %v4776, 1
  %vm4841 = vcmp.eq.s32.totalorder %v4777, 1
  %vm4842 = vcmp.eq.s32.totalorder %v4778, 1
  %vm4843 = vcmp.eq.s32.totalorder %v4779, 1
  %vm4844 = vcmp.eq.s32.totalorder %v4780, 1
  %vm4845 = vcmp.eq.s32.totalorder %v4781, 1
  %vm4846 = vcmp.eq.s32.totalorder %v4782, 1
  %vm4847 = vcmp.eq.s32.totalorder %v4783, 1
  %vm4848 = vcmp.eq.s32.totalorder %v4784, 1
  %vm4849 = vcmp.eq.s32.totalorder %v4785, 1
  %vm4850 = vcmp.eq.s32.totalorder %v4786, 1
  %vm4851 = vcmp.eq.s32.totalorder %v4787, 1
  %vm4852 = vcmp.eq.s32.totalorder %v4788, 1
  %vm4853 = vcmp.eq.s32.totalorder %v4789, 1
  %vm4854 = vcmp.eq.s32.totalorder %v4790, 1
  %vm4855 = vcmp.eq.s32.totalorder %v4791, 1
  %vm4856 = vcmp.eq.s32.totalorder %v4792, 1
  %vm4857 = vcmp.eq.s32.totalorder %v4793, 1
  %vm4858 = vcmp.eq.s32.totalorder %v4794, 1
  %vm4859 = vcmp.eq.s32.totalorder %v4795, 1
  %vm4860 = vcmp.eq.s32.totalorder %v4796, 1
  %vm4861 = vcmp.eq.s32.totalorder %v4797, 1
  %vm4862 = vcmp.eq.s32.totalorder %v4798, 1
  %vm4863 = vcmp.eq.s32.totalorder %v4799, 1
  %vm4864 = vcmp.eq.s32.totalorder %v4800, 1
  %vm4865 = vcmp.eq.s32.totalorder %v4801, 1
  %vm4866 = vcmp.eq.s32.totalorder %v4802, 1
  %vm4867 = vcmp.eq.s32.totalorder %v4803, 1
  %vm4868 = vcmp.eq.s32.totalorder %v4804, 1
  %vm4869 = vcmp.eq.s32.totalorder %v4805, 1
  %vm4870 = vcmp.eq.s32.totalorder %v4806, 1
  %vm4871 = vcmp.eq.s32.totalorder %v4807, 1
  %vm4872 = vcmp.eq.s32.totalorder %v4808, 1
  %vm4873 = vcmp.eq.s32.totalorder %v4809, 1
  %vm4874 = vcmp.eq.s32.totalorder %v4810, 1
  %vm4875 = vcmp.eq.s32.totalorder %v4811, 1
  %vm4876 = vcmp.eq.s32.totalorder %v4812, 1
  %vm4877 = vcmp.eq.s32.totalorder %v4813, 1
  %vm4878 = vcmp.eq.s32.totalorder %v4814, 1
  %vm4879 = vcmp.eq.s32.totalorder %v4815, 1
  %vm4880 = vcmp.eq.s32.totalorder %v4816, 1
  %vm4881 = vcmp.eq.s32.totalorder %v4817, 1
  %vm4882 = vcmp.eq.s32.totalorder %v4818, 1
  %vm4883 = vcmp.eq.s32.totalorder %v4819, 1
  %vm4884 = vcmp.eq.s32.totalorder %v4820, 1
  %vm4885 = vcmp.eq.s32.totalorder %v4821, 1
  %vm4886 = vcmp.eq.s32.totalorder %v4822, 1
  %vm4887 = vcmp.eq.s32.totalorder %v4823, 1
  %vm4888 = vcmp.eq.s32.totalorder %v4824, 1
  %vm4889 = vcmp.eq.s32.totalorder %v4825, 1
  %vm4890 = vcmp.eq.s32.totalorder %v4826, 1
  %vm4891 = vcmp.eq.s32.totalorder %v4827, 1
  %vm4892 = vcmp.eq.s32.totalorder %v4828, 1
  %vm4893 = vcmp.eq.s32.totalorder %v4829, 1
  %v4894 = vsel %vm4830, %v4582, 0.0
  %v4895 = vsel %vm4831, %v4584, 0.0
  %v4896 = vsel %vm4832, %v4427, 0.0
  %v4897 = vsel %vm4833, %v4429, 0.0
  %v4898 = vsel %vm4834, %v4432, 0.0
  %v4899 = vsel %vm4835, %v4434, 0.0
  %v4900 = vsel %vm4836, %v4437, 0.0
  %v4901 = vsel %vm4837, %v4439, 0.0
  %v4902 = vsel %vm4838, %v4442, 0.0
  %v4903 = vsel %vm4839, %v4444, 0.0
  %v4904 = vsel %vm4840, %v4447, 0.0
  %v4905 = vsel %vm4841, %v4449, 0.0
  %v4906 = vsel %vm4842, %v4452, 0.0
  %v4907 = vsel %vm4843, %v4454, 0.0
  %v4908 = vsel %vm4844, %v4457, 0.0
  %v4909 = vsel %vm4845, %v4459, 0.0
  %v4910 = vsel %vm4846, %v4462, 0.0
  %v4911 = vsel %vm4847, %v4464, 0.0
  %v4912 = vsel %vm4848, %v4467, 0.0
  %v4913 = vsel %vm4849, %v4469, 0.0
  %v4914 = vsel %vm4850, %v4472, 0.0
  %v4915 = vsel %vm4851, %v4474, 0.0
  %v4916 = vsel %vm4852, %v4477, 0.0
  %v4917 = vsel %vm4853, %v4479, 0.0
  %v4918 = vsel %vm4854, %v4482, 0.0
  %v4919 = vsel %vm4855, %v4484, 0.0
  %v4920 = vsel %vm4856, %v4487, 0.0
  %v4921 = vsel %vm4857, %v4489, 0.0
  %v4922 = vsel %vm4858, %v4492, 0.0
  %v4923 = vsel %vm4859, %v4494, 0.0
  %v4924 = vsel %vm4860, %v4497, 0.0
  %v4925 = vsel %vm4861, %v4499, 0.0
  %v4926 = vsel %vm4862, %v4502, 0.0
  %v4927 = vsel %vm4863, %v4504, 0.0
  %v4928 = vsel %vm4864, %v4507, 0.0
  %v4929 = vsel %vm4865, %v4509, 0.0
  %v4930 = vsel %vm4866, %v4512, 0.0
  %v4931 = vsel %vm4867, %v4514, 0.0
  %v4932 = vsel %vm4868, %v4517, 0.0
  %v4933 = vsel %vm4869, %v4519, 0.0
  %v4934 = vsel %vm4870, %v4522, 0.0
  %v4935 = vsel %vm4871, %v4524, 0.0
  %v4936 = vsel %vm4872, %v4527, 0.0
  %v4937 = vsel %vm4873, %v4529, 0.0
  %v4938 = vsel %vm4874, %v4532, 0.0
  %v4939 = vsel %vm4875, %v4534, 0.0
  %v4940 = vsel %vm4876, %v4537, 0.0
  %v4941 = vsel %vm4877, %v4539, 0.0
  %v4942 = vsel %vm4878, %v4542, 0.0
  %v4943 = vsel %vm4879, %v4544, 0.0
  %v4944 = vsel %vm4880, %v4547, 0.0
  %v4945 = vsel %vm4881, %v4549, 0.0
  %v4946 = vsel %vm4882, %v4552, 0.0
  %v4947 = vsel %vm4883, %v4554, 0.0
  %v4948 = vsel %vm4884, %v4557, 0.0
  %v4949 = vsel %vm4885, %v4559, 0.0
  %v4950 = vsel %vm4886, %v4562, 0.0
  %v4951 = vsel %vm4887, %v4564, 0.0
  %v4952 = vsel %vm4888, %v4567, 0.0
  %v4953 = vsel %vm4889, %v4569, 0.0
  %v4954 = vsel %vm4890, %v4572, 0.0
  %v4955 = vsel %vm4891, %v4574, 0.0
  %v4956 = vsel %vm4892, %v4577, 0.0
  %v4957 = vsel %vm4893, %v4579, 0.0
  %v4960 = vunpack.c.l.b16 %v4307
  %v4961 = vunpack.c.l.b16 %v4308
  %v4962 = vpack.c.b16 %v4961, %v4960
  %v4964 = vsel %vm4413, %v4962, 0
  %4966 = vmatpush.bf16.msra.mxu0 0
  %4967 = vmatpush.bf16.msra.mxu0 0
  %4968 = vmatpush.bf16.msra.mxu0 0
  %4969 = vmatpush.bf16.msra.mxu0 0
  %4970 = vmatpush.bf16.msra.mxu0 0
  %4971 = vmatpush.bf16.msra.mxu0 0
  %4972 = vmatpush.bf16.msra.mxu0 0
  %4973 = vmatpush.bf16.msra.mxu0 %v4964
  %4974 = vmatmul.bf16.gmra.mxu0 %v4318
  %v4975 = vpop.f32.mrf.mxu0
  %v4976 = vadd.f32 %v4894, %v4975
  %v4977 = vpop.f32.mrf.mxu0
  %v4978 = vadd.f32 %v4895, %v4977
  %4979 = vmatmul.bf16.gmra.mxu0 %v4321
  %v4980 = vpop.f32.mrf.mxu0
  %v4981 = vadd.f32 %v4896, %v4980
  %v4982 = vpop.f32.mrf.mxu0
  %v4983 = vadd.f32 %v4897, %v4982
  %4984 = vmatmul.bf16.gmra.mxu0 %v4324
  %v4985 = vpop.f32.mrf.mxu0
  %v4986 = vadd.f32 %v4898, %v4985
  %v4987 = vpop.f32.mrf.mxu0
  %v4988 = vadd.f32 %v4899, %v4987
  %4989 = vmatmul.bf16.gmra.mxu0 %v4327
  %v4990 = vpop.f32.mrf.mxu0
  %v4991 = vadd.f32 %v4900, %v4990
  %v4992 = vpop.f32.mrf.mxu0
  %v4993 = vadd.f32 %v4901, %v4992
  %4994 = vmatmul.bf16.gmra.mxu0 %v4330
  %v4995 = vpop.f32.mrf.mxu0
  %v4996 = vadd.f32 %v4902, %v4995
  %v4997 = vpop.f32.mrf.mxu0
  %v4998 = vadd.f32 %v4903, %v4997
  %4999 = vmatmul.bf16.gmra.mxu0 %v4333
  %v5000 = vpop.f32.mrf.mxu0
  %v5001 = vadd.f32 %v4904, %v5000
  %v5002 = vpop.f32.mrf.mxu0
  %v5003 = vadd.f32 %v4905, %v5002
  %5004 = vmatmul.bf16.gmra.mxu0 %v4336
  %v5005 = vpop.f32.mrf.mxu0
  %v5006 = vadd.f32 %v4906, %v5005
  %v5007 = vpop.f32.mrf.mxu0
  %v5008 = vadd.f32 %v4907, %v5007
  %5009 = vmatmul.bf16.gmra.mxu0 %v4339
  %v5010 = vpop.f32.mrf.mxu0
  %v5011 = vadd.f32 %v4908, %v5010
  %v5012 = vpop.f32.mrf.mxu0
  %v5013 = vadd.f32 %v4909, %v5012
  %5014 = vmatmul.bf16.gmra.mxu0 %v4342
  %v5015 = vpop.f32.mrf.mxu0
  %v5016 = vadd.f32 %v4910, %v5015
  %v5017 = vpop.f32.mrf.mxu0
  %v5018 = vadd.f32 %v4911, %v5017
  %5019 = vmatmul.bf16.gmra.mxu0 %v4345
  %v5020 = vpop.f32.mrf.mxu0
  %v5021 = vadd.f32 %v4912, %v5020
  %v5022 = vpop.f32.mrf.mxu0
  %v5023 = vadd.f32 %v4913, %v5022
  %5024 = vmatmul.bf16.gmra.mxu0 %v4348
  %v5025 = vpop.f32.mrf.mxu0
  %v5026 = vadd.f32 %v4914, %v5025
  %v5027 = vpop.f32.mrf.mxu0
  %v5028 = vadd.f32 %v4915, %v5027
  %5029 = vmatmul.bf16.gmra.mxu0 %v4351
  %v5030 = vpop.f32.mrf.mxu0
  %v5031 = vadd.f32 %v4916, %v5030
  %v5032 = vpop.f32.mrf.mxu0
  %v5033 = vadd.f32 %v4917, %v5032
  %5034 = vmatmul.bf16.gmra.mxu0 %v4354
  %v5035 = vpop.f32.mrf.mxu0
  %v5036 = vadd.f32 %v4918, %v5035
  %v5037 = vpop.f32.mrf.mxu0
  %v5038 = vadd.f32 %v4919, %v5037
  %5039 = vmatmul.bf16.gmra.mxu0 %v4357
  %v5040 = vpop.f32.mrf.mxu0
  %v5041 = vadd.f32 %v4920, %v5040
  %v5042 = vpop.f32.mrf.mxu0
  %v5043 = vadd.f32 %v4921, %v5042
  %5044 = vmatmul.bf16.gmra.mxu0 %v4360
  %v5045 = vpop.f32.mrf.mxu0
  %v5046 = vadd.f32 %v4922, %v5045
  %v5047 = vpop.f32.mrf.mxu0
  %v5048 = vadd.f32 %v4923, %v5047
  %5049 = vmatmul.bf16.gmra.mxu0 %v4363
  %v5050 = vpop.f32.mrf.mxu0
  %v5051 = vadd.f32 %v4924, %v5050
  %v5052 = vpop.f32.mrf.mxu0
  %v5053 = vadd.f32 %v4925, %v5052
  %5054 = vmatmul.bf16.gmra.mxu0 %v4366
  %v5055 = vpop.f32.mrf.mxu0
  %v5056 = vadd.f32 %v4926, %v5055
  %v5057 = vpop.f32.mrf.mxu0
  %v5058 = vadd.f32 %v4927, %v5057
  %5059 = vmatmul.bf16.gmra.mxu0 %v4369
  %v5060 = vpop.f32.mrf.mxu0
  %v5061 = vadd.f32 %v4928, %v5060
  %v5062 = vpop.f32.mrf.mxu0
  %v5063 = vadd.f32 %v4929, %v5062
  %5064 = vmatmul.bf16.gmra.mxu0 %v4372
  %v5065 = vpop.f32.mrf.mxu0
  %v5066 = vadd.f32 %v4930, %v5065
  %v5067 = vpop.f32.mrf.mxu0
  %v5068 = vadd.f32 %v4931, %v5067
  %5069 = vmatmul.bf16.gmra.mxu0 %v4375
  %v5070 = vpop.f32.mrf.mxu0
  %v5071 = vadd.f32 %v4932, %v5070
  %v5072 = vpop.f32.mrf.mxu0
  %v5073 = vadd.f32 %v4933, %v5072
  %5074 = vmatmul.bf16.gmra.mxu0 %v4378
  %v5075 = vpop.f32.mrf.mxu0
  %v5076 = vadd.f32 %v4934, %v5075
  %v5077 = vpop.f32.mrf.mxu0
  %v5078 = vadd.f32 %v4935, %v5077
  %5079 = vmatmul.bf16.gmra.mxu0 %v4381
  %v5080 = vpop.f32.mrf.mxu0
  %v5081 = vadd.f32 %v4936, %v5080
  %v5082 = vpop.f32.mrf.mxu0
  %v5083 = vadd.f32 %v4937, %v5082
  %5084 = vmatmul.bf16.gmra.mxu0 %v4384
  %v5085 = vpop.f32.mrf.mxu0
  %v5086 = vadd.f32 %v4938, %v5085
  %v5087 = vpop.f32.mrf.mxu0
  %v5088 = vadd.f32 %v4939, %v5087
  %5089 = vmatmul.bf16.gmra.mxu0 %v4387
  %v5090 = vpop.f32.mrf.mxu0
  %v5091 = vadd.f32 %v4940, %v5090
  %v5092 = vpop.f32.mrf.mxu0
  %v5093 = vadd.f32 %v4941, %v5092
  %5094 = vmatmul.bf16.gmra.mxu0 %v4390
  %v5095 = vpop.f32.mrf.mxu0
  %v5096 = vadd.f32 %v4942, %v5095
  %v5097 = vpop.f32.mrf.mxu0
  %v5098 = vadd.f32 %v4943, %v5097
  %5099 = vmatmul.bf16.gmra.mxu0 %v4393
  %v5100 = vpop.f32.mrf.mxu0
  %v5101 = vadd.f32 %v4944, %v5100
  %v5102 = vpop.f32.mrf.mxu0
  %v5103 = vadd.f32 %v4945, %v5102
  %5104 = vmatmul.bf16.gmra.mxu0 %v4396
  %v5105 = vpop.f32.mrf.mxu0
  %v5106 = vadd.f32 %v4946, %v5105
  %v5107 = vpop.f32.mrf.mxu0
  %v5108 = vadd.f32 %v4947, %v5107
  %5109 = vmatmul.bf16.gmra.mxu0 %v4399
  %v5110 = vpop.f32.mrf.mxu0
  %v5111 = vadd.f32 %v4948, %v5110
  %v5112 = vpop.f32.mrf.mxu0
  %v5113 = vadd.f32 %v4949, %v5112
  %5114 = vmatmul.bf16.gmra.mxu0 %v4402
  %v5115 = vpop.f32.mrf.mxu0
  %v5116 = vadd.f32 %v4950, %v5115
  %v5117 = vpop.f32.mrf.mxu0
  %v5118 = vadd.f32 %v4951, %v5117
  %5119 = vmatmul.bf16.gmra.mxu0 %v4405
  %v5120 = vpop.f32.mrf.mxu0
  %v5121 = vadd.f32 %v4952, %v5120
  %v5122 = vpop.f32.mrf.mxu0
  %v5123 = vadd.f32 %v4953, %v5122
  %5124 = vmatmul.bf16.gmra.mxu0 %v4408
  %v5125 = vpop.f32.mrf.mxu0
  %v5126 = vadd.f32 %v4954, %v5125
  %v5127 = vpop.f32.mrf.mxu0
  %v5128 = vadd.f32 %v4955, %v5127
  %5129 = vmatmul.bf16.gmra.mxu0 %v4411
  %v5130 = vpop.f32.mrf.mxu0
  %v5131 = vadd.f32 %v4956, %v5130
  %v5132 = vpop.f32.mrf.mxu0
  %v5133 = vadd.f32 %v4957, %v5132
  %5134 = vdwg.mxu0
  %v5135 = vsel %vm2926, 1, 0
  %v5136 = vsel %vm2927, 1, 0
  %v5137 = vsel %vm2928, 1, 0
  %v5138 = vsel %vm2929, 1, 0
  %v5139 = vsel %vm2930, 1, 0
  %v5140 = vsel %vm2931, 1, 0
  %v5141 = vsel %vm2932, 1, 0
  %v5142 = vsel %vm2933, 1, 0
  %v5143 = vsel %vm2934, 1, 0
  %v5144 = vsel %vm2935, 1, 0
  %v5145 = vsel %vm2936, 1, 0
  %v5146 = vsel %vm2937, 1, 0
  %v5147 = vsel %vm2938, 1, 0
  %v5148 = vsel %vm2939, 1, 0
  %v5149 = vsel %vm2940, 1, 0
  %v5150 = vsel %vm2941, 1, 0
  %v5151 = vsel %vm2942, 1, 0
  %v5152 = vsel %vm2943, 1, 0
  %v5153 = vsel %vm2944, 1, 0
  %v5154 = vsel %vm2945, 1, 0
  %v5155 = vsel %vm2946, 1, 0
  %v5156 = vsel %vm2947, 1, 0
  %v5157 = vsel %vm2948, 1, 0
  %v5158 = vsel %vm2949, 1, 0
  %v5159 = vsel %vm2950, 1, 0
  %v5160 = vsel %vm2951, 1, 0
  %v5161 = vsel %vm2952, 1, 0
  %v5162 = vsel %vm2953, 1, 0
  %v5163 = vsel %vm2954, 1, 0
  %v5164 = vsel %vm2955, 1, 0
  %v5165 = vsel %vm2956, 1, 0
  %v5166 = vsel %vm2957, 1, 0
  %v5167 = vsel %vm2958, 1, 0
  %v5168 = vsel %vm2959, 1, 0
  %v5169 = vsel %vm2960, 1, 0
  %v5170 = vsel %vm2961, 1, 0
  %v5171 = vsel %vm2962, 1, 0
  %v5172 = vsel %vm2963, 1, 0
  %v5173 = vsel %vm2964, 1, 0
  %v5174 = vsel %vm2965, 1, 0
  %v5175 = vsel %vm2966, 1, 0
  %v5176 = vsel %vm2967, 1, 0
  %v5177 = vsel %vm2968, 1, 0
  %v5178 = vsel %vm2969, 1, 0
  %v5179 = vsel %vm2970, 1, 0
  %v5180 = vsel %vm2971, 1, 0
  %v5181 = vsel %vm2972, 1, 0
  %v5182 = vsel %vm2973, 1, 0
  %v5183 = vsel %vm2974, 1, 0
  %v5184 = vsel %vm2975, 1, 0
  %v5185 = vsel %vm2976, 1, 0
  %v5186 = vsel %vm2977, 1, 0
  %v5187 = vsel %vm2978, 1, 0
  %v5188 = vsel %vm2979, 1, 0
  %v5189 = vsel %vm2980, 1, 0
  %v5190 = vsel %vm2981, 1, 0
  %v5191 = vsel %vm2982, 1, 0
  %v5192 = vsel %vm2983, 1, 0
  %v5193 = vsel %vm2984, 1, 0
  %v5194 = vsel %vm2985, 1, 0
  %v5195 = vsel %vm2986, 1, 0
  %v5196 = vsel %vm2987, 1, 0
  %v5197 = vsel %vm2988, 1, 0
  %v5198 = vsel %vm2989, 1, 0
  %vm5199 = vcmp.eq.s32.totalorder %v5135, 1
  %vm5200 = vcmp.eq.s32.totalorder %v5136, 1
  %vm5201 = vcmp.eq.s32.totalorder %v5137, 1
  %vm5202 = vcmp.eq.s32.totalorder %v5138, 1
  %vm5203 = vcmp.eq.s32.totalorder %v5139, 1
  %vm5204 = vcmp.eq.s32.totalorder %v5140, 1
  %vm5205 = vcmp.eq.s32.totalorder %v5141, 1
  %vm5206 = vcmp.eq.s32.totalorder %v5142, 1
  %vm5207 = vcmp.eq.s32.totalorder %v5143, 1
  %vm5208 = vcmp.eq.s32.totalorder %v5144, 1
  %vm5209 = vcmp.eq.s32.totalorder %v5145, 1
  %vm5210 = vcmp.eq.s32.totalorder %v5146, 1
  %vm5211 = vcmp.eq.s32.totalorder %v5147, 1
  %vm5212 = vcmp.eq.s32.totalorder %v5148, 1
  %vm5213 = vcmp.eq.s32.totalorder %v5149, 1
  %vm5214 = vcmp.eq.s32.totalorder %v5150, 1
  %vm5215 = vcmp.eq.s32.totalorder %v5151, 1
  %vm5216 = vcmp.eq.s32.totalorder %v5152, 1
  %vm5217 = vcmp.eq.s32.totalorder %v5153, 1
  %vm5218 = vcmp.eq.s32.totalorder %v5154, 1
  %vm5219 = vcmp.eq.s32.totalorder %v5155, 1
  %vm5220 = vcmp.eq.s32.totalorder %v5156, 1
  %vm5221 = vcmp.eq.s32.totalorder %v5157, 1
  %vm5222 = vcmp.eq.s32.totalorder %v5158, 1
  %vm5223 = vcmp.eq.s32.totalorder %v5159, 1
  %vm5224 = vcmp.eq.s32.totalorder %v5160, 1
  %vm5225 = vcmp.eq.s32.totalorder %v5161, 1
  %vm5226 = vcmp.eq.s32.totalorder %v5162, 1
  %vm5227 = vcmp.eq.s32.totalorder %v5163, 1
  %vm5228 = vcmp.eq.s32.totalorder %v5164, 1
  %vm5229 = vcmp.eq.s32.totalorder %v5165, 1
  %vm5230 = vcmp.eq.s32.totalorder %v5166, 1
  %vm5231 = vcmp.eq.s32.totalorder %v5167, 1
  %vm5232 = vcmp.eq.s32.totalorder %v5168, 1
  %vm5233 = vcmp.eq.s32.totalorder %v5169, 1
  %vm5234 = vcmp.eq.s32.totalorder %v5170, 1
  %vm5235 = vcmp.eq.s32.totalorder %v5171, 1
  %vm5236 = vcmp.eq.s32.totalorder %v5172, 1
  %vm5237 = vcmp.eq.s32.totalorder %v5173, 1
  %vm5238 = vcmp.eq.s32.totalorder %v5174, 1
  %vm5239 = vcmp.eq.s32.totalorder %v5175, 1
  %vm5240 = vcmp.eq.s32.totalorder %v5176, 1
  %vm5241 = vcmp.eq.s32.totalorder %v5177, 1
  %vm5242 = vcmp.eq.s32.totalorder %v5178, 1
  %vm5243 = vcmp.eq.s32.totalorder %v5179, 1
  %vm5244 = vcmp.eq.s32.totalorder %v5180, 1
  %vm5245 = vcmp.eq.s32.totalorder %v5181, 1
  %vm5246 = vcmp.eq.s32.totalorder %v5182, 1
  %vm5247 = vcmp.eq.s32.totalorder %v5183, 1
  %vm5248 = vcmp.eq.s32.totalorder %v5184, 1
  %vm5249 = vcmp.eq.s32.totalorder %v5185, 1
  %vm5250 = vcmp.eq.s32.totalorder %v5186, 1
  %vm5251 = vcmp.eq.s32.totalorder %v5187, 1
  %vm5252 = vcmp.eq.s32.totalorder %v5188, 1
  %vm5253 = vcmp.eq.s32.totalorder %v5189, 1
  %vm5254 = vcmp.eq.s32.totalorder %v5190, 1
  %vm5255 = vcmp.eq.s32.totalorder %v5191, 1
  %vm5256 = vcmp.eq.s32.totalorder %v5192, 1
  %vm5257 = vcmp.eq.s32.totalorder %v5193, 1
  %vm5258 = vcmp.eq.s32.totalorder %v5194, 1
  %vm5259 = vcmp.eq.s32.totalorder %v5195, 1
  %vm5260 = vcmp.eq.s32.totalorder %v5196, 1
  %vm5261 = vcmp.eq.s32.totalorder %v5197, 1
  %vm5262 = vcmp.eq.s32.totalorder %v5198, 1
  %v5263 = vsel %vm5199, %v4612, 0.0
  %v5264 = vsel %vm5200, %v4614, 0.0
  %v5265 = vsel %vm5201, %v4617, 0.0
  %v5266 = vsel %vm5202, %v4619, 0.0
  %v5267 = vsel %vm5203, %v4622, 0.0
  %v5268 = vsel %vm5204, %v4624, 0.0
  %v5269 = vsel %vm5205, %v4627, 0.0
  %v5270 = vsel %vm5206, %v4629, 0.0
  %v5271 = vsel %vm5207, %v4632, 0.0
  %v5272 = vsel %vm5208, %v4634, 0.0
  %v5273 = vsel %vm5209, %v4637, 0.0
  %v5274 = vsel %vm5210, %v4639, 0.0
  %v5275 = vsel %vm5211, %v4642, 0.0
  %v5276 = vsel %vm5212, %v4644, 0.0
  %v5277 = vsel %vm5213, %v4647, 0.0
  %v5278 = vsel %vm5214, %v4649, 0.0
  %v5279 = vsel %vm5215, %v4652, 0.0
  %v5280 = vsel %vm5216, %v4654, 0.0
  %v5281 = vsel %vm5217, %v4657, 0.0
  %v5282 = vsel %vm5218, %v4659, 0.0
  %v5283 = vsel %vm5219, %v4662, 0.0
  %v5284 = vsel %vm5220, %v4664, 0.0
  %v5285 = vsel %vm5221, %v4667, 0.0
  %v5286 = vsel %vm5222, %v4669, 0.0
  %v5287 = vsel %vm5223, %v4672, 0.0
  %v5288 = vsel %vm5224, %v4674, 0.0
  %v5289 = vsel %vm5225, %v4677, 0.0
  %v5290 = vsel %vm5226, %v4679, 0.0
  %v5291 = vsel %vm5227, %v4682, 0.0
  %v5292 = vsel %vm5228, %v4684, 0.0
  %v5293 = vsel %vm5229, %v4687, 0.0
  %v5294 = vsel %vm5230, %v4689, 0.0
  %v5295 = vsel %vm5231, %v4692, 0.0
  %v5296 = vsel %vm5232, %v4694, 0.0
  %v5297 = vsel %vm5233, %v4697, 0.0
  %v5298 = vsel %vm5234, %v4699, 0.0
  %v5299 = vsel %vm5235, %v4702, 0.0
  %v5300 = vsel %vm5236, %v4704, 0.0
  %v5301 = vsel %vm5237, %v4707, 0.0
  %v5302 = vsel %vm5238, %v4709, 0.0
  %v5303 = vsel %vm5239, %v4712, 0.0
  %v5304 = vsel %vm5240, %v4714, 0.0
  %v5305 = vsel %vm5241, %v4717, 0.0
  %v5306 = vsel %vm5242, %v4719, 0.0
  %v5307 = vsel %vm5243, %v4722, 0.0
  %v5308 = vsel %vm5244, %v4724, 0.0
  %v5309 = vsel %vm5245, %v4727, 0.0
  %v5310 = vsel %vm5246, %v4729, 0.0
  %v5311 = vsel %vm5247, %v4732, 0.0
  %v5312 = vsel %vm5248, %v4734, 0.0
  %v5313 = vsel %vm5249, %v4737, 0.0
  %v5314 = vsel %vm5250, %v4739, 0.0
  %v5315 = vsel %vm5251, %v4742, 0.0
  %v5316 = vsel %vm5252, %v4744, 0.0
  %v5317 = vsel %vm5253, %v4747, 0.0
  %v5318 = vsel %vm5254, %v4749, 0.0
  %v5319 = vsel %vm5255, %v4752, 0.0
  %v5320 = vsel %vm5256, %v4754, 0.0
  %v5321 = vsel %vm5257, %v4757, 0.0
  %v5322 = vsel %vm5258, %v4759, 0.0
  %v5323 = vsel %vm5259, %v4762, 0.0
  %v5324 = vsel %vm5260, %v4764, 0.0
  %v5325 = vsel %vm5261, %v4607, 0.0
  %v5326 = vsel %vm5262, %v4609, 0.0
  %v5327 = vadd.f32 %v4976, %v5263
  %v5328 = vadd.f32 %v4978, %v5264
  %v5329 = vadd.f32 %v4981, %v5265
  %v5330 = vadd.f32 %v4983, %v5266
  %v5331 = vadd.f32 %v4986, %v5267
  %v5332 = vadd.f32 %v4988, %v5268
  %v5333 = vadd.f32 %v4991, %v5269
  %v5334 = vadd.f32 %v4993, %v5270
  %v5335 = vadd.f32 %v4996, %v5271
  %v5336 = vadd.f32 %v4998, %v5272
  %v5337 = vadd.f32 %v5001, %v5273
  %v5338 = vadd.f32 %v5003, %v5274
  %v5339 = vadd.f32 %v5006, %v5275
  %v5340 = vadd.f32 %v5008, %v5276
  %v5341 = vadd.f32 %v5011, %v5277
  %v5342 = vadd.f32 %v5013, %v5278
  %v5343 = vadd.f32 %v5016, %v5279
  %v5344 = vadd.f32 %v5018, %v5280
  %v5345 = vadd.f32 %v5021, %v5281
  %v5346 = vadd.f32 %v5023, %v5282
  %v5347 = vadd.f32 %v5026, %v5283
  %v5348 = vadd.f32 %v5028, %v5284
  %v5349 = vadd.f32 %v5031, %v5285
  %v5350 = vadd.f32 %v5033, %v5286
  %v5351 = vadd.f32 %v5036, %v5287
  %v5352 = vadd.f32 %v5038, %v5288
  %v5353 = vadd.f32 %v5041, %v5289
  %v5354 = vadd.f32 %v5043, %v5290
  %v5355 = vadd.f32 %v5046, %v5291
  %v5356 = vadd.f32 %v5048, %v5292
  %v5357 = vadd.f32 %v5051, %v5293
  %v5358 = vadd.f32 %v5053, %v5294
  %v5359 = vadd.f32 %v5056, %v5295
  %v5360 = vadd.f32 %v5058, %v5296
  %v5361 = vadd.f32 %v5061, %v5297
  %v5362 = vadd.f32 %v5063, %v5298
  %v5363 = vadd.f32 %v5066, %v5299
  %v5364 = vadd.f32 %v5068, %v5300
  %v5365 = vadd.f32 %v5071, %v5301
  %v5366 = vadd.f32 %v5073, %v5302
  %v5367 = vadd.f32 %v5076, %v5303
  %v5368 = vadd.f32 %v5078, %v5304
  %v5369 = vadd.f32 %v5081, %v5305
  %v5370 = vadd.f32 %v5083, %v5306
  %v5371 = vadd.f32 %v5086, %v5307
  %v5372 = vadd.f32 %v5088, %v5308
  %v5373 = vadd.f32 %v5091, %v5309
  %v5374 = vadd.f32 %v5093, %v5310
  %v5375 = vadd.f32 %v5096, %v5311
  %v5376 = vadd.f32 %v5098, %v5312
  %v5377 = vadd.f32 %v5101, %v5313
  %v5378 = vadd.f32 %v5103, %v5314
  %v5379 = vadd.f32 %v5106, %v5315
  %v5380 = vadd.f32 %v5108, %v5316
  %v5381 = vadd.f32 %v5111, %v5317
  %v5382 = vadd.f32 %v5113, %v5318
  %v5383 = vadd.f32 %v5116, %v5319
  %v5384 = vadd.f32 %v5118, %v5320
  %v5385 = vadd.f32 %v5121, %v5321
  %v5386 = vadd.f32 %v5123, %v5322
  %v5387 = vadd.f32 %v5126, %v5323
  %v5388 = vadd.f32 %v5128, %v5324
  %v5389 = vadd.f32 %v5131, %v5325
  %v5390 = vadd.f32 %v5133, %v5326
  %v5391 = vld [vmem:[%s6] sm:$0x1]
  %v5393 = vperm.slane %v5391, 0
  %v5395 = vadd.f32 %v5327, %v5393
  %v5396 = vadd.f32 %v5328, %v5393
  %v5397 = vadd.f32 %v5329, %v5393
  %v5398 = vadd.f32 %v5330, %v5393
  %v5399 = vadd.f32 %v5331, %v5393
  %v5400 = vadd.f32 %v5332, %v5393
  %v5401 = vadd.f32 %v5333, %v5393
  %v5402 = vadd.f32 %v5334, %v5393
  %v5403 = vadd.f32 %v5335, %v5393
  %v5404 = vadd.f32 %v5336, %v5393
  %v5405 = vadd.f32 %v5337, %v5393
  %v5406 = vadd.f32 %v5338, %v5393
  %v5407 = vadd.f32 %v5339, %v5393
  %v5408 = vadd.f32 %v5340, %v5393
  %v5409 = vadd.f32 %v5341, %v5393
  %v5410 = vadd.f32 %v5342, %v5393
  %v5411 = vadd.f32 %v5343, %v5393
  %v5412 = vadd.f32 %v5344, %v5393
  %v5413 = vadd.f32 %v5345, %v5393
  %v5414 = vadd.f32 %v5346, %v5393
  %v5415 = vadd.f32 %v5347, %v5393
  %v5416 = vadd.f32 %v5348, %v5393
  %v5417 = vadd.f32 %v5349, %v5393
  %v5418 = vadd.f32 %v5350, %v5393
  %v5419 = vadd.f32 %v5351, %v5393
  %v5420 = vadd.f32 %v5352, %v5393
  %v5421 = vadd.f32 %v5353, %v5393
  %v5422 = vadd.f32 %v5354, %v5393
  %v5423 = vadd.f32 %v5355, %v5393
  %v5424 = vadd.f32 %v5356, %v5393
  %v5425 = vadd.f32 %v5357, %v5393
  %v5426 = vadd.f32 %v5358, %v5393
  %v5427 = vadd.f32 %v5359, %v5393
  %v5428 = vadd.f32 %v5360, %v5393
  %v5429 = vadd.f32 %v5361, %v5393
  %v5430 = vadd.f32 %v5362, %v5393
  %v5431 = vadd.f32 %v5363, %v5393
  %v5432 = vadd.f32 %v5364, %v5393
  %v5433 = vadd.f32 %v5365, %v5393
  %v5434 = vadd.f32 %v5366, %v5393
  %v5435 = vadd.f32 %v5367, %v5393
  %v5436 = vadd.f32 %v5368, %v5393
  %v5437 = vadd.f32 %v5369, %v5393
  %v5438 = vadd.f32 %v5370, %v5393
  %v5439 = vadd.f32 %v5371, %v5393
  %v5440 = vadd.f32 %v5372, %v5393
  %v5441 = vadd.f32 %v5373, %v5393
  %v5442 = vadd.f32 %v5374, %v5393
  %v5443 = vadd.f32 %v5375, %v5393
  %v5444 = vadd.f32 %v5376, %v5393
  %v5445 = vadd.f32 %v5377, %v5393
  %v5446 = vadd.f32 %v5378, %v5393
  %v5447 = vadd.f32 %v5379, %v5393
  %v5448 = vadd.f32 %v5380, %v5393
  %v5449 = vadd.f32 %v5381, %v5393
  %v5450 = vadd.f32 %v5382, %v5393
  %v5451 = vadd.f32 %v5383, %v5393
  %v5452 = vadd.f32 %v5384, %v5393
  %v5453 = vadd.f32 %v5385, %v5393
  %v5454 = vadd.f32 %v5386, %v5393
  %v5455 = vadd.f32 %v5387, %v5393
  %v5456 = vadd.f32 %v5388, %v5393
  %v5457 = vadd.f32 %v5389, %v5393
  %v5458 = vadd.f32 %v5390, %v5393
  %v5459 = vld [vmem:[%s4] sm:$0xff]
  %v5460 = vld [vmem:[%s4 + $0x8] sm:$0xff]
  %v5461 = vld [vmem:[%s4 + $0x10] sm:$0xff]
  %v5462 = vld [vmem:[%s4 + $0x18] sm:$0xff]
  %v5463 = vld [vmem:[%s4 + $0x20] sm:$0xff]
  %v5464 = vld [vmem:[%s4 + $0x28] sm:$0xff]
  %v5465 = vld [vmem:[%s4 + $0x30] sm:$0xff]
  %v5466 = vld [vmem:[%s4 + $0x38] sm:$0xff]
  %v5467 = vld [vmem:[%s4 + $0x40] sm:$0xff]
  %v5468 = vld [vmem:[%s4 + $0x48] sm:$0xff]
  %v5469 = vld [vmem:[%s4 + $0x50] sm:$0xff]
  %v5470 = vld [vmem:[%s4 + $0x58] sm:$0xff]
  %v5471 = vld [vmem:[%s4 + $0x60] sm:$0xff]
  %v5472 = vld [vmem:[%s4 + $0x68] sm:$0xff]
  %v5473 = vld [vmem:[%s4 + $0x70] sm:$0xff]
  %v5474 = vld [vmem:[%s4 + $0x78] sm:$0xff]
  %v5475 = vld [vmem:[%s4 + $0x80] sm:$0xff]
  %v5476 = vld [vmem:[%s4 + $0x88] sm:$0xff]
  %v5477 = vld [vmem:[%s4 + $0x90] sm:$0xff]
  %v5478 = vld [vmem:[%s4 + $0x98] sm:$0xff]
  %v5479 = vld [vmem:[%s4 + $0xa0] sm:$0xff]
  %v5480 = vld [vmem:[%s4 + $0xa8] sm:$0xff]
  %v5481 = vld [vmem:[%s4 + $0xb0] sm:$0xff]
  %v5482 = vld [vmem:[%s4 + $0xb8] sm:$0xff]
  %v5483 = vld [vmem:[%s4 + $0xc0] sm:$0xff]
  %v5484 = vld [vmem:[%s4 + $0xc8] sm:$0xff]
  %v5485 = vld [vmem:[%s4 + $0xd0] sm:$0xff]
  %v5486 = vld [vmem:[%s4 + $0xd8] sm:$0xff]
  %v5487 = vld [vmem:[%s4 + $0xe0] sm:$0xff]
  %v5488 = vld [vmem:[%s4 + $0xe8] sm:$0xff]
  %v5489 = vld [vmem:[%s4 + $0xf0] sm:$0xff]
  %v5490 = vld [vmem:[%s4 + $0xf8] sm:$0xff]
  %v5491 = vld [vmem:[%s4 + $0x100] sm:$0xff]
  %v5492 = vld [vmem:[%s4 + $0x108] sm:$0xff]
  %v5493 = vld [vmem:[%s4 + $0x110] sm:$0xff]
  %v5494 = vld [vmem:[%s4 + $0x118] sm:$0xff]
  %v5495 = vld [vmem:[%s4 + $0x120] sm:$0xff]
  %v5496 = vld [vmem:[%s4 + $0x128] sm:$0xff]
  %v5497 = vld [vmem:[%s4 + $0x130] sm:$0xff]
  %v5498 = vld [vmem:[%s4 + $0x138] sm:$0xff]
  %v5499 = vld [vmem:[%s4 + $0x140] sm:$0xff]
  %v5500 = vld [vmem:[%s4 + $0x148] sm:$0xff]
  %v5501 = vld [vmem:[%s4 + $0x150] sm:$0xff]
  %v5502 = vld [vmem:[%s4 + $0x158] sm:$0xff]
  %v5503 = vld [vmem:[%s4 + $0x160] sm:$0xff]
  %v5504 = vld [vmem:[%s4 + $0x168] sm:$0xff]
  %v5505 = vld [vmem:[%s4 + $0x170] sm:$0xff]
  %v5506 = vld [vmem:[%s4 + $0x178] sm:$0xff]
  %v5507 = vld [vmem:[%s4 + $0x180] sm:$0xff]
  %v5508 = vld [vmem:[%s4 + $0x188] sm:$0xff]
  %v5509 = vld [vmem:[%s4 + $0x190] sm:$0xff]
  %v5510 = vld [vmem:[%s4 + $0x198] sm:$0xff]
  %v5511 = vld [vmem:[%s4 + $0x1a0] sm:$0xff]
  %v5512 = vld [vmem:[%s4 + $0x1a8] sm:$0xff]
  %v5513 = vld [vmem:[%s4 + $0x1b0] sm:$0xff]
  %v5514 = vld [vmem:[%s4 + $0x1b8] sm:$0xff]
  %v5515 = vld [vmem:[%s4 + $0x1c0] sm:$0xff]
  %v5516 = vld [vmem:[%s4 + $0x1c8] sm:$0xff]
  %v5517 = vld [vmem:[%s4 + $0x1d0] sm:$0xff]
  %v5518 = vld [vmem:[%s4 + $0x1d8] sm:$0xff]
  %v5519 = vld [vmem:[%s4 + $0x1e0] sm:$0xff]
  %v5520 = vld [vmem:[%s4 + $0x1e8] sm:$0xff]
  %v5521 = vld [vmem:[%s4 + $0x1f0] sm:$0xff]
  %v5522 = vld [vmem:[%s4 + $0x1f8] sm:$0xff]
  %v5523 = vadd.f32 %v5395, %v5459
  %v5524 = vadd.f32 %v5396, %v5460
  %v5525 = vadd.f32 %v5397, %v5461
  %v5526 = vadd.f32 %v5398, %v5462
  %v5527 = vadd.f32 %v5399, %v5463
  %v5528 = vadd.f32 %v5400, %v5464
  %v5529 = vadd.f32 %v5401, %v5465
  %v5530 = vadd.f32 %v5402, %v5466
  %v5531 = vadd.f32 %v5403, %v5467
  %v5532 = vadd.f32 %v5404, %v5468
  %v5533 = vadd.f32 %v5405, %v5469
  %v5534 = vadd.f32 %v5406, %v5470
  %v5535 = vadd.f32 %v5407, %v5471
  %v5536 = vadd.f32 %v5408, %v5472
  %v5537 = vadd.f32 %v5409, %v5473
  %v5538 = vadd.f32 %v5410, %v5474
  %v5539 = vadd.f32 %v5411, %v5475
  %v5540 = vadd.f32 %v5412, %v5476
  %v5541 = vadd.f32 %v5413, %v5477
  %v5542 = vadd.f32 %v5414, %v5478
  %v5543 = vadd.f32 %v5415, %v5479
  %v5544 = vadd.f32 %v5416, %v5480
  %v5545 = vadd.f32 %v5417, %v5481
  %v5546 = vadd.f32 %v5418, %v5482
  %v5547 = vadd.f32 %v5419, %v5483
  %v5548 = vadd.f32 %v5420, %v5484
  %v5549 = vadd.f32 %v5421, %v5485
  %v5550 = vadd.f32 %v5422, %v5486
  %v5551 = vadd.f32 %v5423, %v5487
  %v5552 = vadd.f32 %v5424, %v5488
  %v5553 = vadd.f32 %v5425, %v5489
  %v5554 = vadd.f32 %v5426, %v5490
  %v5555 = vadd.f32 %v5427, %v5491
  %v5556 = vadd.f32 %v5428, %v5492
  %v5557 = vadd.f32 %v5429, %v5493
  %v5558 = vadd.f32 %v5430, %v5494
  %v5559 = vadd.f32 %v5431, %v5495
  %v5560 = vadd.f32 %v5432, %v5496
  %v5561 = vadd.f32 %v5433, %v5497
  %v5562 = vadd.f32 %v5434, %v5498
  %v5563 = vadd.f32 %v5435, %v5499
  %v5564 = vadd.f32 %v5436, %v5500
  %v5565 = vadd.f32 %v5437, %v5501
  %v5566 = vadd.f32 %v5438, %v5502
  %v5567 = vadd.f32 %v5439, %v5503
  %v5568 = vadd.f32 %v5440, %v5504
  %v5569 = vadd.f32 %v5441, %v5505
  %v5570 = vadd.f32 %v5442, %v5506
  %v5571 = vadd.f32 %v5443, %v5507
  %v5572 = vadd.f32 %v5444, %v5508
  %v5573 = vadd.f32 %v5445, %v5509
  %v5574 = vadd.f32 %v5446, %v5510
  %v5575 = vadd.f32 %v5447, %v5511
  %v5576 = vadd.f32 %v5448, %v5512
  %v5577 = vadd.f32 %v5449, %v5513
  %v5578 = vadd.f32 %v5450, %v5514
  %v5579 = vadd.f32 %v5451, %v5515
  %v5580 = vadd.f32 %v5452, %v5516
  %v5581 = vadd.f32 %v5453, %v5517
  %v5582 = vadd.f32 %v5454, %v5518
  %v5583 = vadd.f32 %v5455, %v5519
  %v5584 = vadd.f32 %v5456, %v5520
  %v5585 = vadd.f32 %v5457, %v5521
  %v5586 = vadd.f32 %v5458, %v5522
  %v5587 = vmax.f32 %v5523, 0.0
  %v5588 = vmax.f32 %v5524, 0.0
  %v5589 = vmax.f32 %v5525, 0.0
  %v5590 = vmax.f32 %v5526, 0.0
  %v5591 = vmax.f32 %v5527, 0.0
  %v5592 = vmax.f32 %v5528, 0.0
  %v5593 = vmax.f32 %v5529, 0.0
  %v5594 = vmax.f32 %v5530, 0.0
  %v5595 = vmax.f32 %v5531, 0.0
  %v5596 = vmax.f32 %v5532, 0.0
  %v5597 = vmax.f32 %v5533, 0.0
  %v5598 = vmax.f32 %v5534, 0.0
  %v5599 = vmax.f32 %v5535, 0.0
  %v5600 = vmax.f32 %v5536, 0.0
  %v5601 = vmax.f32 %v5537, 0.0
  %v5602 = vmax.f32 %v5538, 0.0
  %v5603 = vmax.f32 %v5539, 0.0
  %v5604 = vmax.f32 %v5540, 0.0
  %v5605 = vmax.f32 %v5541, 0.0
  %v5606 = vmax.f32 %v5542, 0.0
  %v5607 = vmax.f32 %v5543, 0.0
  %v5608 = vmax.f32 %v5544, 0.0
  %v5609 = vmax.f32 %v5545, 0.0
  %v5610 = vmax.f32 %v5546, 0.0
  %v5611 = vmax.f32 %v5547, 0.0
  %v5612 = vmax.f32 %v5548, 0.0
  %v5613 = vmax.f32 %v5549, 0.0
  %v5614 = vmax.f32 %v5550, 0.0
  %v5615 = vmax.f32 %v5551, 0.0
  %v5616 = vmax.f32 %v5552, 0.0
  %v5617 = vmax.f32 %v5553, 0.0
  %v5618 = vmax.f32 %v5554, 0.0
  %v5619 = vmax.f32 %v5555, 0.0
  %v5620 = vmax.f32 %v5556, 0.0
  %v5621 = vmax.f32 %v5557, 0.0
  %v5622 = vmax.f32 %v5558, 0.0
  %v5623 = vmax.f32 %v5559, 0.0
  %v5624 = vmax.f32 %v5560, 0.0
  %v5625 = vmax.f32 %v5561, 0.0
  %v5626 = vmax.f32 %v5562, 0.0
  %v5627 = vmax.f32 %v5563, 0.0
  %v5628 = vmax.f32 %v5564, 0.0
  %v5629 = vmax.f32 %v5565, 0.0
  %v5630 = vmax.f32 %v5566, 0.0
  %v5631 = vmax.f32 %v5567, 0.0
  %v5632 = vmax.f32 %v5568, 0.0
  %v5633 = vmax.f32 %v5569, 0.0
  %v5634 = vmax.f32 %v5570, 0.0
  %v5635 = vmax.f32 %v5571, 0.0
  %v5636 = vmax.f32 %v5572, 0.0
  %v5637 = vmax.f32 %v5573, 0.0
  %v5638 = vmax.f32 %v5574, 0.0
  %v5639 = vmax.f32 %v5575, 0.0
  %v5640 = vmax.f32 %v5576, 0.0
  %v5641 = vmax.f32 %v5577, 0.0
  %v5642 = vmax.f32 %v5578, 0.0
  %v5643 = vmax.f32 %v5579, 0.0
  %v5644 = vmax.f32 %v5580, 0.0
  %v5645 = vmax.f32 %v5581, 0.0
  %v5646 = vmax.f32 %v5582, 0.0
  %v5647 = vmax.f32 %v5583, 0.0
  %v5648 = vmax.f32 %v5584, 0.0
  %v5649 = vmax.f32 %v5585, 0.0
  %v5650 = vmax.f32 %v5586, 0.0
  %v5651 = vrot.slane %v5587, 7
  %v5652 = vrot.slane %v5588, 7
  %v5653 = vrot.slane %v5589, 7
  %v5654 = vrot.slane %v5590, 7
  %v5655 = vrot.slane %v5591, 7
  %v5656 = vrot.slane %v5592, 7
  %v5657 = vrot.slane %v5593, 7
  %v5658 = vrot.slane %v5594, 7
  %v5659 = vrot.slane %v5595, 7
  %v5660 = vrot.slane %v5596, 7
  %v5661 = vrot.slane %v5597, 7
  %v5662 = vrot.slane %v5598, 7
  %v5663 = vrot.slane %v5599, 7
  %v5664 = vrot.slane %v5600, 7
  %v5665 = vrot.slane %v5601, 7
  %v5666 = vrot.slane %v5602, 7
  %v5667 = vrot.slane %v5603, 7
  %v5668 = vrot.slane %v5604, 7
  %v5669 = vrot.slane %v5605, 7
  %v5670 = vrot.slane %v5606, 7
  %v5671 = vrot.slane %v5607, 7
  %v5672 = vrot.slane %v5608, 7
  %v5673 = vrot.slane %v5609, 7
  %v5674 = vrot.slane %v5610, 7
  %v5675 = vrot.slane %v5611, 7
  %v5676 = vrot.slane %v5612, 7
  %v5677 = vrot.slane %v5613, 7
  %v5678 = vrot.slane %v5614, 7
  %v5679 = vrot.slane %v5615, 7
  %v5680 = vrot.slane %v5616, 7
  %v5681 = vrot.slane %v5617, 7
  %v5682 = vrot.slane %v5618, 7
  %v5683 = vrot.slane %v5619, 7
  %v5684 = vrot.slane %v5620, 7
  %v5685 = vrot.slane %v5621, 7
  %v5686 = vrot.slane %v5622, 7
  %v5687 = vrot.slane %v5623, 7
  %v5688 = vrot.slane %v5624, 7
  %v5689 = vrot.slane %v5625, 7
  %v5690 = vrot.slane %v5626, 7
  %v5691 = vrot.slane %v5627, 7
  %v5692 = vrot.slane %v5628, 7
  %v5693 = vrot.slane %v5629, 7
  %v5694 = vrot.slane %v5630, 7
  %v5695 = vrot.slane %v5631, 7
  %v5696 = vrot.slane %v5632, 7
  %v5697 = vrot.slane %v5633, 7
  %v5698 = vrot.slane %v5634, 7
  %v5699 = vrot.slane %v5635, 7
  %v5700 = vrot.slane %v5636, 7
  %v5701 = vrot.slane %v5637, 7
  %v5702 = vrot.slane %v5638, 7
  %v5703 = vrot.slane %v5639, 7
  %v5704 = vrot.slane %v5640, 7
  %v5705 = vrot.slane %v5641, 7
  %v5706 = vrot.slane %v5642, 7
  %v5707 = vrot.slane %v5643, 7
  %v5708 = vrot.slane %v5644, 7
  %v5709 = vrot.slane %v5645, 7
  %v5710 = vrot.slane %v5646, 7
  %v5711 = vrot.slane %v5647, 7
  %v5712 = vrot.slane %v5648, 7
  %v5713 = vrot.slane %v5649, 7
  %v5714 = vrot.slane %v5650, 7
  %v5715 = vsel %vm3054, %v5713, %v5714
  %v5716 = vsel %vm3054, %v5712, %v5713
  %v5717 = vsel %vm3054, %v5711, %v5712
  %v5718 = vsel %vm3054, %v5710, %v5711
  %v5719 = vsel %vm3054, %v5709, %v5710
  %v5720 = vsel %vm3054, %v5708, %v5709
  %v5721 = vsel %vm3054, %v5707, %v5708
  %v5722 = vsel %vm3054, %v5706, %v5707
  %v5723 = vsel %vm3054, %v5705, %v5706
  %v5724 = vsel %vm3054, %v5704, %v5705
  %v5725 = vsel %vm3054, %v5703, %v5704
  %v5726 = vsel %vm3054, %v5702, %v5703
  %v5727 = vsel %vm3054, %v5701, %v5702
  %v5728 = vsel %vm3054, %v5700, %v5701
  %v5729 = vsel %vm3054, %v5699, %v5700
  %v5730 = vsel %vm3054, %v5698, %v5699
  %v5731 = vsel %vm3054, %v5697, %v5698
  %v5732 = vsel %vm3054, %v5696, %v5697
  %v5733 = vsel %vm3054, %v5695, %v5696
  %v5734 = vsel %vm3054, %v5694, %v5695
  %v5735 = vsel %vm3054, %v5693, %v5694
  %v5736 = vsel %vm3054, %v5692, %v5693
  %v5737 = vsel %vm3054, %v5691, %v5692
  %v5738 = vsel %vm3054, %v5690, %v5691
  %v5739 = vsel %vm3054, %v5689, %v5690
  %v5740 = vsel %vm3054, %v5688, %v5689
  %v5741 = vsel %vm3054, %v5687, %v5688
  %v5742 = vsel %vm3054, %v5686, %v5687
  %v5743 = vsel %vm3054, %v5685, %v5686
  %v5744 = vsel %vm3054, %v5684, %v5685
  %v5745 = vsel %vm3054, %v5683, %v5684
  %v5746 = vsel %vm3054, %v5682, %v5683
  %v5747 = vsel %vm3054, %v5681, %v5682
  %v5748 = vsel %vm3054, %v5680, %v5681
  %v5749 = vsel %vm3054, %v5679, %v5680
  %v5750 = vsel %vm3054, %v5678, %v5679
  %v5751 = vsel %vm3054, %v5677, %v5678
  %v5752 = vsel %vm3054, %v5676, %v5677
  %v5753 = vsel %vm3054, %v5675, %v5676
  %v5754 = vsel %vm3054, %v5674, %v5675
  %v5755 = vsel %vm3054, %v5673, %v5674
  %v5756 = vsel %vm3054, %v5672, %v5673
  %v5757 = vsel %vm3054, %v5671, %v5672
  %v5758 = vsel %vm3054, %v5670, %v5671
  %v5759 = vsel %vm3054, %v5669, %v5670
  %v5760 = vsel %vm3054, %v5668, %v5669
  %v5761 = vsel %vm3054, %v5667, %v5668
  %v5762 = vsel %vm3054, %v5666, %v5667
  %v5763 = vsel %vm3054, %v5665, %v5666
  %v5764 = vsel %vm3054, %v5664, %v5665
  %v5765 = vsel %vm3054, %v5663, %v5664
  %v5766 = vsel %vm3054, %v5662, %v5663
  %v5767 = vsel %vm3054, %v5661, %v5662
  %v5768 = vsel %vm3054, %v5660, %v5661
  %v5769 = vsel %vm3054, %v5659, %v5660
  %v5770 = vsel %vm3054, %v5658, %v5659
  %v5771 = vsel %vm3054, %v5657, %v5658
  %v5772 = vsel %vm3054, %v5656, %v5657
  %v5773 = vsel %vm3054, %v5655, %v5656
  %v5774 = vsel %vm3054, %v5654, %v5655
  %v5775 = vsel %vm3054, %v5653, %v5654
  %v5776 = vsel %vm3054, %v5652, %v5653
  %v5777 = vsel %vm3054, %v5651, %v5652
  %v5778 = vsel %vm3054, %v5714, %v5651
  %v5779 = vsel %vm3183, %v5778, 0.0
  %v5780 = vsel %vm3184, %v5777, 0.0
  %v5781 = vsel %vm3185, %v5776, 0.0
  %v5782 = vsel %vm3186, %v5775, 0.0
  %v5783 = vsel %vm3187, %v5774, 0.0
  %v5784 = vsel %vm3188, %v5773, 0.0
  %v5785 = vsel %vm3189, %v5772, 0.0
  %v5786 = vsel %vm3190, %v5771, 0.0
  %v5787 = vsel %vm3191, %v5770, 0.0
  %v5788 = vsel %vm3192, %v5769, 0.0
  %v5789 = vsel %vm3193, %v5768, 0.0
  %v5790 = vsel %vm3194, %v5767, 0.0
  %v5791 = vsel %vm3195, %v5766, 0.0
  %v5792 = vsel %vm3196, %v5765, 0.0
  %v5793 = vsel %vm3197, %v5764, 0.0
  %v5794 = vsel %vm3198, %v5763, 0.0
  %v5795 = vsel %vm3199, %v5762, 0.0
  %v5796 = vsel %vm3200, %v5761, 0.0
  %v5797 = vsel %vm3201, %v5760, 0.0
  %v5798 = vsel %vm3202, %v5759, 0.0
  %v5799 = vsel %vm3203, %v5758, 0.0
  %v5800 = vsel %vm3204, %v5757, 0.0
  %v5801 = vsel %vm3205, %v5756, 0.0
  %v5802 = vsel %vm3206, %v5755, 0.0
  %v5803 = vsel %vm3207, %v5754, 0.0
  %v5804 = vsel %vm3208, %v5753, 0.0
  %v5805 = vsel %vm3209, %v5752, 0.0
  %v5806 = vsel %vm3210, %v5751, 0.0
  %v5807 = vsel %vm3211, %v5750, 0.0
  %v5808 = vsel %vm3212, %v5749, 0.0
  %v5809 = vsel %vm3213, %v5748, 0.0
  %v5810 = vsel %vm3214, %v5747, 0.0
  %v5811 = vsel %vm3215, %v5746, 0.0
  %v5812 = vsel %vm3216, %v5745, 0.0
  %v5813 = vsel %vm3217, %v5744, 0.0
  %v5814 = vsel %vm3218, %v5743, 0.0
  %v5815 = vsel %vm3219, %v5742, 0.0
  %v5816 = vsel %vm3220, %v5741, 0.0
  %v5817 = vsel %vm3221, %v5740, 0.0
  %v5818 = vsel %vm3222, %v5739, 0.0
  %v5819 = vsel %vm3223, %v5738, 0.0
  %v5820 = vsel %vm3224, %v5737, 0.0
  %v5821 = vsel %vm3225, %v5736, 0.0
  %v5822 = vsel %vm3226, %v5735, 0.0
  %v5823 = vsel %vm3227, %v5734, 0.0
  %v5824 = vsel %vm3228, %v5733, 0.0
  %v5825 = vsel %vm3229, %v5732, 0.0
  %v5826 = vsel %vm3230, %v5731, 0.0
  %v5827 = vsel %vm3231, %v5730, 0.0
  %v5828 = vsel %vm3232, %v5729, 0.0
  %v5829 = vsel %vm3233, %v5728, 0.0
  %v5830 = vsel %vm3234, %v5727, 0.0
  %v5831 = vsel %vm3235, %v5726, 0.0
  %v5832 = vsel %vm3236, %v5725, 0.0
  %v5833 = vsel %vm3237, %v5724, 0.0
  %v5834 = vsel %vm3238, %v5723, 0.0
  %v5835 = vsel %vm3239, %v5722, 0.0
  %v5836 = vsel %vm3240, %v5721, 0.0
  %v5837 = vsel %vm3241, %v5720, 0.0
  %v5838 = vsel %vm3242, %v5719, 0.0
  %v5839 = vsel %vm3243, %v5718, 0.0
  %v5840 = vsel %vm3244, %v5717, 0.0
  %v5841 = vsel %vm3245, %v5716, 0.0
  %v5842 = vsel %vm3246, %v5715, 0.0
  %v5843 = vrot.slane %v5587, 1
  %v5844 = vrot.slane %v5588, 1
  %v5845 = vrot.slane %v5589, 1
  %v5846 = vrot.slane %v5590, 1
  %v5847 = vrot.slane %v5591, 1
  %v5848 = vrot.slane %v5592, 1
  %v5849 = vrot.slane %v5593, 1
  %v5850 = vrot.slane %v5594, 1
  %v5851 = vrot.slane %v5595, 1
  %v5852 = vrot.slane %v5596, 1
  %v5853 = vrot.slane %v5597, 1
  %v5854 = vrot.slane %v5598, 1
  %v5855 = vrot.slane %v5599, 1
  %v5856 = vrot.slane %v5600, 1
  %v5857 = vrot.slane %v5601, 1
  %v5858 = vrot.slane %v5602, 1
  %v5859 = vrot.slane %v5603, 1
  %v5860 = vrot.slane %v5604, 1
  %v5861 = vrot.slane %v5605, 1
  %v5862 = vrot.slane %v5606, 1
  %v5863 = vrot.slane %v5607, 1
  %v5864 = vrot.slane %v5608, 1
  %v5865 = vrot.slane %v5609, 1
  %v5866 = vrot.slane %v5610, 1
  %v5867 = vrot.slane %v5611, 1
  %v5868 = vrot.slane %v5612, 1
  %v5869 = vrot.slane %v5613, 1
  %v5870 = vrot.slane %v5614, 1
  %v5871 = vrot.slane %v5615, 1
  %v5872 = vrot.slane %v5616, 1
  %v5873 = vrot.slane %v5617, 1
  %v5874 = vrot.slane %v5618, 1
  %v5875 = vrot.slane %v5619, 1
  %v5876 = vrot.slane %v5620, 1
  %v5877 = vrot.slane %v5621, 1
  %v5878 = vrot.slane %v5622, 1
  %v5879 = vrot.slane %v5623, 1
  %v5880 = vrot.slane %v5624, 1
  %v5881 = vrot.slane %v5625, 1
  %v5882 = vrot.slane %v5626, 1
  %v5883 = vrot.slane %v5627, 1
  %v5884 = vrot.slane %v5628, 1
  %v5885 = vrot.slane %v5629, 1
  %v5886 = vrot.slane %v5630, 1
  %v5887 = vrot.slane %v5631, 1
  %v5888 = vrot.slane %v5632, 1
  %v5889 = vrot.slane %v5633, 1
  %v5890 = vrot.slane %v5634, 1
  %v5891 = vrot.slane %v5635, 1
  %v5892 = vrot.slane %v5636, 1
  %v5893 = vrot.slane %v5637, 1
  %v5894 = vrot.slane %v5638, 1
  %v5895 = vrot.slane %v5639, 1
  %v5896 = vrot.slane %v5640, 1
  %v5897 = vrot.slane %v5641, 1
  %v5898 = vrot.slane %v5642, 1
  %v5899 = vrot.slane %v5643, 1
  %v5900 = vrot.slane %v5644, 1
  %v5901 = vrot.slane %v5645, 1
  %v5902 = vrot.slane %v5646, 1
  %v5903 = vrot.slane %v5647, 1
  %v5904 = vrot.slane %v5648, 1
  %v5905 = vrot.slane %v5649, 1
  %v5906 = vrot.slane %v5650, 1
  %v5907 = vsel %vm3375, %v5905, %v5906
  %v5908 = vsel %vm3375, %v5904, %v5905
  %v5909 = vsel %vm3375, %v5903, %v5904
  %v5910 = vsel %vm3375, %v5902, %v5903
  %v5911 = vsel %vm3375, %v5901, %v5902
  %v5912 = vsel %vm3375, %v5900, %v5901
  %v5913 = vsel %vm3375, %v5899, %v5900
  %v5914 = vsel %vm3375, %v5898, %v5899
  %v5915 = vsel %vm3375, %v5897, %v5898
  %v5916 = vsel %vm3375, %v5896, %v5897
  %v5917 = vsel %vm3375, %v5895, %v5896
  %v5918 = vsel %vm3375, %v5894, %v5895
  %v5919 = vsel %vm3375, %v5893, %v5894
  %v5920 = vsel %vm3375, %v5892, %v5893
  %v5921 = vsel %vm3375, %v5891, %v5892
  %v5922 = vsel %vm3375, %v5890, %v5891
  %v5923 = vsel %vm3375, %v5889, %v5890
  %v5924 = vsel %vm3375, %v5888, %v5889
  %v5925 = vsel %vm3375, %v5887, %v5888
  %v5926 = vsel %vm3375, %v5886, %v5887
  %v5927 = vsel %vm3375, %v5885, %v5886
  %v5928 = vsel %vm3375, %v5884, %v5885
  %v5929 = vsel %vm3375, %v5883, %v5884
  %v5930 = vsel %vm3375, %v5882, %v5883
  %v5931 = vsel %vm3375, %v5881, %v5882
  %v5932 = vsel %vm3375, %v5880, %v5881
  %v5933 = vsel %vm3375, %v5879, %v5880
  %v5934 = vsel %vm3375, %v5878, %v5879
  %v5935 = vsel %vm3375, %v5877, %v5878
  %v5936 = vsel %vm3375, %v5876, %v5877
  %v5937 = vsel %vm3375, %v5875, %v5876
  %v5938 = vsel %vm3375, %v5874, %v5875
  %v5939 = vsel %vm3375, %v5873, %v5874
  %v5940 = vsel %vm3375, %v5872, %v5873
  %v5941 = vsel %vm3375, %v5871, %v5872
  %v5942 = vsel %vm3375, %v5870, %v5871
  %v5943 = vsel %vm3375, %v5869, %v5870
  %v5944 = vsel %vm3375, %v5868, %v5869
  %v5945 = vsel %vm3375, %v5867, %v5868
  %v5946 = vsel %vm3375, %v5866, %v5867
  %v5947 = vsel %vm3375, %v5865, %v5866
  %v5948 = vsel %vm3375, %v5864, %v5865
  %v5949 = vsel %vm3375, %v5863, %v5864
  %v5950 = vsel %vm3375, %v5862, %v5863
  %v5951 = vsel %vm3375, %v5861, %v5862
  %v5952 = vsel %vm3375, %v5860, %v5861
  %v5953 = vsel %vm3375, %v5859, %v5860
  %v5954 = vsel %vm3375, %v5858, %v5859
  %v5955 = vsel %vm3375, %v5857, %v5858
  %v5956 = vsel %vm3375, %v5856, %v5857
  %v5957 = vsel %vm3375, %v5855, %v5856
  %v5958 = vsel %vm3375, %v5854, %v5855
  %v5959 = vsel %vm3375, %v5853, %v5854
  %v5960 = vsel %vm3375, %v5852, %v5853
  %v5961 = vsel %vm3375, %v5851, %v5852
  %v5962 = vsel %vm3375, %v5850, %v5851
  %v5963 = vsel %vm3375, %v5849, %v5850
  %v5964 = vsel %vm3375, %v5848, %v5849
  %v5965 = vsel %vm3375, %v5847, %v5848
  %v5966 = vsel %vm3375, %v5846, %v5847
  %v5967 = vsel %vm3375, %v5845, %v5846
  %v5968 = vsel %vm3375, %v5844, %v5845
  %v5969 = vsel %vm3375, %v5843, %v5844
  %v5970 = vsel %vm3375, %v5906, %v5843
  %v5971 = vsel %vm3504, %v5969, 0.0
  %v5972 = vsel %vm3505, %v5968, 0.0
  %v5973 = vsel %vm3506, %v5967, 0.0
  %v5974 = vsel %vm3507, %v5966, 0.0
  %v5975 = vsel %vm3508, %v5965, 0.0
  %v5976 = vsel %vm3509, %v5964, 0.0
  %v5977 = vsel %vm3510, %v5963, 0.0
  %v5978 = vsel %vm3511, %v5962, 0.0
  %v5979 = vsel %vm3512, %v5961, 0.0
  %v5980 = vsel %vm3513, %v5960, 0.0
  %v5981 = vsel %vm3514, %v5959, 0.0
  %v5982 = vsel %vm3515, %v5958, 0.0
  %v5983 = vsel %vm3516, %v5957, 0.0
  %v5984 = vsel %vm3517, %v5956, 0.0
  %v5985 = vsel %vm3518, %v5955, 0.0
  %v5986 = vsel %vm3519, %v5954, 0.0
  %v5987 = vsel %vm3520, %v5953, 0.0
  %v5988 = vsel %vm3521, %v5952, 0.0
  %v5989 = vsel %vm3522, %v5951, 0.0
  %v5990 = vsel %vm3523, %v5950, 0.0
  %v5991 = vsel %vm3524, %v5949, 0.0
  %v5992 = vsel %vm3525, %v5948, 0.0
  %v5993 = vsel %vm3526, %v5947, 0.0
  %v5994 = vsel %vm3527, %v5946, 0.0
  %v5995 = vsel %vm3528, %v5945, 0.0
  %v5996 = vsel %vm3529, %v5944, 0.0
  %v5997 = vsel %vm3530, %v5943, 0.0
  %v5998 = vsel %vm3531, %v5942, 0.0
  %v5999 = vsel %vm3532, %v5941, 0.0
  %v6000 = vsel %vm3533, %v5940, 0.0
  %v6001 = vsel %vm3534, %v5939, 0.0
  %v6002 = vsel %vm3535, %v5938, 0.0
  %v6003 = vsel %vm3536, %v5937, 0.0
  %v6004 = vsel %vm3537, %v5936, 0.0
  %v6005 = vsel %vm3538, %v5935, 0.0
  %v6006 = vsel %vm3539, %v5934, 0.0
  %v6007 = vsel %vm3540, %v5933, 0.0
  %v6008 = vsel %vm3541, %v5932, 0.0
  %v6009 = vsel %vm3542, %v5931, 0.0
  %v6010 = vsel %vm3543, %v5930, 0.0
  %v6011 = vsel %vm3544, %v5929, 0.0
  %v6012 = vsel %vm3545, %v5928, 0.0
  %v6013 = vsel %vm3546, %v5927, 0.0
  %v6014 = vsel %vm3547, %v5926, 0.0
  %v6015 = vsel %vm3548, %v5925, 0.0
  %v6016 = vsel %vm3549, %v5924, 0.0
  %v6017 = vsel %vm3550, %v5923, 0.0
  %v6018 = vsel %vm3551, %v5922, 0.0
  %v6019 = vsel %vm3552, %v5921, 0.0
  %v6020 = vsel %vm3553, %v5920, 0.0
  %v6021 = vsel %vm3554, %v5919, 0.0
  %v6022 = vsel %vm3555, %v5918, 0.0
  %v6023 = vsel %vm3556, %v5917, 0.0
  %v6024 = vsel %vm3557, %v5916, 0.0
  %v6025 = vsel %vm3558, %v5915, 0.0
  %v6026 = vsel %vm3559, %v5914, 0.0
  %v6027 = vsel %vm3560, %v5913, 0.0
  %v6028 = vsel %vm3561, %v5912, 0.0
  %v6029 = vsel %vm3562, %v5911, 0.0
  %v6030 = vsel %vm3563, %v5910, 0.0
  %v6031 = vsel %vm3564, %v5909, 0.0
  %v6032 = vsel %vm3565, %v5908, 0.0
  %v6033 = vsel %vm3566, %v5907, 0.0
  %v6034 = vsel %vm3567, %v5970, 0.0
  %6099 = vrot.lane.b32.xlu0 %v5587, 32
  %v6100 = vpop.permute.xlu0 %6099
  %6101 = vrot.lane.b32.xlu0 %v5588, 32
  %v6102 = vpop.permute.xlu0 %6101
  %6103 = vrot.lane.b32.xlu0 %v5589, 32
  %v6104 = vpop.permute.xlu0 %6103
  %6105 = vrot.lane.b32.xlu0 %v5590, 32
  %v6106 = vpop.permute.xlu0 %6105
  %6107 = vrot.lane.b32.xlu0 %v5591, 32
  %v6108 = vpop.permute.xlu0 %6107
  %6109 = vrot.lane.b32.xlu0 %v5592, 32
  %v6110 = vpop.permute.xlu0 %6109
  %6111 = vrot.lane.b32.xlu0 %v5593, 32
  %v6112 = vpop.permute.xlu0 %6111
  %6113 = vrot.lane.b32.xlu0 %v5594, 32
  %v6114 = vpop.permute.xlu0 %6113
  %6115 = vrot.lane.b32.xlu0 %v5595, 32
  %v6116 = vpop.permute.xlu0 %6115
  %6117 = vrot.lane.b32.xlu0 %v5596, 32
  %v6118 = vpop.permute.xlu0 %6117
  %6119 = vrot.lane.b32.xlu0 %v5597, 32
  %v6120 = vpop.permute.xlu0 %6119
  %6121 = vrot.lane.b32.xlu0 %v5598, 32
  %v6122 = vpop.permute.xlu0 %6121
  %6123 = vrot.lane.b32.xlu0 %v5599, 32
  %v6124 = vpop.permute.xlu0 %6123
  %6125 = vrot.lane.b32.xlu0 %v5600, 32
  %v6126 = vpop.permute.xlu0 %6125
  %6127 = vrot.lane.b32.xlu0 %v5601, 32
  %v6128 = vpop.permute.xlu0 %6127
  %6129 = vrot.lane.b32.xlu0 %v5602, 32
  %v6130 = vpop.permute.xlu0 %6129
  %6131 = vrot.lane.b32.xlu0 %v5603, 32
  %v6132 = vpop.permute.xlu0 %6131
  %6133 = vrot.lane.b32.xlu0 %v5604, 32
  %v6134 = vpop.permute.xlu0 %6133
  %6135 = vrot.lane.b32.xlu0 %v5605, 32
  %v6136 = vpop.permute.xlu0 %6135
  %6137 = vrot.lane.b32.xlu0 %v5606, 32
  %v6138 = vpop.permute.xlu0 %6137
  %6139 = vrot.lane.b32.xlu0 %v5607, 32
  %v6140 = vpop.permute.xlu0 %6139
  %6141 = vrot.lane.b32.xlu0 %v5608, 32
  %v6142 = vpop.permute.xlu0 %6141
  %6143 = vrot.lane.b32.xlu0 %v5609, 32
  %v6144 = vpop.permute.xlu0 %6143
  %6145 = vrot.lane.b32.xlu0 %v5610, 32
  %v6146 = vpop.permute.xlu0 %6145
  %6147 = vrot.lane.b32.xlu0 %v5611, 32
  %v6148 = vpop.permute.xlu0 %6147
  %6149 = vrot.lane.b32.xlu0 %v5612, 32
  %v6150 = vpop.permute.xlu0 %6149
  %6151 = vrot.lane.b32.xlu0 %v5613, 32
  %v6152 = vpop.permute.xlu0 %6151
  %6153 = vrot.lane.b32.xlu0 %v5614, 32
  %v6154 = vpop.permute.xlu0 %6153
  %6155 = vrot.lane.b32.xlu0 %v5615, 32
  %v6156 = vpop.permute.xlu0 %6155
  %6157 = vrot.lane.b32.xlu0 %v5616, 32
  %v6158 = vpop.permute.xlu0 %6157
  %6159 = vrot.lane.b32.xlu0 %v5617, 32
  %v6160 = vpop.permute.xlu0 %6159
  %6161 = vrot.lane.b32.xlu0 %v5618, 32
  %v6162 = vpop.permute.xlu0 %6161
  %6163 = vrot.lane.b32.xlu0 %v5619, 32
  %v6164 = vpop.permute.xlu0 %6163
  %6165 = vrot.lane.b32.xlu0 %v5620, 32
  %v6166 = vpop.permute.xlu0 %6165
  %6167 = vrot.lane.b32.xlu0 %v5621, 32
  %v6168 = vpop.permute.xlu0 %6167
  %6169 = vrot.lane.b32.xlu0 %v5622, 32
  %v6170 = vpop.permute.xlu0 %6169
  %6171 = vrot.lane.b32.xlu0 %v5623, 32
  %v6172 = vpop.permute.xlu0 %6171
  %6173 = vrot.lane.b32.xlu0 %v5624, 32
  %v6174 = vpop.permute.xlu0 %6173
  %6175 = vrot.lane.b32.xlu0 %v5625, 32
  %v6176 = vpop.permute.xlu0 %6175
  %6177 = vrot.lane.b32.xlu0 %v5626, 32
  %v6178 = vpop.permute.xlu0 %6177
  %6179 = vrot.lane.b32.xlu0 %v5627, 32
  %v6180 = vpop.permute.xlu0 %6179
  %6181 = vrot.lane.b32.xlu0 %v5628, 32
  %v6182 = vpop.permute.xlu0 %6181
  %6183 = vrot.lane.b32.xlu0 %v5629, 32
  %v6184 = vpop.permute.xlu0 %6183
  %6185 = vrot.lane.b32.xlu0 %v5630, 32
  %v6186 = vpop.permute.xlu0 %6185
  %6187 = vrot.lane.b32.xlu0 %v5631, 32
  %v6188 = vpop.permute.xlu0 %6187
  %6189 = vrot.lane.b32.xlu0 %v5632, 32
  %v6190 = vpop.permute.xlu0 %6189
  %6191 = vrot.lane.b32.xlu0 %v5633, 32
  %v6192 = vpop.permute.xlu0 %6191
  %6193 = vrot.lane.b32.xlu0 %v5634, 32
  %v6194 = vpop.permute.xlu0 %6193
  %6195 = vrot.lane.b32.xlu0 %v5635, 32
  %v6196 = vpop.permute.xlu0 %6195
  %6197 = vrot.lane.b32.xlu0 %v5636, 32
  %v6198 = vpop.permute.xlu0 %6197
  %6199 = vrot.lane.b32.xlu0 %v5637, 32
  %v6200 = vpop.permute.xlu0 %6199
  %6201 = vrot.lane.b32.xlu0 %v5638, 32
  %v6202 = vpop.permute.xlu0 %6201
  %6203 = vrot.lane.b32.xlu0 %v5639, 32
  %v6204 = vpop.permute.xlu0 %6203
  %6205 = vrot.lane.b32.xlu0 %v5640, 32
  %v6206 = vpop.permute.xlu0 %6205
  %6207 = vrot.lane.b32.xlu0 %v5641, 32
  %v6208 = vpop.permute.xlu0 %6207
  %6209 = vrot.lane.b32.xlu0 %v5642, 32
  %v6210 = vpop.permute.xlu0 %6209
  %6211 = vrot.lane.b32.xlu0 %v5643, 32
  %v6212 = vpop.permute.xlu0 %6211
  %6213 = vrot.lane.b32.xlu0 %v5644, 32
  %v6214 = vpop.permute.xlu0 %6213
  %6215 = vrot.lane.b32.xlu0 %v5645, 32
  %v6216 = vpop.permute.xlu0 %6215
  %6217 = vrot.lane.b32.xlu0 %v5646, 32
  %v6218 = vpop.permute.xlu0 %6217
  %6219 = vrot.lane.b32.xlu0 %v5647, 32
  %v6220 = vpop.permute.xlu0 %6219
  %6221 = vrot.lane.b32.xlu0 %v5648, 32
  %v6222 = vpop.permute.xlu0 %6221
  %6223 = vrot.lane.b32.xlu0 %v5649, 32
  %v6224 = vpop.permute.xlu0 %6223
  %6225 = vrot.lane.b32.xlu0 %v5650, 32
  %v6226 = vpop.permute.xlu0 %6225
  %6355 = vrot.lane.b32.xlu0 %v5971, 64
  %v6356 = vpop.permute.xlu0 %6355
  %6357 = vrot.lane.b32.xlu0 %v5972, 64
  %v6358 = vpop.permute.xlu0 %6357
  %6359 = vrot.lane.b32.xlu0 %v5973, 64
  %v6360 = vpop.permute.xlu0 %6359
  %6361 = vrot.lane.b32.xlu0 %v5974, 64
  %v6362 = vpop.permute.xlu0 %6361
  %6363 = vrot.lane.b32.xlu0 %v5975, 64
  %v6364 = vpop.permute.xlu0 %6363
  %6365 = vrot.lane.b32.xlu0 %v5976, 64
  %v6366 = vpop.permute.xlu0 %6365
  %6367 = vrot.lane.b32.xlu0 %v5977, 64
  %v6368 = vpop.permute.xlu0 %6367
  %6369 = vrot.lane.b32.xlu0 %v5978, 64
  %v6370 = vpop.permute.xlu0 %6369
  %6371 = vrot.lane.b32.xlu0 %v5979, 64
  %v6372 = vpop.permute.xlu0 %6371
  %6373 = vrot.lane.b32.xlu0 %v5980, 64
  %v6374 = vpop.permute.xlu0 %6373
  %6375 = vrot.lane.b32.xlu0 %v5981, 64
  %v6376 = vpop.permute.xlu0 %6375
  %6377 = vrot.lane.b32.xlu0 %v5982, 64
  %v6378 = vpop.permute.xlu0 %6377
  %6379 = vrot.lane.b32.xlu0 %v5983, 64
  %v6380 = vpop.permute.xlu0 %6379
  %6381 = vrot.lane.b32.xlu0 %v5984, 64
  %v6382 = vpop.permute.xlu0 %6381
  %6383 = vrot.lane.b32.xlu0 %v5985, 64
  %v6384 = vpop.permute.xlu0 %6383
  %6385 = vrot.lane.b32.xlu0 %v5986, 64
  %v6386 = vpop.permute.xlu0 %6385
  %6387 = vrot.lane.b32.xlu0 %v5987, 64
  %v6388 = vpop.permute.xlu0 %6387
  %6389 = vrot.lane.b32.xlu0 %v5988, 64
  %v6390 = vpop.permute.xlu0 %6389
  %6391 = vrot.lane.b32.xlu0 %v5989, 64
  %v6392 = vpop.permute.xlu0 %6391
  %6393 = vrot.lane.b32.xlu0 %v5990, 64
  %v6394 = vpop.permute.xlu0 %6393
  %6395 = vrot.lane.b32.xlu0 %v5991, 64
  %v6396 = vpop.permute.xlu0 %6395
  %6397 = vrot.lane.b32.xlu0 %v5992, 64
  %v6398 = vpop.permute.xlu0 %6397
  %6399 = vrot.lane.b32.xlu0 %v5993, 64
  %v6400 = vpop.permute.xlu0 %6399
  %6401 = vrot.lane.b32.xlu0 %v5994, 64
  %v6402 = vpop.permute.xlu0 %6401
  %6403 = vrot.lane.b32.xlu0 %v5995, 64
  %v6404 = vpop.permute.xlu0 %6403
  %6405 = vrot.lane.b32.xlu0 %v5996, 64
  %v6406 = vpop.permute.xlu0 %6405
  %6407 = vrot.lane.b32.xlu0 %v5997, 64
  %v6408 = vpop.permute.xlu0 %6407
  %6409 = vrot.lane.b32.xlu0 %v5998, 64
  %v6410 = vpop.permute.xlu0 %6409
  %6411 = vrot.lane.b32.xlu0 %v5999, 64
  %v6412 = vpop.permute.xlu0 %6411
  %6413 = vrot.lane.b32.xlu0 %v6000, 64
  %v6414 = vpop.permute.xlu0 %6413
  %6415 = vrot.lane.b32.xlu0 %v6001, 64
  %v6416 = vpop.permute.xlu0 %6415
  %6417 = vrot.lane.b32.xlu0 %v6002, 64
  %v6418 = vpop.permute.xlu0 %6417
  %6419 = vrot.lane.b32.xlu0 %v6003, 64
  %v6420 = vpop.permute.xlu0 %6419
  %6421 = vrot.lane.b32.xlu0 %v6004, 64
  %v6422 = vpop.permute.xlu0 %6421
  %6423 = vrot.lane.b32.xlu0 %v6005, 64
  %v6424 = vpop.permute.xlu0 %6423
  %6425 = vrot.lane.b32.xlu0 %v6006, 64
  %v6426 = vpop.permute.xlu0 %6425
  %6427 = vrot.lane.b32.xlu0 %v6007, 64
  %v6428 = vpop.permute.xlu0 %6427
  %6429 = vrot.lane.b32.xlu0 %v6008, 64
  %v6430 = vpop.permute.xlu0 %6429
  %6431 = vrot.lane.b32.xlu0 %v6009, 64
  %v6432 = vpop.permute.xlu0 %6431
  %6433 = vrot.lane.b32.xlu0 %v6010, 64
  %v6434 = vpop.permute.xlu0 %6433
  %6435 = vrot.lane.b32.xlu0 %v6011, 64
  %v6436 = vpop.permute.xlu0 %6435
  %6437 = vrot.lane.b32.xlu0 %v6012, 64
  %v6438 = vpop.permute.xlu0 %6437
  %6439 = vrot.lane.b32.xlu0 %v6013, 64
  %v6440 = vpop.permute.xlu0 %6439
  %6441 = vrot.lane.b32.xlu0 %v6014, 64
  %v6442 = vpop.permute.xlu0 %6441
  %6443 = vrot.lane.b32.xlu0 %v6015, 64
  %v6444 = vpop.permute.xlu0 %6443
  %6445 = vrot.lane.b32.xlu0 %v6016, 64
  %v6446 = vpop.permute.xlu0 %6445
  %6447 = vrot.lane.b32.xlu0 %v6017, 64
  %v6448 = vpop.permute.xlu0 %6447
  %6449 = vrot.lane.b32.xlu0 %v6018, 64
  %v6450 = vpop.permute.xlu0 %6449
  %6451 = vrot.lane.b32.xlu0 %v6019, 64
  %v6452 = vpop.permute.xlu0 %6451
  %6453 = vrot.lane.b32.xlu0 %v6020, 64
  %v6454 = vpop.permute.xlu0 %6453
  %6455 = vrot.lane.b32.xlu0 %v6021, 64
  %v6456 = vpop.permute.xlu0 %6455
  %6457 = vrot.lane.b32.xlu0 %v6022, 64
  %v6458 = vpop.permute.xlu0 %6457
  %6459 = vrot.lane.b32.xlu0 %v6023, 64
  %v6460 = vpop.permute.xlu0 %6459
  %6461 = vrot.lane.b32.xlu0 %v6024, 64
  %v6462 = vpop.permute.xlu0 %6461
  %6463 = vrot.lane.b32.xlu0 %v6025, 64
  %v6464 = vpop.permute.xlu0 %6463
  %6465 = vrot.lane.b32.xlu0 %v6026, 64
  %v6466 = vpop.permute.xlu0 %6465
  %6467 = vrot.lane.b32.xlu0 %v6027, 64
  %v6468 = vpop.permute.xlu0 %6467
  %6469 = vrot.lane.b32.xlu0 %v6028, 64
  %v6470 = vpop.permute.xlu0 %6469
  %6471 = vrot.lane.b32.xlu0 %v6029, 64
  %v6472 = vpop.permute.xlu0 %6471
  %6473 = vrot.lane.b32.xlu0 %v6030, 64
  %v6474 = vpop.permute.xlu0 %6473
  %6475 = vrot.lane.b32.xlu0 %v6031, 64
  %v6476 = vpop.permute.xlu0 %6475
  %6477 = vrot.lane.b32.xlu0 %v6032, 64
  %v6478 = vpop.permute.xlu0 %6477
  %6479 = vrot.lane.b32.xlu0 %v6033, 64
  %v6480 = vpop.permute.xlu0 %6479
  %6481 = vrot.lane.b32.xlu0 %v6034, 64
  %v6482 = vpop.permute.xlu0 %6481
  %vm6547 = vcmask 261120
  %v6548 = vsel %vm6547, %v5779, %v6100
  %v6549 = vsel %vm6547, %v5780, %v6102
  %v6550 = vsel %vm6547, %v5781, %v6104
  %v6551 = vsel %vm6547, %v5782, %v6106
  %v6552 = vsel %vm6547, %v5783, %v6108
  %v6553 = vsel %vm6547, %v5784, %v6110
  %v6554 = vsel %vm6547, %v5785, %v6112
  %v6555 = vsel %vm6547, %v5786, %v6114
  %v6556 = vsel %vm6547, %v5787, %v6116
  %v6557 = vsel %vm6547, %v5788, %v6118
  %v6558 = vsel %vm6547, %v5789, %v6120
  %v6559 = vsel %vm6547, %v5790, %v6122
  %v6560 = vsel %vm6547, %v5791, %v6124
  %v6561 = vsel %vm6547, %v5792, %v6126
  %v6562 = vsel %vm6547, %v5793, %v6128
  %v6563 = vsel %vm6547, %v5794, %v6130
  %v6564 = vsel %vm6547, %v5795, %v6132
  %v6565 = vsel %vm6547, %v5796, %v6134
  %v6566 = vsel %vm6547, %v5797, %v6136
  %v6567 = vsel %vm6547, %v5798, %v6138
  %v6568 = vsel %vm6547, %v5799, %v6140
  %v6569 = vsel %vm6547, %v5800, %v6142
  %v6570 = vsel %vm6547, %v5801, %v6144
  %v6571 = vsel %vm6547, %v5802, %v6146
  %v6572 = vsel %vm6547, %v5803, %v6148
  %v6573 = vsel %vm6547, %v5804, %v6150
  %v6574 = vsel %vm6547, %v5805, %v6152
  %v6575 = vsel %vm6547, %v5806, %v6154
  %v6576 = vsel %vm6547, %v5807, %v6156
  %v6577 = vsel %vm6547, %v5808, %v6158
  %v6578 = vsel %vm6547, %v5809, %v6160
  %v6579 = vsel %vm6547, %v5810, %v6162
  %v6580 = vsel %vm6547, %v5811, %v6164
  %v6581 = vsel %vm6547, %v5812, %v6166
  %v6582 = vsel %vm6547, %v5813, %v6168
  %v6583 = vsel %vm6547, %v5814, %v6170
  %v6584 = vsel %vm6547, %v5815, %v6172
  %v6585 = vsel %vm6547, %v5816, %v6174
  %v6586 = vsel %vm6547, %v5817, %v6176
  %v6587 = vsel %vm6547, %v5818, %v6178
  %v6588 = vsel %vm6547, %v5819, %v6180
  %v6589 = vsel %vm6547, %v5820, %v6182
  %v6590 = vsel %vm6547, %v5821, %v6184
  %v6591 = vsel %vm6547, %v5822, %v6186
  %v6592 = vsel %vm6547, %v5823, %v6188
  %v6593 = vsel %vm6547, %v5824, %v6190
  %v6594 = vsel %vm6547, %v5825, %v6192
  %v6595 = vsel %vm6547, %v5826, %v6194
  %v6596 = vsel %vm6547, %v5827, %v6196
  %v6597 = vsel %vm6547, %v5828, %v6198
  %v6598 = vsel %vm6547, %v5829, %v6200
  %v6599 = vsel %vm6547, %v5830, %v6202
  %v6600 = vsel %vm6547, %v5831, %v6204
  %v6601 = vsel %vm6547, %v5832, %v6206
  %v6602 = vsel %vm6547, %v5833, %v6208
  %v6603 = vsel %vm6547, %v5834, %v6210
  %v6604 = vsel %vm6547, %v5835, %v6212
  %v6605 = vsel %vm6547, %v5836, %v6214
  %v6606 = vsel %vm6547, %v5837, %v6216
  %v6607 = vsel %vm6547, %v5838, %v6218
  %v6608 = vsel %vm6547, %v5839, %v6220
  %v6609 = vsel %vm6547, %v5840, %v6222
  %v6610 = vsel %vm6547, %v5841, %v6224
  %v6611 = vsel %vm6547, %v5842, %v6226
  %vm6612 = vcmask 523264
  %v6613 = vsel %vm6612, %v6548, %v6356
  %v6614 = vsel %vm6612, %v6549, %v6358
  %v6615 = vsel %vm6612, %v6550, %v6360
  %v6616 = vsel %vm6612, %v6551, %v6362
  %v6617 = vsel %vm6612, %v6552, %v6364
  %v6618 = vsel %vm6612, %v6553, %v6366
  %v6619 = vsel %vm6612, %v6554, %v6368
  %v6620 = vsel %vm6612, %v6555, %v6370
  %v6621 = vsel %vm6612, %v6556, %v6372
  %v6622 = vsel %vm6612, %v6557, %v6374
  %v6623 = vsel %vm6612, %v6558, %v6376
  %v6624 = vsel %vm6612, %v6559, %v6378
  %v6625 = vsel %vm6612, %v6560, %v6380
  %v6626 = vsel %vm6612, %v6561, %v6382
  %v6627 = vsel %vm6612, %v6562, %v6384
  %v6628 = vsel %vm6612, %v6563, %v6386
  %v6629 = vsel %vm6612, %v6564, %v6388
  %v6630 = vsel %vm6612, %v6565, %v6390
  %v6631 = vsel %vm6612, %v6566, %v6392
  %v6632 = vsel %vm6612, %v6567, %v6394
  %v6633 = vsel %vm6612, %v6568, %v6396
  %v6634 = vsel %vm6612, %v6569, %v6398
  %v6635 = vsel %vm6612, %v6570, %v6400
  %v6636 = vsel %vm6612, %v6571, %v6402
  %v6637 = vsel %vm6612, %v6572, %v6404
  %v6638 = vsel %vm6612, %v6573, %v6406
  %v6639 = vsel %vm6612, %v6574, %v6408
  %v6640 = vsel %vm6612, %v6575, %v6410
  %v6641 = vsel %vm6612, %v6576, %v6412
  %v6642 = vsel %vm6612, %v6577, %v6414
  %v6643 = vsel %vm6612, %v6578, %v6416
  %v6644 = vsel %vm6612, %v6579, %v6418
  %v6645 = vsel %vm6612, %v6580, %v6420
  %v6646 = vsel %vm6612, %v6581, %v6422
  %v6647 = vsel %vm6612, %v6582, %v6424
  %v6648 = vsel %vm6612, %v6583, %v6426
  %v6649 = vsel %vm6612, %v6584, %v6428
  %v6650 = vsel %vm6612, %v6585, %v6430
  %v6651 = vsel %vm6612, %v6586, %v6432
  %v6652 = vsel %vm6612, %v6587, %v6434
  %v6653 = vsel %vm6612, %v6588, %v6436
  %v6654 = vsel %vm6612, %v6589, %v6438
  %v6655 = vsel %vm6612, %v6590, %v6440
  %v6656 = vsel %vm6612, %v6591, %v6442
  %v6657 = vsel %vm6612, %v6592, %v6444
  %v6658 = vsel %vm6612, %v6593, %v6446
  %v6659 = vsel %vm6612, %v6594, %v6448
  %v6660 = vsel %vm6612, %v6595, %v6450
  %v6661 = vsel %vm6612, %v6596, %v6452
  %v6662 = vsel %vm6612, %v6597, %v6454
  %v6663 = vsel %vm6612, %v6598, %v6456
  %v6664 = vsel %vm6612, %v6599, %v6458
  %v6665 = vsel %vm6612, %v6600, %v6460
  %v6666 = vsel %vm6612, %v6601, %v6462
  %v6667 = vsel %vm6612, %v6602, %v6464
  %v6668 = vsel %vm6612, %v6603, %v6466
  %v6669 = vsel %vm6612, %v6604, %v6468
  %v6670 = vsel %vm6612, %v6605, %v6470
  %v6671 = vsel %vm6612, %v6606, %v6472
  %v6672 = vsel %vm6612, %v6607, %v6474
  %v6673 = vsel %vm6612, %v6608, %v6476
  %v6674 = vsel %vm6612, %v6609, %v6478
  %v6675 = vsel %vm6612, %v6610, %v6480
  %v6676 = vsel %vm6612, %v6611, %v6482
  %v6677 = vpack.c.bf16 %v6614, %v6613
  %v6678 = vpack.c.bf16 %v6616, %v6615
  %v6679 = vpack.c.bf16 %v6618, %v6617
  %v6680 = vpack.c.bf16 %v6620, %v6619
  %v6681 = vpack.c.bf16 %v6622, %v6621
  %v6682 = vpack.c.bf16 %v6624, %v6623
  %v6683 = vpack.c.bf16 %v6626, %v6625
  %v6684 = vpack.c.bf16 %v6628, %v6627
  %v6685 = vpack.c.bf16 %v6630, %v6629
  %v6686 = vpack.c.bf16 %v6632, %v6631
  %v6687 = vpack.c.bf16 %v6634, %v6633
  %v6688 = vpack.c.bf16 %v6636, %v6635
  %v6689 = vpack.c.bf16 %v6638, %v6637
  %v6690 = vpack.c.bf16 %v6640, %v6639
  %v6691 = vpack.c.bf16 %v6642, %v6641
  %v6692 = vpack.c.bf16 %v6644, %v6643
  %v6693 = vpack.c.bf16 %v6646, %v6645
  %v6694 = vpack.c.bf16 %v6648, %v6647
  %v6695 = vpack.c.bf16 %v6650, %v6649
  %v6696 = vpack.c.bf16 %v6652, %v6651
  %v6697 = vpack.c.bf16 %v6654, %v6653
  %v6698 = vpack.c.bf16 %v6656, %v6655
  %v6699 = vpack.c.bf16 %v6658, %v6657
  %v6700 = vpack.c.bf16 %v6660, %v6659
  %v6701 = vpack.c.bf16 %v6662, %v6661
  %v6702 = vpack.c.bf16 %v6664, %v6663
  %v6703 = vpack.c.bf16 %v6666, %v6665
  %v6704 = vpack.c.bf16 %v6668, %v6667
  %v6705 = vpack.c.bf16 %v6670, %v6669
  %v6706 = vpack.c.bf16 %v6672, %v6671
  %v6707 = vpack.c.bf16 %v6674, %v6673
  %v6708 = vpack.c.bf16 %v6676, %v6675
  %s6709 = scalar_lea.vmem %s7, 48
  %v6710 = vld [vmem:[%s6709] sm:$0xf]
  %v6711 = vld [vmem:[%s6709 + $0x4] sm:$0xf]
  %v6712 = vld [vmem:[%s6709 + $0x8] sm:$0xf]
  %v6713 = vld [vmem:[%s6709 + $0xc] sm:$0xf]
  %v6714 = vld [vmem:[%s6709 + $0x10] sm:$0xf]
  %v6715 = vld [vmem:[%s6709 + $0x14] sm:$0xf]
  %v6716 = vld [vmem:[%s6709 + $0x18] sm:$0xf]
  %v6717 = vld [vmem:[%s6709 + $0x1c] sm:$0xf]
  %v6718 = vld [vmem:[%s6709 + $0x20] sm:$0xf]
  %v6719 = vld [vmem:[%s6709 + $0x24] sm:$0xf]
  %v6720 = vld [vmem:[%s6709 + $0x28] sm:$0xf]
  %v6721 = vld [vmem:[%s6709 + $0x2c] sm:$0xf]
  %v6722 = vld [vmem:[%s7] sm:$0xf]
  %v6723 = vld [vmem:[%s7 + $0x4] sm:$0xf]
  %v6724 = vld [vmem:[%s7 + $0x8] sm:$0xf]
  %v6725 = vld [vmem:[%s7 + $0xc] sm:$0xf]
  %v6726 = vld [vmem:[%s7 + $0x10] sm:$0xf]
  %v6727 = vld [vmem:[%s7 + $0x14] sm:$0xf]
  %v6728 = vld [vmem:[%s7 + $0x18] sm:$0xf]
  %v6729 = vld [vmem:[%s7 + $0x1c] sm:$0xf]
  %v6730 = vld [vmem:[%s7 + $0x20] sm:$0xf]
  %v6731 = vld [vmem:[%s7 + $0x24] sm:$0xf]
  %v6732 = vld [vmem:[%s7 + $0x28] sm:$0xf]
  %v6733 = vld [vmem:[%s7 + $0x2c] sm:$0xf]
  %v6746 = vunpack.c.l.b16 %v6722
  %v6747 = vunpack.c.l.b16 %v6723
  %v6748 = vunpack.c.l.b16 %v6724
  %v6749 = vunpack.c.l.b16 %v6725
  %v6750 = vunpack.c.l.b16 %v6726
  %v6751 = vunpack.c.l.b16 %v6727
  %v6752 = vunpack.c.l.b16 %v6728
  %v6753 = vunpack.c.l.b16 %v6729
  %v6754 = vunpack.c.l.b16 %v6730
  %v6755 = vunpack.c.l.b16 %v6731
  %v6756 = vunpack.c.l.b16 %v6732
  %v6757 = vunpack.c.l.b16 %v6733
  %v6758 = vpack.c.b16 %v6747, %v6746
  %v6759 = vpack.c.b16 %v6749, %v6748
  %v6760 = vpack.c.b16 %v6751, %v6750
  %v6761 = vpack.c.b16 %v6753, %v6752
  %v6762 = vpack.c.b16 %v6755, %v6754
  %v6763 = vpack.c.b16 %v6757, %v6756
  %vm6770 = vcmask 785408
  %v6772 = vsel %vm6770, %v6677, 0
  %v6775 = vsel %vm6770, %v6678, 0
  %v6778 = vsel %vm6770, %v6679, 0
  %v6781 = vsel %vm6770, %v6680, 0
  %v6784 = vsel %vm6770, %v6681, 0
  %v6787 = vsel %vm6770, %v6682, 0
  %v6790 = vsel %vm6770, %v6683, 0
  %v6793 = vsel %vm6770, %v6684, 0
  %v6796 = vsel %vm6770, %v6685, 0
  %v6799 = vsel %vm6770, %v6686, 0
  %v6802 = vsel %vm6770, %v6687, 0
  %v6805 = vsel %vm6770, %v6688, 0
  %v6808 = vsel %vm6770, %v6689, 0
  %v6811 = vsel %vm6770, %v6690, 0
  %v6814 = vsel %vm6770, %v6691, 0
  %v6817 = vsel %vm6770, %v6692, 0
  %v6820 = vsel %vm6770, %v6693, 0
  %v6823 = vsel %vm6770, %v6694, 0
  %v6826 = vsel %vm6770, %v6695, 0
  %v6829 = vsel %vm6770, %v6696, 0
  %v6832 = vsel %vm6770, %v6697, 0
  %v6835 = vsel %vm6770, %v6698, 0
  %v6838 = vsel %vm6770, %v6699, 0
  %v6841 = vsel %vm6770, %v6700, 0
  %v6844 = vsel %vm6770, %v6701, 0
  %v6847 = vsel %vm6770, %v6702, 0
  %v6850 = vsel %vm6770, %v6703, 0
  %v6853 = vsel %vm6770, %v6704, 0
  %v6856 = vsel %vm6770, %v6705, 0
  %v6859 = vsel %vm6770, %v6706, 0
  %v6862 = vsel %vm6770, %v6707, 0
  %v6865 = vsel %vm6770, %v6708, 0
  %6867 = vmatpush.bf16.msra.mxu0 0
  %6868 = vmatpush.bf16.msra.mxu0 0
  %6869 = vmatpush.bf16.msra.mxu0 %v6763
  %6870 = vmatpush.bf16.msra.mxu0 %v6762
  %6871 = vmatpush.bf16.msra.mxu0 %v6761
  %6872 = vmatpush.bf16.msra.mxu0 %v6760
  %6873 = vmatpush.bf16.msra.mxu0 %v6759
  %6874 = vmatpush.bf16.msra.mxu0 %v6758
  %6875 = vmatmul.bf16.gmra.mxu0 %v6772
  %v6876 = vpop.f32.mrf.mxu0
  %v6877 = vadd.f32 0.0, %v6876
  %v6878 = vpop.f32.mrf.mxu0
  %v6879 = vadd.f32 0.0, %v6878
  %6880 = vmatmul.bf16.gmra.mxu0 %v6775
  %v6881 = vpop.f32.mrf.mxu0
  %v6882 = vadd.f32 0.0, %v6881
  %v6883 = vpop.f32.mrf.mxu0
  %v6884 = vadd.f32 0.0, %v6883
  %6885 = vmatmul.bf16.gmra.mxu0 %v6778
  %v6886 = vpop.f32.mrf.mxu0
  %v6887 = vadd.f32 0.0, %v6886
  %v6888 = vpop.f32.mrf.mxu0
  %v6889 = vadd.f32 0.0, %v6888
  %6890 = vmatmul.bf16.gmra.mxu0 %v6781
  %v6891 = vpop.f32.mrf.mxu0
  %v6892 = vadd.f32 0.0, %v6891
  %v6893 = vpop.f32.mrf.mxu0
  %v6894 = vadd.f32 0.0, %v6893
  %6895 = vmatmul.bf16.gmra.mxu0 %v6784
  %v6896 = vpop.f32.mrf.mxu0
  %v6897 = vadd.f32 0.0, %v6896
  %v6898 = vpop.f32.mrf.mxu0
  %v6899 = vadd.f32 0.0, %v6898
  %6900 = vmatmul.bf16.gmra.mxu0 %v6787
  %v6901 = vpop.f32.mrf.mxu0
  %v6902 = vadd.f32 0.0, %v6901
  %v6903 = vpop.f32.mrf.mxu0
  %v6904 = vadd.f32 0.0, %v6903
  %6905 = vmatmul.bf16.gmra.mxu0 %v6790
  %v6906 = vpop.f32.mrf.mxu0
  %v6907 = vadd.f32 0.0, %v6906
  %v6908 = vpop.f32.mrf.mxu0
  %v6909 = vadd.f32 0.0, %v6908
  %6910 = vmatmul.bf16.gmra.mxu0 %v6793
  %v6911 = vpop.f32.mrf.mxu0
  %v6912 = vadd.f32 0.0, %v6911
  %v6913 = vpop.f32.mrf.mxu0
  %v6914 = vadd.f32 0.0, %v6913
  %6915 = vmatmul.bf16.gmra.mxu0 %v6796
  %v6916 = vpop.f32.mrf.mxu0
  %v6917 = vadd.f32 0.0, %v6916
  %v6918 = vpop.f32.mrf.mxu0
  %v6919 = vadd.f32 0.0, %v6918
  %6920 = vmatmul.bf16.gmra.mxu0 %v6799
  %v6921 = vpop.f32.mrf.mxu0
  %v6922 = vadd.f32 0.0, %v6921
  %v6923 = vpop.f32.mrf.mxu0
  %v6924 = vadd.f32 0.0, %v6923
  %6925 = vmatmul.bf16.gmra.mxu0 %v6802
  %v6926 = vpop.f32.mrf.mxu0
  %v6927 = vadd.f32 0.0, %v6926
  %v6928 = vpop.f32.mrf.mxu0
  %v6929 = vadd.f32 0.0, %v6928
  %6930 = vmatmul.bf16.gmra.mxu0 %v6805
  %v6931 = vpop.f32.mrf.mxu0
  %v6932 = vadd.f32 0.0, %v6931
  %v6933 = vpop.f32.mrf.mxu0
  %v6934 = vadd.f32 0.0, %v6933
  %6935 = vmatmul.bf16.gmra.mxu0 %v6808
  %v6936 = vpop.f32.mrf.mxu0
  %v6937 = vadd.f32 0.0, %v6936
  %v6938 = vpop.f32.mrf.mxu0
  %v6939 = vadd.f32 0.0, %v6938
  %6940 = vmatmul.bf16.gmra.mxu0 %v6811
  %v6941 = vpop.f32.mrf.mxu0
  %v6942 = vadd.f32 0.0, %v6941
  %v6943 = vpop.f32.mrf.mxu0
  %v6944 = vadd.f32 0.0, %v6943
  %6945 = vmatmul.bf16.gmra.mxu0 %v6814
  %v6946 = vpop.f32.mrf.mxu0
  %v6947 = vadd.f32 0.0, %v6946
  %v6948 = vpop.f32.mrf.mxu0
  %v6949 = vadd.f32 0.0, %v6948
  %6950 = vmatmul.bf16.gmra.mxu0 %v6817
  %v6951 = vpop.f32.mrf.mxu0
  %v6952 = vadd.f32 0.0, %v6951
  %v6953 = vpop.f32.mrf.mxu0
  %v6954 = vadd.f32 0.0, %v6953
  %6955 = vmatmul.bf16.gmra.mxu0 %v6820
  %v6956 = vpop.f32.mrf.mxu0
  %v6957 = vadd.f32 0.0, %v6956
  %v6958 = vpop.f32.mrf.mxu0
  %v6959 = vadd.f32 0.0, %v6958
  %6960 = vmatmul.bf16.gmra.mxu0 %v6823
  %v6961 = vpop.f32.mrf.mxu0
  %v6962 = vadd.f32 0.0, %v6961
  %v6963 = vpop.f32.mrf.mxu0
  %v6964 = vadd.f32 0.0, %v6963
  %6965 = vmatmul.bf16.gmra.mxu0 %v6826
  %v6966 = vpop.f32.mrf.mxu0
  %v6967 = vadd.f32 0.0, %v6966
  %v6968 = vpop.f32.mrf.mxu0
  %v6969 = vadd.f32 0.0, %v6968
  %6970 = vmatmul.bf16.gmra.mxu0 %v6829
  %v6971 = vpop.f32.mrf.mxu0
  %v6972 = vadd.f32 0.0, %v6971
  %v6973 = vpop.f32.mrf.mxu0
  %v6974 = vadd.f32 0.0, %v6973
  %6975 = vmatmul.bf16.gmra.mxu0 %v6832
  %v6976 = vpop.f32.mrf.mxu0
  %v6977 = vadd.f32 0.0, %v6976
  %v6978 = vpop.f32.mrf.mxu0
  %v6979 = vadd.f32 0.0, %v6978
  %6980 = vmatmul.bf16.gmra.mxu0 %v6835
  %v6981 = vpop.f32.mrf.mxu0
  %v6982 = vadd.f32 0.0, %v6981
  %v6983 = vpop.f32.mrf.mxu0
  %v6984 = vadd.f32 0.0, %v6983
  %6985 = vmatmul.bf16.gmra.mxu0 %v6838
  %v6986 = vpop.f32.mrf.mxu0
  %v6987 = vadd.f32 0.0, %v6986
  %v6988 = vpop.f32.mrf.mxu0
  %v6989 = vadd.f32 0.0, %v6988
  %6990 = vmatmul.bf16.gmra.mxu0 %v6841
  %v6991 = vpop.f32.mrf.mxu0
  %v6992 = vadd.f32 0.0, %v6991
  %v6993 = vpop.f32.mrf.mxu0
  %v6994 = vadd.f32 0.0, %v6993
  %6995 = vmatmul.bf16.gmra.mxu0 %v6844
  %v6996 = vpop.f32.mrf.mxu0
  %v6997 = vadd.f32 0.0, %v6996
  %v6998 = vpop.f32.mrf.mxu0
  %v6999 = vadd.f32 0.0, %v6998
  %7000 = vmatmul.bf16.gmra.mxu0 %v6847
  %v7001 = vpop.f32.mrf.mxu0
  %v7002 = vadd.f32 0.0, %v7001
  %v7003 = vpop.f32.mrf.mxu0
  %v7004 = vadd.f32 0.0, %v7003
  %7005 = vmatmul.bf16.gmra.mxu0 %v6850
  %v7006 = vpop.f32.mrf.mxu0
  %v7007 = vadd.f32 0.0, %v7006
  %v7008 = vpop.f32.mrf.mxu0
  %v7009 = vadd.f32 0.0, %v7008
  %7010 = vmatmul.bf16.gmra.mxu0 %v6853
  %v7011 = vpop.f32.mrf.mxu0
  %v7012 = vadd.f32 0.0, %v7011
  %v7013 = vpop.f32.mrf.mxu0
  %v7014 = vadd.f32 0.0, %v7013
  %7015 = vmatmul.bf16.gmra.mxu0 %v6856
  %v7016 = vpop.f32.mrf.mxu0
  %v7017 = vadd.f32 0.0, %v7016
  %v7018 = vpop.f32.mrf.mxu0
  %v7019 = vadd.f32 0.0, %v7018
  %7020 = vmatmul.bf16.gmra.mxu0 %v6859
  %v7021 = vpop.f32.mrf.mxu0
  %v7022 = vadd.f32 0.0, %v7021
  %v7023 = vpop.f32.mrf.mxu0
  %v7024 = vadd.f32 0.0, %v7023
  %7025 = vmatmul.bf16.gmra.mxu0 %v6862
  %v7026 = vpop.f32.mrf.mxu0
  %v7027 = vadd.f32 0.0, %v7026
  %v7028 = vpop.f32.mrf.mxu0
  %v7029 = vadd.f32 0.0, %v7028
  %7030 = vmatmul.bf16.gmra.mxu0 %v6865
  %v7031 = vpop.f32.mrf.mxu0
  %v7032 = vadd.f32 0.0, %v7031
  %v7033 = vpop.f32.mrf.mxu0
  %v7034 = vadd.f32 0.0, %v7033
  %7035 = vdwg.mxu0
  %s7036 = scalar_lea.vmem %s7, 96
  %v7037 = vld [vmem:[%s7036] sm:$0xf]
  %v7038 = vld [vmem:[%s7036 + $0x4] sm:$0xf]
  %v7039 = vld [vmem:[%s7036 + $0x8] sm:$0xf]
  %v7040 = vld [vmem:[%s7036 + $0xc] sm:$0xf]
  %v7041 = vld [vmem:[%s7036 + $0x10] sm:$0xf]
  %v7042 = vld [vmem:[%s7036 + $0x14] sm:$0xf]
  %v7043 = vld [vmem:[%s7036 + $0x18] sm:$0xf]
  %v7044 = vld [vmem:[%s7036 + $0x1c] sm:$0xf]
  %v7045 = vld [vmem:[%s7036 + $0x20] sm:$0xf]
  %v7046 = vld [vmem:[%s7036 + $0x24] sm:$0xf]
  %v7047 = vld [vmem:[%s7036 + $0x28] sm:$0xf]
  %v7048 = vld [vmem:[%s7036 + $0x2c] sm:$0xf]
  %v7061 = vunpack.c.l.b16 %v7037
  %v7062 = vunpack.c.l.b16 %v7038
  %v7063 = vunpack.c.l.b16 %v7039
  %v7064 = vunpack.c.l.b16 %v7040
  %v7065 = vunpack.c.l.b16 %v7041
  %v7066 = vunpack.c.l.b16 %v7042
  %v7067 = vunpack.c.l.b16 %v7043
  %v7068 = vunpack.c.l.b16 %v7044
  %v7069 = vunpack.c.l.b16 %v7045
  %v7070 = vunpack.c.l.b16 %v7046
  %v7071 = vunpack.c.l.b16 %v7047
  %v7072 = vunpack.c.l.b16 %v7048
  %v7073 = vpack.c.b16 %v7062, %v7061
  %v7074 = vpack.c.b16 %v7064, %v7063
  %v7075 = vpack.c.b16 %v7066, %v7065
  %v7076 = vpack.c.b16 %v7068, %v7067
  %v7077 = vpack.c.b16 %v7070, %v7069
  %v7078 = vpack.c.b16 %v7072, %v7071
  %7085 = vmatpush.bf16.msra.mxu0 0
  %7086 = vmatpush.bf16.msra.mxu0 0
  %7087 = vmatpush.bf16.msra.mxu0 %v7078
  %7088 = vmatpush.bf16.msra.mxu0 %v7077
  %7089 = vmatpush.bf16.msra.mxu0 %v7076
  %7090 = vmatpush.bf16.msra.mxu0 %v7075
  %7091 = vmatpush.bf16.msra.mxu0 %v7074
  %7092 = vmatpush.bf16.msra.mxu0 %v7073
  %7093 = vmatmul.bf16.gmra.mxu0 %v6772
  %v7094 = vpop.f32.mrf.mxu0
  %v7095 = vadd.f32 0.0, %v7094
  %v7096 = vpop.f32.mrf.mxu0
  %v7097 = vadd.f32 0.0, %v7096
  %7098 = vmatmul.bf16.gmra.mxu0 %v6775
  %v7099 = vpop.f32.mrf.mxu0
  %v7100 = vadd.f32 0.0, %v7099
  %v7101 = vpop.f32.mrf.mxu0
  %v7102 = vadd.f32 0.0, %v7101
  %7103 = vmatmul.bf16.gmra.mxu0 %v6778
  %v7104 = vpop.f32.mrf.mxu0
  %v7105 = vadd.f32 0.0, %v7104
  %v7106 = vpop.f32.mrf.mxu0
  %v7107 = vadd.f32 0.0, %v7106
  %7108 = vmatmul.bf16.gmra.mxu0 %v6781
  %v7109 = vpop.f32.mrf.mxu0
  %v7110 = vadd.f32 0.0, %v7109
  %v7111 = vpop.f32.mrf.mxu0
  %v7112 = vadd.f32 0.0, %v7111
  %7113 = vmatmul.bf16.gmra.mxu0 %v6784
  %v7114 = vpop.f32.mrf.mxu0
  %v7115 = vadd.f32 0.0, %v7114
  %v7116 = vpop.f32.mrf.mxu0
  %v7117 = vadd.f32 0.0, %v7116
  %7118 = vmatmul.bf16.gmra.mxu0 %v6787
  %v7119 = vpop.f32.mrf.mxu0
  %v7120 = vadd.f32 0.0, %v7119
  %v7121 = vpop.f32.mrf.mxu0
  %v7122 = vadd.f32 0.0, %v7121
  %7123 = vmatmul.bf16.gmra.mxu0 %v6790
  %v7124 = vpop.f32.mrf.mxu0
  %v7125 = vadd.f32 0.0, %v7124
  %v7126 = vpop.f32.mrf.mxu0
  %v7127 = vadd.f32 0.0, %v7126
  %7128 = vmatmul.bf16.gmra.mxu0 %v6793
  %v7129 = vpop.f32.mrf.mxu0
  %v7130 = vadd.f32 0.0, %v7129
  %v7131 = vpop.f32.mrf.mxu0
  %v7132 = vadd.f32 0.0, %v7131
  %7133 = vmatmul.bf16.gmra.mxu0 %v6796
  %v7134 = vpop.f32.mrf.mxu0
  %v7135 = vadd.f32 0.0, %v7134
  %v7136 = vpop.f32.mrf.mxu0
  %v7137 = vadd.f32 0.0, %v7136
  %7138 = vmatmul.bf16.gmra.mxu0 %v6799
  %v7139 = vpop.f32.mrf.mxu0
  %v7140 = vadd.f32 0.0, %v7139
  %v7141 = vpop.f32.mrf.mxu0
  %v7142 = vadd.f32 0.0, %v7141
  %7143 = vmatmul.bf16.gmra.mxu0 %v6802
  %v7144 = vpop.f32.mrf.mxu0
  %v7145 = vadd.f32 0.0, %v7144
  %v7146 = vpop.f32.mrf.mxu0
  %v7147 = vadd.f32 0.0, %v7146
  %7148 = vmatmul.bf16.gmra.mxu0 %v6805
  %v7149 = vpop.f32.mrf.mxu0
  %v7150 = vadd.f32 0.0, %v7149
  %v7151 = vpop.f32.mrf.mxu0
  %v7152 = vadd.f32 0.0, %v7151
  %7153 = vmatmul.bf16.gmra.mxu0 %v6808
  %v7154 = vpop.f32.mrf.mxu0
  %v7155 = vadd.f32 0.0, %v7154
  %v7156 = vpop.f32.mrf.mxu0
  %v7157 = vadd.f32 0.0, %v7156
  %7158 = vmatmul.bf16.gmra.mxu0 %v6811
  %v7159 = vpop.f32.mrf.mxu0
  %v7160 = vadd.f32 0.0, %v7159
  %v7161 = vpop.f32.mrf.mxu0
  %v7162 = vadd.f32 0.0, %v7161
  %7163 = vmatmul.bf16.gmra.mxu0 %v6814
  %v7164 = vpop.f32.mrf.mxu0
  %v7165 = vadd.f32 0.0, %v7164
  %v7166 = vpop.f32.mrf.mxu0
  %v7167 = vadd.f32 0.0, %v7166
  %7168 = vmatmul.bf16.gmra.mxu0 %v6817
  %v7169 = vpop.f32.mrf.mxu0
  %v7170 = vadd.f32 0.0, %v7169
  %v7171 = vpop.f32.mrf.mxu0
  %v7172 = vadd.f32 0.0, %v7171
  %7173 = vmatmul.bf16.gmra.mxu0 %v6820
  %v7174 = vpop.f32.mrf.mxu0
  %v7175 = vadd.f32 0.0, %v7174
  %v7176 = vpop.f32.mrf.mxu0
  %v7177 = vadd.f32 0.0, %v7176
  %7178 = vmatmul.bf16.gmra.mxu0 %v6823
  %v7179 = vpop.f32.mrf.mxu0
  %v7180 = vadd.f32 0.0, %v7179
  %v7181 = vpop.f32.mrf.mxu0
  %v7182 = vadd.f32 0.0, %v7181
  %7183 = vmatmul.bf16.gmra.mxu0 %v6826
  %v7184 = vpop.f32.mrf.mxu0
  %v7185 = vadd.f32 0.0, %v7184
  %v7186 = vpop.f32.mrf.mxu0
  %v7187 = vadd.f32 0.0, %v7186
  %7188 = vmatmul.bf16.gmra.mxu0 %v6829
  %v7189 = vpop.f32.mrf.mxu0
  %v7190 = vadd.f32 0.0, %v7189
  %v7191 = vpop.f32.mrf.mxu0
  %v7192 = vadd.f32 0.0, %v7191
  %7193 = vmatmul.bf16.gmra.mxu0 %v6832
  %v7194 = vpop.f32.mrf.mxu0
  %v7195 = vadd.f32 0.0, %v7194
  %v7196 = vpop.f32.mrf.mxu0
  %v7197 = vadd.f32 0.0, %v7196
  %7198 = vmatmul.bf16.gmra.mxu0 %v6835
  %v7199 = vpop.f32.mrf.mxu0
  %v7200 = vadd.f32 0.0, %v7199
  %v7201 = vpop.f32.mrf.mxu0
  %v7202 = vadd.f32 0.0, %v7201
  %7203 = vmatmul.bf16.gmra.mxu0 %v6838
  %v7204 = vpop.f32.mrf.mxu0
  %v7205 = vadd.f32 0.0, %v7204
  %v7206 = vpop.f32.mrf.mxu0
  %v7207 = vadd.f32 0.0, %v7206
  %7208 = vmatmul.bf16.gmra.mxu0 %v6841
  %v7209 = vpop.f32.mrf.mxu0
  %v7210 = vadd.f32 0.0, %v7209
  %v7211 = vpop.f32.mrf.mxu0
  %v7212 = vadd.f32 0.0, %v7211
  %7213 = vmatmul.bf16.gmra.mxu0 %v6844
  %v7214 = vpop.f32.mrf.mxu0
  %v7215 = vadd.f32 0.0, %v7214
  %v7216 = vpop.f32.mrf.mxu0
  %v7217 = vadd.f32 0.0, %v7216
  %7218 = vmatmul.bf16.gmra.mxu0 %v6847
  %v7219 = vpop.f32.mrf.mxu0
  %v7220 = vadd.f32 0.0, %v7219
  %v7221 = vpop.f32.mrf.mxu0
  %v7222 = vadd.f32 0.0, %v7221
  %7223 = vmatmul.bf16.gmra.mxu0 %v6850
  %v7224 = vpop.f32.mrf.mxu0
  %v7225 = vadd.f32 0.0, %v7224
  %v7226 = vpop.f32.mrf.mxu0
  %v7227 = vadd.f32 0.0, %v7226
  %7228 = vmatmul.bf16.gmra.mxu0 %v6853
  %v7229 = vpop.f32.mrf.mxu0
  %v7230 = vadd.f32 0.0, %v7229
  %v7231 = vpop.f32.mrf.mxu0
  %v7232 = vadd.f32 0.0, %v7231
  %7233 = vmatmul.bf16.gmra.mxu0 %v6856
  %v7234 = vpop.f32.mrf.mxu0
  %v7235 = vadd.f32 0.0, %v7234
  %v7236 = vpop.f32.mrf.mxu0
  %v7237 = vadd.f32 0.0, %v7236
  %7238 = vmatmul.bf16.gmra.mxu0 %v6859
  %v7239 = vpop.f32.mrf.mxu0
  %v7240 = vadd.f32 0.0, %v7239
  %v7241 = vpop.f32.mrf.mxu0
  %v7242 = vadd.f32 0.0, %v7241
  %7243 = vmatmul.bf16.gmra.mxu0 %v6862
  %v7244 = vpop.f32.mrf.mxu0
  %v7245 = vadd.f32 0.0, %v7244
  %v7246 = vpop.f32.mrf.mxu0
  %v7247 = vadd.f32 0.0, %v7246
  %7248 = vmatmul.bf16.gmra.mxu0 %v6865
  %v7249 = vpop.f32.mrf.mxu0
  %v7250 = vadd.f32 0.0, %v7249
  %v7251 = vpop.f32.mrf.mxu0
  %v7252 = vadd.f32 0.0, %v7251
  %7253 = vdwg.mxu0
  %v7254 = vsel %vm4830, %v7032, 0.0
  %v7255 = vsel %vm4831, %v7034, 0.0
  %v7256 = vsel %vm4832, %v6877, 0.0
  %v7257 = vsel %vm4833, %v6879, 0.0
  %v7258 = vsel %vm4834, %v6882, 0.0
  %v7259 = vsel %vm4835, %v6884, 0.0
  %v7260 = vsel %vm4836, %v6887, 0.0
  %v7261 = vsel %vm4837, %v6889, 0.0
  %v7262 = vsel %vm4838, %v6892, 0.0
  %v7263 = vsel %vm4839, %v6894, 0.0
  %v7264 = vsel %vm4840, %v6897, 0.0
  %v7265 = vsel %vm4841, %v6899, 0.0
  %v7266 = vsel %vm4842, %v6902, 0.0
  %v7267 = vsel %vm4843, %v6904, 0.0
  %v7268 = vsel %vm4844, %v6907, 0.0
  %v7269 = vsel %vm4845, %v6909, 0.0
  %v7270 = vsel %vm4846, %v6912, 0.0
  %v7271 = vsel %vm4847, %v6914, 0.0
  %v7272 = vsel %vm4848, %v6917, 0.0
  %v7273 = vsel %vm4849, %v6919, 0.0
  %v7274 = vsel %vm4850, %v6922, 0.0
  %v7275 = vsel %vm4851, %v6924, 0.0
  %v7276 = vsel %vm4852, %v6927, 0.0
  %v7277 = vsel %vm4853, %v6929, 0.0
  %v7278 = vsel %vm4854, %v6932, 0.0
  %v7279 = vsel %vm4855, %v6934, 0.0
  %v7280 = vsel %vm4856, %v6937, 0.0
  %v7281 = vsel %vm4857, %v6939, 0.0
  %v7282 = vsel %vm4858, %v6942, 0.0
  %v7283 = vsel %vm4859, %v6944, 0.0
  %v7284 = vsel %vm4860, %v6947, 0.0
  %v7285 = vsel %vm4861, %v6949, 0.0
  %v7286 = vsel %vm4862, %v6952, 0.0
  %v7287 = vsel %vm4863, %v6954, 0.0
  %v7288 = vsel %vm4864, %v6957, 0.0
  %v7289 = vsel %vm4865, %v6959, 0.0
  %v7290 = vsel %vm4866, %v6962, 0.0
  %v7291 = vsel %vm4867, %v6964, 0.0
  %v7292 = vsel %vm4868, %v6967, 0.0
  %v7293 = vsel %vm4869, %v6969, 0.0
  %v7294 = vsel %vm4870, %v6972, 0.0
  %v7295 = vsel %vm4871, %v6974, 0.0
  %v7296 = vsel %vm4872, %v6977, 0.0
  %v7297 = vsel %vm4873, %v6979, 0.0
  %v7298 = vsel %vm4874, %v6982, 0.0
  %v7299 = vsel %vm4875, %v6984, 0.0
  %v7300 = vsel %vm4876, %v6987, 0.0
  %v7301 = vsel %vm4877, %v6989, 0.0
  %v7302 = vsel %vm4878, %v6992, 0.0
  %v7303 = vsel %vm4879, %v6994, 0.0
  %v7304 = vsel %vm4880, %v6997, 0.0
  %v7305 = vsel %vm4881, %v6999, 0.0
  %v7306 = vsel %vm4882, %v7002, 0.0
  %v7307 = vsel %vm4883, %v7004, 0.0
  %v7308 = vsel %vm4884, %v7007, 0.0
  %v7309 = vsel %vm4885, %v7009, 0.0
  %v7310 = vsel %vm4886, %v7012, 0.0
  %v7311 = vsel %vm4887, %v7014, 0.0
  %v7312 = vsel %vm4888, %v7017, 0.0
  %v7313 = vsel %vm4889, %v7019, 0.0
  %v7314 = vsel %vm4890, %v7022, 0.0
  %v7315 = vsel %vm4891, %v7024, 0.0
  %v7316 = vsel %vm4892, %v7027, 0.0
  %v7317 = vsel %vm4893, %v7029, 0.0
  %v7330 = vunpack.c.l.b16 %v6710
  %v7331 = vunpack.c.l.b16 %v6711
  %v7332 = vunpack.c.l.b16 %v6712
  %v7333 = vunpack.c.l.b16 %v6713
  %v7334 = vunpack.c.l.b16 %v6714
  %v7335 = vunpack.c.l.b16 %v6715
  %v7336 = vunpack.c.l.b16 %v6716
  %v7337 = vunpack.c.l.b16 %v6717
  %v7338 = vunpack.c.l.b16 %v6718
  %v7339 = vunpack.c.l.b16 %v6719
  %v7340 = vunpack.c.l.b16 %v6720
  %v7341 = vunpack.c.l.b16 %v6721
  %v7342 = vpack.c.b16 %v7331, %v7330
  %v7343 = vpack.c.b16 %v7333, %v7332
  %v7344 = vpack.c.b16 %v7335, %v7334
  %v7345 = vpack.c.b16 %v7337, %v7336
  %v7346 = vpack.c.b16 %v7339, %v7338
  %v7347 = vpack.c.b16 %v7341, %v7340
  %7354 = vmatpush.bf16.msra.mxu0 0
  %7355 = vmatpush.bf16.msra.mxu0 0
  %7356 = vmatpush.bf16.msra.mxu0 %v7347
  %7357 = vmatpush.bf16.msra.mxu0 %v7346
  %7358 = vmatpush.bf16.msra.mxu0 %v7345
  %7359 = vmatpush.bf16.msra.mxu0 %v7344
  %7360 = vmatpush.bf16.msra.mxu0 %v7343
  %7361 = vmatpush.bf16.msra.mxu0 %v7342
  %7362 = vmatmul.bf16.gmra.mxu0 %v6772
  %v7363 = vpop.f32.mrf.mxu0
  %v7364 = vadd.f32 %v7254, %v7363
  %v7365 = vpop.f32.mrf.mxu0
  %v7366 = vadd.f32 %v7255, %v7365
  %7367 = vmatmul.bf16.gmra.mxu0 %v6775
  %v7368 = vpop.f32.mrf.mxu0
  %v7369 = vadd.f32 %v7256, %v7368
  %v7370 = vpop.f32.mrf.mxu0
  %v7371 = vadd.f32 %v7257, %v7370
  %7372 = vmatmul.bf16.gmra.mxu0 %v6778
  %v7373 = vpop.f32.mrf.mxu0
  %v7374 = vadd.f32 %v7258, %v7373
  %v7375 = vpop.f32.mrf.mxu0
  %v7376 = vadd.f32 %v7259, %v7375
  %7377 = vmatmul.bf16.gmra.mxu0 %v6781
  %v7378 = vpop.f32.mrf.mxu0
  %v7379 = vadd.f32 %v7260, %v7378
  %v7380 = vpop.f32.mrf.mxu0
  %v7381 = vadd.f32 %v7261, %v7380
  %7382 = vmatmul.bf16.gmra.mxu0 %v6784
  %v7383 = vpop.f32.mrf.mxu0
  %v7384 = vadd.f32 %v7262, %v7383
  %v7385 = vpop.f32.mrf.mxu0
  %v7386 = vadd.f32 %v7263, %v7385
  %7387 = vmatmul.bf16.gmra.mxu0 %v6787
  %v7388 = vpop.f32.mrf.mxu0
  %v7389 = vadd.f32 %v7264, %v7388
  %v7390 = vpop.f32.mrf.mxu0
  %v7391 = vadd.f32 %v7265, %v7390
  %7392 = vmatmul.bf16.gmra.mxu0 %v6790
  %v7393 = vpop.f32.mrf.mxu0
  %v7394 = vadd.f32 %v7266, %v7393
  %v7395 = vpop.f32.mrf.mxu0
  %v7396 = vadd.f32 %v7267, %v7395
  %7397 = vmatmul.bf16.gmra.mxu0 %v6793
  %v7398 = vpop.f32.mrf.mxu0
  %v7399 = vadd.f32 %v7268, %v7398
  %v7400 = vpop.f32.mrf.mxu0
  %v7401 = vadd.f32 %v7269, %v7400
  %7402 = vmatmul.bf16.gmra.mxu0 %v6796
  %v7403 = vpop.f32.mrf.mxu0
  %v7404 = vadd.f32 %v7270, %v7403
  %v7405 = vpop.f32.mrf.mxu0
  %v7406 = vadd.f32 %v7271, %v7405
  %7407 = vmatmul.bf16.gmra.mxu0 %v6799
  %v7408 = vpop.f32.mrf.mxu0
  %v7409 = vadd.f32 %v7272, %v7408
  %v7410 = vpop.f32.mrf.mxu0
  %v7411 = vadd.f32 %v7273, %v7410
  %7412 = vmatmul.bf16.gmra.mxu0 %v6802
  %v7413 = vpop.f32.mrf.mxu0
  %v7414 = vadd.f32 %v7274, %v7413
  %v7415 = vpop.f32.mrf.mxu0
  %v7416 = vadd.f32 %v7275, %v7415
  %7417 = vmatmul.bf16.gmra.mxu0 %v6805
  %v7418 = vpop.f32.mrf.mxu0
  %v7419 = vadd.f32 %v7276, %v7418
  %v7420 = vpop.f32.mrf.mxu0
  %v7421 = vadd.f32 %v7277, %v7420
  %7422 = vmatmul.bf16.gmra.mxu0 %v6808
  %v7423 = vpop.f32.mrf.mxu0
  %v7424 = vadd.f32 %v7278, %v7423
  %v7425 = vpop.f32.mrf.mxu0
  %v7426 = vadd.f32 %v7279, %v7425
  %7427 = vmatmul.bf16.gmra.mxu0 %v6811
  %v7428 = vpop.f32.mrf.mxu0
  %v7429 = vadd.f32 %v7280, %v7428
  %v7430 = vpop.f32.mrf.mxu0
  %v7431 = vadd.f32 %v7281, %v7430
  %7432 = vmatmul.bf16.gmra.mxu0 %v6814
  %v7433 = vpop.f32.mrf.mxu0
  %v7434 = vadd.f32 %v7282, %v7433
  %v7435 = vpop.f32.mrf.mxu0
  %v7436 = vadd.f32 %v7283, %v7435
  %7437 = vmatmul.bf16.gmra.mxu0 %v6817
  %v7438 = vpop.f32.mrf.mxu0
  %v7439 = vadd.f32 %v7284, %v7438
  %v7440 = vpop.f32.mrf.mxu0
  %v7441 = vadd.f32 %v7285, %v7440
  %7442 = vmatmul.bf16.gmra.mxu0 %v6820
  %v7443 = vpop.f32.mrf.mxu0
  %v7444 = vadd.f32 %v7286, %v7443
  %v7445 = vpop.f32.mrf.mxu0
  %v7446 = vadd.f32 %v7287, %v7445
  %7447 = vmatmul.bf16.gmra.mxu0 %v6823
  %v7448 = vpop.f32.mrf.mxu0
  %v7449 = vadd.f32 %v7288, %v7448
  %v7450 = vpop.f32.mrf.mxu0
  %v7451 = vadd.f32 %v7289, %v7450
  %7452 = vmatmul.bf16.gmra.mxu0 %v6826
  %v7453 = vpop.f32.mrf.mxu0
  %v7454 = vadd.f32 %v7290, %v7453
  %v7455 = vpop.f32.mrf.mxu0
  %v7456 = vadd.f32 %v7291, %v7455
  %7457 = vmatmul.bf16.gmra.mxu0 %v6829
  %v7458 = vpop.f32.mrf.mxu0
  %v7459 = vadd.f32 %v7292, %v7458
  %v7460 = vpop.f32.mrf.mxu0
  %v7461 = vadd.f32 %v7293, %v7460
  %7462 = vmatmul.bf16.gmra.mxu0 %v6832
  %v7463 = vpop.f32.mrf.mxu0
  %v7464 = vadd.f32 %v7294, %v7463
  %v7465 = vpop.f32.mrf.mxu0
  %v7466 = vadd.f32 %v7295, %v7465
  %7467 = vmatmul.bf16.gmra.mxu0 %v6835
  %v7468 = vpop.f32.mrf.mxu0
  %v7469 = vadd.f32 %v7296, %v7468
  %v7470 = vpop.f32.mrf.mxu0
  %v7471 = vadd.f32 %v7297, %v7470
  %7472 = vmatmul.bf16.gmra.mxu0 %v6838
  %v7473 = vpop.f32.mrf.mxu0
  %v7474 = vadd.f32 %v7298, %v7473
  %v7475 = vpop.f32.mrf.mxu0
  %v7476 = vadd.f32 %v7299, %v7475
  %7477 = vmatmul.bf16.gmra.mxu0 %v6841
  %v7478 = vpop.f32.mrf.mxu0
  %v7479 = vadd.f32 %v7300, %v7478
  %v7480 = vpop.f32.mrf.mxu0
  %v7481 = vadd.f32 %v7301, %v7480
  %7482 = vmatmul.bf16.gmra.mxu0 %v6844
  %v7483 = vpop.f32.mrf.mxu0
  %v7484 = vadd.f32 %v7302, %v7483
  %v7485 = vpop.f32.mrf.mxu0
  %v7486 = vadd.f32 %v7303, %v7485
  %7487 = vmatmul.bf16.gmra.mxu0 %v6847
  %v7488 = vpop.f32.mrf.mxu0
  %v7489 = vadd.f32 %v7304, %v7488
  %v7490 = vpop.f32.mrf.mxu0
  %v7491 = vadd.f32 %v7305, %v7490
  %7492 = vmatmul.bf16.gmra.mxu0 %v6850
  %v7493 = vpop.f32.mrf.mxu0
  %v7494 = vadd.f32 %v7306, %v7493
  %v7495 = vpop.f32.mrf.mxu0
  %v7496 = vadd.f32 %v7307, %v7495
  %7497 = vmatmul.bf16.gmra.mxu0 %v6853
  %v7498 = vpop.f32.mrf.mxu0
  %v7499 = vadd.f32 %v7308, %v7498
  %v7500 = vpop.f32.mrf.mxu0
  %v7501 = vadd.f32 %v7309, %v7500
  %7502 = vmatmul.bf16.gmra.mxu0 %v6856
  %v7503 = vpop.f32.mrf.mxu0
  %v7504 = vadd.f32 %v7310, %v7503
  %v7505 = vpop.f32.mrf.mxu0
  %v7506 = vadd.f32 %v7311, %v7505
  %7507 = vmatmul.bf16.gmra.mxu0 %v6859
  %v7508 = vpop.f32.mrf.mxu0
  %v7509 = vadd.f32 %v7312, %v7508
  %v7510 = vpop.f32.mrf.mxu0
  %v7511 = vadd.f32 %v7313, %v7510
  %7512 = vmatmul.bf16.gmra.mxu0 %v6862
  %v7513 = vpop.f32.mrf.mxu0
  %v7514 = vadd.f32 %v7314, %v7513
  %v7515 = vpop.f32.mrf.mxu0
  %v7516 = vadd.f32 %v7315, %v7515
  %7517 = vmatmul.bf16.gmra.mxu0 %v6865
  %v7518 = vpop.f32.mrf.mxu0
  %v7519 = vadd.f32 %v7316, %v7518
  %v7520 = vpop.f32.mrf.mxu0
  %v7521 = vadd.f32 %v7317, %v7520
  %7522 = vdwg.mxu0
  %v7523 = vsel %vm5199, %v7100, 0.0
  %v7524 = vsel %vm5200, %v7102, 0.0
  %v7525 = vsel %vm5201, %v7105, 0.0
  %v7526 = vsel %vm5202, %v7107, 0.0
  %v7527 = vsel %vm5203, %v7110, 0.0
  %v7528 = vsel %vm5204, %v7112, 0.0
  %v7529 = vsel %vm5205, %v7115, 0.0
  %v7530 = vsel %vm5206, %v7117, 0.0
  %v7531 = vsel %vm5207, %v7120, 0.0
  %v7532 = vsel %vm5208, %v7122, 0.0
  %v7533 = vsel %vm5209, %v7125, 0.0
  %v7534 = vsel %vm5210, %v7127, 0.0
  %v7535 = vsel %vm5211, %v7130, 0.0
  %v7536 = vsel %vm5212, %v7132, 0.0
  %v7537 = vsel %vm5213, %v7135, 0.0
  %v7538 = vsel %vm5214, %v7137, 0.0
  %v7539 = vsel %vm5215, %v7140, 0.0
  %v7540 = vsel %vm5216, %v7142, 0.0
  %v7541 = vsel %vm5217, %v7145, 0.0
  %v7542 = vsel %vm5218, %v7147, 0.0
  %v7543 = vsel %vm5219, %v7150, 0.0
  %v7544 = vsel %vm5220, %v7152, 0.0
  %v7545 = vsel %vm5221, %v7155, 0.0
  %v7546 = vsel %vm5222, %v7157, 0.0
  %v7547 = vsel %vm5223, %v7160, 0.0
  %v7548 = vsel %vm5224, %v7162, 0.0
  %v7549 = vsel %vm5225, %v7165, 0.0
  %v7550 = vsel %vm5226, %v7167, 0.0
  %v7551 = vsel %vm5227, %v7170, 0.0
  %v7552 = vsel %vm5228, %v7172, 0.0
  %v7553 = vsel %vm5229, %v7175, 0.0
  %v7554 = vsel %vm5230, %v7177, 0.0
  %v7555 = vsel %vm5231, %v7180, 0.0
  %v7556 = vsel %vm5232, %v7182, 0.0
  %v7557 = vsel %vm5233, %v7185, 0.0
  %v7558 = vsel %vm5234, %v7187, 0.0
  %v7559 = vsel %vm5235, %v7190, 0.0
  %v7560 = vsel %vm5236, %v7192, 0.0
  %v7561 = vsel %vm5237, %v7195, 0.0
  %v7562 = vsel %vm5238, %v7197, 0.0
  %v7563 = vsel %vm5239, %v7200, 0.0
  %v7564 = vsel %vm5240, %v7202, 0.0
  %v7565 = vsel %vm5241, %v7205, 0.0
  %v7566 = vsel %vm5242, %v7207, 0.0
  %v7567 = vsel %vm5243, %v7210, 0.0
  %v7568 = vsel %vm5244, %v7212, 0.0
  %v7569 = vsel %vm5245, %v7215, 0.0
  %v7570 = vsel %vm5246, %v7217, 0.0
  %v7571 = vsel %vm5247, %v7220, 0.0
  %v7572 = vsel %vm5248, %v7222, 0.0
  %v7573 = vsel %vm5249, %v7225, 0.0
  %v7574 = vsel %vm5250, %v7227, 0.0
  %v7575 = vsel %vm5251, %v7230, 0.0
  %v7576 = vsel %vm5252, %v7232, 0.0
  %v7577 = vsel %vm5253, %v7235, 0.0
  %v7578 = vsel %vm5254, %v7237, 0.0
  %v7579 = vsel %vm5255, %v7240, 0.0
  %v7580 = vsel %vm5256, %v7242, 0.0
  %v7581 = vsel %vm5257, %v7245, 0.0
  %v7582 = vsel %vm5258, %v7247, 0.0
  %v7583 = vsel %vm5259, %v7250, 0.0
  %v7584 = vsel %vm5260, %v7252, 0.0
  %v7585 = vsel %vm5261, %v7095, 0.0
  %v7586 = vsel %vm5262, %v7097, 0.0
  %v7587 = vadd.f32 %v7364, %v7523
  %v7588 = vadd.f32 %v7366, %v7524
  %v7589 = vadd.f32 %v7369, %v7525
  %v7590 = vadd.f32 %v7371, %v7526
  %v7591 = vadd.f32 %v7374, %v7527
  %v7592 = vadd.f32 %v7376, %v7528
  %v7593 = vadd.f32 %v7379, %v7529
  %v7594 = vadd.f32 %v7381, %v7530
  %v7595 = vadd.f32 %v7384, %v7531
  %v7596 = vadd.f32 %v7386, %v7532
  %v7597 = vadd.f32 %v7389, %v7533
  %v7598 = vadd.f32 %v7391, %v7534
  %v7599 = vadd.f32 %v7394, %v7535
  %v7600 = vadd.f32 %v7396, %v7536
  %v7601 = vadd.f32 %v7399, %v7537
  %v7602 = vadd.f32 %v7401, %v7538
  %v7603 = vadd.f32 %v7404, %v7539
  %v7604 = vadd.f32 %v7406, %v7540
  %v7605 = vadd.f32 %v7409, %v7541
  %v7606 = vadd.f32 %v7411, %v7542
  %v7607 = vadd.f32 %v7414, %v7543
  %v7608 = vadd.f32 %v7416, %v7544
  %v7609 = vadd.f32 %v7419, %v7545
  %v7610 = vadd.f32 %v7421, %v7546
  %v7611 = vadd.f32 %v7424, %v7547
  %v7612 = vadd.f32 %v7426, %v7548
  %v7613 = vadd.f32 %v7429, %v7549
  %v7614 = vadd.f32 %v7431, %v7550
  %v7615 = vadd.f32 %v7434, %v7551
  %v7616 = vadd.f32 %v7436, %v7552
  %v7617 = vadd.f32 %v7439, %v7553
  %v7618 = vadd.f32 %v7441, %v7554
  %v7619 = vadd.f32 %v7444, %v7555
  %v7620 = vadd.f32 %v7446, %v7556
  %v7621 = vadd.f32 %v7449, %v7557
  %v7622 = vadd.f32 %v7451, %v7558
  %v7623 = vadd.f32 %v7454, %v7559
  %v7624 = vadd.f32 %v7456, %v7560
  %v7625 = vadd.f32 %v7459, %v7561
  %v7626 = vadd.f32 %v7461, %v7562
  %v7627 = vadd.f32 %v7464, %v7563
  %v7628 = vadd.f32 %v7466, %v7564
  %v7629 = vadd.f32 %v7469, %v7565
  %v7630 = vadd.f32 %v7471, %v7566
  %v7631 = vadd.f32 %v7474, %v7567
  %v7632 = vadd.f32 %v7476, %v7568
  %v7633 = vadd.f32 %v7479, %v7569
  %v7634 = vadd.f32 %v7481, %v7570
  %v7635 = vadd.f32 %v7484, %v7571
  %v7636 = vadd.f32 %v7486, %v7572
  %v7637 = vadd.f32 %v7489, %v7573
  %v7638 = vadd.f32 %v7491, %v7574
  %v7639 = vadd.f32 %v7494, %v7575
  %v7640 = vadd.f32 %v7496, %v7576
  %v7641 = vadd.f32 %v7499, %v7577
  %v7642 = vadd.f32 %v7501, %v7578
  %v7643 = vadd.f32 %v7504, %v7579
  %v7644 = vadd.f32 %v7506, %v7580
  %v7645 = vadd.f32 %v7509, %v7581
  %v7646 = vadd.f32 %v7511, %v7582
  %v7647 = vadd.f32 %v7514, %v7583
  %v7648 = vadd.f32 %v7516, %v7584
  %v7649 = vadd.f32 %v7519, %v7585
  %v7650 = vadd.f32 %v7521, %v7586
  %v7651 = vld [vmem:[%s8] sm:$0x1]
  %v7653 = vperm.slane %v7651, 0
  %v7655 = vadd.f32 %v7587, %v7653
  %v7656 = vadd.f32 %v7588, %v7653
  %v7657 = vadd.f32 %v7589, %v7653
  %v7658 = vadd.f32 %v7590, %v7653
  %v7659 = vadd.f32 %v7591, %v7653
  %v7660 = vadd.f32 %v7592, %v7653
  %v7661 = vadd.f32 %v7593, %v7653
  %v7662 = vadd.f32 %v7594, %v7653
  %v7663 = vadd.f32 %v7595, %v7653
  %v7664 = vadd.f32 %v7596, %v7653
  %v7665 = vadd.f32 %v7597, %v7653
  %v7666 = vadd.f32 %v7598, %v7653
  %v7667 = vadd.f32 %v7599, %v7653
  %v7668 = vadd.f32 %v7600, %v7653
  %v7669 = vadd.f32 %v7601, %v7653
  %v7670 = vadd.f32 %v7602, %v7653
  %v7671 = vadd.f32 %v7603, %v7653
  %v7672 = vadd.f32 %v7604, %v7653
  %v7673 = vadd.f32 %v7605, %v7653
  %v7674 = vadd.f32 %v7606, %v7653
  %v7675 = vadd.f32 %v7607, %v7653
  %v7676 = vadd.f32 %v7608, %v7653
  %v7677 = vadd.f32 %v7609, %v7653
  %v7678 = vadd.f32 %v7610, %v7653
  %v7679 = vadd.f32 %v7611, %v7653
  %v7680 = vadd.f32 %v7612, %v7653
  %v7681 = vadd.f32 %v7613, %v7653
  %v7682 = vadd.f32 %v7614, %v7653
  %v7683 = vadd.f32 %v7615, %v7653
  %v7684 = vadd.f32 %v7616, %v7653
  %v7685 = vadd.f32 %v7617, %v7653
  %v7686 = vadd.f32 %v7618, %v7653
  %v7687 = vadd.f32 %v7619, %v7653
  %v7688 = vadd.f32 %v7620, %v7653
  %v7689 = vadd.f32 %v7621, %v7653
  %v7690 = vadd.f32 %v7622, %v7653
  %v7691 = vadd.f32 %v7623, %v7653
  %v7692 = vadd.f32 %v7624, %v7653
  %v7693 = vadd.f32 %v7625, %v7653
  %v7694 = vadd.f32 %v7626, %v7653
  %v7695 = vadd.f32 %v7627, %v7653
  %v7696 = vadd.f32 %v7628, %v7653
  %v7697 = vadd.f32 %v7629, %v7653
  %v7698 = vadd.f32 %v7630, %v7653
  %v7699 = vadd.f32 %v7631, %v7653
  %v7700 = vadd.f32 %v7632, %v7653
  %v7701 = vadd.f32 %v7633, %v7653
  %v7702 = vadd.f32 %v7634, %v7653
  %v7703 = vadd.f32 %v7635, %v7653
  %v7704 = vadd.f32 %v7636, %v7653
  %v7705 = vadd.f32 %v7637, %v7653
  %v7706 = vadd.f32 %v7638, %v7653
  %v7707 = vadd.f32 %v7639, %v7653
  %v7708 = vadd.f32 %v7640, %v7653
  %v7709 = vadd.f32 %v7641, %v7653
  %v7710 = vadd.f32 %v7642, %v7653
  %v7711 = vadd.f32 %v7643, %v7653
  %v7712 = vadd.f32 %v7644, %v7653
  %v7713 = vadd.f32 %v7645, %v7653
  %v7714 = vadd.f32 %v7646, %v7653
  %v7715 = vadd.f32 %v7647, %v7653
  %v7716 = vadd.f32 %v7648, %v7653
  %v7717 = vadd.f32 %v7649, %v7653
  %v7718 = vadd.f32 %v7650, %v7653
  %v7719 = vmax.f32 %v7655, 0.0
  %v7720 = vmax.f32 %v7656, 0.0
  %v7721 = vmax.f32 %v7657, 0.0
  %v7722 = vmax.f32 %v7658, 0.0
  %v7723 = vmax.f32 %v7659, 0.0
  %v7724 = vmax.f32 %v7660, 0.0
  %v7725 = vmax.f32 %v7661, 0.0
  %v7726 = vmax.f32 %v7662, 0.0
  %v7727 = vmax.f32 %v7663, 0.0
  %v7728 = vmax.f32 %v7664, 0.0
  %v7729 = vmax.f32 %v7665, 0.0
  %v7730 = vmax.f32 %v7666, 0.0
  %v7731 = vmax.f32 %v7667, 0.0
  %v7732 = vmax.f32 %v7668, 0.0
  %v7733 = vmax.f32 %v7669, 0.0
  %v7734 = vmax.f32 %v7670, 0.0
  %v7735 = vmax.f32 %v7671, 0.0
  %v7736 = vmax.f32 %v7672, 0.0
  %v7737 = vmax.f32 %v7673, 0.0
  %v7738 = vmax.f32 %v7674, 0.0
  %v7739 = vmax.f32 %v7675, 0.0
  %v7740 = vmax.f32 %v7676, 0.0
  %v7741 = vmax.f32 %v7677, 0.0
  %v7742 = vmax.f32 %v7678, 0.0
  %v7743 = vmax.f32 %v7679, 0.0
  %v7744 = vmax.f32 %v7680, 0.0
  %v7745 = vmax.f32 %v7681, 0.0
  %v7746 = vmax.f32 %v7682, 0.0
  %v7747 = vmax.f32 %v7683, 0.0
  %v7748 = vmax.f32 %v7684, 0.0
  %v7749 = vmax.f32 %v7685, 0.0
  %v7750 = vmax.f32 %v7686, 0.0
  %v7751 = vmax.f32 %v7687, 0.0
  %v7752 = vmax.f32 %v7688, 0.0
  %v7753 = vmax.f32 %v7689, 0.0
  %v7754 = vmax.f32 %v7690, 0.0
  %v7755 = vmax.f32 %v7691, 0.0
  %v7756 = vmax.f32 %v7692, 0.0
  %v7757 = vmax.f32 %v7693, 0.0
  %v7758 = vmax.f32 %v7694, 0.0
  %v7759 = vmax.f32 %v7695, 0.0
  %v7760 = vmax.f32 %v7696, 0.0
  %v7761 = vmax.f32 %v7697, 0.0
  %v7762 = vmax.f32 %v7698, 0.0
  %v7763 = vmax.f32 %v7699, 0.0
  %v7764 = vmax.f32 %v7700, 0.0
  %v7765 = vmax.f32 %v7701, 0.0
  %v7766 = vmax.f32 %v7702, 0.0
  %v7767 = vmax.f32 %v7703, 0.0
  %v7768 = vmax.f32 %v7704, 0.0
  %v7769 = vmax.f32 %v7705, 0.0
  %v7770 = vmax.f32 %v7706, 0.0
  %v7771 = vmax.f32 %v7707, 0.0
  %v7772 = vmax.f32 %v7708, 0.0
  %v7773 = vmax.f32 %v7709, 0.0
  %v7774 = vmax.f32 %v7710, 0.0
  %v7775 = vmax.f32 %v7711, 0.0
  %v7776 = vmax.f32 %v7712, 0.0
  %v7777 = vmax.f32 %v7713, 0.0
  %v7778 = vmax.f32 %v7714, 0.0
  %v7779 = vmax.f32 %v7715, 0.0
  %v7780 = vmax.f32 %v7716, 0.0
  %v7781 = vmax.f32 %v7717, 0.0
  %v7782 = vmax.f32 %v7718, 0.0
  %v7783 = vrot.slane %v7719, 7
  %v7784 = vrot.slane %v7720, 7
  %v7785 = vrot.slane %v7721, 7
  %v7786 = vrot.slane %v7722, 7
  %v7787 = vrot.slane %v7723, 7
  %v7788 = vrot.slane %v7724, 7
  %v7789 = vrot.slane %v7725, 7
  %v7790 = vrot.slane %v7726, 7
  %v7791 = vrot.slane %v7727, 7
  %v7792 = vrot.slane %v7728, 7
  %v7793 = vrot.slane %v7729, 7
  %v7794 = vrot.slane %v7730, 7
  %v7795 = vrot.slane %v7731, 7
  %v7796 = vrot.slane %v7732, 7
  %v7797 = vrot.slane %v7733, 7
  %v7798 = vrot.slane %v7734, 7
  %v7799 = vrot.slane %v7735, 7
  %v7800 = vrot.slane %v7736, 7
  %v7801 = vrot.slane %v7737, 7
  %v7802 = vrot.slane %v7738, 7
  %v7803 = vrot.slane %v7739, 7
  %v7804 = vrot.slane %v7740, 7
  %v7805 = vrot.slane %v7741, 7
  %v7806 = vrot.slane %v7742, 7
  %v7807 = vrot.slane %v7743, 7
  %v7808 = vrot.slane %v7744, 7
  %v7809 = vrot.slane %v7745, 7
  %v7810 = vrot.slane %v7746, 7
  %v7811 = vrot.slane %v7747, 7
  %v7812 = vrot.slane %v7748, 7
  %v7813 = vrot.slane %v7749, 7
  %v7814 = vrot.slane %v7750, 7
  %v7815 = vrot.slane %v7751, 7
  %v7816 = vrot.slane %v7752, 7
  %v7817 = vrot.slane %v7753, 7
  %v7818 = vrot.slane %v7754, 7
  %v7819 = vrot.slane %v7755, 7
  %v7820 = vrot.slane %v7756, 7
  %v7821 = vrot.slane %v7757, 7
  %v7822 = vrot.slane %v7758, 7
  %v7823 = vrot.slane %v7759, 7
  %v7824 = vrot.slane %v7760, 7
  %v7825 = vrot.slane %v7761, 7
  %v7826 = vrot.slane %v7762, 7
  %v7827 = vrot.slane %v7763, 7
  %v7828 = vrot.slane %v7764, 7
  %v7829 = vrot.slane %v7765, 7
  %v7830 = vrot.slane %v7766, 7
  %v7831 = vrot.slane %v7767, 7
  %v7832 = vrot.slane %v7768, 7
  %v7833 = vrot.slane %v7769, 7
  %v7834 = vrot.slane %v7770, 7
  %v7835 = vrot.slane %v7771, 7
  %v7836 = vrot.slane %v7772, 7
  %v7837 = vrot.slane %v7773, 7
  %v7838 = vrot.slane %v7774, 7
  %v7839 = vrot.slane %v7775, 7
  %v7840 = vrot.slane %v7776, 7
  %v7841 = vrot.slane %v7777, 7
  %v7842 = vrot.slane %v7778, 7
  %v7843 = vrot.slane %v7779, 7
  %v7844 = vrot.slane %v7780, 7
  %v7845 = vrot.slane %v7781, 7
  %v7846 = vrot.slane %v7782, 7
  %v7847 = vsel %vm3054, %v7845, %v7846
  %v7848 = vsel %vm3054, %v7844, %v7845
  %v7849 = vsel %vm3054, %v7843, %v7844
  %v7850 = vsel %vm3054, %v7842, %v7843
  %v7851 = vsel %vm3054, %v7841, %v7842
  %v7852 = vsel %vm3054, %v7840, %v7841
  %v7853 = vsel %vm3054, %v7839, %v7840
  %v7854 = vsel %vm3054, %v7838, %v7839
  %v7855 = vsel %vm3054, %v7837, %v7838
  %v7856 = vsel %vm3054, %v7836, %v7837
  %v7857 = vsel %vm3054, %v7835, %v7836
  %v7858 = vsel %vm3054, %v7834, %v7835
  %v7859 = vsel %vm3054, %v7833, %v7834
  %v7860 = vsel %vm3054, %v7832, %v7833
  %v7861 = vsel %vm3054, %v7831, %v7832
  %v7862 = vsel %vm3054, %v7830, %v7831
  %v7863 = vsel %vm3054, %v7829, %v7830
  %v7864 = vsel %vm3054, %v7828, %v7829
  %v7865 = vsel %vm3054, %v7827, %v7828
  %v7866 = vsel %vm3054, %v7826, %v7827
  %v7867 = vsel %vm3054, %v7825, %v7826
  %v7868 = vsel %vm3054, %v7824, %v7825
  %v7869 = vsel %vm3054, %v7823, %v7824
  %v7870 = vsel %vm3054, %v7822, %v7823
  %v7871 = vsel %vm3054, %v7821, %v7822
  %v7872 = vsel %vm3054, %v7820, %v7821
  %v7873 = vsel %vm3054, %v7819, %v7820
  %v7874 = vsel %vm3054, %v7818, %v7819
  %v7875 = vsel %vm3054, %v7817, %v7818
  %v7876 = vsel %vm3054, %v7816, %v7817
  %v7877 = vsel %vm3054, %v7815, %v7816
  %v7878 = vsel %vm3054, %v7814, %v7815
  %v7879 = vsel %vm3054, %v7813, %v7814
  %v7880 = vsel %vm3054, %v7812, %v7813
  %v7881 = vsel %vm3054, %v7811, %v7812
  %v7882 = vsel %vm3054, %v7810, %v7811
  %v7883 = vsel %vm3054, %v7809, %v7810
  %v7884 = vsel %vm3054, %v7808, %v7809
  %v7885 = vsel %vm3054, %v7807, %v7808
  %v7886 = vsel %vm3054, %v7806, %v7807
  %v7887 = vsel %vm3054, %v7805, %v7806
  %v7888 = vsel %vm3054, %v7804, %v7805
  %v7889 = vsel %vm3054, %v7803, %v7804
  %v7890 = vsel %vm3054, %v7802, %v7803
  %v7891 = vsel %vm3054, %v7801, %v7802
  %v7892 = vsel %vm3054, %v7800, %v7801
  %v7893 = vsel %vm3054, %v7799, %v7800
  %v7894 = vsel %vm3054, %v7798, %v7799
  %v7895 = vsel %vm3054, %v7797, %v7798
  %v7896 = vsel %vm3054, %v7796, %v7797
  %v7897 = vsel %vm3054, %v7795, %v7796
  %v7898 = vsel %vm3054, %v7794, %v7795
  %v7899 = vsel %vm3054, %v7793, %v7794
  %v7900 = vsel %vm3054, %v7792, %v7793
  %v7901 = vsel %vm3054, %v7791, %v7792
  %v7902 = vsel %vm3054, %v7790, %v7791
  %v7903 = vsel %vm3054, %v7789, %v7790
  %v7904 = vsel %vm3054, %v7788, %v7789
  %v7905 = vsel %vm3054, %v7787, %v7788
  %v7906 = vsel %vm3054, %v7786, %v7787
  %v7907 = vsel %vm3054, %v7785, %v7786
  %v7908 = vsel %vm3054, %v7784, %v7785
  %v7909 = vsel %vm3054, %v7783, %v7784
  %v7910 = vsel %vm3054, %v7846, %v7783
  %v7911 = vsel %vm3183, %v7910, 0.0
  %v7912 = vsel %vm3184, %v7909, 0.0
  %v7913 = vsel %vm3185, %v7908, 0.0
  %v7914 = vsel %vm3186, %v7907, 0.0
  %v7915 = vsel %vm3187, %v7906, 0.0
  %v7916 = vsel %vm3188, %v7905, 0.0
  %v7917 = vsel %vm3189, %v7904, 0.0
  %v7918 = vsel %vm3190, %v7903, 0.0
  %v7919 = vsel %vm3191, %v7902, 0.0
  %v7920 = vsel %vm3192, %v7901, 0.0
  %v7921 = vsel %vm3193, %v7900, 0.0
  %v7922 = vsel %vm3194, %v7899, 0.0
  %v7923 = vsel %vm3195, %v7898, 0.0
  %v7924 = vsel %vm3196, %v7897, 0.0
  %v7925 = vsel %vm3197, %v7896, 0.0
  %v7926 = vsel %vm3198, %v7895, 0.0
  %v7927 = vsel %vm3199, %v7894, 0.0
  %v7928 = vsel %vm3200, %v7893, 0.0
  %v7929 = vsel %vm3201, %v7892, 0.0
  %v7930 = vsel %vm3202, %v7891, 0.0
  %v7931 = vsel %vm3203, %v7890, 0.0
  %v7932 = vsel %vm3204, %v7889, 0.0
  %v7933 = vsel %vm3205, %v7888, 0.0
  %v7934 = vsel %vm3206, %v7887, 0.0
  %v7935 = vsel %vm3207, %v7886, 0.0
  %v7936 = vsel %vm3208, %v7885, 0.0
  %v7937 = vsel %vm3209, %v7884, 0.0
  %v7938 = vsel %vm3210, %v7883, 0.0
  %v7939 = vsel %vm3211, %v7882, 0.0
  %v7940 = vsel %vm3212, %v7881, 0.0
  %v7941 = vsel %vm3213, %v7880, 0.0
  %v7942 = vsel %vm3214, %v7879, 0.0
  %v7943 = vsel %vm3215, %v7878, 0.0
  %v7944 = vsel %vm3216, %v7877, 0.0
  %v7945 = vsel %vm3217, %v7876, 0.0
  %v7946 = vsel %vm3218, %v7875, 0.0
  %v7947 = vsel %vm3219, %v7874, 0.0
  %v7948 = vsel %vm3220, %v7873, 0.0
  %v7949 = vsel %vm3221, %v7872, 0.0
  %v7950 = vsel %vm3222, %v7871, 0.0
  %v7951 = vsel %vm3223, %v7870, 0.0
  %v7952 = vsel %vm3224, %v7869, 0.0
  %v7953 = vsel %vm3225, %v7868, 0.0
  %v7954 = vsel %vm3226, %v7867, 0.0
  %v7955 = vsel %vm3227, %v7866, 0.0
  %v7956 = vsel %vm3228, %v7865, 0.0
  %v7957 = vsel %vm3229, %v7864, 0.0
  %v7958 = vsel %vm3230, %v7863, 0.0
  %v7959 = vsel %vm3231, %v7862, 0.0
  %v7960 = vsel %vm3232, %v7861, 0.0
  %v7961 = vsel %vm3233, %v7860, 0.0
  %v7962 = vsel %vm3234, %v7859, 0.0
  %v7963 = vsel %vm3235, %v7858, 0.0
  %v7964 = vsel %vm3236, %v7857, 0.0
  %v7965 = vsel %vm3237, %v7856, 0.0
  %v7966 = vsel %vm3238, %v7855, 0.0
  %v7967 = vsel %vm3239, %v7854, 0.0
  %v7968 = vsel %vm3240, %v7853, 0.0
  %v7969 = vsel %vm3241, %v7852, 0.0
  %v7970 = vsel %vm3242, %v7851, 0.0
  %v7971 = vsel %vm3243, %v7850, 0.0
  %v7972 = vsel %vm3244, %v7849, 0.0
  %v7973 = vsel %vm3245, %v7848, 0.0
  %v7974 = vsel %vm3246, %v7847, 0.0
  %v7975 = vrot.slane %v7719, 1
  %v7976 = vrot.slane %v7720, 1
  %v7977 = vrot.slane %v7721, 1
  %v7978 = vrot.slane %v7722, 1
  %v7979 = vrot.slane %v7723, 1
  %v7980 = vrot.slane %v7724, 1
  %v7981 = vrot.slane %v7725, 1
  %v7982 = vrot.slane %v7726, 1
  %v7983 = vrot.slane %v7727, 1
  %v7984 = vrot.slane %v7728, 1
  %v7985 = vrot.slane %v7729, 1
  %v7986 = vrot.slane %v7730, 1
  %v7987 = vrot.slane %v7731, 1
  %v7988 = vrot.slane %v7732, 1
  %v7989 = vrot.slane %v7733, 1
  %v7990 = vrot.slane %v7734, 1
  %v7991 = vrot.slane %v7735, 1
  %v7992 = vrot.slane %v7736, 1
  %v7993 = vrot.slane %v7737, 1
  %v7994 = vrot.slane %v7738, 1
  %v7995 = vrot.slane %v7739, 1
  %v7996 = vrot.slane %v7740, 1
  %v7997 = vrot.slane %v7741, 1
  %v7998 = vrot.slane %v7742, 1
  %v7999 = vrot.slane %v7743, 1
  %v8000 = vrot.slane %v7744, 1
  %v8001 = vrot.slane %v7745, 1
  %v8002 = vrot.slane %v7746, 1
  %v8003 = vrot.slane %v7747, 1
  %v8004 = vrot.slane %v7748, 1
  %v8005 = vrot.slane %v7749, 1
  %v8006 = vrot.slane %v7750, 1
  %v8007 = vrot.slane %v7751, 1
  %v8008 = vrot.slane %v7752, 1
  %v8009 = vrot.slane %v7753, 1
  %v8010 = vrot.slane %v7754, 1
  %v8011 = vrot.slane %v7755, 1
  %v8012 = vrot.slane %v7756, 1
  %v8013 = vrot.slane %v7757, 1
  %v8014 = vrot.slane %v7758, 1
  %v8015 = vrot.slane %v7759, 1
  %v8016 = vrot.slane %v7760, 1
  %v8017 = vrot.slane %v7761, 1
  %v8018 = vrot.slane %v7762, 1
  %v8019 = vrot.slane %v7763, 1
  %v8020 = vrot.slane %v7764, 1
  %v8021 = vrot.slane %v7765, 1
  %v8022 = vrot.slane %v7766, 1
  %v8023 = vrot.slane %v7767, 1
  %v8024 = vrot.slane %v7768, 1
  %v8025 = vrot.slane %v7769, 1
  %v8026 = vrot.slane %v7770, 1
  %v8027 = vrot.slane %v7771, 1
  %v8028 = vrot.slane %v7772, 1
  %v8029 = vrot.slane %v7773, 1
  %v8030 = vrot.slane %v7774, 1
  %v8031 = vrot.slane %v7775, 1
  %v8032 = vrot.slane %v7776, 1
  %v8033 = vrot.slane %v7777, 1
  %v8034 = vrot.slane %v7778, 1
  %v8035 = vrot.slane %v7779, 1
  %v8036 = vrot.slane %v7780, 1
  %v8037 = vrot.slane %v7781, 1
  %v8038 = vrot.slane %v7782, 1
  %v8039 = vsel %vm3375, %v8037, %v8038
  %v8040 = vsel %vm3375, %v8036, %v8037
  %v8041 = vsel %vm3375, %v8035, %v8036
  %v8042 = vsel %vm3375, %v8034, %v8035
  %v8043 = vsel %vm3375, %v8033, %v8034
  %v8044 = vsel %vm3375, %v8032, %v8033
  %v8045 = vsel %vm3375, %v8031, %v8032
  %v8046 = vsel %vm3375, %v8030, %v8031
  %v8047 = vsel %vm3375, %v8029, %v8030
  %v8048 = vsel %vm3375, %v8028, %v8029
  %v8049 = vsel %vm3375, %v8027, %v8028
  %v8050 = vsel %vm3375, %v8026, %v8027
  %v8051 = vsel %vm3375, %v8025, %v8026
  %v8052 = vsel %vm3375, %v8024, %v8025
  %v8053 = vsel %vm3375, %v8023, %v8024
  %v8054 = vsel %vm3375, %v8022, %v8023
  %v8055 = vsel %vm3375, %v8021, %v8022
  %v8056 = vsel %vm3375, %v8020, %v8021
  %v8057 = vsel %vm3375, %v8019, %v8020
  %v8058 = vsel %vm3375, %v8018, %v8019
  %v8059 = vsel %vm3375, %v8017, %v8018
  %v8060 = vsel %vm3375, %v8016, %v8017
  %v8061 = vsel %vm3375, %v8015, %v8016
  %v8062 = vsel %vm3375, %v8014, %v8015
  %v8063 = vsel %vm3375, %v8013, %v8014
  %v8064 = vsel %vm3375, %v8012, %v8013
  %v8065 = vsel %vm3375, %v8011, %v8012
  %v8066 = vsel %vm3375, %v8010, %v8011
  %v8067 = vsel %vm3375, %v8009, %v8010
  %v8068 = vsel %vm3375, %v8008, %v8009
  %v8069 = vsel %vm3375, %v8007, %v8008
  %v8070 = vsel %vm3375, %v8006, %v8007
  %v8071 = vsel %vm3375, %v8005, %v8006
  %v8072 = vsel %vm3375, %v8004, %v8005
  %v8073 = vsel %vm3375, %v8003, %v8004
  %v8074 = vsel %vm3375, %v8002, %v8003
  %v8075 = vsel %vm3375, %v8001, %v8002
  %v8076 = vsel %vm3375, %v8000, %v8001
  %v8077 = vsel %vm3375, %v7999, %v8000
  %v8078 = vsel %vm3375, %v7998, %v7999
  %v8079 = vsel %vm3375, %v7997, %v7998
  %v8080 = vsel %vm3375, %v7996, %v7997
  %v8081 = vsel %vm3375, %v7995, %v7996
  %v8082 = vsel %vm3375, %v7994, %v7995
  %v8083 = vsel %vm3375, %v7993, %v7994
  %v8084 = vsel %vm3375, %v7992, %v7993
  %v8085 = vsel %vm3375, %v7991, %v7992
  %v8086 = vsel %vm3375, %v7990, %v7991
  %v8087 = vsel %vm3375, %v7989, %v7990
  %v8088 = vsel %vm3375, %v7988, %v7989
  %v8089 = vsel %vm3375, %v7987, %v7988
  %v8090 = vsel %vm3375, %v7986, %v7987
  %v8091 = vsel %vm3375, %v7985, %v7986
  %v8092 = vsel %vm3375, %v7984, %v7985
  %v8093 = vsel %vm3375, %v7983, %v7984
  %v8094 = vsel %vm3375, %v7982, %v7983
  %v8095 = vsel %vm3375, %v7981, %v7982
  %v8096 = vsel %vm3375, %v7980, %v7981
  %v8097 = vsel %vm3375, %v7979, %v7980
  %v8098 = vsel %vm3375, %v7978, %v7979
  %v8099 = vsel %vm3375, %v7977, %v7978
  %v8100 = vsel %vm3375, %v7976, %v7977
  %v8101 = vsel %vm3375, %v7975, %v7976
  %v8102 = vsel %vm3375, %v8038, %v7975
  %v8103 = vsel %vm3504, %v8101, 0.0
  %v8104 = vsel %vm3505, %v8100, 0.0
  %v8105 = vsel %vm3506, %v8099, 0.0
  %v8106 = vsel %vm3507, %v8098, 0.0
  %v8107 = vsel %vm3508, %v8097, 0.0
  %v8108 = vsel %vm3509, %v8096, 0.0
  %v8109 = vsel %vm3510, %v8095, 0.0
  %v8110 = vsel %vm3511, %v8094, 0.0
  %v8111 = vsel %vm3512, %v8093, 0.0
  %v8112 = vsel %vm3513, %v8092, 0.0
  %v8113 = vsel %vm3514, %v8091, 0.0
  %v8114 = vsel %vm3515, %v8090, 0.0
  %v8115 = vsel %vm3516, %v8089, 0.0
  %v8116 = vsel %vm3517, %v8088, 0.0
  %v8117 = vsel %vm3518, %v8087, 0.0
  %v8118 = vsel %vm3519, %v8086, 0.0
  %v8119 = vsel %vm3520, %v8085, 0.0
  %v8120 = vsel %vm3521, %v8084, 0.0
  %v8121 = vsel %vm3522, %v8083, 0.0
  %v8122 = vsel %vm3523, %v8082, 0.0
  %v8123 = vsel %vm3524, %v8081, 0.0
  %v8124 = vsel %vm3525, %v8080, 0.0
  %v8125 = vsel %vm3526, %v8079, 0.0
  %v8126 = vsel %vm3527, %v8078, 0.0
  %v8127 = vsel %vm3528, %v8077, 0.0
  %v8128 = vsel %vm3529, %v8076, 0.0
  %v8129 = vsel %vm3530, %v8075, 0.0
  %v8130 = vsel %vm3531, %v8074, 0.0
  %v8131 = vsel %vm3532, %v8073, 0.0
  %v8132 = vsel %vm3533, %v8072, 0.0
  %v8133 = vsel %vm3534, %v8071, 0.0
  %v8134 = vsel %vm3535, %v8070, 0.0
  %v8135 = vsel %vm3536, %v8069, 0.0
  %v8136 = vsel %vm3537, %v8068, 0.0
  %v8137 = vsel %vm3538, %v8067, 0.0
  %v8138 = vsel %vm3539, %v8066, 0.0
  %v8139 = vsel %vm3540, %v8065, 0.0
  %v8140 = vsel %vm3541, %v8064, 0.0
  %v8141 = vsel %vm3542, %v8063, 0.0
  %v8142 = vsel %vm3543, %v8062, 0.0
  %v8143 = vsel %vm3544, %v8061, 0.0
  %v8144 = vsel %vm3545, %v8060, 0.0
  %v8145 = vsel %vm3546, %v8059, 0.0
  %v8146 = vsel %vm3547, %v8058, 0.0
  %v8147 = vsel %vm3548, %v8057, 0.0
  %v8148 = vsel %vm3549, %v8056, 0.0
  %v8149 = vsel %vm3550, %v8055, 0.0
  %v8150 = vsel %vm3551, %v8054, 0.0
  %v8151 = vsel %vm3552, %v8053, 0.0
  %v8152 = vsel %vm3553, %v8052, 0.0
  %v8153 = vsel %vm3554, %v8051, 0.0
  %v8154 = vsel %vm3555, %v8050, 0.0
  %v8155 = vsel %vm3556, %v8049, 0.0
  %v8156 = vsel %vm3557, %v8048, 0.0
  %v8157 = vsel %vm3558, %v8047, 0.0
  %v8158 = vsel %vm3559, %v8046, 0.0
  %v8159 = vsel %vm3560, %v8045, 0.0
  %v8160 = vsel %vm3561, %v8044, 0.0
  %v8161 = vsel %vm3562, %v8043, 0.0
  %v8162 = vsel %vm3563, %v8042, 0.0
  %v8163 = vsel %vm3564, %v8041, 0.0
  %v8164 = vsel %vm3565, %v8040, 0.0
  %v8165 = vsel %vm3566, %v8039, 0.0
  %v8166 = vsel %vm3567, %v8102, 0.0
  %8231 = vrot.lane.b32.xlu0 %v7719, 32
  %v8232 = vpop.permute.xlu0 %8231
  %8233 = vrot.lane.b32.xlu0 %v7720, 32
  %v8234 = vpop.permute.xlu0 %8233
  %8235 = vrot.lane.b32.xlu0 %v7721, 32
  %v8236 = vpop.permute.xlu0 %8235
  %8237 = vrot.lane.b32.xlu0 %v7722, 32
  %v8238 = vpop.permute.xlu0 %8237
  %8239 = vrot.lane.b32.xlu0 %v7723, 32
  %v8240 = vpop.permute.xlu0 %8239
  %8241 = vrot.lane.b32.xlu0 %v7724, 32
  %v8242 = vpop.permute.xlu0 %8241
  %8243 = vrot.lane.b32.xlu0 %v7725, 32
  %v8244 = vpop.permute.xlu0 %8243
  %8245 = vrot.lane.b32.xlu0 %v7726, 32
  %v8246 = vpop.permute.xlu0 %8245
  %8247 = vrot.lane.b32.xlu0 %v7727, 32
  %v8248 = vpop.permute.xlu0 %8247
  %8249 = vrot.lane.b32.xlu0 %v7728, 32
  %v8250 = vpop.permute.xlu0 %8249
  %8251 = vrot.lane.b32.xlu0 %v7729, 32
  %v8252 = vpop.permute.xlu0 %8251
  %8253 = vrot.lane.b32.xlu0 %v7730, 32
  %v8254 = vpop.permute.xlu0 %8253
  %8255 = vrot.lane.b32.xlu0 %v7731, 32
  %v8256 = vpop.permute.xlu0 %8255
  %8257 = vrot.lane.b32.xlu0 %v7732, 32
  %v8258 = vpop.permute.xlu0 %8257
  %8259 = vrot.lane.b32.xlu0 %v7733, 32
  %v8260 = vpop.permute.xlu0 %8259
  %8261 = vrot.lane.b32.xlu0 %v7734, 32
  %v8262 = vpop.permute.xlu0 %8261
  %8263 = vrot.lane.b32.xlu0 %v7735, 32
  %v8264 = vpop.permute.xlu0 %8263
  %8265 = vrot.lane.b32.xlu0 %v7736, 32
  %v8266 = vpop.permute.xlu0 %8265
  %8267 = vrot.lane.b32.xlu0 %v7737, 32
  %v8268 = vpop.permute.xlu0 %8267
  %8269 = vrot.lane.b32.xlu0 %v7738, 32
  %v8270 = vpop.permute.xlu0 %8269
  %8271 = vrot.lane.b32.xlu0 %v7739, 32
  %v8272 = vpop.permute.xlu0 %8271
  %8273 = vrot.lane.b32.xlu0 %v7740, 32
  %v8274 = vpop.permute.xlu0 %8273
  %8275 = vrot.lane.b32.xlu0 %v7741, 32
  %v8276 = vpop.permute.xlu0 %8275
  %8277 = vrot.lane.b32.xlu0 %v7742, 32
  %v8278 = vpop.permute.xlu0 %8277
  %8279 = vrot.lane.b32.xlu0 %v7743, 32
  %v8280 = vpop.permute.xlu0 %8279
  %8281 = vrot.lane.b32.xlu0 %v7744, 32
  %v8282 = vpop.permute.xlu0 %8281
  %8283 = vrot.lane.b32.xlu0 %v7745, 32
  %v8284 = vpop.permute.xlu0 %8283
  %8285 = vrot.lane.b32.xlu0 %v7746, 32
  %v8286 = vpop.permute.xlu0 %8285
  %8287 = vrot.lane.b32.xlu0 %v7747, 32
  %v8288 = vpop.permute.xlu0 %8287
  %8289 = vrot.lane.b32.xlu0 %v7748, 32
  %v8290 = vpop.permute.xlu0 %8289
  %8291 = vrot.lane.b32.xlu0 %v7749, 32
  %v8292 = vpop.permute.xlu0 %8291
  %8293 = vrot.lane.b32.xlu0 %v7750, 32
  %v8294 = vpop.permute.xlu0 %8293
  %8295 = vrot.lane.b32.xlu0 %v7751, 32
  %v8296 = vpop.permute.xlu0 %8295
  %8297 = vrot.lane.b32.xlu0 %v7752, 32
  %v8298 = vpop.permute.xlu0 %8297
  %8299 = vrot.lane.b32.xlu0 %v7753, 32
  %v8300 = vpop.permute.xlu0 %8299
  %8301 = vrot.lane.b32.xlu0 %v7754, 32
  %v8302 = vpop.permute.xlu0 %8301
  %8303 = vrot.lane.b32.xlu0 %v7755, 32
  %v8304 = vpop.permute.xlu0 %8303
  %8305 = vrot.lane.b32.xlu0 %v7756, 32
  %v8306 = vpop.permute.xlu0 %8305
  %8307 = vrot.lane.b32.xlu0 %v7757, 32
  %v8308 = vpop.permute.xlu0 %8307
  %8309 = vrot.lane.b32.xlu0 %v7758, 32
  %v8310 = vpop.permute.xlu0 %8309
  %8311 = vrot.lane.b32.xlu0 %v7759, 32
  %v8312 = vpop.permute.xlu0 %8311
  %8313 = vrot.lane.b32.xlu0 %v7760, 32
  %v8314 = vpop.permute.xlu0 %8313
  %8315 = vrot.lane.b32.xlu0 %v7761, 32
  %v8316 = vpop.permute.xlu0 %8315
  %8317 = vrot.lane.b32.xlu0 %v7762, 32
  %v8318 = vpop.permute.xlu0 %8317
  %8319 = vrot.lane.b32.xlu0 %v7763, 32
  %v8320 = vpop.permute.xlu0 %8319
  %8321 = vrot.lane.b32.xlu0 %v7764, 32
  %v8322 = vpop.permute.xlu0 %8321
  %8323 = vrot.lane.b32.xlu0 %v7765, 32
  %v8324 = vpop.permute.xlu0 %8323
  %8325 = vrot.lane.b32.xlu0 %v7766, 32
  %v8326 = vpop.permute.xlu0 %8325
  %8327 = vrot.lane.b32.xlu0 %v7767, 32
  %v8328 = vpop.permute.xlu0 %8327
  %8329 = vrot.lane.b32.xlu0 %v7768, 32
  %v8330 = vpop.permute.xlu0 %8329
  %8331 = vrot.lane.b32.xlu0 %v7769, 32
  %v8332 = vpop.permute.xlu0 %8331
  %8333 = vrot.lane.b32.xlu0 %v7770, 32
  %v8334 = vpop.permute.xlu0 %8333
  %8335 = vrot.lane.b32.xlu0 %v7771, 32
  %v8336 = vpop.permute.xlu0 %8335
  %8337 = vrot.lane.b32.xlu0 %v7772, 32
  %v8338 = vpop.permute.xlu0 %8337
  %8339 = vrot.lane.b32.xlu0 %v7773, 32
  %v8340 = vpop.permute.xlu0 %8339
  %8341 = vrot.lane.b32.xlu0 %v7774, 32
  %v8342 = vpop.permute.xlu0 %8341
  %8343 = vrot.lane.b32.xlu0 %v7775, 32
  %v8344 = vpop.permute.xlu0 %8343
  %8345 = vrot.lane.b32.xlu0 %v7776, 32
  %v8346 = vpop.permute.xlu0 %8345
  %8347 = vrot.lane.b32.xlu0 %v7777, 32
  %v8348 = vpop.permute.xlu0 %8347
  %8349 = vrot.lane.b32.xlu0 %v7778, 32
  %v8350 = vpop.permute.xlu0 %8349
  %8351 = vrot.lane.b32.xlu0 %v7779, 32
  %v8352 = vpop.permute.xlu0 %8351
  %8353 = vrot.lane.b32.xlu0 %v7780, 32
  %v8354 = vpop.permute.xlu0 %8353
  %8355 = vrot.lane.b32.xlu0 %v7781, 32
  %v8356 = vpop.permute.xlu0 %8355
  %8357 = vrot.lane.b32.xlu0 %v7782, 32
  %v8358 = vpop.permute.xlu0 %8357
  %8487 = vrot.lane.b32.xlu0 %v8103, 64
  %v8488 = vpop.permute.xlu0 %8487
  %8489 = vrot.lane.b32.xlu0 %v8104, 64
  %v8490 = vpop.permute.xlu0 %8489
  %8491 = vrot.lane.b32.xlu0 %v8105, 64
  %v8492 = vpop.permute.xlu0 %8491
  %8493 = vrot.lane.b32.xlu0 %v8106, 64
  %v8494 = vpop.permute.xlu0 %8493
  %8495 = vrot.lane.b32.xlu0 %v8107, 64
  %v8496 = vpop.permute.xlu0 %8495
  %8497 = vrot.lane.b32.xlu0 %v8108, 64
  %v8498 = vpop.permute.xlu0 %8497
  %8499 = vrot.lane.b32.xlu0 %v8109, 64
  %v8500 = vpop.permute.xlu0 %8499
  %8501 = vrot.lane.b32.xlu0 %v8110, 64
  %v8502 = vpop.permute.xlu0 %8501
  %8503 = vrot.lane.b32.xlu0 %v8111, 64
  %v8504 = vpop.permute.xlu0 %8503
  %8505 = vrot.lane.b32.xlu0 %v8112, 64
  %v8506 = vpop.permute.xlu0 %8505
  %8507 = vrot.lane.b32.xlu0 %v8113, 64
  %v8508 = vpop.permute.xlu0 %8507
  %8509 = vrot.lane.b32.xlu0 %v8114, 64
  %v8510 = vpop.permute.xlu0 %8509
  %8511 = vrot.lane.b32.xlu0 %v8115, 64
  %v8512 = vpop.permute.xlu0 %8511
  %8513 = vrot.lane.b32.xlu0 %v8116, 64
  %v8514 = vpop.permute.xlu0 %8513
  %8515 = vrot.lane.b32.xlu0 %v8117, 64
  %v8516 = vpop.permute.xlu0 %8515
  %8517 = vrot.lane.b32.xlu0 %v8118, 64
  %v8518 = vpop.permute.xlu0 %8517
  %8519 = vrot.lane.b32.xlu0 %v8119, 64
  %v8520 = vpop.permute.xlu0 %8519
  %8521 = vrot.lane.b32.xlu0 %v8120, 64
  %v8522 = vpop.permute.xlu0 %8521
  %8523 = vrot.lane.b32.xlu0 %v8121, 64
  %v8524 = vpop.permute.xlu0 %8523
  %8525 = vrot.lane.b32.xlu0 %v8122, 64
  %v8526 = vpop.permute.xlu0 %8525
  %8527 = vrot.lane.b32.xlu0 %v8123, 64
  %v8528 = vpop.permute.xlu0 %8527
  %8529 = vrot.lane.b32.xlu0 %v8124, 64
  %v8530 = vpop.permute.xlu0 %8529
  %8531 = vrot.lane.b32.xlu0 %v8125, 64
  %v8532 = vpop.permute.xlu0 %8531
  %8533 = vrot.lane.b32.xlu0 %v8126, 64
  %v8534 = vpop.permute.xlu0 %8533
  %8535 = vrot.lane.b32.xlu0 %v8127, 64
  %v8536 = vpop.permute.xlu0 %8535
  %8537 = vrot.lane.b32.xlu0 %v8128, 64
  %v8538 = vpop.permute.xlu0 %8537
  %8539 = vrot.lane.b32.xlu0 %v8129, 64
  %v8540 = vpop.permute.xlu0 %8539
  %8541 = vrot.lane.b32.xlu0 %v8130, 64
  %v8542 = vpop.permute.xlu0 %8541
  %8543 = vrot.lane.b32.xlu0 %v8131, 64
  %v8544 = vpop.permute.xlu0 %8543
  %8545 = vrot.lane.b32.xlu0 %v8132, 64
  %v8546 = vpop.permute.xlu0 %8545
  %8547 = vrot.lane.b32.xlu0 %v8133, 64
  %v8548 = vpop.permute.xlu0 %8547
  %8549 = vrot.lane.b32.xlu0 %v8134, 64
  %v8550 = vpop.permute.xlu0 %8549
  %8551 = vrot.lane.b32.xlu0 %v8135, 64
  %v8552 = vpop.permute.xlu0 %8551
  %8553 = vrot.lane.b32.xlu0 %v8136, 64
  %v8554 = vpop.permute.xlu0 %8553
  %8555 = vrot.lane.b32.xlu0 %v8137, 64
  %v8556 = vpop.permute.xlu0 %8555
  %8557 = vrot.lane.b32.xlu0 %v8138, 64
  %v8558 = vpop.permute.xlu0 %8557
  %8559 = vrot.lane.b32.xlu0 %v8139, 64
  %v8560 = vpop.permute.xlu0 %8559
  %8561 = vrot.lane.b32.xlu0 %v8140, 64
  %v8562 = vpop.permute.xlu0 %8561
  %8563 = vrot.lane.b32.xlu0 %v8141, 64
  %v8564 = vpop.permute.xlu0 %8563
  %8565 = vrot.lane.b32.xlu0 %v8142, 64
  %v8566 = vpop.permute.xlu0 %8565
  %8567 = vrot.lane.b32.xlu0 %v8143, 64
  %v8568 = vpop.permute.xlu0 %8567
  %8569 = vrot.lane.b32.xlu0 %v8144, 64
  %v8570 = vpop.permute.xlu0 %8569
  %8571 = vrot.lane.b32.xlu0 %v8145, 64
  %v8572 = vpop.permute.xlu0 %8571
  %8573 = vrot.lane.b32.xlu0 %v8146, 64
  %v8574 = vpop.permute.xlu0 %8573
  %8575 = vrot.lane.b32.xlu0 %v8147, 64
  %v8576 = vpop.permute.xlu0 %8575
  %8577 = vrot.lane.b32.xlu0 %v8148, 64
  %v8578 = vpop.permute.xlu0 %8577
  %8579 = vrot.lane.b32.xlu0 %v8149, 64
  %v8580 = vpop.permute.xlu0 %8579
  %8581 = vrot.lane.b32.xlu0 %v8150, 64
  %v8582 = vpop.permute.xlu0 %8581
  %8583 = vrot.lane.b32.xlu0 %v8151, 64
  %v8584 = vpop.permute.xlu0 %8583
  %8585 = vrot.lane.b32.xlu0 %v8152, 64
  %v8586 = vpop.permute.xlu0 %8585
  %8587 = vrot.lane.b32.xlu0 %v8153, 64
  %v8588 = vpop.permute.xlu0 %8587
  %8589 = vrot.lane.b32.xlu0 %v8154, 64
  %v8590 = vpop.permute.xlu0 %8589
  %8591 = vrot.lane.b32.xlu0 %v8155, 64
  %v8592 = vpop.permute.xlu0 %8591
  %8593 = vrot.lane.b32.xlu0 %v8156, 64
  %v8594 = vpop.permute.xlu0 %8593
  %8595 = vrot.lane.b32.xlu0 %v8157, 64
  %v8596 = vpop.permute.xlu0 %8595
  %8597 = vrot.lane.b32.xlu0 %v8158, 64
  %v8598 = vpop.permute.xlu0 %8597
  %8599 = vrot.lane.b32.xlu0 %v8159, 64
  %v8600 = vpop.permute.xlu0 %8599
  %8601 = vrot.lane.b32.xlu0 %v8160, 64
  %v8602 = vpop.permute.xlu0 %8601
  %8603 = vrot.lane.b32.xlu0 %v8161, 64
  %v8604 = vpop.permute.xlu0 %8603
  %8605 = vrot.lane.b32.xlu0 %v8162, 64
  %v8606 = vpop.permute.xlu0 %8605
  %8607 = vrot.lane.b32.xlu0 %v8163, 64
  %v8608 = vpop.permute.xlu0 %8607
  %8609 = vrot.lane.b32.xlu0 %v8164, 64
  %v8610 = vpop.permute.xlu0 %8609
  %8611 = vrot.lane.b32.xlu0 %v8165, 64
  %v8612 = vpop.permute.xlu0 %8611
  %8613 = vrot.lane.b32.xlu0 %v8166, 64
  %v8614 = vpop.permute.xlu0 %8613
  %v8679 = vsel %vm6547, %v7911, %v8232
  %v8680 = vsel %vm6547, %v7912, %v8234
  %v8681 = vsel %vm6547, %v7913, %v8236
  %v8682 = vsel %vm6547, %v7914, %v8238
  %v8683 = vsel %vm6547, %v7915, %v8240
  %v8684 = vsel %vm6547, %v7916, %v8242
  %v8685 = vsel %vm6547, %v7917, %v8244
  %v8686 = vsel %vm6547, %v7918, %v8246
  %v8687 = vsel %vm6547, %v7919, %v8248
  %v8688 = vsel %vm6547, %v7920, %v8250
  %v8689 = vsel %vm6547, %v7921, %v8252
  %v8690 = vsel %vm6547, %v7922, %v8254
  %v8691 = vsel %vm6547, %v7923, %v8256
  %v8692 = vsel %vm6547, %v7924, %v8258
  %v8693 = vsel %vm6547, %v7925, %v8260
  %v8694 = vsel %vm6547, %v7926, %v8262
  %v8695 = vsel %vm6547, %v7927, %v8264
  %v8696 = vsel %vm6547, %v7928, %v8266
  %v8697 = vsel %vm6547, %v7929, %v8268
  %v8698 = vsel %vm6547, %v7930, %v8270
  %v8699 = vsel %vm6547, %v7931, %v8272
  %v8700 = vsel %vm6547, %v7932, %v8274
  %v8701 = vsel %vm6547, %v7933, %v8276
  %v8702 = vsel %vm6547, %v7934, %v8278
  %v8703 = vsel %vm6547, %v7935, %v8280
  %v8704 = vsel %vm6547, %v7936, %v8282
  %v8705 = vsel %vm6547, %v7937, %v8284
  %v8706 = vsel %vm6547, %v7938, %v8286
  %v8707 = vsel %vm6547, %v7939, %v8288
  %v8708 = vsel %vm6547, %v7940, %v8290
  %v8709 = vsel %vm6547, %v7941, %v8292
  %v8710 = vsel %vm6547, %v7942, %v8294
  %v8711 = vsel %vm6547, %v7943, %v8296
  %v8712 = vsel %vm6547, %v7944, %v8298
  %v8713 = vsel %vm6547, %v7945, %v8300
  %v8714 = vsel %vm6547, %v7946, %v8302
  %v8715 = vsel %vm6547, %v7947, %v8304
  %v8716 = vsel %vm6547, %v7948, %v8306
  %v8717 = vsel %vm6547, %v7949, %v8308
  %v8718 = vsel %vm6547, %v7950, %v8310
  %v8719 = vsel %vm6547, %v7951, %v8312
  %v8720 = vsel %vm6547, %v7952, %v8314
  %v8721 = vsel %vm6547, %v7953, %v8316
  %v8722 = vsel %vm6547, %v7954, %v8318
  %v8723 = vsel %vm6547, %v7955, %v8320
  %v8724 = vsel %vm6547, %v7956, %v8322
  %v8725 = vsel %vm6547, %v7957, %v8324
  %v8726 = vsel %vm6547, %v7958, %v8326
  %v8727 = vsel %vm6547, %v7959, %v8328
  %v8728 = vsel %vm6547, %v7960, %v8330
  %v8729 = vsel %vm6547, %v7961, %v8332
  %v8730 = vsel %vm6547, %v7962, %v8334
  %v8731 = vsel %vm6547, %v7963, %v8336
  %v8732 = vsel %vm6547, %v7964, %v8338
  %v8733 = vsel %vm6547, %v7965, %v8340
  %v8734 = vsel %vm6547, %v7966, %v8342
  %v8735 = vsel %vm6547, %v7967, %v8344
  %v8736 = vsel %vm6547, %v7968, %v8346
  %v8737 = vsel %vm6547, %v7969, %v8348
  %v8738 = vsel %vm6547, %v7970, %v8350
  %v8739 = vsel %vm6547, %v7971, %v8352
  %v8740 = vsel %vm6547, %v7972, %v8354
  %v8741 = vsel %vm6547, %v7973, %v8356
  %v8742 = vsel %vm6547, %v7974, %v8358
  %v8743 = vsel %vm6612, %v8679, %v8488
  %v8744 = vsel %vm6612, %v8680, %v8490
  %v8745 = vsel %vm6612, %v8681, %v8492
  %v8746 = vsel %vm6612, %v8682, %v8494
  %v8747 = vsel %vm6612, %v8683, %v8496
  %v8748 = vsel %vm6612, %v8684, %v8498
  %v8749 = vsel %vm6612, %v8685, %v8500
  %v8750 = vsel %vm6612, %v8686, %v8502
  %v8751 = vsel %vm6612, %v8687, %v8504
  %v8752 = vsel %vm6612, %v8688, %v8506
  %v8753 = vsel %vm6612, %v8689, %v8508
  %v8754 = vsel %vm6612, %v8690, %v8510
  %v8755 = vsel %vm6612, %v8691, %v8512
  %v8756 = vsel %vm6612, %v8692, %v8514
  %v8757 = vsel %vm6612, %v8693, %v8516
  %v8758 = vsel %vm6612, %v8694, %v8518
  %v8759 = vsel %vm6612, %v8695, %v8520
  %v8760 = vsel %vm6612, %v8696, %v8522
  %v8761 = vsel %vm6612, %v8697, %v8524
  %v8762 = vsel %vm6612, %v8698, %v8526
  %v8763 = vsel %vm6612, %v8699, %v8528
  %v8764 = vsel %vm6612, %v8700, %v8530
  %v8765 = vsel %vm6612, %v8701, %v8532
  %v8766 = vsel %vm6612, %v8702, %v8534
  %v8767 = vsel %vm6612, %v8703, %v8536
  %v8768 = vsel %vm6612, %v8704, %v8538
  %v8769 = vsel %vm6612, %v8705, %v8540
  %v8770 = vsel %vm6612, %v8706, %v8542
  %v8771 = vsel %vm6612, %v8707, %v8544
  %v8772 = vsel %vm6612, %v8708, %v8546
  %v8773 = vsel %vm6612, %v8709, %v8548
  %v8774 = vsel %vm6612, %v8710, %v8550
  %v8775 = vsel %vm6612, %v8711, %v8552
  %v8776 = vsel %vm6612, %v8712, %v8554
  %v8777 = vsel %vm6612, %v8713, %v8556
  %v8778 = vsel %vm6612, %v8714, %v8558
  %v8779 = vsel %vm6612, %v8715, %v8560
  %v8780 = vsel %vm6612, %v8716, %v8562
  %v8781 = vsel %vm6612, %v8717, %v8564
  %v8782 = vsel %vm6612, %v8718, %v8566
  %v8783 = vsel %vm6612, %v8719, %v8568
  %v8784 = vsel %vm6612, %v8720, %v8570
  %v8785 = vsel %vm6612, %v8721, %v8572
  %v8786 = vsel %vm6612, %v8722, %v8574
  %v8787 = vsel %vm6612, %v8723, %v8576
  %v8788 = vsel %vm6612, %v8724, %v8578
  %v8789 = vsel %vm6612, %v8725, %v8580
  %v8790 = vsel %vm6612, %v8726, %v8582
  %v8791 = vsel %vm6612, %v8727, %v8584
  %v8792 = vsel %vm6612, %v8728, %v8586
  %v8793 = vsel %vm6612, %v8729, %v8588
  %v8794 = vsel %vm6612, %v8730, %v8590
  %v8795 = vsel %vm6612, %v8731, %v8592
  %v8796 = vsel %vm6612, %v8732, %v8594
  %v8797 = vsel %vm6612, %v8733, %v8596
  %v8798 = vsel %vm6612, %v8734, %v8598
  %v8799 = vsel %vm6612, %v8735, %v8600
  %v8800 = vsel %vm6612, %v8736, %v8602
  %v8801 = vsel %vm6612, %v8737, %v8604
  %v8802 = vsel %vm6612, %v8738, %v8606
  %v8803 = vsel %vm6612, %v8739, %v8608
  %v8804 = vsel %vm6612, %v8740, %v8610
  %v8805 = vsel %vm6612, %v8741, %v8612
  %v8806 = vsel %vm6612, %v8742, %v8614
  %v8807 = vpack.c.bf16 %v8744, %v8743
  %v8808 = vpack.c.bf16 %v8746, %v8745
  %v8809 = vpack.c.bf16 %v8748, %v8747
  %v8810 = vpack.c.bf16 %v8750, %v8749
  %v8811 = vpack.c.bf16 %v8752, %v8751
  %v8812 = vpack.c.bf16 %v8754, %v8753
  %v8813 = vpack.c.bf16 %v8756, %v8755
  %v8814 = vpack.c.bf16 %v8758, %v8757
  %v8815 = vpack.c.bf16 %v8760, %v8759
  %v8816 = vpack.c.bf16 %v8762, %v8761
  %v8817 = vpack.c.bf16 %v8764, %v8763
  %v8818 = vpack.c.bf16 %v8766, %v8765
  %v8819 = vpack.c.bf16 %v8768, %v8767
  %v8820 = vpack.c.bf16 %v8770, %v8769
  %v8821 = vpack.c.bf16 %v8772, %v8771
  %v8822 = vpack.c.bf16 %v8774, %v8773
  %v8823 = vpack.c.bf16 %v8776, %v8775
  %v8824 = vpack.c.bf16 %v8778, %v8777
  %v8825 = vpack.c.bf16 %v8780, %v8779
  %v8826 = vpack.c.bf16 %v8782, %v8781
  %v8827 = vpack.c.bf16 %v8784, %v8783
  %v8828 = vpack.c.bf16 %v8786, %v8785
  %v8829 = vpack.c.bf16 %v8788, %v8787
  %v8830 = vpack.c.bf16 %v8790, %v8789
  %v8831 = vpack.c.bf16 %v8792, %v8791
  %v8832 = vpack.c.bf16 %v8794, %v8793
  %v8833 = vpack.c.bf16 %v8796, %v8795
  %v8834 = vpack.c.bf16 %v8798, %v8797
  %v8835 = vpack.c.bf16 %v8800, %v8799
  %v8836 = vpack.c.bf16 %v8802, %v8801
  %v8837 = vpack.c.bf16 %v8804, %v8803
  %v8838 = vpack.c.bf16 %v8806, %v8805
  %s8839 = scalar_lea.vmem %s9, 48
  %v8840 = vld [vmem:[%s8839] sm:$0xf]
  %v8841 = vld [vmem:[%s8839 + $0x4] sm:$0xf]
  %v8842 = vld [vmem:[%s8839 + $0x8] sm:$0xf]
  %v8843 = vld [vmem:[%s8839 + $0xc] sm:$0xf]
  %v8844 = vld [vmem:[%s8839 + $0x10] sm:$0xf]
  %v8845 = vld [vmem:[%s8839 + $0x14] sm:$0xf]
  %v8846 = vld [vmem:[%s8839 + $0x18] sm:$0xf]
  %v8847 = vld [vmem:[%s8839 + $0x1c] sm:$0xf]
  %v8848 = vld [vmem:[%s8839 + $0x20] sm:$0xf]
  %v8849 = vld [vmem:[%s8839 + $0x24] sm:$0xf]
  %v8850 = vld [vmem:[%s8839 + $0x28] sm:$0xf]
  %v8851 = vld [vmem:[%s8839 + $0x2c] sm:$0xf]
  %v8852 = vld [vmem:[%s9] sm:$0xf]
  %v8853 = vld [vmem:[%s9 + $0x4] sm:$0xf]
  %v8854 = vld [vmem:[%s9 + $0x8] sm:$0xf]
  %v8855 = vld [vmem:[%s9 + $0xc] sm:$0xf]
  %v8856 = vld [vmem:[%s9 + $0x10] sm:$0xf]
  %v8857 = vld [vmem:[%s9 + $0x14] sm:$0xf]
  %v8858 = vld [vmem:[%s9 + $0x18] sm:$0xf]
  %v8859 = vld [vmem:[%s9 + $0x1c] sm:$0xf]
  %v8860 = vld [vmem:[%s9 + $0x20] sm:$0xf]
  %v8861 = vld [vmem:[%s9 + $0x24] sm:$0xf]
  %v8862 = vld [vmem:[%s9 + $0x28] sm:$0xf]
  %v8863 = vld [vmem:[%s9 + $0x2c] sm:$0xf]
  %v8876 = vunpack.c.l.b16 %v8852
  %v8877 = vunpack.c.l.b16 %v8853
  %v8878 = vunpack.c.l.b16 %v8854
  %v8879 = vunpack.c.l.b16 %v8855
  %v8880 = vunpack.c.l.b16 %v8856
  %v8881 = vunpack.c.l.b16 %v8857
  %v8882 = vunpack.c.l.b16 %v8858
  %v8883 = vunpack.c.l.b16 %v8859
  %v8884 = vunpack.c.l.b16 %v8860
  %v8885 = vunpack.c.l.b16 %v8861
  %v8886 = vunpack.c.l.b16 %v8862
  %v8887 = vunpack.c.l.b16 %v8863
  %v8888 = vpack.c.b16 %v8877, %v8876
  %v8889 = vpack.c.b16 %v8879, %v8878
  %v8890 = vpack.c.b16 %v8881, %v8880
  %v8891 = vpack.c.b16 %v8883, %v8882
  %v8892 = vpack.c.b16 %v8885, %v8884
  %v8893 = vpack.c.b16 %v8887, %v8886
  %v8901 = vsel %vm6770, %v8807, 0
  %v8904 = vsel %vm6770, %v8808, 0
  %v8907 = vsel %vm6770, %v8809, 0
  %v8910 = vsel %vm6770, %v8810, 0
  %v8913 = vsel %vm6770, %v8811, 0
  %v8916 = vsel %vm6770, %v8812, 0
  %v8919 = vsel %vm6770, %v8813, 0
  %v8922 = vsel %vm6770, %v8814, 0
  %v8925 = vsel %vm6770, %v8815, 0
  %v8928 = vsel %vm6770, %v8816, 0
  %v8931 = vsel %vm6770, %v8817, 0
  %v8934 = vsel %vm6770, %v8818, 0
  %v8937 = vsel %vm6770, %v8819, 0
  %v8940 = vsel %vm6770, %v8820, 0
  %v8943 = vsel %vm6770, %v8821, 0
  %v8946 = vsel %vm6770, %v8822, 0
  %v8949 = vsel %vm6770, %v8823, 0
  %v8952 = vsel %vm6770, %v8824, 0
  %v8955 = vsel %vm6770, %v8825, 0
  %v8958 = vsel %vm6770, %v8826, 0
  %v8961 = vsel %vm6770, %v8827, 0
  %v8964 = vsel %vm6770, %v8828, 0
  %v8967 = vsel %vm6770, %v8829, 0
  %v8970 = vsel %vm6770, %v8830, 0
  %v8973 = vsel %vm6770, %v8831, 0
  %v8976 = vsel %vm6770, %v8832, 0
  %v8979 = vsel %vm6770, %v8833, 0
  %v8982 = vsel %vm6770, %v8834, 0
  %v8985 = vsel %vm6770, %v8835, 0
  %v8988 = vsel %vm6770, %v8836, 0
  %v8991 = vsel %vm6770, %v8837, 0
  %v8994 = vsel %vm6770, %v8838, 0
  %8996 = vmatpush.bf16.msra.mxu0 0
  %8997 = vmatpush.bf16.msra.mxu0 0
  %8998 = vmatpush.bf16.msra.mxu0 %v8893
  %8999 = vmatpush.bf16.msra.mxu0 %v8892
  %9000 = vmatpush.bf16.msra.mxu0 %v8891
  %9001 = vmatpush.bf16.msra.mxu0 %v8890
  %9002 = vmatpush.bf16.msra.mxu0 %v8889
  %9003 = vmatpush.bf16.msra.mxu0 %v8888
  %9004 = vmatmul.bf16.gmra.mxu0 %v8901
  %v9005 = vpop.f32.mrf.mxu0
  %v9006 = vadd.f32 0.0, %v9005
  %v9007 = vpop.f32.mrf.mxu0
  %v9008 = vadd.f32 0.0, %v9007
  %9009 = vmatmul.bf16.gmra.mxu0 %v8904
  %v9010 = vpop.f32.mrf.mxu0
  %v9011 = vadd.f32 0.0, %v9010
  %v9012 = vpop.f32.mrf.mxu0
  %v9013 = vadd.f32 0.0, %v9012
  %9014 = vmatmul.bf16.gmra.mxu0 %v8907
  %v9015 = vpop.f32.mrf.mxu0
  %v9016 = vadd.f32 0.0, %v9015
  %v9017 = vpop.f32.mrf.mxu0
  %v9018 = vadd.f32 0.0, %v9017
  %9019 = vmatmul.bf16.gmra.mxu0 %v8910
  %v9020 = vpop.f32.mrf.mxu0
  %v9021 = vadd.f32 0.0, %v9020
  %v9022 = vpop.f32.mrf.mxu0
  %v9023 = vadd.f32 0.0, %v9022
  %9024 = vmatmul.bf16.gmra.mxu0 %v8913
  %v9025 = vpop.f32.mrf.mxu0
  %v9026 = vadd.f32 0.0, %v9025
  %v9027 = vpop.f32.mrf.mxu0
  %v9028 = vadd.f32 0.0, %v9027
  %9029 = vmatmul.bf16.gmra.mxu0 %v8916
  %v9030 = vpop.f32.mrf.mxu0
  %v9031 = vadd.f32 0.0, %v9030
  %v9032 = vpop.f32.mrf.mxu0
  %v9033 = vadd.f32 0.0, %v9032
  %9034 = vmatmul.bf16.gmra.mxu0 %v8919
  %v9035 = vpop.f32.mrf.mxu0
  %v9036 = vadd.f32 0.0, %v9035
  %v9037 = vpop.f32.mrf.mxu0
  %v9038 = vadd.f32 0.0, %v9037
  %9039 = vmatmul.bf16.gmra.mxu0 %v8922
  %v9040 = vpop.f32.mrf.mxu0
  %v9041 = vadd.f32 0.0, %v9040
  %v9042 = vpop.f32.mrf.mxu0
  %v9043 = vadd.f32 0.0, %v9042
  %9044 = vmatmul.bf16.gmra.mxu0 %v8925
  %v9045 = vpop.f32.mrf.mxu0
  %v9046 = vadd.f32 0.0, %v9045
  %v9047 = vpop.f32.mrf.mxu0
  %v9048 = vadd.f32 0.0, %v9047
  %9049 = vmatmul.bf16.gmra.mxu0 %v8928
  %v9050 = vpop.f32.mrf.mxu0
  %v9051 = vadd.f32 0.0, %v9050
  %v9052 = vpop.f32.mrf.mxu0
  %v9053 = vadd.f32 0.0, %v9052
  %9054 = vmatmul.bf16.gmra.mxu0 %v8931
  %v9055 = vpop.f32.mrf.mxu0
  %v9056 = vadd.f32 0.0, %v9055
  %v9057 = vpop.f32.mrf.mxu0
  %v9058 = vadd.f32 0.0, %v9057
  %9059 = vmatmul.bf16.gmra.mxu0 %v8934
  %v9060 = vpop.f32.mrf.mxu0
  %v9061 = vadd.f32 0.0, %v9060
  %v9062 = vpop.f32.mrf.mxu0
  %v9063 = vadd.f32 0.0, %v9062
  %9064 = vmatmul.bf16.gmra.mxu0 %v8937
  %v9065 = vpop.f32.mrf.mxu0
  %v9066 = vadd.f32 0.0, %v9065
  %v9067 = vpop.f32.mrf.mxu0
  %v9068 = vadd.f32 0.0, %v9067
  %9069 = vmatmul.bf16.gmra.mxu0 %v8940
  %v9070 = vpop.f32.mrf.mxu0
  %v9071 = vadd.f32 0.0, %v9070
  %v9072 = vpop.f32.mrf.mxu0
  %v9073 = vadd.f32 0.0, %v9072
  %9074 = vmatmul.bf16.gmra.mxu0 %v8943
  %v9075 = vpop.f32.mrf.mxu0
  %v9076 = vadd.f32 0.0, %v9075
  %v9077 = vpop.f32.mrf.mxu0
  %v9078 = vadd.f32 0.0, %v9077
  %9079 = vmatmul.bf16.gmra.mxu0 %v8946
  %v9080 = vpop.f32.mrf.mxu0
  %v9081 = vadd.f32 0.0, %v9080
  %v9082 = vpop.f32.mrf.mxu0
  %v9083 = vadd.f32 0.0, %v9082
  %9084 = vmatmul.bf16.gmra.mxu0 %v8949
  %v9085 = vpop.f32.mrf.mxu0
  %v9086 = vadd.f32 0.0, %v9085
  %v9087 = vpop.f32.mrf.mxu0
  %v9088 = vadd.f32 0.0, %v9087
  %9089 = vmatmul.bf16.gmra.mxu0 %v8952
  %v9090 = vpop.f32.mrf.mxu0
  %v9091 = vadd.f32 0.0, %v9090
  %v9092 = vpop.f32.mrf.mxu0
  %v9093 = vadd.f32 0.0, %v9092
  %9094 = vmatmul.bf16.gmra.mxu0 %v8955
  %v9095 = vpop.f32.mrf.mxu0
  %v9096 = vadd.f32 0.0, %v9095
  %v9097 = vpop.f32.mrf.mxu0
  %v9098 = vadd.f32 0.0, %v9097
  %9099 = vmatmul.bf16.gmra.mxu0 %v8958
  %v9100 = vpop.f32.mrf.mxu0
  %v9101 = vadd.f32 0.0, %v9100
  %v9102 = vpop.f32.mrf.mxu0
  %v9103 = vadd.f32 0.0, %v9102
  %9104 = vmatmul.bf16.gmra.mxu0 %v8961
  %v9105 = vpop.f32.mrf.mxu0
  %v9106 = vadd.f32 0.0, %v9105
  %v9107 = vpop.f32.mrf.mxu0
  %v9108 = vadd.f32 0.0, %v9107
  %9109 = vmatmul.bf16.gmra.mxu0 %v8964
  %v9110 = vpop.f32.mrf.mxu0
  %v9111 = vadd.f32 0.0, %v9110
  %v9112 = vpop.f32.mrf.mxu0
  %v9113 = vadd.f32 0.0, %v9112
  %9114 = vmatmul.bf16.gmra.mxu0 %v8967
  %v9115 = vpop.f32.mrf.mxu0
  %v9116 = vadd.f32 0.0, %v9115
  %v9117 = vpop.f32.mrf.mxu0
  %v9118 = vadd.f32 0.0, %v9117
  %9119 = vmatmul.bf16.gmra.mxu0 %v8970
  %v9120 = vpop.f32.mrf.mxu0
  %v9121 = vadd.f32 0.0, %v9120
  %v9122 = vpop.f32.mrf.mxu0
  %v9123 = vadd.f32 0.0, %v9122
  %9124 = vmatmul.bf16.gmra.mxu0 %v8973
  %v9125 = vpop.f32.mrf.mxu0
  %v9126 = vadd.f32 0.0, %v9125
  %v9127 = vpop.f32.mrf.mxu0
  %v9128 = vadd.f32 0.0, %v9127
  %9129 = vmatmul.bf16.gmra.mxu0 %v8976
  %v9130 = vpop.f32.mrf.mxu0
  %v9131 = vadd.f32 0.0, %v9130
  %v9132 = vpop.f32.mrf.mxu0
  %v9133 = vadd.f32 0.0, %v9132
  %9134 = vmatmul.bf16.gmra.mxu0 %v8979
  %v9135 = vpop.f32.mrf.mxu0
  %v9136 = vadd.f32 0.0, %v9135
  %v9137 = vpop.f32.mrf.mxu0
  %v9138 = vadd.f32 0.0, %v9137
  %9139 = vmatmul.bf16.gmra.mxu0 %v8982
  %v9140 = vpop.f32.mrf.mxu0
  %v9141 = vadd.f32 0.0, %v9140
  %v9142 = vpop.f32.mrf.mxu0
  %v9143 = vadd.f32 0.0, %v9142
  %9144 = vmatmul.bf16.gmra.mxu0 %v8985
  %v9145 = vpop.f32.mrf.mxu0
  %v9146 = vadd.f32 0.0, %v9145
  %v9147 = vpop.f32.mrf.mxu0
  %v9148 = vadd.f32 0.0, %v9147
  %9149 = vmatmul.bf16.gmra.mxu0 %v8988
  %v9150 = vpop.f32.mrf.mxu0
  %v9151 = vadd.f32 0.0, %v9150
  %v9152 = vpop.f32.mrf.mxu0
  %v9153 = vadd.f32 0.0, %v9152
  %9154 = vmatmul.bf16.gmra.mxu0 %v8991
  %v9155 = vpop.f32.mrf.mxu0
  %v9156 = vadd.f32 0.0, %v9155
  %v9157 = vpop.f32.mrf.mxu0
  %v9158 = vadd.f32 0.0, %v9157
  %9159 = vmatmul.bf16.gmra.mxu0 %v8994
  %v9160 = vpop.f32.mrf.mxu0
  %v9161 = vadd.f32 0.0, %v9160
  %v9162 = vpop.f32.mrf.mxu0
  %v9163 = vadd.f32 0.0, %v9162
  %9164 = vdwg.mxu0
  %s9165 = scalar_lea.vmem %s9, 96
  %v9166 = vld [vmem:[%s9165] sm:$0xf]
  %v9167 = vld [vmem:[%s9165 + $0x4] sm:$0xf]
  %v9168 = vld [vmem:[%s9165 + $0x8] sm:$0xf]
  %v9169 = vld [vmem:[%s9165 + $0xc] sm:$0xf]
  %v9170 = vld [vmem:[%s9165 + $0x10] sm:$0xf]
  %v9171 = vld [vmem:[%s9165 + $0x14] sm:$0xf]
  %v9172 = vld [vmem:[%s9165 + $0x18] sm:$0xf]
  %v9173 = vld [vmem:[%s9165 + $0x1c] sm:$0xf]
  %v9174 = vld [vmem:[%s9165 + $0x20] sm:$0xf]
  %v9175 = vld [vmem:[%s9165 + $0x24] sm:$0xf]
  %v9176 = vld [vmem:[%s9165 + $0x28] sm:$0xf]
  %v9177 = vld [vmem:[%s9165 + $0x2c] sm:$0xf]
  %v9190 = vunpack.c.l.b16 %v9166
  %v9191 = vunpack.c.l.b16 %v9167
  %v9192 = vunpack.c.l.b16 %v9168
  %v9193 = vunpack.c.l.b16 %v9169
  %v9194 = vunpack.c.l.b16 %v9170
  %v9195 = vunpack.c.l.b16 %v9171
  %v9196 = vunpack.c.l.b16 %v9172
  %v9197 = vunpack.c.l.b16 %v9173
  %v9198 = vunpack.c.l.b16 %v9174
  %v9199 = vunpack.c.l.b16 %v9175
  %v9200 = vunpack.c.l.b16 %v9176
  %v9201 = vunpack.c.l.b16 %v9177
  %v9202 = vpack.c.b16 %v9191, %v9190
  %v9203 = vpack.c.b16 %v9193, %v9192
  %v9204 = vpack.c.b16 %v9195, %v9194
  %v9205 = vpack.c.b16 %v9197, %v9196
  %v9206 = vpack.c.b16 %v9199, %v9198
  %v9207 = vpack.c.b16 %v9201, %v9200
  %9214 = vmatpush.bf16.msra.mxu0 0
  %9215 = vmatpush.bf16.msra.mxu0 0
  %9216 = vmatpush.bf16.msra.mxu0 %v9207
  %9217 = vmatpush.bf16.msra.mxu0 %v9206
  %9218 = vmatpush.bf16.msra.mxu0 %v9205
  %9219 = vmatpush.bf16.msra.mxu0 %v9204
  %9220 = vmatpush.bf16.msra.mxu0 %v9203
  %9221 = vmatpush.bf16.msra.mxu0 %v9202
  %9222 = vmatmul.bf16.gmra.mxu0 %v8901
  %v9223 = vpop.f32.mrf.mxu0
  %v9224 = vadd.f32 0.0, %v9223
  %v9225 = vpop.f32.mrf.mxu0
  %v9226 = vadd.f32 0.0, %v9225
  %9227 = vmatmul.bf16.gmra.mxu0 %v8904
  %v9228 = vpop.f32.mrf.mxu0
  %v9229 = vadd.f32 0.0, %v9228
  %v9230 = vpop.f32.mrf.mxu0
  %v9231 = vadd.f32 0.0, %v9230
  %9232 = vmatmul.bf16.gmra.mxu0 %v8907
  %v9233 = vpop.f32.mrf.mxu0
  %v9234 = vadd.f32 0.0, %v9233
  %v9235 = vpop.f32.mrf.mxu0
  %v9236 = vadd.f32 0.0, %v9235
  %9237 = vmatmul.bf16.gmra.mxu0 %v8910
  %v9238 = vpop.f32.mrf.mxu0
  %v9239 = vadd.f32 0.0, %v9238
  %v9240 = vpop.f32.mrf.mxu0
  %v9241 = vadd.f32 0.0, %v9240
  %9242 = vmatmul.bf16.gmra.mxu0 %v8913
  %v9243 = vpop.f32.mrf.mxu0
  %v9244 = vadd.f32 0.0, %v9243
  %v9245 = vpop.f32.mrf.mxu0
  %v9246 = vadd.f32 0.0, %v9245
  %9247 = vmatmul.bf16.gmra.mxu0 %v8916
  %v9248 = vpop.f32.mrf.mxu0
  %v9249 = vadd.f32 0.0, %v9248
  %v9250 = vpop.f32.mrf.mxu0
  %v9251 = vadd.f32 0.0, %v9250
  %9252 = vmatmul.bf16.gmra.mxu0 %v8919
  %v9253 = vpop.f32.mrf.mxu0
  %v9254 = vadd.f32 0.0, %v9253
  %v9255 = vpop.f32.mrf.mxu0
  %v9256 = vadd.f32 0.0, %v9255
  %9257 = vmatmul.bf16.gmra.mxu0 %v8922
  %v9258 = vpop.f32.mrf.mxu0
  %v9259 = vadd.f32 0.0, %v9258
  %v9260 = vpop.f32.mrf.mxu0
  %v9261 = vadd.f32 0.0, %v9260
  %9262 = vmatmul.bf16.gmra.mxu0 %v8925
  %v9263 = vpop.f32.mrf.mxu0
  %v9264 = vadd.f32 0.0, %v9263
  %v9265 = vpop.f32.mrf.mxu0
  %v9266 = vadd.f32 0.0, %v9265
  %9267 = vmatmul.bf16.gmra.mxu0 %v8928
  %v9268 = vpop.f32.mrf.mxu0
  %v9269 = vadd.f32 0.0, %v9268
  %v9270 = vpop.f32.mrf.mxu0
  %v9271 = vadd.f32 0.0, %v9270
  %9272 = vmatmul.bf16.gmra.mxu0 %v8931
  %v9273 = vpop.f32.mrf.mxu0
  %v9274 = vadd.f32 0.0, %v9273
  %v9275 = vpop.f32.mrf.mxu0
  %v9276 = vadd.f32 0.0, %v9275
  %9277 = vmatmul.bf16.gmra.mxu0 %v8934
  %v9278 = vpop.f32.mrf.mxu0
  %v9279 = vadd.f32 0.0, %v9278
  %v9280 = vpop.f32.mrf.mxu0
  %v9281 = vadd.f32 0.0, %v9280
  %9282 = vmatmul.bf16.gmra.mxu0 %v8937
  %v9283 = vpop.f32.mrf.mxu0
  %v9284 = vadd.f32 0.0, %v9283
  %v9285 = vpop.f32.mrf.mxu0
  %v9286 = vadd.f32 0.0, %v9285
  %9287 = vmatmul.bf16.gmra.mxu0 %v8940
  %v9288 = vpop.f32.mrf.mxu0
  %v9289 = vadd.f32 0.0, %v9288
  %v9290 = vpop.f32.mrf.mxu0
  %v9291 = vadd.f32 0.0, %v9290
  %9292 = vmatmul.bf16.gmra.mxu0 %v8943
  %v9293 = vpop.f32.mrf.mxu0
  %v9294 = vadd.f32 0.0, %v9293
  %v9295 = vpop.f32.mrf.mxu0
  %v9296 = vadd.f32 0.0, %v9295
  %9297 = vmatmul.bf16.gmra.mxu0 %v8946
  %v9298 = vpop.f32.mrf.mxu0
  %v9299 = vadd.f32 0.0, %v9298
  %v9300 = vpop.f32.mrf.mxu0
  %v9301 = vadd.f32 0.0, %v9300
  %9302 = vmatmul.bf16.gmra.mxu0 %v8949
  %v9303 = vpop.f32.mrf.mxu0
  %v9304 = vadd.f32 0.0, %v9303
  %v9305 = vpop.f32.mrf.mxu0
  %v9306 = vadd.f32 0.0, %v9305
  %9307 = vmatmul.bf16.gmra.mxu0 %v8952
  %v9308 = vpop.f32.mrf.mxu0
  %v9309 = vadd.f32 0.0, %v9308
  %v9310 = vpop.f32.mrf.mxu0
  %v9311 = vadd.f32 0.0, %v9310
  %9312 = vmatmul.bf16.gmra.mxu0 %v8955
  %v9313 = vpop.f32.mrf.mxu0
  %v9314 = vadd.f32 0.0, %v9313
  %v9315 = vpop.f32.mrf.mxu0
  %v9316 = vadd.f32 0.0, %v9315
  %9317 = vmatmul.bf16.gmra.mxu0 %v8958
  %v9318 = vpop.f32.mrf.mxu0
  %v9319 = vadd.f32 0.0, %v9318
  %v9320 = vpop.f32.mrf.mxu0
  %v9321 = vadd.f32 0.0, %v9320
  %9322 = vmatmul.bf16.gmra.mxu0 %v8961
  %v9323 = vpop.f32.mrf.mxu0
  %v9324 = vadd.f32 0.0, %v9323
  %v9325 = vpop.f32.mrf.mxu0
  %v9326 = vadd.f32 0.0, %v9325
  %9327 = vmatmul.bf16.gmra.mxu0 %v8964
  %v9328 = vpop.f32.mrf.mxu0
  %v9329 = vadd.f32 0.0, %v9328
  %v9330 = vpop.f32.mrf.mxu0
  %v9331 = vadd.f32 0.0, %v9330
  %9332 = vmatmul.bf16.gmra.mxu0 %v8967
  %v9333 = vpop.f32.mrf.mxu0
  %v9334 = vadd.f32 0.0, %v9333
  %v9335 = vpop.f32.mrf.mxu0
  %v9336 = vadd.f32 0.0, %v9335
  %9337 = vmatmul.bf16.gmra.mxu0 %v8970
  %v9338 = vpop.f32.mrf.mxu0
  %v9339 = vadd.f32 0.0, %v9338
  %v9340 = vpop.f32.mrf.mxu0
  %v9341 = vadd.f32 0.0, %v9340
  %9342 = vmatmul.bf16.gmra.mxu0 %v8973
  %v9343 = vpop.f32.mrf.mxu0
  %v9344 = vadd.f32 0.0, %v9343
  %v9345 = vpop.f32.mrf.mxu0
  %v9346 = vadd.f32 0.0, %v9345
  %9347 = vmatmul.bf16.gmra.mxu0 %v8976
  %v9348 = vpop.f32.mrf.mxu0
  %v9349 = vadd.f32 0.0, %v9348
  %v9350 = vpop.f32.mrf.mxu0
  %v9351 = vadd.f32 0.0, %v9350
  %9352 = vmatmul.bf16.gmra.mxu0 %v8979
  %v9353 = vpop.f32.mrf.mxu0
  %v9354 = vadd.f32 0.0, %v9353
  %v9355 = vpop.f32.mrf.mxu0
  %v9356 = vadd.f32 0.0, %v9355
  %9357 = vmatmul.bf16.gmra.mxu0 %v8982
  %v9358 = vpop.f32.mrf.mxu0
  %v9359 = vadd.f32 0.0, %v9358
  %v9360 = vpop.f32.mrf.mxu0
  %v9361 = vadd.f32 0.0, %v9360
  %9362 = vmatmul.bf16.gmra.mxu0 %v8985
  %v9363 = vpop.f32.mrf.mxu0
  %v9364 = vadd.f32 0.0, %v9363
  %v9365 = vpop.f32.mrf.mxu0
  %v9366 = vadd.f32 0.0, %v9365
  %9367 = vmatmul.bf16.gmra.mxu0 %v8988
  %v9368 = vpop.f32.mrf.mxu0
  %v9369 = vadd.f32 0.0, %v9368
  %v9370 = vpop.f32.mrf.mxu0
  %v9371 = vadd.f32 0.0, %v9370
  %9372 = vmatmul.bf16.gmra.mxu0 %v8991
  %v9373 = vpop.f32.mrf.mxu0
  %v9374 = vadd.f32 0.0, %v9373
  %v9375 = vpop.f32.mrf.mxu0
  %v9376 = vadd.f32 0.0, %v9375
  %9377 = vmatmul.bf16.gmra.mxu0 %v8994
  %v9378 = vpop.f32.mrf.mxu0
  %v9379 = vadd.f32 0.0, %v9378
  %v9380 = vpop.f32.mrf.mxu0
  %v9381 = vadd.f32 0.0, %v9380
  %9382 = vdwg.mxu0
  %v9383 = vsel %vm4830, %v9161, 0.0
  %v9384 = vsel %vm4831, %v9163, 0.0
  %v9385 = vsel %vm4832, %v9006, 0.0
  %v9386 = vsel %vm4833, %v9008, 0.0
  %v9387 = vsel %vm4834, %v9011, 0.0
  %v9388 = vsel %vm4835, %v9013, 0.0
  %v9389 = vsel %vm4836, %v9016, 0.0
  %v9390 = vsel %vm4837, %v9018, 0.0
  %v9391 = vsel %vm4838, %v9021, 0.0
  %v9392 = vsel %vm4839, %v9023, 0.0
  %v9393 = vsel %vm4840, %v9026, 0.0
  %v9394 = vsel %vm4841, %v9028, 0.0
  %v9395 = vsel %vm4842, %v9031, 0.0
  %v9396 = vsel %vm4843, %v9033, 0.0
  %v9397 = vsel %vm4844, %v9036, 0.0
  %v9398 = vsel %vm4845, %v9038, 0.0
  %v9399 = vsel %vm4846, %v9041, 0.0
  %v9400 = vsel %vm4847, %v9043, 0.0
  %v9401 = vsel %vm4848, %v9046, 0.0
  %v9402 = vsel %vm4849, %v9048, 0.0
  %v9403 = vsel %vm4850, %v9051, 0.0
  %v9404 = vsel %vm4851, %v9053, 0.0
  %v9405 = vsel %vm4852, %v9056, 0.0
  %v9406 = vsel %vm4853, %v9058, 0.0
  %v9407 = vsel %vm4854, %v9061, 0.0
  %v9408 = vsel %vm4855, %v9063, 0.0
  %v9409 = vsel %vm4856, %v9066, 0.0
  %v9410 = vsel %vm4857, %v9068, 0.0
  %v9411 = vsel %vm4858, %v9071, 0.0
  %v9412 = vsel %vm4859, %v9073, 0.0
  %v9413 = vsel %vm4860, %v9076, 0.0
  %v9414 = vsel %vm4861, %v9078, 0.0
  %v9415 = vsel %vm4862, %v9081, 0.0
  %v9416 = vsel %vm4863, %v9083, 0.0
  %v9417 = vsel %vm4864, %v9086, 0.0
  %v9418 = vsel %vm4865, %v9088, 0.0
  %v9419 = vsel %vm4866, %v9091, 0.0
  %v9420 = vsel %vm4867, %v9093, 0.0
  %v9421 = vsel %vm4868, %v9096, 0.0
  %v9422 = vsel %vm4869, %v9098, 0.0
  %v9423 = vsel %vm4870, %v9101, 0.0
  %v9424 = vsel %vm4871, %v9103, 0.0
  %v9425 = vsel %vm4872, %v9106, 0.0
  %v9426 = vsel %vm4873, %v9108, 0.0
  %v9427 = vsel %vm4874, %v9111, 0.0
  %v9428 = vsel %vm4875, %v9113, 0.0
  %v9429 = vsel %vm4876, %v9116, 0.0
  %v9430 = vsel %vm4877, %v9118, 0.0
  %v9431 = vsel %vm4878, %v9121, 0.0
  %v9432 = vsel %vm4879, %v9123, 0.0
  %v9433 = vsel %vm4880, %v9126, 0.0
  %v9434 = vsel %vm4881, %v9128, 0.0
  %v9435 = vsel %vm4882, %v9131, 0.0
  %v9436 = vsel %vm4883, %v9133, 0.0
  %v9437 = vsel %vm4884, %v9136, 0.0
  %v9438 = vsel %vm4885, %v9138, 0.0
  %v9439 = vsel %vm4886, %v9141, 0.0
  %v9440 = vsel %vm4887, %v9143, 0.0
  %v9441 = vsel %vm4888, %v9146, 0.0
  %v9442 = vsel %vm4889, %v9148, 0.0
  %v9443 = vsel %vm4890, %v9151, 0.0
  %v9444 = vsel %vm4891, %v9153, 0.0
  %v9445 = vsel %vm4892, %v9156, 0.0
  %v9446 = vsel %vm4893, %v9158, 0.0
  %v9459 = vunpack.c.l.b16 %v8840
  %v9460 = vunpack.c.l.b16 %v8841
  %v9461 = vunpack.c.l.b16 %v8842
  %v9462 = vunpack.c.l.b16 %v8843
  %v9463 = vunpack.c.l.b16 %v8844
  %v9464 = vunpack.c.l.b16 %v8845
  %v9465 = vunpack.c.l.b16 %v8846
  %v9466 = vunpack.c.l.b16 %v8847
  %v9467 = vunpack.c.l.b16 %v8848
  %v9468 = vunpack.c.l.b16 %v8849
  %v9469 = vunpack.c.l.b16 %v8850
  %v9470 = vunpack.c.l.b16 %v8851
  %v9471 = vpack.c.b16 %v9460, %v9459
  %v9472 = vpack.c.b16 %v9462, %v9461
  %v9473 = vpack.c.b16 %v9464, %v9463
  %v9474 = vpack.c.b16 %v9466, %v9465
  %v9475 = vpack.c.b16 %v9468, %v9467
  %v9476 = vpack.c.b16 %v9470, %v9469
  %9483 = vmatpush.bf16.msra.mxu0 0
  %9484 = vmatpush.bf16.msra.mxu0 0
  %9485 = vmatpush.bf16.msra.mxu0 %v9476
  %9486 = vmatpush.bf16.msra.mxu0 %v9475
  %9487 = vmatpush.bf16.msra.mxu0 %v9474
  %9488 = vmatpush.bf16.msra.mxu0 %v9473
  %9489 = vmatpush.bf16.msra.mxu0 %v9472
  %9490 = vmatpush.bf16.msra.mxu0 %v9471
  %9491 = vmatmul.bf16.gmra.mxu0 %v8901
  %v9492 = vpop.f32.mrf.mxu0
  %v9493 = vadd.f32 %v9383, %v9492
  %v9494 = vpop.f32.mrf.mxu0
  %v9495 = vadd.f32 %v9384, %v9494
  %9496 = vmatmul.bf16.gmra.mxu0 %v8904
  %v9497 = vpop.f32.mrf.mxu0
  %v9498 = vadd.f32 %v9385, %v9497
  %v9499 = vpop.f32.mrf.mxu0
  %v9500 = vadd.f32 %v9386, %v9499
  %9501 = vmatmul.bf16.gmra.mxu0 %v8907
  %v9502 = vpop.f32.mrf.mxu0
  %v9503 = vadd.f32 %v9387, %v9502
  %v9504 = vpop.f32.mrf.mxu0
  %v9505 = vadd.f32 %v9388, %v9504
  %9506 = vmatmul.bf16.gmra.mxu0 %v8910
  %v9507 = vpop.f32.mrf.mxu0
  %v9508 = vadd.f32 %v9389, %v9507
  %v9509 = vpop.f32.mrf.mxu0
  %v9510 = vadd.f32 %v9390, %v9509
  %9511 = vmatmul.bf16.gmra.mxu0 %v8913
  %v9512 = vpop.f32.mrf.mxu0
  %v9513 = vadd.f32 %v9391, %v9512
  %v9514 = vpop.f32.mrf.mxu0
  %v9515 = vadd.f32 %v9392, %v9514
  %9516 = vmatmul.bf16.gmra.mxu0 %v8916
  %v9517 = vpop.f32.mrf.mxu0
  %v9518 = vadd.f32 %v9393, %v9517
  %v9519 = vpop.f32.mrf.mxu0
  %v9520 = vadd.f32 %v9394, %v9519
  %9521 = vmatmul.bf16.gmra.mxu0 %v8919
  %v9522 = vpop.f32.mrf.mxu0
  %v9523 = vadd.f32 %v9395, %v9522
  %v9524 = vpop.f32.mrf.mxu0
  %v9525 = vadd.f32 %v9396, %v9524
  %9526 = vmatmul.bf16.gmra.mxu0 %v8922
  %v9527 = vpop.f32.mrf.mxu0
  %v9528 = vadd.f32 %v9397, %v9527
  %v9529 = vpop.f32.mrf.mxu0
  %v9530 = vadd.f32 %v9398, %v9529
  %9531 = vmatmul.bf16.gmra.mxu0 %v8925
  %v9532 = vpop.f32.mrf.mxu0
  %v9533 = vadd.f32 %v9399, %v9532
  %v9534 = vpop.f32.mrf.mxu0
  %v9535 = vadd.f32 %v9400, %v9534
  %9536 = vmatmul.bf16.gmra.mxu0 %v8928
  %v9537 = vpop.f32.mrf.mxu0
  %v9538 = vadd.f32 %v9401, %v9537
  %v9539 = vpop.f32.mrf.mxu0
  %v9540 = vadd.f32 %v9402, %v9539
  %9541 = vmatmul.bf16.gmra.mxu0 %v8931
  %v9542 = vpop.f32.mrf.mxu0
  %v9543 = vadd.f32 %v9403, %v9542
  %v9544 = vpop.f32.mrf.mxu0
  %v9545 = vadd.f32 %v9404, %v9544
  %9546 = vmatmul.bf16.gmra.mxu0 %v8934
  %v9547 = vpop.f32.mrf.mxu0
  %v9548 = vadd.f32 %v9405, %v9547
  %v9549 = vpop.f32.mrf.mxu0
  %v9550 = vadd.f32 %v9406, %v9549
  %9551 = vmatmul.bf16.gmra.mxu0 %v8937
  %v9552 = vpop.f32.mrf.mxu0
  %v9553 = vadd.f32 %v9407, %v9552
  %v9554 = vpop.f32.mrf.mxu0
  %v9555 = vadd.f32 %v9408, %v9554
  %9556 = vmatmul.bf16.gmra.mxu0 %v8940
  %v9557 = vpop.f32.mrf.mxu0
  %v9558 = vadd.f32 %v9409, %v9557
  %v9559 = vpop.f32.mrf.mxu0
  %v9560 = vadd.f32 %v9410, %v9559
  %9561 = vmatmul.bf16.gmra.mxu0 %v8943
  %v9562 = vpop.f32.mrf.mxu0
  %v9563 = vadd.f32 %v9411, %v9562
  %v9564 = vpop.f32.mrf.mxu0
  %v9565 = vadd.f32 %v9412, %v9564
  %9566 = vmatmul.bf16.gmra.mxu0 %v8946
  %v9567 = vpop.f32.mrf.mxu0
  %v9568 = vadd.f32 %v9413, %v9567
  %v9569 = vpop.f32.mrf.mxu0
  %v9570 = vadd.f32 %v9414, %v9569
  %9571 = vmatmul.bf16.gmra.mxu0 %v8949
  %v9572 = vpop.f32.mrf.mxu0
  %v9573 = vadd.f32 %v9415, %v9572
  %v9574 = vpop.f32.mrf.mxu0
  %v9575 = vadd.f32 %v9416, %v9574
  %9576 = vmatmul.bf16.gmra.mxu0 %v8952
  %v9577 = vpop.f32.mrf.mxu0
  %v9578 = vadd.f32 %v9417, %v9577
  %v9579 = vpop.f32.mrf.mxu0
  %v9580 = vadd.f32 %v9418, %v9579
  %9581 = vmatmul.bf16.gmra.mxu0 %v8955
  %v9582 = vpop.f32.mrf.mxu0
  %v9583 = vadd.f32 %v9419, %v9582
  %v9584 = vpop.f32.mrf.mxu0
  %v9585 = vadd.f32 %v9420, %v9584
  %9586 = vmatmul.bf16.gmra.mxu0 %v8958
  %v9587 = vpop.f32.mrf.mxu0
  %v9588 = vadd.f32 %v9421, %v9587
  %v9589 = vpop.f32.mrf.mxu0
  %v9590 = vadd.f32 %v9422, %v9589
  %9591 = vmatmul.bf16.gmra.mxu0 %v8961
  %v9592 = vpop.f32.mrf.mxu0
  %v9593 = vadd.f32 %v9423, %v9592
  %v9594 = vpop.f32.mrf.mxu0
  %v9595 = vadd.f32 %v9424, %v9594
  %9596 = vmatmul.bf16.gmra.mxu0 %v8964
  %v9597 = vpop.f32.mrf.mxu0
  %v9598 = vadd.f32 %v9425, %v9597
  %v9599 = vpop.f32.mrf.mxu0
  %v9600 = vadd.f32 %v9426, %v9599
  %9601 = vmatmul.bf16.gmra.mxu0 %v8967
  %v9602 = vpop.f32.mrf.mxu0
  %v9603 = vadd.f32 %v9427, %v9602
  %v9604 = vpop.f32.mrf.mxu0
  %v9605 = vadd.f32 %v9428, %v9604
  %9606 = vmatmul.bf16.gmra.mxu0 %v8970
  %v9607 = vpop.f32.mrf.mxu0
  %v9608 = vadd.f32 %v9429, %v9607
  %v9609 = vpop.f32.mrf.mxu0
  %v9610 = vadd.f32 %v9430, %v9609
  %9611 = vmatmul.bf16.gmra.mxu0 %v8973
  %v9612 = vpop.f32.mrf.mxu0
  %v9613 = vadd.f32 %v9431, %v9612
  %v9614 = vpop.f32.mrf.mxu0
  %v9615 = vadd.f32 %v9432, %v9614
  %9616 = vmatmul.bf16.gmra.mxu0 %v8976
  %v9617 = vpop.f32.mrf.mxu0
  %v9618 = vadd.f32 %v9433, %v9617
  %v9619 = vpop.f32.mrf.mxu0
  %v9620 = vadd.f32 %v9434, %v9619
  %9621 = vmatmul.bf16.gmra.mxu0 %v8979
  %v9622 = vpop.f32.mrf.mxu0
  %v9623 = vadd.f32 %v9435, %v9622
  %v9624 = vpop.f32.mrf.mxu0
  %v9625 = vadd.f32 %v9436, %v9624
  %9626 = vmatmul.bf16.gmra.mxu0 %v8982
  %v9627 = vpop.f32.mrf.mxu0
  %v9628 = vadd.f32 %v9437, %v9627
  %v9629 = vpop.f32.mrf.mxu0
  %v9630 = vadd.f32 %v9438, %v9629
  %9631 = vmatmul.bf16.gmra.mxu0 %v8985
  %v9632 = vpop.f32.mrf.mxu0
  %v9633 = vadd.f32 %v9439, %v9632
  %v9634 = vpop.f32.mrf.mxu0
  %v9635 = vadd.f32 %v9440, %v9634
  %9636 = vmatmul.bf16.gmra.mxu0 %v8988
  %v9637 = vpop.f32.mrf.mxu0
  %v9638 = vadd.f32 %v9441, %v9637
  %v9639 = vpop.f32.mrf.mxu0
  %v9640 = vadd.f32 %v9442, %v9639
  %9641 = vmatmul.bf16.gmra.mxu0 %v8991
  %v9642 = vpop.f32.mrf.mxu0
  %v9643 = vadd.f32 %v9443, %v9642
  %v9644 = vpop.f32.mrf.mxu0
  %v9645 = vadd.f32 %v9444, %v9644
  %9646 = vmatmul.bf16.gmra.mxu0 %v8994
  %v9647 = vpop.f32.mrf.mxu0
  %v9648 = vadd.f32 %v9445, %v9647
  %v9649 = vpop.f32.mrf.mxu0
  %v9650 = vadd.f32 %v9446, %v9649
  %9651 = vdwg.mxu0
  %v9652 = vsel %vm5199, %v9229, 0.0
  %v9653 = vsel %vm5200, %v9231, 0.0
  %v9654 = vsel %vm5201, %v9234, 0.0
  %v9655 = vsel %vm5202, %v9236, 0.0
  %v9656 = vsel %vm5203, %v9239, 0.0
  %v9657 = vsel %vm5204, %v9241, 0.0
  %v9658 = vsel %vm5205, %v9244, 0.0
  %v9659 = vsel %vm5206, %v9246, 0.0
  %v9660 = vsel %vm5207, %v9249, 0.0
  %v9661 = vsel %vm5208, %v9251, 0.0
  %v9662 = vsel %vm5209, %v9254, 0.0
  %v9663 = vsel %vm5210, %v9256, 0.0
  %v9664 = vsel %vm5211, %v9259, 0.0
  %v9665 = vsel %vm5212, %v9261, 0.0
  %v9666 = vsel %vm5213, %v9264, 0.0
  %v9667 = vsel %vm5214, %v9266, 0.0
  %v9668 = vsel %vm5215, %v9269, 0.0
  %v9669 = vsel %vm5216, %v9271, 0.0
  %v9670 = vsel %vm5217, %v9274, 0.0
  %v9671 = vsel %vm5218, %v9276, 0.0
  %v9672 = vsel %vm5219, %v9279, 0.0
  %v9673 = vsel %vm5220, %v9281, 0.0
  %v9674 = vsel %vm5221, %v9284, 0.0
  %v9675 = vsel %vm5222, %v9286, 0.0
  %v9676 = vsel %vm5223, %v9289, 0.0
  %v9677 = vsel %vm5224, %v9291, 0.0
  %v9678 = vsel %vm5225, %v9294, 0.0
  %v9679 = vsel %vm5226, %v9296, 0.0
  %v9680 = vsel %vm5227, %v9299, 0.0
  %v9681 = vsel %vm5228, %v9301, 0.0
  %v9682 = vsel %vm5229, %v9304, 0.0
  %v9683 = vsel %vm5230, %v9306, 0.0
  %v9684 = vsel %vm5231, %v9309, 0.0
  %v9685 = vsel %vm5232, %v9311, 0.0
  %v9686 = vsel %vm5233, %v9314, 0.0
  %v9687 = vsel %vm5234, %v9316, 0.0
  %v9688 = vsel %vm5235, %v9319, 0.0
  %v9689 = vsel %vm5236, %v9321, 0.0
  %v9690 = vsel %vm5237, %v9324, 0.0
  %v9691 = vsel %vm5238, %v9326, 0.0
  %v9692 = vsel %vm5239, %v9329, 0.0
  %v9693 = vsel %vm5240, %v9331, 0.0
  %v9694 = vsel %vm5241, %v9334, 0.0
  %v9695 = vsel %vm5242, %v9336, 0.0
  %v9696 = vsel %vm5243, %v9339, 0.0
  %v9697 = vsel %vm5244, %v9341, 0.0
  %v9698 = vsel %vm5245, %v9344, 0.0
  %v9699 = vsel %vm5246, %v9346, 0.0
  %v9700 = vsel %vm5247, %v9349, 0.0
  %v9701 = vsel %vm5248, %v9351, 0.0
  %v9702 = vsel %vm5249, %v9354, 0.0
  %v9703 = vsel %vm5250, %v9356, 0.0
  %v9704 = vsel %vm5251, %v9359, 0.0
  %v9705 = vsel %vm5252, %v9361, 0.0
  %v9706 = vsel %vm5253, %v9364, 0.0
  %v9707 = vsel %vm5254, %v9366, 0.0
  %v9708 = vsel %vm5255, %v9369, 0.0
  %v9709 = vsel %vm5256, %v9371, 0.0
  %v9710 = vsel %vm5257, %v9374, 0.0
  %v9711 = vsel %vm5258, %v9376, 0.0
  %v9712 = vsel %vm5259, %v9379, 0.0
  %v9713 = vsel %vm5260, %v9381, 0.0
  %v9714 = vsel %vm5261, %v9224, 0.0
  %v9715 = vsel %vm5262, %v9226, 0.0
  %v9716 = vadd.f32 %v9493, %v9652
  %v9717 = vadd.f32 %v9495, %v9653
  %v9718 = vadd.f32 %v9498, %v9654
  %v9719 = vadd.f32 %v9500, %v9655
  %v9720 = vadd.f32 %v9503, %v9656
  %v9721 = vadd.f32 %v9505, %v9657
  %v9722 = vadd.f32 %v9508, %v9658
  %v9723 = vadd.f32 %v9510, %v9659
  %v9724 = vadd.f32 %v9513, %v9660
  %v9725 = vadd.f32 %v9515, %v9661
  %v9726 = vadd.f32 %v9518, %v9662
  %v9727 = vadd.f32 %v9520, %v9663
  %v9728 = vadd.f32 %v9523, %v9664
  %v9729 = vadd.f32 %v9525, %v9665
  %v9730 = vadd.f32 %v9528, %v9666
  %v9731 = vadd.f32 %v9530, %v9667
  %v9732 = vadd.f32 %v9533, %v9668
  %v9733 = vadd.f32 %v9535, %v9669
  %v9734 = vadd.f32 %v9538, %v9670
  %v9735 = vadd.f32 %v9540, %v9671
  %v9736 = vadd.f32 %v9543, %v9672
  %v9737 = vadd.f32 %v9545, %v9673
  %v9738 = vadd.f32 %v9548, %v9674
  %v9739 = vadd.f32 %v9550, %v9675
  %v9740 = vadd.f32 %v9553, %v9676
  %v9741 = vadd.f32 %v9555, %v9677
  %v9742 = vadd.f32 %v9558, %v9678
  %v9743 = vadd.f32 %v9560, %v9679
  %v9744 = vadd.f32 %v9563, %v9680
  %v9745 = vadd.f32 %v9565, %v9681
  %v9746 = vadd.f32 %v9568, %v9682
  %v9747 = vadd.f32 %v9570, %v9683
  %v9748 = vadd.f32 %v9573, %v9684
  %v9749 = vadd.f32 %v9575, %v9685
  %v9750 = vadd.f32 %v9578, %v9686
  %v9751 = vadd.f32 %v9580, %v9687
  %v9752 = vadd.f32 %v9583, %v9688
  %v9753 = vadd.f32 %v9585, %v9689
  %v9754 = vadd.f32 %v9588, %v9690
  %v9755 = vadd.f32 %v9590, %v9691
  %v9756 = vadd.f32 %v9593, %v9692
  %v9757 = vadd.f32 %v9595, %v9693
  %v9758 = vadd.f32 %v9598, %v9694
  %v9759 = vadd.f32 %v9600, %v9695
  %v9760 = vadd.f32 %v9603, %v9696
  %v9761 = vadd.f32 %v9605, %v9697
  %v9762 = vadd.f32 %v9608, %v9698
  %v9763 = vadd.f32 %v9610, %v9699
  %v9764 = vadd.f32 %v9613, %v9700
  %v9765 = vadd.f32 %v9615, %v9701
  %v9766 = vadd.f32 %v9618, %v9702
  %v9767 = vadd.f32 %v9620, %v9703
  %v9768 = vadd.f32 %v9623, %v9704
  %v9769 = vadd.f32 %v9625, %v9705
  %v9770 = vadd.f32 %v9628, %v9706
  %v9771 = vadd.f32 %v9630, %v9707
  %v9772 = vadd.f32 %v9633, %v9708
  %v9773 = vadd.f32 %v9635, %v9709
  %v9774 = vadd.f32 %v9638, %v9710
  %v9775 = vadd.f32 %v9640, %v9711
  %v9776 = vadd.f32 %v9643, %v9712
  %v9777 = vadd.f32 %v9645, %v9713
  %v9778 = vadd.f32 %v9648, %v9714
  %v9779 = vadd.f32 %v9650, %v9715
  %v9780 = vld [vmem:[%s10] sm:$0x1]
  %v9782 = vperm.slane %v9780, 0
  %v9784 = vadd.f32 %v9716, %v9782
  %v9785 = vadd.f32 %v9717, %v9782
  %v9786 = vadd.f32 %v9718, %v9782
  %v9787 = vadd.f32 %v9719, %v9782
  %v9788 = vadd.f32 %v9720, %v9782
  %v9789 = vadd.f32 %v9721, %v9782
  %v9790 = vadd.f32 %v9722, %v9782
  %v9791 = vadd.f32 %v9723, %v9782
  %v9792 = vadd.f32 %v9724, %v9782
  %v9793 = vadd.f32 %v9725, %v9782
  %v9794 = vadd.f32 %v9726, %v9782
  %v9795 = vadd.f32 %v9727, %v9782
  %v9796 = vadd.f32 %v9728, %v9782
  %v9797 = vadd.f32 %v9729, %v9782
  %v9798 = vadd.f32 %v9730, %v9782
  %v9799 = vadd.f32 %v9731, %v9782
  %v9800 = vadd.f32 %v9732, %v9782
  %v9801 = vadd.f32 %v9733, %v9782
  %v9802 = vadd.f32 %v9734, %v9782
  %v9803 = vadd.f32 %v9735, %v9782
  %v9804 = vadd.f32 %v9736, %v9782
  %v9805 = vadd.f32 %v9737, %v9782
  %v9806 = vadd.f32 %v9738, %v9782
  %v9807 = vadd.f32 %v9739, %v9782
  %v9808 = vadd.f32 %v9740, %v9782
  %v9809 = vadd.f32 %v9741, %v9782
  %v9810 = vadd.f32 %v9742, %v9782
  %v9811 = vadd.f32 %v9743, %v9782
  %v9812 = vadd.f32 %v9744, %v9782
  %v9813 = vadd.f32 %v9745, %v9782
  %v9814 = vadd.f32 %v9746, %v9782
  %v9815 = vadd.f32 %v9747, %v9782
  %v9816 = vadd.f32 %v9748, %v9782
  %v9817 = vadd.f32 %v9749, %v9782
  %v9818 = vadd.f32 %v9750, %v9782
  %v9819 = vadd.f32 %v9751, %v9782
  %v9820 = vadd.f32 %v9752, %v9782
  %v9821 = vadd.f32 %v9753, %v9782
  %v9822 = vadd.f32 %v9754, %v9782
  %v9823 = vadd.f32 %v9755, %v9782
  %v9824 = vadd.f32 %v9756, %v9782
  %v9825 = vadd.f32 %v9757, %v9782
  %v9826 = vadd.f32 %v9758, %v9782
  %v9827 = vadd.f32 %v9759, %v9782
  %v9828 = vadd.f32 %v9760, %v9782
  %v9829 = vadd.f32 %v9761, %v9782
  %v9830 = vadd.f32 %v9762, %v9782
  %v9831 = vadd.f32 %v9763, %v9782
  %v9832 = vadd.f32 %v9764, %v9782
  %v9833 = vadd.f32 %v9765, %v9782
  %v9834 = vadd.f32 %v9766, %v9782
  %v9835 = vadd.f32 %v9767, %v9782
  %v9836 = vadd.f32 %v9768, %v9782
  %v9837 = vadd.f32 %v9769, %v9782
  %v9838 = vadd.f32 %v9770, %v9782
  %v9839 = vadd.f32 %v9771, %v9782
  %v9840 = vadd.f32 %v9772, %v9782
  %v9841 = vadd.f32 %v9773, %v9782
  %v9842 = vadd.f32 %v9774, %v9782
  %v9843 = vadd.f32 %v9775, %v9782
  %v9844 = vadd.f32 %v9776, %v9782
  %v9845 = vadd.f32 %v9777, %v9782
  %v9846 = vadd.f32 %v9778, %v9782
  %v9847 = vadd.f32 %v9779, %v9782
  %v9848 = vadd.f32 %v9784, %v5587
  %v9849 = vadd.f32 %v9785, %v5588
  %v9850 = vadd.f32 %v9786, %v5589
  %v9851 = vadd.f32 %v9787, %v5590
  %v9852 = vadd.f32 %v9788, %v5591
  %v9853 = vadd.f32 %v9789, %v5592
  %v9854 = vadd.f32 %v9790, %v5593
  %v9855 = vadd.f32 %v9791, %v5594
  %v9856 = vadd.f32 %v9792, %v5595
  %v9857 = vadd.f32 %v9793, %v5596
  %v9858 = vadd.f32 %v9794, %v5597
  %v9859 = vadd.f32 %v9795, %v5598
  %v9860 = vadd.f32 %v9796, %v5599
  %v9861 = vadd.f32 %v9797, %v5600
  %v9862 = vadd.f32 %v9798, %v5601
  %v9863 = vadd.f32 %v9799, %v5602
  %v9864 = vadd.f32 %v9800, %v5603
  %v9865 = vadd.f32 %v9801, %v5604
  %v9866 = vadd.f32 %v9802, %v5605
  %v9867 = vadd.f32 %v9803, %v5606
  %v9868 = vadd.f32 %v9804, %v5607
  %v9869 = vadd.f32 %v9805, %v5608
  %v9870 = vadd.f32 %v9806, %v5609
  %v9871 = vadd.f32 %v9807, %v5610
  %v9872 = vadd.f32 %v9808, %v5611
  %v9873 = vadd.f32 %v9809, %v5612
  %v9874 = vadd.f32 %v9810, %v5613
  %v9875 = vadd.f32 %v9811, %v5614
  %v9876 = vadd.f32 %v9812, %v5615
  %v9877 = vadd.f32 %v9813, %v5616
  %v9878 = vadd.f32 %v9814, %v5617
  %v9879 = vadd.f32 %v9815, %v5618
  %v9880 = vadd.f32 %v9816, %v5619
  %v9881 = vadd.f32 %v9817, %v5620
  %v9882 = vadd.f32 %v9818, %v5621
  %v9883 = vadd.f32 %v9819, %v5622
  %v9884 = vadd.f32 %v9820, %v5623
  %v9885 = vadd.f32 %v9821, %v5624
  %v9886 = vadd.f32 %v9822, %v5625
  %v9887 = vadd.f32 %v9823, %v5626
  %v9888 = vadd.f32 %v9824, %v5627
  %v9889 = vadd.f32 %v9825, %v5628
  %v9890 = vadd.f32 %v9826, %v5629
  %v9891 = vadd.f32 %v9827, %v5630
  %v9892 = vadd.f32 %v9828, %v5631
  %v9893 = vadd.f32 %v9829, %v5632
  %v9894 = vadd.f32 %v9830, %v5633
  %v9895 = vadd.f32 %v9831, %v5634
  %v9896 = vadd.f32 %v9832, %v5635
  %v9897 = vadd.f32 %v9833, %v5636
  %v9898 = vadd.f32 %v9834, %v5637
  %v9899 = vadd.f32 %v9835, %v5638
  %v9900 = vadd.f32 %v9836, %v5639
  %v9901 = vadd.f32 %v9837, %v5640
  %v9902 = vadd.f32 %v9838, %v5641
  %v9903 = vadd.f32 %v9839, %v5642
  %v9904 = vadd.f32 %v9840, %v5643
  %v9905 = vadd.f32 %v9841, %v5644
  %v9906 = vadd.f32 %v9842, %v5645
  %v9907 = vadd.f32 %v9843, %v5646
  %v9908 = vadd.f32 %v9844, %v5647
  %v9909 = vadd.f32 %v9845, %v5648
  %v9910 = vadd.f32 %v9846, %v5649
  %v9911 = vadd.f32 %v9847, %v5650
  %v9912 = vmax.f32 %v9848, 0.0
  %v9913 = vmax.f32 %v9849, 0.0
  %v9914 = vmax.f32 %v9850, 0.0
  %v9915 = vmax.f32 %v9851, 0.0
  %v9916 = vmax.f32 %v9852, 0.0
  %v9917 = vmax.f32 %v9853, 0.0
  %v9918 = vmax.f32 %v9854, 0.0
  %v9919 = vmax.f32 %v9855, 0.0
  %v9920 = vmax.f32 %v9856, 0.0
  %v9921 = vmax.f32 %v9857, 0.0
  %v9922 = vmax.f32 %v9858, 0.0
  %v9923 = vmax.f32 %v9859, 0.0
  %v9924 = vmax.f32 %v9860, 0.0
  %v9925 = vmax.f32 %v9861, 0.0
  %v9926 = vmax.f32 %v9862, 0.0
  %v9927 = vmax.f32 %v9863, 0.0
  %v9928 = vmax.f32 %v9864, 0.0
  %v9929 = vmax.f32 %v9865, 0.0
  %v9930 = vmax.f32 %v9866, 0.0
  %v9931 = vmax.f32 %v9867, 0.0
  %v9932 = vmax.f32 %v9868, 0.0
  %v9933 = vmax.f32 %v9869, 0.0
  %v9934 = vmax.f32 %v9870, 0.0
  %v9935 = vmax.f32 %v9871, 0.0
  %v9936 = vmax.f32 %v9872, 0.0
  %v9937 = vmax.f32 %v9873, 0.0
  %v9938 = vmax.f32 %v9874, 0.0
  %v9939 = vmax.f32 %v9875, 0.0
  %v9940 = vmax.f32 %v9876, 0.0
  %v9941 = vmax.f32 %v9877, 0.0
  %v9942 = vmax.f32 %v9878, 0.0
  %v9943 = vmax.f32 %v9879, 0.0
  %v9944 = vmax.f32 %v9880, 0.0
  %v9945 = vmax.f32 %v9881, 0.0
  %v9946 = vmax.f32 %v9882, 0.0
  %v9947 = vmax.f32 %v9883, 0.0
  %v9948 = vmax.f32 %v9884, 0.0
  %v9949 = vmax.f32 %v9885, 0.0
  %v9950 = vmax.f32 %v9886, 0.0
  %v9951 = vmax.f32 %v9887, 0.0
  %v9952 = vmax.f32 %v9888, 0.0
  %v9953 = vmax.f32 %v9889, 0.0
  %v9954 = vmax.f32 %v9890, 0.0
  %v9955 = vmax.f32 %v9891, 0.0
  %v9956 = vmax.f32 %v9892, 0.0
  %v9957 = vmax.f32 %v9893, 0.0
  %v9958 = vmax.f32 %v9894, 0.0
  %v9959 = vmax.f32 %v9895, 0.0
  %v9960 = vmax.f32 %v9896, 0.0
  %v9961 = vmax.f32 %v9897, 0.0
  %v9962 = vmax.f32 %v9898, 0.0
  %v9963 = vmax.f32 %v9899, 0.0
  %v9964 = vmax.f32 %v9900, 0.0
  %v9965 = vmax.f32 %v9901, 0.0
  %v9966 = vmax.f32 %v9902, 0.0
  %v9967 = vmax.f32 %v9903, 0.0
  %v9968 = vmax.f32 %v9904, 0.0
  %v9969 = vmax.f32 %v9905, 0.0
  %v9970 = vmax.f32 %v9906, 0.0
  %v9971 = vmax.f32 %v9907, 0.0
  %v9972 = vmax.f32 %v9908, 0.0
  %v9973 = vmax.f32 %v9909, 0.0
  %v9974 = vmax.f32 %v9910, 0.0
  %v9975 = vmax.f32 %v9911, 0.0
  %v9976 = vrot.slane %v9912, 7
  %v9977 = vrot.slane %v9913, 7
  %v9978 = vrot.slane %v9914, 7
  %v9979 = vrot.slane %v9915, 7
  %v9980 = vrot.slane %v9916, 7
  %v9981 = vrot.slane %v9917, 7
  %v9982 = vrot.slane %v9918, 7
  %v9983 = vrot.slane %v9919, 7
  %v9984 = vrot.slane %v9920, 7
  %v9985 = vrot.slane %v9921, 7
  %v9986 = vrot.slane %v9922, 7
  %v9987 = vrot.slane %v9923, 7
  %v9988 = vrot.slane %v9924, 7
  %v9989 = vrot.slane %v9925, 7
  %v9990 = vrot.slane %v9926, 7
  %v9991 = vrot.slane %v9927, 7
  %v9992 = vrot.slane %v9928, 7
  %v9993 = vrot.slane %v9929, 7
  %v9994 = vrot.slane %v9930, 7
  %v9995 = vrot.slane %v9931, 7
  %v9996 = vrot.slane %v9932, 7
  %v9997 = vrot.slane %v9933, 7
  %v9998 = vrot.slane %v9934, 7
  %v9999 = vrot.slane %v9935, 7
  %v10000 = vrot.slane %v9936, 7
  %v10001 = vrot.slane %v9937, 7
  %v10002 = vrot.slane %v9938, 7
  %v10003 = vrot.slane %v9939, 7
  %v10004 = vrot.slane %v9940, 7
  %v10005 = vrot.slane %v9941, 7
  %v10006 = vrot.slane %v9942, 7
  %v10007 = vrot.slane %v9943, 7
  %v10008 = vrot.slane %v9944, 7
  %v10009 = vrot.slane %v9945, 7
  %v10010 = vrot.slane %v9946, 7
  %v10011 = vrot.slane %v9947, 7
  %v10012 = vrot.slane %v9948, 7
  %v10013 = vrot.slane %v9949, 7
  %v10014 = vrot.slane %v9950, 7
  %v10015 = vrot.slane %v9951, 7
  %v10016 = vrot.slane %v9952, 7
  %v10017 = vrot.slane %v9953, 7
  %v10018 = vrot.slane %v9954, 7
  %v10019 = vrot.slane %v9955, 7
  %v10020 = vrot.slane %v9956, 7
  %v10021 = vrot.slane %v9957, 7
  %v10022 = vrot.slane %v9958, 7
  %v10023 = vrot.slane %v9959, 7
  %v10024 = vrot.slane %v9960, 7
  %v10025 = vrot.slane %v9961, 7
  %v10026 = vrot.slane %v9962, 7
  %v10027 = vrot.slane %v9963, 7
  %v10028 = vrot.slane %v9964, 7
  %v10029 = vrot.slane %v9965, 7
  %v10030 = vrot.slane %v9966, 7
  %v10031 = vrot.slane %v9967, 7
  %v10032 = vrot.slane %v9968, 7
  %v10033 = vrot.slane %v9969, 7
  %v10034 = vrot.slane %v9970, 7
  %v10035 = vrot.slane %v9971, 7
  %v10036 = vrot.slane %v9972, 7
  %v10037 = vrot.slane %v9973, 7
  %v10038 = vrot.slane %v9974, 7
  %v10039 = vrot.slane %v9975, 7
  %v10040 = vsel %vm3054, %v10038, %v10039
  %v10041 = vsel %vm3054, %v10037, %v10038
  %v10042 = vsel %vm3054, %v10036, %v10037
  %v10043 = vsel %vm3054, %v10035, %v10036
  %v10044 = vsel %vm3054, %v10034, %v10035
  %v10045 = vsel %vm3054, %v10033, %v10034
  %v10046 = vsel %vm3054, %v10032, %v10033
  %v10047 = vsel %vm3054, %v10031, %v10032
  %v10048 = vsel %vm3054, %v10030, %v10031
  %v10049 = vsel %vm3054, %v10029, %v10030
  %v10050 = vsel %vm3054, %v10028, %v10029
  %v10051 = vsel %vm3054, %v10027, %v10028
  %v10052 = vsel %vm3054, %v10026, %v10027
  %v10053 = vsel %vm3054, %v10025, %v10026
  %v10054 = vsel %vm3054, %v10024, %v10025
  %v10055 = vsel %vm3054, %v10023, %v10024
  %v10056 = vsel %vm3054, %v10022, %v10023
  %v10057 = vsel %vm3054, %v10021, %v10022
  %v10058 = vsel %vm3054, %v10020, %v10021
  %v10059 = vsel %vm3054, %v10019, %v10020
  %v10060 = vsel %vm3054, %v10018, %v10019
  %v10061 = vsel %vm3054, %v10017, %v10018
  %v10062 = vsel %vm3054, %v10016, %v10017
  %v10063 = vsel %vm3054, %v10015, %v10016
  %v10064 = vsel %vm3054, %v10014, %v10015
  %v10065 = vsel %vm3054, %v10013, %v10014
  %v10066 = vsel %vm3054, %v10012, %v10013
  %v10067 = vsel %vm3054, %v10011, %v10012
  %v10068 = vsel %vm3054, %v10010, %v10011
  %v10069 = vsel %vm3054, %v10009, %v10010
  %v10070 = vsel %vm3054, %v10008, %v10009
  %v10071 = vsel %vm3054, %v10007, %v10008
  %v10072 = vsel %vm3054, %v10006, %v10007
  %v10073 = vsel %vm3054, %v10005, %v10006
  %v10074 = vsel %vm3054, %v10004, %v10005
  %v10075 = vsel %vm3054, %v10003, %v10004
  %v10076 = vsel %vm3054, %v10002, %v10003
  %v10077 = vsel %vm3054, %v10001, %v10002
  %v10078 = vsel %vm3054, %v10000, %v10001
  %v10079 = vsel %vm3054, %v9999, %v10000
  %v10080 = vsel %vm3054, %v9998, %v9999
  %v10081 = vsel %vm3054, %v9997, %v9998
  %v10082 = vsel %vm3054, %v9996, %v9997
  %v10083 = vsel %vm3054, %v9995, %v9996
  %v10084 = vsel %vm3054, %v9994, %v9995
  %v10085 = vsel %vm3054, %v9993, %v9994
  %v10086 = vsel %vm3054, %v9992, %v9993
  %v10087 = vsel %vm3054, %v9991, %v9992
  %v10088 = vsel %vm3054, %v9990, %v9991
  %v10089 = vsel %vm3054, %v9989, %v9990
  %v10090 = vsel %vm3054, %v9988, %v9989
  %v10091 = vsel %vm3054, %v9987, %v9988
  %v10092 = vsel %vm3054, %v9986, %v9987
  %v10093 = vsel %vm3054, %v9985, %v9986
  %v10094 = vsel %vm3054, %v9984, %v9985
  %v10095 = vsel %vm3054, %v9983, %v9984
  %v10096 = vsel %vm3054, %v9982, %v9983
  %v10097 = vsel %vm3054, %v9981, %v9982
  %v10098 = vsel %vm3054, %v9980, %v9981
  %v10099 = vsel %vm3054, %v9979, %v9980
  %v10100 = vsel %vm3054, %v9978, %v9979
  %v10101 = vsel %vm3054, %v9977, %v9978
  %v10102 = vsel %vm3054, %v9976, %v9977
  %v10103 = vsel %vm3054, %v10039, %v9976
  %v10104 = vsel %vm3183, %v10103, 0.0
  %v10105 = vsel %vm3184, %v10102, 0.0
  %v10106 = vsel %vm3185, %v10101, 0.0
  %v10107 = vsel %vm3186, %v10100, 0.0
  %v10108 = vsel %vm3187, %v10099, 0.0
  %v10109 = vsel %vm3188, %v10098, 0.0
  %v10110 = vsel %vm3189, %v10097, 0.0
  %v10111 = vsel %vm3190, %v10096, 0.0
  %v10112 = vsel %vm3191, %v10095, 0.0
  %v10113 = vsel %vm3192, %v10094, 0.0
  %v10114 = vsel %vm3193, %v10093, 0.0
  %v10115 = vsel %vm3194, %v10092, 0.0
  %v10116 = vsel %vm3195, %v10091, 0.0
  %v10117 = vsel %vm3196, %v10090, 0.0
  %v10118 = vsel %vm3197, %v10089, 0.0
  %v10119 = vsel %vm3198, %v10088, 0.0
  %v10120 = vsel %vm3199, %v10087, 0.0
  %v10121 = vsel %vm3200, %v10086, 0.0
  %v10122 = vsel %vm3201, %v10085, 0.0
  %v10123 = vsel %vm3202, %v10084, 0.0
  %v10124 = vsel %vm3203, %v10083, 0.0
  %v10125 = vsel %vm3204, %v10082, 0.0
  %v10126 = vsel %vm3205, %v10081, 0.0
  %v10127 = vsel %vm3206, %v10080, 0.0
  %v10128 = vsel %vm3207, %v10079, 0.0
  %v10129 = vsel %vm3208, %v10078, 0.0
  %v10130 = vsel %vm3209, %v10077, 0.0
  %v10131 = vsel %vm3210, %v10076, 0.0
  %v10132 = vsel %vm3211, %v10075, 0.0
  %v10133 = vsel %vm3212, %v10074, 0.0
  %v10134 = vsel %vm3213, %v10073, 0.0
  %v10135 = vsel %vm3214, %v10072, 0.0
  %v10136 = vsel %vm3215, %v10071, 0.0
  %v10137 = vsel %vm3216, %v10070, 0.0
  %v10138 = vsel %vm3217, %v10069, 0.0
  %v10139 = vsel %vm3218, %v10068, 0.0
  %v10140 = vsel %vm3219, %v10067, 0.0
  %v10141 = vsel %vm3220, %v10066, 0.0
  %v10142 = vsel %vm3221, %v10065, 0.0
  %v10143 = vsel %vm3222, %v10064, 0.0
  %v10144 = vsel %vm3223, %v10063, 0.0
  %v10145 = vsel %vm3224, %v10062, 0.0
  %v10146 = vsel %vm3225, %v10061, 0.0
  %v10147 = vsel %vm3226, %v10060, 0.0
  %v10148 = vsel %vm3227, %v10059, 0.0
  %v10149 = vsel %vm3228, %v10058, 0.0
  %v10150 = vsel %vm3229, %v10057, 0.0
  %v10151 = vsel %vm3230, %v10056, 0.0
  %v10152 = vsel %vm3231, %v10055, 0.0
  %v10153 = vsel %vm3232, %v10054, 0.0
  %v10154 = vsel %vm3233, %v10053, 0.0
  %v10155 = vsel %vm3234, %v10052, 0.0
  %v10156 = vsel %vm3235, %v10051, 0.0
  %v10157 = vsel %vm3236, %v10050, 0.0
  %v10158 = vsel %vm3237, %v10049, 0.0
  %v10159 = vsel %vm3238, %v10048, 0.0
  %v10160 = vsel %vm3239, %v10047, 0.0
  %v10161 = vsel %vm3240, %v10046, 0.0
  %v10162 = vsel %vm3241, %v10045, 0.0
  %v10163 = vsel %vm3242, %v10044, 0.0
  %v10164 = vsel %vm3243, %v10043, 0.0
  %v10165 = vsel %vm3244, %v10042, 0.0
  %v10166 = vsel %vm3245, %v10041, 0.0
  %v10167 = vsel %vm3246, %v10040, 0.0
  %v10168 = vrot.slane %v9912, 1
  %v10169 = vrot.slane %v9913, 1
  %v10170 = vrot.slane %v9914, 1
  %v10171 = vrot.slane %v9915, 1
  %v10172 = vrot.slane %v9916, 1
  %v10173 = vrot.slane %v9917, 1
  %v10174 = vrot.slane %v9918, 1
  %v10175 = vrot.slane %v9919, 1
  %v10176 = vrot.slane %v9920, 1
  %v10177 = vrot.slane %v9921, 1
  %v10178 = vrot.slane %v9922, 1
  %v10179 = vrot.slane %v9923, 1
  %v10180 = vrot.slane %v9924, 1
  %v10181 = vrot.slane %v9925, 1
  %v10182 = vrot.slane %v9926, 1
  %v10183 = vrot.slane %v9927, 1
  %v10184 = vrot.slane %v9928, 1
  %v10185 = vrot.slane %v9929, 1
  %v10186 = vrot.slane %v9930, 1
  %v10187 = vrot.slane %v9931, 1
  %v10188 = vrot.slane %v9932, 1
  %v10189 = vrot.slane %v9933, 1
  %v10190 = vrot.slane %v9934, 1
  %v10191 = vrot.slane %v9935, 1
  %v10192 = vrot.slane %v9936, 1
  %v10193 = vrot.slane %v9937, 1
  %v10194 = vrot.slane %v9938, 1
  %v10195 = vrot.slane %v9939, 1
  %v10196 = vrot.slane %v9940, 1
  %v10197 = vrot.slane %v9941, 1
  %v10198 = vrot.slane %v9942, 1
  %v10199 = vrot.slane %v9943, 1
  %v10200 = vrot.slane %v9944, 1
  %v10201 = vrot.slane %v9945, 1
  %v10202 = vrot.slane %v9946, 1
  %v10203 = vrot.slane %v9947, 1
  %v10204 = vrot.slane %v9948, 1
  %v10205 = vrot.slane %v9949, 1
  %v10206 = vrot.slane %v9950, 1
  %v10207 = vrot.slane %v9951, 1
  %v10208 = vrot.slane %v9952, 1
  %v10209 = vrot.slane %v9953, 1
  %v10210 = vrot.slane %v9954, 1
  %v10211 = vrot.slane %v9955, 1
  %v10212 = vrot.slane %v9956, 1
  %v10213 = vrot.slane %v9957, 1
  %v10214 = vrot.slane %v9958, 1
  %v10215 = vrot.slane %v9959, 1
  %v10216 = vrot.slane %v9960, 1
  %v10217 = vrot.slane %v9961, 1
  %v10218 = vrot.slane %v9962, 1
  %v10219 = vrot.slane %v9963, 1
  %v10220 = vrot.slane %v9964, 1
  %v10221 = vrot.slane %v9965, 1
  %v10222 = vrot.slane %v9966, 1
  %v10223 = vrot.slane %v9967, 1
  %v10224 = vrot.slane %v9968, 1
  %v10225 = vrot.slane %v9969, 1
  %v10226 = vrot.slane %v9970, 1
  %v10227 = vrot.slane %v9971, 1
  %v10228 = vrot.slane %v9972, 1
  %v10229 = vrot.slane %v9973, 1
  %v10230 = vrot.slane %v9974, 1
  %v10231 = vrot.slane %v9975, 1
  %v10232 = vsel %vm3375, %v10230, %v10231
  %v10233 = vsel %vm3375, %v10229, %v10230
  %v10234 = vsel %vm3375, %v10228, %v10229
  %v10235 = vsel %vm3375, %v10227, %v10228
  %v10236 = vsel %vm3375, %v10226, %v10227
  %v10237 = vsel %vm3375, %v10225, %v10226
  %v10238 = vsel %vm3375, %v10224, %v10225
  %v10239 = vsel %vm3375, %v10223, %v10224
  %v10240 = vsel %vm3375, %v10222, %v10223
  %v10241 = vsel %vm3375, %v10221, %v10222
  %v10242 = vsel %vm3375, %v10220, %v10221
  %v10243 = vsel %vm3375, %v10219, %v10220
  %v10244 = vsel %vm3375, %v10218, %v10219
  %v10245 = vsel %vm3375, %v10217, %v10218
  %v10246 = vsel %vm3375, %v10216, %v10217
  %v10247 = vsel %vm3375, %v10215, %v10216
  %v10248 = vsel %vm3375, %v10214, %v10215
  %v10249 = vsel %vm3375, %v10213, %v10214
  %v10250 = vsel %vm3375, %v10212, %v10213
  %v10251 = vsel %vm3375, %v10211, %v10212
  %v10252 = vsel %vm3375, %v10210, %v10211
  %v10253 = vsel %vm3375, %v10209, %v10210
  %v10254 = vsel %vm3375, %v10208, %v10209
  %v10255 = vsel %vm3375, %v10207, %v10208
  %v10256 = vsel %vm3375, %v10206, %v10207
  %v10257 = vsel %vm3375, %v10205, %v10206
  %v10258 = vsel %vm3375, %v10204, %v10205
  %v10259 = vsel %vm3375, %v10203, %v10204
  %v10260 = vsel %vm3375, %v10202, %v10203
  %v10261 = vsel %vm3375, %v10201, %v10202
  %v10262 = vsel %vm3375, %v10200, %v10201
  %v10263 = vsel %vm3375, %v10199, %v10200
  %v10264 = vsel %vm3375, %v10198, %v10199
  %v10265 = vsel %vm3375, %v10197, %v10198
  %v10266 = vsel %vm3375, %v10196, %v10197
  %v10267 = vsel %vm3375, %v10195, %v10196
  %v10268 = vsel %vm3375, %v10194, %v10195
  %v10269 = vsel %vm3375, %v10193, %v10194
  %v10270 = vsel %vm3375, %v10192, %v10193
  %v10271 = vsel %vm3375, %v10191, %v10192
  %v10272 = vsel %vm3375, %v10190, %v10191
  %v10273 = vsel %vm3375, %v10189, %v10190
  %v10274 = vsel %vm3375, %v10188, %v10189
  %v10275 = vsel %vm3375, %v10187, %v10188
  %v10276 = vsel %vm3375, %v10186, %v10187
  %v10277 = vsel %vm3375, %v10185, %v10186
  %v10278 = vsel %vm3375, %v10184, %v10185
  %v10279 = vsel %vm3375, %v10183, %v10184
  %v10280 = vsel %vm3375, %v10182, %v10183
  %v10281 = vsel %vm3375, %v10181, %v10182
  %v10282 = vsel %vm3375, %v10180, %v10181
  %v10283 = vsel %vm3375, %v10179, %v10180
  %v10284 = vsel %vm3375, %v10178, %v10179
  %v10285 = vsel %vm3375, %v10177, %v10178
  %v10286 = vsel %vm3375, %v10176, %v10177
  %v10287 = vsel %vm3375, %v10175, %v10176
  %v10288 = vsel %vm3375, %v10174, %v10175
  %v10289 = vsel %vm3375, %v10173, %v10174
  %v10290 = vsel %vm3375, %v10172, %v10173
  %v10291 = vsel %vm3375, %v10171, %v10172
  %v10292 = vsel %vm3375, %v10170, %v10171
  %v10293 = vsel %vm3375, %v10169, %v10170
  %v10294 = vsel %vm3375, %v10168, %v10169
  %v10295 = vsel %vm3375, %v10231, %v10168
  %v10296 = vsel %vm3504, %v10294, 0.0
  %v10297 = vsel %vm3505, %v10293, 0.0
  %v10298 = vsel %vm3506, %v10292, 0.0
  %v10299 = vsel %vm3507, %v10291, 0.0
  %v10300 = vsel %vm3508, %v10290, 0.0
  %v10301 = vsel %vm3509, %v10289, 0.0
  %v10302 = vsel %vm3510, %v10288, 0.0
  %v10303 = vsel %vm3511, %v10287, 0.0
  %v10304 = vsel %vm3512, %v10286, 0.0
  %v10305 = vsel %vm3513, %v10285, 0.0
  %v10306 = vsel %vm3514, %v10284, 0.0
  %v10307 = vsel %vm3515, %v10283, 0.0
  %v10308 = vsel %vm3516, %v10282, 0.0
  %v10309 = vsel %vm3517, %v10281, 0.0
  %v10310 = vsel %vm3518, %v10280, 0.0
  %v10311 = vsel %vm3519, %v10279, 0.0
  %v10312 = vsel %vm3520, %v10278, 0.0
  %v10313 = vsel %vm3521, %v10277, 0.0
  %v10314 = vsel %vm3522, %v10276, 0.0
  %v10315 = vsel %vm3523, %v10275, 0.0
  %v10316 = vsel %vm3524, %v10274, 0.0
  %v10317 = vsel %vm3525, %v10273, 0.0
  %v10318 = vsel %vm3526, %v10272, 0.0
  %v10319 = vsel %vm3527, %v10271, 0.0
  %v10320 = vsel %vm3528, %v10270, 0.0
  %v10321 = vsel %vm3529, %v10269, 0.0
  %v10322 = vsel %vm3530, %v10268, 0.0
  %v10323 = vsel %vm3531, %v10267, 0.0
  %v10324 = vsel %vm3532, %v10266, 0.0
  %v10325 = vsel %vm3533, %v10265, 0.0
  %v10326 = vsel %vm3534, %v10264, 0.0
  %v10327 = vsel %vm3535, %v10263, 0.0
  %v10328 = vsel %vm3536, %v10262, 0.0
  %v10329 = vsel %vm3537, %v10261, 0.0
  %v10330 = vsel %vm3538, %v10260, 0.0
  %v10331 = vsel %vm3539, %v10259, 0.0
  %v10332 = vsel %vm3540, %v10258, 0.0
  %v10333 = vsel %vm3541, %v10257, 0.0
  %v10334 = vsel %vm3542, %v10256, 0.0
  %v10335 = vsel %vm3543, %v10255, 0.0
  %v10336 = vsel %vm3544, %v10254, 0.0
  %v10337 = vsel %vm3545, %v10253, 0.0
  %v10338 = vsel %vm3546, %v10252, 0.0
  %v10339 = vsel %vm3547, %v10251, 0.0
  %v10340 = vsel %vm3548, %v10250, 0.0
  %v10341 = vsel %vm3549, %v10249, 0.0
  %v10342 = vsel %vm3550, %v10248, 0.0
  %v10343 = vsel %vm3551, %v10247, 0.0
  %v10344 = vsel %vm3552, %v10246, 0.0
  %v10345 = vsel %vm3553, %v10245, 0.0
  %v10346 = vsel %vm3554, %v10244, 0.0
  %v10347 = vsel %vm3555, %v10243, 0.0
  %v10348 = vsel %vm3556, %v10242, 0.0
  %v10349 = vsel %vm3557, %v10241, 0.0
  %v10350 = vsel %vm3558, %v10240, 0.0
  %v10351 = vsel %vm3559, %v10239, 0.0
  %v10352 = vsel %vm3560, %v10238, 0.0
  %v10353 = vsel %vm3561, %v10237, 0.0
  %v10354 = vsel %vm3562, %v10236, 0.0
  %v10355 = vsel %vm3563, %v10235, 0.0
  %v10356 = vsel %vm3564, %v10234, 0.0
  %v10357 = vsel %vm3565, %v10233, 0.0
  %v10358 = vsel %vm3566, %v10232, 0.0
  %v10359 = vsel %vm3567, %v10295, 0.0
  %10424 = vrot.lane.b32.xlu0 %v9912, 32
  %v10425 = vpop.permute.xlu0 %10424
  %10426 = vrot.lane.b32.xlu0 %v9913, 32
  %v10427 = vpop.permute.xlu0 %10426
  %10428 = vrot.lane.b32.xlu0 %v9914, 32
  %v10429 = vpop.permute.xlu0 %10428
  %10430 = vrot.lane.b32.xlu0 %v9915, 32
  %v10431 = vpop.permute.xlu0 %10430
  %10432 = vrot.lane.b32.xlu0 %v9916, 32
  %v10433 = vpop.permute.xlu0 %10432
  %10434 = vrot.lane.b32.xlu0 %v9917, 32
  %v10435 = vpop.permute.xlu0 %10434
  %10436 = vrot.lane.b32.xlu0 %v9918, 32
  %v10437 = vpop.permute.xlu0 %10436
  %10438 = vrot.lane.b32.xlu0 %v9919, 32
  %v10439 = vpop.permute.xlu0 %10438
  %10440 = vrot.lane.b32.xlu0 %v9920, 32
  %v10441 = vpop.permute.xlu0 %10440
  %10442 = vrot.lane.b32.xlu0 %v9921, 32
  %v10443 = vpop.permute.xlu0 %10442
  %10444 = vrot.lane.b32.xlu0 %v9922, 32
  %v10445 = vpop.permute.xlu0 %10444
  %10446 = vrot.lane.b32.xlu0 %v9923, 32
  %v10447 = vpop.permute.xlu0 %10446
  %10448 = vrot.lane.b32.xlu0 %v9924, 32
  %v10449 = vpop.permute.xlu0 %10448
  %10450 = vrot.lane.b32.xlu0 %v9925, 32
  %v10451 = vpop.permute.xlu0 %10450
  %10452 = vrot.lane.b32.xlu0 %v9926, 32
  %v10453 = vpop.permute.xlu0 %10452
  %10454 = vrot.lane.b32.xlu0 %v9927, 32
  %v10455 = vpop.permute.xlu0 %10454
  %10456 = vrot.lane.b32.xlu0 %v9928, 32
  %v10457 = vpop.permute.xlu0 %10456
  %10458 = vrot.lane.b32.xlu0 %v9929, 32
  %v10459 = vpop.permute.xlu0 %10458
  %10460 = vrot.lane.b32.xlu0 %v9930, 32
  %v10461 = vpop.permute.xlu0 %10460
  %10462 = vrot.lane.b32.xlu0 %v9931, 32
  %v10463 = vpop.permute.xlu0 %10462
  %10464 = vrot.lane.b32.xlu0 %v9932, 32
  %v10465 = vpop.permute.xlu0 %10464
  %10466 = vrot.lane.b32.xlu0 %v9933, 32
  %v10467 = vpop.permute.xlu0 %10466
  %10468 = vrot.lane.b32.xlu0 %v9934, 32
  %v10469 = vpop.permute.xlu0 %10468
  %10470 = vrot.lane.b32.xlu0 %v9935, 32
  %v10471 = vpop.permute.xlu0 %10470
  %10472 = vrot.lane.b32.xlu0 %v9936, 32
  %v10473 = vpop.permute.xlu0 %10472
  %10474 = vrot.lane.b32.xlu0 %v9937, 32
  %v10475 = vpop.permute.xlu0 %10474
  %10476 = vrot.lane.b32.xlu0 %v9938, 32
  %v10477 = vpop.permute.xlu0 %10476
  %10478 = vrot.lane.b32.xlu0 %v9939, 32
  %v10479 = vpop.permute.xlu0 %10478
  %10480 = vrot.lane.b32.xlu0 %v9940, 32
  %v10481 = vpop.permute.xlu0 %10480
  %10482 = vrot.lane.b32.xlu0 %v9941, 32
  %v10483 = vpop.permute.xlu0 %10482
  %10484 = vrot.lane.b32.xlu0 %v9942, 32
  %v10485 = vpop.permute.xlu0 %10484
  %10486 = vrot.lane.b32.xlu0 %v9943, 32
  %v10487 = vpop.permute.xlu0 %10486
  %10488 = vrot.lane.b32.xlu0 %v9944, 32
  %v10489 = vpop.permute.xlu0 %10488
  %10490 = vrot.lane.b32.xlu0 %v9945, 32
  %v10491 = vpop.permute.xlu0 %10490
  %10492 = vrot.lane.b32.xlu0 %v9946, 32
  %v10493 = vpop.permute.xlu0 %10492
  %10494 = vrot.lane.b32.xlu0 %v9947, 32
  %v10495 = vpop.permute.xlu0 %10494
  %10496 = vrot.lane.b32.xlu0 %v9948, 32
  %v10497 = vpop.permute.xlu0 %10496
  %10498 = vrot.lane.b32.xlu0 %v9949, 32
  %v10499 = vpop.permute.xlu0 %10498
  %10500 = vrot.lane.b32.xlu0 %v9950, 32
  %v10501 = vpop.permute.xlu0 %10500
  %10502 = vrot.lane.b32.xlu0 %v9951, 32
  %v10503 = vpop.permute.xlu0 %10502
  %10504 = vrot.lane.b32.xlu0 %v9952, 32
  %v10505 = vpop.permute.xlu0 %10504
  %10506 = vrot.lane.b32.xlu0 %v9953, 32
  %v10507 = vpop.permute.xlu0 %10506
  %10508 = vrot.lane.b32.xlu0 %v9954, 32
  %v10509 = vpop.permute.xlu0 %10508
  %10510 = vrot.lane.b32.xlu0 %v9955, 32
  %v10511 = vpop.permute.xlu0 %10510
  %10512 = vrot.lane.b32.xlu0 %v9956, 32
  %v10513 = vpop.permute.xlu0 %10512
  %10514 = vrot.lane.b32.xlu0 %v9957, 32
  %v10515 = vpop.permute.xlu0 %10514
  %10516 = vrot.lane.b32.xlu0 %v9958, 32
  %v10517 = vpop.permute.xlu0 %10516
  %10518 = vrot.lane.b32.xlu0 %v9959, 32
  %v10519 = vpop.permute.xlu0 %10518
  %10520 = vrot.lane.b32.xlu0 %v9960, 32
  %v10521 = vpop.permute.xlu0 %10520
  %10522 = vrot.lane.b32.xlu0 %v9961, 32
  %v10523 = vpop.permute.xlu0 %10522
  %10524 = vrot.lane.b32.xlu0 %v9962, 32
  %v10525 = vpop.permute.xlu0 %10524
  %10526 = vrot.lane.b32.xlu0 %v9963, 32
  %v10527 = vpop.permute.xlu0 %10526
  %10528 = vrot.lane.b32.xlu0 %v9964, 32
  %v10529 = vpop.permute.xlu0 %10528
  %10530 = vrot.lane.b32.xlu0 %v9965, 32
  %v10531 = vpop.permute.xlu0 %10530
  %10532 = vrot.lane.b32.xlu0 %v9966, 32
  %v10533 = vpop.permute.xlu0 %10532
  %10534 = vrot.lane.b32.xlu0 %v9967, 32
  %v10535 = vpop.permute.xlu0 %10534
  %10536 = vrot.lane.b32.xlu0 %v9968, 32
  %v10537 = vpop.permute.xlu0 %10536
  %10538 = vrot.lane.b32.xlu0 %v9969, 32
  %v10539 = vpop.permute.xlu0 %10538
  %10540 = vrot.lane.b32.xlu0 %v9970, 32
  %v10541 = vpop.permute.xlu0 %10540
  %10542 = vrot.lane.b32.xlu0 %v9971, 32
  %v10543 = vpop.permute.xlu0 %10542
  %10544 = vrot.lane.b32.xlu0 %v9972, 32
  %v10545 = vpop.permute.xlu0 %10544
  %10546 = vrot.lane.b32.xlu0 %v9973, 32
  %v10547 = vpop.permute.xlu0 %10546
  %10548 = vrot.lane.b32.xlu0 %v9974, 32
  %v10549 = vpop.permute.xlu0 %10548
  %10550 = vrot.lane.b32.xlu0 %v9975, 32
  %v10551 = vpop.permute.xlu0 %10550
  %10680 = vrot.lane.b32.xlu0 %v10296, 64
  %v10681 = vpop.permute.xlu0 %10680
  %10682 = vrot.lane.b32.xlu0 %v10297, 64
  %v10683 = vpop.permute.xlu0 %10682
  %10684 = vrot.lane.b32.xlu0 %v10298, 64
  %v10685 = vpop.permute.xlu0 %10684
  %10686 = vrot.lane.b32.xlu0 %v10299, 64
  %v10687 = vpop.permute.xlu0 %10686
  %10688 = vrot.lane.b32.xlu0 %v10300, 64
  %v10689 = vpop.permute.xlu0 %10688
  %10690 = vrot.lane.b32.xlu0 %v10301, 64
  %v10691 = vpop.permute.xlu0 %10690
  %10692 = vrot.lane.b32.xlu0 %v10302, 64
  %v10693 = vpop.permute.xlu0 %10692
  %10694 = vrot.lane.b32.xlu0 %v10303, 64
  %v10695 = vpop.permute.xlu0 %10694
  %10696 = vrot.lane.b32.xlu0 %v10304, 64
  %v10697 = vpop.permute.xlu0 %10696
  %10698 = vrot.lane.b32.xlu0 %v10305, 64
  %v10699 = vpop.permute.xlu0 %10698
  %10700 = vrot.lane.b32.xlu0 %v10306, 64
  %v10701 = vpop.permute.xlu0 %10700
  %10702 = vrot.lane.b32.xlu0 %v10307, 64
  %v10703 = vpop.permute.xlu0 %10702
  %10704 = vrot.lane.b32.xlu0 %v10308, 64
  %v10705 = vpop.permute.xlu0 %10704
  %10706 = vrot.lane.b32.xlu0 %v10309, 64
  %v10707 = vpop.permute.xlu0 %10706
  %10708 = vrot.lane.b32.xlu0 %v10310, 64
  %v10709 = vpop.permute.xlu0 %10708
  %10710 = vrot.lane.b32.xlu0 %v10311, 64
  %v10711 = vpop.permute.xlu0 %10710
  %10712 = vrot.lane.b32.xlu0 %v10312, 64
  %v10713 = vpop.permute.xlu0 %10712
  %10714 = vrot.lane.b32.xlu0 %v10313, 64
  %v10715 = vpop.permute.xlu0 %10714
  %10716 = vrot.lane.b32.xlu0 %v10314, 64
  %v10717 = vpop.permute.xlu0 %10716
  %10718 = vrot.lane.b32.xlu0 %v10315, 64
  %v10719 = vpop.permute.xlu0 %10718
  %10720 = vrot.lane.b32.xlu0 %v10316, 64
  %v10721 = vpop.permute.xlu0 %10720
  %10722 = vrot.lane.b32.xlu0 %v10317, 64
  %v10723 = vpop.permute.xlu0 %10722
  %10724 = vrot.lane.b32.xlu0 %v10318, 64
  %v10725 = vpop.permute.xlu0 %10724
  %10726 = vrot.lane.b32.xlu0 %v10319, 64
  %v10727 = vpop.permute.xlu0 %10726
  %10728 = vrot.lane.b32.xlu0 %v10320, 64
  %v10729 = vpop.permute.xlu0 %10728
  %10730 = vrot.lane.b32.xlu0 %v10321, 64
  %v10731 = vpop.permute.xlu0 %10730
  %10732 = vrot.lane.b32.xlu0 %v10322, 64
  %v10733 = vpop.permute.xlu0 %10732
  %10734 = vrot.lane.b32.xlu0 %v10323, 64
  %v10735 = vpop.permute.xlu0 %10734
  %10736 = vrot.lane.b32.xlu0 %v10324, 64
  %v10737 = vpop.permute.xlu0 %10736
  %10738 = vrot.lane.b32.xlu0 %v10325, 64
  %v10739 = vpop.permute.xlu0 %10738
  %10740 = vrot.lane.b32.xlu0 %v10326, 64
  %v10741 = vpop.permute.xlu0 %10740
  %10742 = vrot.lane.b32.xlu0 %v10327, 64
  %v10743 = vpop.permute.xlu0 %10742
  %10744 = vrot.lane.b32.xlu0 %v10328, 64
  %v10745 = vpop.permute.xlu0 %10744
  %10746 = vrot.lane.b32.xlu0 %v10329, 64
  %v10747 = vpop.permute.xlu0 %10746
  %10748 = vrot.lane.b32.xlu0 %v10330, 64
  %v10749 = vpop.permute.xlu0 %10748
  %10750 = vrot.lane.b32.xlu0 %v10331, 64
  %v10751 = vpop.permute.xlu0 %10750
  %10752 = vrot.lane.b32.xlu0 %v10332, 64
  %v10753 = vpop.permute.xlu0 %10752
  %10754 = vrot.lane.b32.xlu0 %v10333, 64
  %v10755 = vpop.permute.xlu0 %10754
  %10756 = vrot.lane.b32.xlu0 %v10334, 64
  %v10757 = vpop.permute.xlu0 %10756
  %10758 = vrot.lane.b32.xlu0 %v10335, 64
  %v10759 = vpop.permute.xlu0 %10758
  %10760 = vrot.lane.b32.xlu0 %v10336, 64
  %v10761 = vpop.permute.xlu0 %10760
  %10762 = vrot.lane.b32.xlu0 %v10337, 64
  %v10763 = vpop.permute.xlu0 %10762
  %10764 = vrot.lane.b32.xlu0 %v10338, 64
  %v10765 = vpop.permute.xlu0 %10764
  %10766 = vrot.lane.b32.xlu0 %v10339, 64
  %v10767 = vpop.permute.xlu0 %10766
  %10768 = vrot.lane.b32.xlu0 %v10340, 64
  %v10769 = vpop.permute.xlu0 %10768
  %10770 = vrot.lane.b32.xlu0 %v10341, 64
  %v10771 = vpop.permute.xlu0 %10770
  %10772 = vrot.lane.b32.xlu0 %v10342, 64
  %v10773 = vpop.permute.xlu0 %10772
  %10774 = vrot.lane.b32.xlu0 %v10343, 64
  %v10775 = vpop.permute.xlu0 %10774
  %10776 = vrot.lane.b32.xlu0 %v10344, 64
  %v10777 = vpop.permute.xlu0 %10776
  %10778 = vrot.lane.b32.xlu0 %v10345, 64
  %v10779 = vpop.permute.xlu0 %10778
  %10780 = vrot.lane.b32.xlu0 %v10346, 64
  %v10781 = vpop.permute.xlu0 %10780
  %10782 = vrot.lane.b32.xlu0 %v10347, 64
  %v10783 = vpop.permute.xlu0 %10782
  %10784 = vrot.lane.b32.xlu0 %v10348, 64
  %v10785 = vpop.permute.xlu0 %10784
  %10786 = vrot.lane.b32.xlu0 %v10349, 64
  %v10787 = vpop.permute.xlu0 %10786
  %10788 = vrot.lane.b32.xlu0 %v10350, 64
  %v10789 = vpop.permute.xlu0 %10788
  %10790 = vrot.lane.b32.xlu0 %v10351, 64
  %v10791 = vpop.permute.xlu0 %10790
  %10792 = vrot.lane.b32.xlu0 %v10352, 64
  %v10793 = vpop.permute.xlu0 %10792
  %10794 = vrot.lane.b32.xlu0 %v10353, 64
  %v10795 = vpop.permute.xlu0 %10794
  %10796 = vrot.lane.b32.xlu0 %v10354, 64
  %v10797 = vpop.permute.xlu0 %10796
  %10798 = vrot.lane.b32.xlu0 %v10355, 64
  %v10799 = vpop.permute.xlu0 %10798
  %10800 = vrot.lane.b32.xlu0 %v10356, 64
  %v10801 = vpop.permute.xlu0 %10800
  %10802 = vrot.lane.b32.xlu0 %v10357, 64
  %v10803 = vpop.permute.xlu0 %10802
  %10804 = vrot.lane.b32.xlu0 %v10358, 64
  %v10805 = vpop.permute.xlu0 %10804
  %10806 = vrot.lane.b32.xlu0 %v10359, 64
  %v10807 = vpop.permute.xlu0 %10806
  %v10872 = vsel %vm6547, %v10104, %v10425
  %v10873 = vsel %vm6547, %v10105, %v10427
  %v10874 = vsel %vm6547, %v10106, %v10429
  %v10875 = vsel %vm6547, %v10107, %v10431
  %v10876 = vsel %vm6547, %v10108, %v10433
  %v10877 = vsel %vm6547, %v10109, %v10435
  %v10878 = vsel %vm6547, %v10110, %v10437
  %v10879 = vsel %vm6547, %v10111, %v10439
  %v10880 = vsel %vm6547, %v10112, %v10441
  %v10881 = vsel %vm6547, %v10113, %v10443
  %v10882 = vsel %vm6547, %v10114, %v10445
  %v10883 = vsel %vm6547, %v10115, %v10447
  %v10884 = vsel %vm6547, %v10116, %v10449
  %v10885 = vsel %vm6547, %v10117, %v10451
  %v10886 = vsel %vm6547, %v10118, %v10453
  %v10887 = vsel %vm6547, %v10119, %v10455
  %v10888 = vsel %vm6547, %v10120, %v10457
  %v10889 = vsel %vm6547, %v10121, %v10459
  %v10890 = vsel %vm6547, %v10122, %v10461
  %v10891 = vsel %vm6547, %v10123, %v10463
  %v10892 = vsel %vm6547, %v10124, %v10465
  %v10893 = vsel %vm6547, %v10125, %v10467
  %v10894 = vsel %vm6547, %v10126, %v10469
  %v10895 = vsel %vm6547, %v10127, %v10471
  %v10896 = vsel %vm6547, %v10128, %v10473
  %v10897 = vsel %vm6547, %v10129, %v10475
  %v10898 = vsel %vm6547, %v10130, %v10477
  %v10899 = vsel %vm6547, %v10131, %v10479
  %v10900 = vsel %vm6547, %v10132, %v10481
  %v10901 = vsel %vm6547, %v10133, %v10483
  %v10902 = vsel %vm6547, %v10134, %v10485
  %v10903 = vsel %vm6547, %v10135, %v10487
  %v10904 = vsel %vm6547, %v10136, %v10489
  %v10905 = vsel %vm6547, %v10137, %v10491
  %v10906 = vsel %vm6547, %v10138, %v10493
  %v10907 = vsel %vm6547, %v10139, %v10495
  %v10908 = vsel %vm6547, %v10140, %v10497
  %v10909 = vsel %vm6547, %v10141, %v10499
  %v10910 = vsel %vm6547, %v10142, %v10501
  %v10911 = vsel %vm6547, %v10143, %v10503
  %v10912 = vsel %vm6547, %v10144, %v10505
  %v10913 = vsel %vm6547, %v10145, %v10507
  %v10914 = vsel %vm6547, %v10146, %v10509
  %v10915 = vsel %vm6547, %v10147, %v10511
  %v10916 = vsel %vm6547, %v10148, %v10513
  %v10917 = vsel %vm6547, %v10149, %v10515
  %v10918 = vsel %vm6547, %v10150, %v10517
  %v10919 = vsel %vm6547, %v10151, %v10519
  %v10920 = vsel %vm6547, %v10152, %v10521
  %v10921 = vsel %vm6547, %v10153, %v10523
  %v10922 = vsel %vm6547, %v10154, %v10525
  %v10923 = vsel %vm6547, %v10155, %v10527
  %v10924 = vsel %vm6547, %v10156, %v10529
  %v10925 = vsel %vm6547, %v10157, %v10531
  %v10926 = vsel %vm6547, %v10158, %v10533
  %v10927 = vsel %vm6547, %v10159, %v10535
  %v10928 = vsel %vm6547, %v10160, %v10537
  %v10929 = vsel %vm6547, %v10161, %v10539
  %v10930 = vsel %vm6547, %v10162, %v10541
  %v10931 = vsel %vm6547, %v10163, %v10543
  %v10932 = vsel %vm6547, %v10164, %v10545
  %v10933 = vsel %vm6547, %v10165, %v10547
  %v10934 = vsel %vm6547, %v10166, %v10549
  %v10935 = vsel %vm6547, %v10167, %v10551
  %v10936 = vsel %vm6612, %v10872, %v10681
  %v10937 = vsel %vm6612, %v10873, %v10683
  %v10938 = vsel %vm6612, %v10874, %v10685
  %v10939 = vsel %vm6612, %v10875, %v10687
  %v10940 = vsel %vm6612, %v10876, %v10689
  %v10941 = vsel %vm6612, %v10877, %v10691
  %v10942 = vsel %vm6612, %v10878, %v10693
  %v10943 = vsel %vm6612, %v10879, %v10695
  %v10944 = vsel %vm6612, %v10880, %v10697
  %v10945 = vsel %vm6612, %v10881, %v10699
  %v10946 = vsel %vm6612, %v10882, %v10701
  %v10947 = vsel %vm6612, %v10883, %v10703
  %v10948 = vsel %vm6612, %v10884, %v10705
  %v10949 = vsel %vm6612, %v10885, %v10707
  %v10950 = vsel %vm6612, %v10886, %v10709
  %v10951 = vsel %vm6612, %v10887, %v10711
  %v10952 = vsel %vm6612, %v10888, %v10713
  %v10953 = vsel %vm6612, %v10889, %v10715
  %v10954 = vsel %vm6612, %v10890, %v10717
  %v10955 = vsel %vm6612, %v10891, %v10719
  %v10956 = vsel %vm6612, %v10892, %v10721
  %v10957 = vsel %vm6612, %v10893, %v10723
  %v10958 = vsel %vm6612, %v10894, %v10725
  %v10959 = vsel %vm6612, %v10895, %v10727
  %v10960 = vsel %vm6612, %v10896, %v10729
  %v10961 = vsel %vm6612, %v10897, %v10731
  %v10962 = vsel %vm6612, %v10898, %v10733
  %v10963 = vsel %vm6612, %v10899, %v10735
  %v10964 = vsel %vm6612, %v10900, %v10737
  %v10965 = vsel %vm6612, %v10901, %v10739
  %v10966 = vsel %vm6612, %v10902, %v10741
  %v10967 = vsel %vm6612, %v10903, %v10743
  %v10968 = vsel %vm6612, %v10904, %v10745
  %v10969 = vsel %vm6612, %v10905, %v10747
  %v10970 = vsel %vm6612, %v10906, %v10749
  %v10971 = vsel %vm6612, %v10907, %v10751
  %v10972 = vsel %vm6612, %v10908, %v10753
  %v10973 = vsel %vm6612, %v10909, %v10755
  %v10974 = vsel %vm6612, %v10910, %v10757
  %v10975 = vsel %vm6612, %v10911, %v10759
  %v10976 = vsel %vm6612, %v10912, %v10761
  %v10977 = vsel %vm6612, %v10913, %v10763
  %v10978 = vsel %vm6612, %v10914, %v10765
  %v10979 = vsel %vm6612, %v10915, %v10767
  %v10980 = vsel %vm6612, %v10916, %v10769
  %v10981 = vsel %vm6612, %v10917, %v10771
  %v10982 = vsel %vm6612, %v10918, %v10773
  %v10983 = vsel %vm6612, %v10919, %v10775
  %v10984 = vsel %vm6612, %v10920, %v10777
  %v10985 = vsel %vm6612, %v10921, %v10779
  %v10986 = vsel %vm6612, %v10922, %v10781
  %v10987 = vsel %vm6612, %v10923, %v10783
  %v10988 = vsel %vm6612, %v10924, %v10785
  %v10989 = vsel %vm6612, %v10925, %v10787
  %v10990 = vsel %vm6612, %v10926, %v10789
  %v10991 = vsel %vm6612, %v10927, %v10791
  %v10992 = vsel %vm6612, %v10928, %v10793
  %v10993 = vsel %vm6612, %v10929, %v10795
  %v10994 = vsel %vm6612, %v10930, %v10797
  %v10995 = vsel %vm6612, %v10931, %v10799
  %v10996 = vsel %vm6612, %v10932, %v10801
  %v10997 = vsel %vm6612, %v10933, %v10803
  %v10998 = vsel %vm6612, %v10934, %v10805
  %v10999 = vsel %vm6612, %v10935, %v10807
  %v11000 = vpack.c.bf16 %v10937, %v10936
  %v11001 = vpack.c.bf16 %v10939, %v10938
  %v11002 = vpack.c.bf16 %v10941, %v10940
  %v11003 = vpack.c.bf16 %v10943, %v10942
  %v11004 = vpack.c.bf16 %v10945, %v10944
  %v11005 = vpack.c.bf16 %v10947, %v10946
  %v11006 = vpack.c.bf16 %v10949, %v10948
  %v11007 = vpack.c.bf16 %v10951, %v10950
  %v11008 = vpack.c.bf16 %v10953, %v10952
  %v11009 = vpack.c.bf16 %v10955, %v10954
  %v11010 = vpack.c.bf16 %v10957, %v10956
  %v11011 = vpack.c.bf16 %v10959, %v10958
  %v11012 = vpack.c.bf16 %v10961, %v10960
  %v11013 = vpack.c.bf16 %v10963, %v10962
  %v11014 = vpack.c.bf16 %v10965, %v10964
  %v11015 = vpack.c.bf16 %v10967, %v10966
  %v11016 = vpack.c.bf16 %v10969, %v10968
  %v11017 = vpack.c.bf16 %v10971, %v10970
  %v11018 = vpack.c.bf16 %v10973, %v10972
  %v11019 = vpack.c.bf16 %v10975, %v10974
  %v11020 = vpack.c.bf16 %v10977, %v10976
  %v11021 = vpack.c.bf16 %v10979, %v10978
  %v11022 = vpack.c.bf16 %v10981, %v10980
  %v11023 = vpack.c.bf16 %v10983, %v10982
  %v11024 = vpack.c.bf16 %v10985, %v10984
  %v11025 = vpack.c.bf16 %v10987, %v10986
  %v11026 = vpack.c.bf16 %v10989, %v10988
  %v11027 = vpack.c.bf16 %v10991, %v10990
  %v11028 = vpack.c.bf16 %v10993, %v10992
  %v11029 = vpack.c.bf16 %v10995, %v10994
  %v11030 = vpack.c.bf16 %v10997, %v10996
  %v11031 = vpack.c.bf16 %v10999, %v10998
  %s11032 = scalar_lea.vmem %s11, 48
  %v11033 = vld [vmem:[%s11032] sm:$0xf]
  %v11034 = vld [vmem:[%s11032 + $0x4] sm:$0xf]
  %v11035 = vld [vmem:[%s11032 + $0x8] sm:$0xf]
  %v11036 = vld [vmem:[%s11032 + $0xc] sm:$0xf]
  %v11037 = vld [vmem:[%s11032 + $0x10] sm:$0xf]
  %v11038 = vld [vmem:[%s11032 + $0x14] sm:$0xf]
  %v11039 = vld [vmem:[%s11032 + $0x18] sm:$0xf]
  %v11040 = vld [vmem:[%s11032 + $0x1c] sm:$0xf]
  %v11041 = vld [vmem:[%s11032 + $0x20] sm:$0xf]
  %v11042 = vld [vmem:[%s11032 + $0x24] sm:$0xf]
  %v11043 = vld [vmem:[%s11032 + $0x28] sm:$0xf]
  %v11044 = vld [vmem:[%s11032 + $0x2c] sm:$0xf]
  %v11045 = vld [vmem:[%s11] sm:$0xf]
  %v11046 = vld [vmem:[%s11 + $0x4] sm:$0xf]
  %v11047 = vld [vmem:[%s11 + $0x8] sm:$0xf]
  %v11048 = vld [vmem:[%s11 + $0xc] sm:$0xf]
  %v11049 = vld [vmem:[%s11 + $0x10] sm:$0xf]
  %v11050 = vld [vmem:[%s11 + $0x14] sm:$0xf]
  %v11051 = vld [vmem:[%s11 + $0x18] sm:$0xf]
  %v11052 = vld [vmem:[%s11 + $0x1c] sm:$0xf]
  %v11053 = vld [vmem:[%s11 + $0x20] sm:$0xf]
  %v11054 = vld [vmem:[%s11 + $0x24] sm:$0xf]
  %v11055 = vld [vmem:[%s11 + $0x28] sm:$0xf]
  %v11056 = vld [vmem:[%s11 + $0x2c] sm:$0xf]
  %v11069 = vunpack.c.l.b16 %v11045
  %v11070 = vunpack.c.l.b16 %v11046
  %v11071 = vunpack.c.l.b16 %v11047
  %v11072 = vunpack.c.l.b16 %v11048
  %v11073 = vunpack.c.l.b16 %v11049
  %v11074 = vunpack.c.l.b16 %v11050
  %v11075 = vunpack.c.l.b16 %v11051
  %v11076 = vunpack.c.l.b16 %v11052
  %v11077 = vunpack.c.l.b16 %v11053
  %v11078 = vunpack.c.l.b16 %v11054
  %v11079 = vunpack.c.l.b16 %v11055
  %v11080 = vunpack.c.l.b16 %v11056
  %v11081 = vpack.c.b16 %v11070, %v11069
  %v11082 = vpack.c.b16 %v11072, %v11071
  %v11083 = vpack.c.b16 %v11074, %v11073
  %v11084 = vpack.c.b16 %v11076, %v11075
  %v11085 = vpack.c.b16 %v11078, %v11077
  %v11086 = vpack.c.b16 %v11080, %v11079
  %v11094 = vsel %vm6770, %v11000, 0
  %v11097 = vsel %vm6770, %v11001, 0
  %v11100 = vsel %vm6770, %v11002, 0
  %v11103 = vsel %vm6770, %v11003, 0
  %v11106 = vsel %vm6770, %v11004, 0
  %v11109 = vsel %vm6770, %v11005, 0
  %v11112 = vsel %vm6770, %v11006, 0
  %v11115 = vsel %vm6770, %v11007, 0
  %v11118 = vsel %vm6770, %v11008, 0
  %v11121 = vsel %vm6770, %v11009, 0
  %v11124 = vsel %vm6770, %v11010, 0
  %v11127 = vsel %vm6770, %v11011, 0
  %v11130 = vsel %vm6770, %v11012, 0
  %v11133 = vsel %vm6770, %v11013, 0
  %v11136 = vsel %vm6770, %v11014, 0
  %v11139 = vsel %vm6770, %v11015, 0
  %v11142 = vsel %vm6770, %v11016, 0
  %v11145 = vsel %vm6770, %v11017, 0
  %v11148 = vsel %vm6770, %v11018, 0
  %v11151 = vsel %vm6770, %v11019, 0
  %v11154 = vsel %vm6770, %v11020, 0
  %v11157 = vsel %vm6770, %v11021, 0
  %v11160 = vsel %vm6770, %v11022, 0
  %v11163 = vsel %vm6770, %v11023, 0
  %v11166 = vsel %vm6770, %v11024, 0
  %v11169 = vsel %vm6770, %v11025, 0
  %v11172 = vsel %vm6770, %v11026, 0
  %v11175 = vsel %vm6770, %v11027, 0
  %v11178 = vsel %vm6770, %v11028, 0
  %v11181 = vsel %vm6770, %v11029, 0
  %v11184 = vsel %vm6770, %v11030, 0
  %v11187 = vsel %vm6770, %v11031, 0
  %11189 = vmatpush.bf16.msra.mxu0 0
  %11190 = vmatpush.bf16.msra.mxu0 0
  %11191 = vmatpush.bf16.msra.mxu0 %v11086
  %11192 = vmatpush.bf16.msra.mxu0 %v11085
  %11193 = vmatpush.bf16.msra.mxu0 %v11084
  %11194 = vmatpush.bf16.msra.mxu0 %v11083
  %11195 = vmatpush.bf16.msra.mxu0 %v11082
  %11196 = vmatpush.bf16.msra.mxu0 %v11081
  %11197 = vmatmul.bf16.gmra.mxu0 %v11094
  %v11198 = vpop.f32.mrf.mxu0
  %v11199 = vadd.f32 0.0, %v11198
  %v11200 = vpop.f32.mrf.mxu0
  %v11201 = vadd.f32 0.0, %v11200
  %11202 = vmatmul.bf16.gmra.mxu0 %v11097
  %v11203 = vpop.f32.mrf.mxu0
  %v11204 = vadd.f32 0.0, %v11203
  %v11205 = vpop.f32.mrf.mxu0
  %v11206 = vadd.f32 0.0, %v11205
  %11207 = vmatmul.bf16.gmra.mxu0 %v11100
  %v11208 = vpop.f32.mrf.mxu0
  %v11209 = vadd.f32 0.0, %v11208
  %v11210 = vpop.f32.mrf.mxu0
  %v11211 = vadd.f32 0.0, %v11210
  %11212 = vmatmul.bf16.gmra.mxu0 %v11103
  %v11213 = vpop.f32.mrf.mxu0
  %v11214 = vadd.f32 0.0, %v11213
  %v11215 = vpop.f32.mrf.mxu0
  %v11216 = vadd.f32 0.0, %v11215
  %11217 = vmatmul.bf16.gmra.mxu0 %v11106
  %v11218 = vpop.f32.mrf.mxu0
  %v11219 = vadd.f32 0.0, %v11218
  %v11220 = vpop.f32.mrf.mxu0
  %v11221 = vadd.f32 0.0, %v11220
  %11222 = vmatmul.bf16.gmra.mxu0 %v11109
  %v11223 = vpop.f32.mrf.mxu0
  %v11224 = vadd.f32 0.0, %v11223
  %v11225 = vpop.f32.mrf.mxu0
  %v11226 = vadd.f32 0.0, %v11225
  %11227 = vmatmul.bf16.gmra.mxu0 %v11112
  %v11228 = vpop.f32.mrf.mxu0
  %v11229 = vadd.f32 0.0, %v11228
  %v11230 = vpop.f32.mrf.mxu0
  %v11231 = vadd.f32 0.0, %v11230
  %11232 = vmatmul.bf16.gmra.mxu0 %v11115
  %v11233 = vpop.f32.mrf.mxu0
  %v11234 = vadd.f32 0.0, %v11233
  %v11235 = vpop.f32.mrf.mxu0
  %v11236 = vadd.f32 0.0, %v11235
  %11237 = vmatmul.bf16.gmra.mxu0 %v11118
  %v11238 = vpop.f32.mrf.mxu0
  %v11239 = vadd.f32 0.0, %v11238
  %v11240 = vpop.f32.mrf.mxu0
  %v11241 = vadd.f32 0.0, %v11240
  %11242 = vmatmul.bf16.gmra.mxu0 %v11121
  %v11243 = vpop.f32.mrf.mxu0
  %v11244 = vadd.f32 0.0, %v11243
  %v11245 = vpop.f32.mrf.mxu0
  %v11246 = vadd.f32 0.0, %v11245
  %11247 = vmatmul.bf16.gmra.mxu0 %v11124
  %v11248 = vpop.f32.mrf.mxu0
  %v11249 = vadd.f32 0.0, %v11248
  %v11250 = vpop.f32.mrf.mxu0
  %v11251 = vadd.f32 0.0, %v11250
  %11252 = vmatmul.bf16.gmra.mxu0 %v11127
  %v11253 = vpop.f32.mrf.mxu0
  %v11254 = vadd.f32 0.0, %v11253
  %v11255 = vpop.f32.mrf.mxu0
  %v11256 = vadd.f32 0.0, %v11255
  %11257 = vmatmul.bf16.gmra.mxu0 %v11130
  %v11258 = vpop.f32.mrf.mxu0
  %v11259 = vadd.f32 0.0, %v11258
  %v11260 = vpop.f32.mrf.mxu0
  %v11261 = vadd.f32 0.0, %v11260
  %11262 = vmatmul.bf16.gmra.mxu0 %v11133
  %v11263 = vpop.f32.mrf.mxu0
  %v11264 = vadd.f32 0.0, %v11263
  %v11265 = vpop.f32.mrf.mxu0
  %v11266 = vadd.f32 0.0, %v11265
  %11267 = vmatmul.bf16.gmra.mxu0 %v11136
  %v11268 = vpop.f32.mrf.mxu0
  %v11269 = vadd.f32 0.0, %v11268
  %v11270 = vpop.f32.mrf.mxu0
  %v11271 = vadd.f32 0.0, %v11270
  %11272 = vmatmul.bf16.gmra.mxu0 %v11139
  %v11273 = vpop.f32.mrf.mxu0
  %v11274 = vadd.f32 0.0, %v11273
  %v11275 = vpop.f32.mrf.mxu0
  %v11276 = vadd.f32 0.0, %v11275
  %11277 = vmatmul.bf16.gmra.mxu0 %v11142
  %v11278 = vpop.f32.mrf.mxu0
  %v11279 = vadd.f32 0.0, %v11278
  %v11280 = vpop.f32.mrf.mxu0
  %v11281 = vadd.f32 0.0, %v11280
  %11282 = vmatmul.bf16.gmra.mxu0 %v11145
  %v11283 = vpop.f32.mrf.mxu0
  %v11284 = vadd.f32 0.0, %v11283
  %v11285 = vpop.f32.mrf.mxu0
  %v11286 = vadd.f32 0.0, %v11285
  %11287 = vmatmul.bf16.gmra.mxu0 %v11148
  %v11288 = vpop.f32.mrf.mxu0
  %v11289 = vadd.f32 0.0, %v11288
  %v11290 = vpop.f32.mrf.mxu0
  %v11291 = vadd.f32 0.0, %v11290
  %11292 = vmatmul.bf16.gmra.mxu0 %v11151
  %v11293 = vpop.f32.mrf.mxu0
  %v11294 = vadd.f32 0.0, %v11293
  %v11295 = vpop.f32.mrf.mxu0
  %v11296 = vadd.f32 0.0, %v11295
  %11297 = vmatmul.bf16.gmra.mxu0 %v11154
  %v11298 = vpop.f32.mrf.mxu0
  %v11299 = vadd.f32 0.0, %v11298
  %v11300 = vpop.f32.mrf.mxu0
  %v11301 = vadd.f32 0.0, %v11300
  %11302 = vmatmul.bf16.gmra.mxu0 %v11157
  %v11303 = vpop.f32.mrf.mxu0
  %v11304 = vadd.f32 0.0, %v11303
  %v11305 = vpop.f32.mrf.mxu0
  %v11306 = vadd.f32 0.0, %v11305
  %11307 = vmatmul.bf16.gmra.mxu0 %v11160
  %v11308 = vpop.f32.mrf.mxu0
  %v11309 = vadd.f32 0.0, %v11308
  %v11310 = vpop.f32.mrf.mxu0
  %v11311 = vadd.f32 0.0, %v11310
  %11312 = vmatmul.bf16.gmra.mxu0 %v11163
  %v11313 = vpop.f32.mrf.mxu0
  %v11314 = vadd.f32 0.0, %v11313
  %v11315 = vpop.f32.mrf.mxu0
  %v11316 = vadd.f32 0.0, %v11315
  %11317 = vmatmul.bf16.gmra.mxu0 %v11166
  %v11318 = vpop.f32.mrf.mxu0
  %v11319 = vadd.f32 0.0, %v11318
  %v11320 = vpop.f32.mrf.mxu0
  %v11321 = vadd.f32 0.0, %v11320
  %11322 = vmatmul.bf16.gmra.mxu0 %v11169
  %v11323 = vpop.f32.mrf.mxu0
  %v11324 = vadd.f32 0.0, %v11323
  %v11325 = vpop.f32.mrf.mxu0
  %v11326 = vadd.f32 0.0, %v11325
  %11327 = vmatmul.bf16.gmra.mxu0 %v11172
  %v11328 = vpop.f32.mrf.mxu0
  %v11329 = vadd.f32 0.0, %v11328
  %v11330 = vpop.f32.mrf.mxu0
  %v11331 = vadd.f32 0.0, %v11330
  %11332 = vmatmul.bf16.gmra.mxu0 %v11175
  %v11333 = vpop.f32.mrf.mxu0
  %v11334 = vadd.f32 0.0, %v11333
  %v11335 = vpop.f32.mrf.mxu0
  %v11336 = vadd.f32 0.0, %v11335
  %11337 = vmatmul.bf16.gmra.mxu0 %v11178
  %v11338 = vpop.f32.mrf.mxu0
  %v11339 = vadd.f32 0.0, %v11338
  %v11340 = vpop.f32.mrf.mxu0
  %v11341 = vadd.f32 0.0, %v11340
  %11342 = vmatmul.bf16.gmra.mxu0 %v11181
  %v11343 = vpop.f32.mrf.mxu0
  %v11344 = vadd.f32 0.0, %v11343
  %v11345 = vpop.f32.mrf.mxu0
  %v11346 = vadd.f32 0.0, %v11345
  %11347 = vmatmul.bf16.gmra.mxu0 %v11184
  %v11348 = vpop.f32.mrf.mxu0
  %v11349 = vadd.f32 0.0, %v11348
  %v11350 = vpop.f32.mrf.mxu0
  %v11351 = vadd.f32 0.0, %v11350
  %11352 = vmatmul.bf16.gmra.mxu0 %v11187
  %v11353 = vpop.f32.mrf.mxu0
  %v11354 = vadd.f32 0.0, %v11353
  %v11355 = vpop.f32.mrf.mxu0
  %v11356 = vadd.f32 0.0, %v11355
  %11357 = vdwg.mxu0
  %s11358 = scalar_lea.vmem %s11, 96
  %v11359 = vld [vmem:[%s11358] sm:$0xf]
  %v11360 = vld [vmem:[%s11358 + $0x4] sm:$0xf]
  %v11361 = vld [vmem:[%s11358 + $0x8] sm:$0xf]
  %v11362 = vld [vmem:[%s11358 + $0xc] sm:$0xf]
  %v11363 = vld [vmem:[%s11358 + $0x10] sm:$0xf]
  %v11364 = vld [vmem:[%s11358 + $0x14] sm:$0xf]
  %v11365 = vld [vmem:[%s11358 + $0x18] sm:$0xf]
  %v11366 = vld [vmem:[%s11358 + $0x1c] sm:$0xf]
  %v11367 = vld [vmem:[%s11358 + $0x20] sm:$0xf]
  %v11368 = vld [vmem:[%s11358 + $0x24] sm:$0xf]
  %v11369 = vld [vmem:[%s11358 + $0x28] sm:$0xf]
  %v11370 = vld [vmem:[%s11358 + $0x2c] sm:$0xf]
  %v11383 = vunpack.c.l.b16 %v11359
  %v11384 = vunpack.c.l.b16 %v11360
  %v11385 = vunpack.c.l.b16 %v11361
  %v11386 = vunpack.c.l.b16 %v11362
  %v11387 = vunpack.c.l.b16 %v11363
  %v11388 = vunpack.c.l.b16 %v11364
  %v11389 = vunpack.c.l.b16 %v11365
  %v11390 = vunpack.c.l.b16 %v11366
  %v11391 = vunpack.c.l.b16 %v11367
  %v11392 = vunpack.c.l.b16 %v11368
  %v11393 = vunpack.c.l.b16 %v11369
  %v11394 = vunpack.c.l.b16 %v11370
  %v11395 = vpack.c.b16 %v11384, %v11383
  %v11396 = vpack.c.b16 %v11386, %v11385
  %v11397 = vpack.c.b16 %v11388, %v11387
  %v11398 = vpack.c.b16 %v11390, %v11389
  %v11399 = vpack.c.b16 %v11392, %v11391
  %v11400 = vpack.c.b16 %v11394, %v11393
  %11407 = vmatpush.bf16.msra.mxu0 0
  %11408 = vmatpush.bf16.msra.mxu0 0
  %11409 = vmatpush.bf16.msra.mxu0 %v11400
  %11410 = vmatpush.bf16.msra.mxu0 %v11399
  %11411 = vmatpush.bf16.msra.mxu0 %v11398
  %11412 = vmatpush.bf16.msra.mxu0 %v11397
  %11413 = vmatpush.bf16.msra.mxu0 %v11396
  %11414 = vmatpush.bf16.msra.mxu0 %v11395
  %11415 = vmatmul.bf16.gmra.mxu0 %v11094
  %v11416 = vpop.f32.mrf.mxu0
  %v11417 = vadd.f32 0.0, %v11416
  %v11418 = vpop.f32.mrf.mxu0
  %v11419 = vadd.f32 0.0, %v11418
  %11420 = vmatmul.bf16.gmra.mxu0 %v11097
  %v11421 = vpop.f32.mrf.mxu0
  %v11422 = vadd.f32 0.0, %v11421
  %v11423 = vpop.f32.mrf.mxu0
  %v11424 = vadd.f32 0.0, %v11423
  %11425 = vmatmul.bf16.gmra.mxu0 %v11100
  %v11426 = vpop.f32.mrf.mxu0
  %v11427 = vadd.f32 0.0, %v11426
  %v11428 = vpop.f32.mrf.mxu0
  %v11429 = vadd.f32 0.0, %v11428
  %11430 = vmatmul.bf16.gmra.mxu0 %v11103
  %v11431 = vpop.f32.mrf.mxu0
  %v11432 = vadd.f32 0.0, %v11431
  %v11433 = vpop.f32.mrf.mxu0
  %v11434 = vadd.f32 0.0, %v11433
  %11435 = vmatmul.bf16.gmra.mxu0 %v11106
  %v11436 = vpop.f32.mrf.mxu0
  %v11437 = vadd.f32 0.0, %v11436
  %v11438 = vpop.f32.mrf.mxu0
  %v11439 = vadd.f32 0.0, %v11438
  %11440 = vmatmul.bf16.gmra.mxu0 %v11109
  %v11441 = vpop.f32.mrf.mxu0
  %v11442 = vadd.f32 0.0, %v11441
  %v11443 = vpop.f32.mrf.mxu0
  %v11444 = vadd.f32 0.0, %v11443
  %11445 = vmatmul.bf16.gmra.mxu0 %v11112
  %v11446 = vpop.f32.mrf.mxu0
  %v11447 = vadd.f32 0.0, %v11446
  %v11448 = vpop.f32.mrf.mxu0
  %v11449 = vadd.f32 0.0, %v11448
  %11450 = vmatmul.bf16.gmra.mxu0 %v11115
  %v11451 = vpop.f32.mrf.mxu0
  %v11452 = vadd.f32 0.0, %v11451
  %v11453 = vpop.f32.mrf.mxu0
  %v11454 = vadd.f32 0.0, %v11453
  %11455 = vmatmul.bf16.gmra.mxu0 %v11118
  %v11456 = vpop.f32.mrf.mxu0
  %v11457 = vadd.f32 0.0, %v11456
  %v11458 = vpop.f32.mrf.mxu0
  %v11459 = vadd.f32 0.0, %v11458
  %11460 = vmatmul.bf16.gmra.mxu0 %v11121
  %v11461 = vpop.f32.mrf.mxu0
  %v11462 = vadd.f32 0.0, %v11461
  %v11463 = vpop.f32.mrf.mxu0
  %v11464 = vadd.f32 0.0, %v11463
  %11465 = vmatmul.bf16.gmra.mxu0 %v11124
  %v11466 = vpop.f32.mrf.mxu0
  %v11467 = vadd.f32 0.0, %v11466
  %v11468 = vpop.f32.mrf.mxu0
  %v11469 = vadd.f32 0.0, %v11468
  %11470 = vmatmul.bf16.gmra.mxu0 %v11127
  %v11471 = vpop.f32.mrf.mxu0
  %v11472 = vadd.f32 0.0, %v11471
  %v11473 = vpop.f32.mrf.mxu0
  %v11474 = vadd.f32 0.0, %v11473
  %11475 = vmatmul.bf16.gmra.mxu0 %v11130
  %v11476 = vpop.f32.mrf.mxu0
  %v11477 = vadd.f32 0.0, %v11476
  %v11478 = vpop.f32.mrf.mxu0
  %v11479 = vadd.f32 0.0, %v11478
  %11480 = vmatmul.bf16.gmra.mxu0 %v11133
  %v11481 = vpop.f32.mrf.mxu0
  %v11482 = vadd.f32 0.0, %v11481
  %v11483 = vpop.f32.mrf.mxu0
  %v11484 = vadd.f32 0.0, %v11483
  %11485 = vmatmul.bf16.gmra.mxu0 %v11136
  %v11486 = vpop.f32.mrf.mxu0
  %v11487 = vadd.f32 0.0, %v11486
  %v11488 = vpop.f32.mrf.mxu0
  %v11489 = vadd.f32 0.0, %v11488
  %11490 = vmatmul.bf16.gmra.mxu0 %v11139
  %v11491 = vpop.f32.mrf.mxu0
  %v11492 = vadd.f32 0.0, %v11491
  %v11493 = vpop.f32.mrf.mxu0
  %v11494 = vadd.f32 0.0, %v11493
  %11495 = vmatmul.bf16.gmra.mxu0 %v11142
  %v11496 = vpop.f32.mrf.mxu0
  %v11497 = vadd.f32 0.0, %v11496
  %v11498 = vpop.f32.mrf.mxu0
  %v11499 = vadd.f32 0.0, %v11498
  %11500 = vmatmul.bf16.gmra.mxu0 %v11145
  %v11501 = vpop.f32.mrf.mxu0
  %v11502 = vadd.f32 0.0, %v11501
  %v11503 = vpop.f32.mrf.mxu0
  %v11504 = vadd.f32 0.0, %v11503
  %11505 = vmatmul.bf16.gmra.mxu0 %v11148
  %v11506 = vpop.f32.mrf.mxu0
  %v11507 = vadd.f32 0.0, %v11506
  %v11508 = vpop.f32.mrf.mxu0
  %v11509 = vadd.f32 0.0, %v11508
  %11510 = vmatmul.bf16.gmra.mxu0 %v11151
  %v11511 = vpop.f32.mrf.mxu0
  %v11512 = vadd.f32 0.0, %v11511
  %v11513 = vpop.f32.mrf.mxu0
  %v11514 = vadd.f32 0.0, %v11513
  %11515 = vmatmul.bf16.gmra.mxu0 %v11154
  %v11516 = vpop.f32.mrf.mxu0
  %v11517 = vadd.f32 0.0, %v11516
  %v11518 = vpop.f32.mrf.mxu0
  %v11519 = vadd.f32 0.0, %v11518
  %11520 = vmatmul.bf16.gmra.mxu0 %v11157
  %v11521 = vpop.f32.mrf.mxu0
  %v11522 = vadd.f32 0.0, %v11521
  %v11523 = vpop.f32.mrf.mxu0
  %v11524 = vadd.f32 0.0, %v11523
  %11525 = vmatmul.bf16.gmra.mxu0 %v11160
  %v11526 = vpop.f32.mrf.mxu0
  %v11527 = vadd.f32 0.0, %v11526
  %v11528 = vpop.f32.mrf.mxu0
  %v11529 = vadd.f32 0.0, %v11528
  %11530 = vmatmul.bf16.gmra.mxu0 %v11163
  %v11531 = vpop.f32.mrf.mxu0
  %v11532 = vadd.f32 0.0, %v11531
  %v11533 = vpop.f32.mrf.mxu0
  %v11534 = vadd.f32 0.0, %v11533
  %11535 = vmatmul.bf16.gmra.mxu0 %v11166
  %v11536 = vpop.f32.mrf.mxu0
  %v11537 = vadd.f32 0.0, %v11536
  %v11538 = vpop.f32.mrf.mxu0
  %v11539 = vadd.f32 0.0, %v11538
  %11540 = vmatmul.bf16.gmra.mxu0 %v11169
  %v11541 = vpop.f32.mrf.mxu0
  %v11542 = vadd.f32 0.0, %v11541
  %v11543 = vpop.f32.mrf.mxu0
  %v11544 = vadd.f32 0.0, %v11543
  %11545 = vmatmul.bf16.gmra.mxu0 %v11172
  %v11546 = vpop.f32.mrf.mxu0
  %v11547 = vadd.f32 0.0, %v11546
  %v11548 = vpop.f32.mrf.mxu0
  %v11549 = vadd.f32 0.0, %v11548
  %11550 = vmatmul.bf16.gmra.mxu0 %v11175
  %v11551 = vpop.f32.mrf.mxu0
  %v11552 = vadd.f32 0.0, %v11551
  %v11553 = vpop.f32.mrf.mxu0
  %v11554 = vadd.f32 0.0, %v11553
  %11555 = vmatmul.bf16.gmra.mxu0 %v11178
  %v11556 = vpop.f32.mrf.mxu0
  %v11557 = vadd.f32 0.0, %v11556
  %v11558 = vpop.f32.mrf.mxu0
  %v11559 = vadd.f32 0.0, %v11558
  %11560 = vmatmul.bf16.gmra.mxu0 %v11181
  %v11561 = vpop.f32.mrf.mxu0
  %v11562 = vadd.f32 0.0, %v11561
  %v11563 = vpop.f32.mrf.mxu0
  %v11564 = vadd.f32 0.0, %v11563
  %11565 = vmatmul.bf16.gmra.mxu0 %v11184
  %v11566 = vpop.f32.mrf.mxu0
  %v11567 = vadd.f32 0.0, %v11566
  %v11568 = vpop.f32.mrf.mxu0
  %v11569 = vadd.f32 0.0, %v11568
  %11570 = vmatmul.bf16.gmra.mxu0 %v11187
  %v11571 = vpop.f32.mrf.mxu0
  %v11572 = vadd.f32 0.0, %v11571
  %v11573 = vpop.f32.mrf.mxu0
  %v11574 = vadd.f32 0.0, %v11573
  %11575 = vdwg.mxu0
  %v11576 = vsel %vm4830, %v11354, 0.0
  %v11577 = vsel %vm4831, %v11356, 0.0
  %v11578 = vsel %vm4832, %v11199, 0.0
  %v11579 = vsel %vm4833, %v11201, 0.0
  %v11580 = vsel %vm4834, %v11204, 0.0
  %v11581 = vsel %vm4835, %v11206, 0.0
  %v11582 = vsel %vm4836, %v11209, 0.0
  %v11583 = vsel %vm4837, %v11211, 0.0
  %v11584 = vsel %vm4838, %v11214, 0.0
  %v11585 = vsel %vm4839, %v11216, 0.0
  %v11586 = vsel %vm4840, %v11219, 0.0
  %v11587 = vsel %vm4841, %v11221, 0.0
  %v11588 = vsel %vm4842, %v11224, 0.0
  %v11589 = vsel %vm4843, %v11226, 0.0
  %v11590 = vsel %vm4844, %v11229, 0.0
  %v11591 = vsel %vm4845, %v11231, 0.0
  %v11592 = vsel %vm4846, %v11234, 0.0
  %v11593 = vsel %vm4847, %v11236, 0.0
  %v11594 = vsel %vm4848, %v11239, 0.0
  %v11595 = vsel %vm4849, %v11241, 0.0
  %v11596 = vsel %vm4850, %v11244, 0.0
  %v11597 = vsel %vm4851, %v11246, 0.0
  %v11598 = vsel %vm4852, %v11249, 0.0
  %v11599 = vsel %vm4853, %v11251, 0.0
  %v11600 = vsel %vm4854, %v11254, 0.0
  %v11601 = vsel %vm4855, %v11256, 0.0
  %v11602 = vsel %vm4856, %v11259, 0.0
  %v11603 = vsel %vm4857, %v11261, 0.0
  %v11604 = vsel %vm4858, %v11264, 0.0
  %v11605 = vsel %vm4859, %v11266, 0.0
  %v11606 = vsel %vm4860, %v11269, 0.0
  %v11607 = vsel %vm4861, %v11271, 0.0
  %v11608 = vsel %vm4862, %v11274, 0.0
  %v11609 = vsel %vm4863, %v11276, 0.0
  %v11610 = vsel %vm4864, %v11279, 0.0
  %v11611 = vsel %vm4865, %v11281, 0.0
  %v11612 = vsel %vm4866, %v11284, 0.0
  %v11613 = vsel %vm4867, %v11286, 0.0
  %v11614 = vsel %vm4868, %v11289, 0.0
  %v11615 = vsel %vm4869, %v11291, 0.0
  %v11616 = vsel %vm4870, %v11294, 0.0
  %v11617 = vsel %vm4871, %v11296, 0.0
  %v11618 = vsel %vm4872, %v11299, 0.0
  %v11619 = vsel %vm4873, %v11301, 0.0
  %v11620 = vsel %vm4874, %v11304, 0.0
  %v11621 = vsel %vm4875, %v11306, 0.0
  %v11622 = vsel %vm4876, %v11309, 0.0
  %v11623 = vsel %vm4877, %v11311, 0.0
  %v11624 = vsel %vm4878, %v11314, 0.0
  %v11625 = vsel %vm4879, %v11316, 0.0
  %v11626 = vsel %vm4880, %v11319, 0.0
  %v11627 = vsel %vm4881, %v11321, 0.0
  %v11628 = vsel %vm4882, %v11324, 0.0
  %v11629 = vsel %vm4883, %v11326, 0.0
  %v11630 = vsel %vm4884, %v11329, 0.0
  %v11631 = vsel %vm4885, %v11331, 0.0
  %v11632 = vsel %vm4886, %v11334, 0.0
  %v11633 = vsel %vm4887, %v11336, 0.0
  %v11634 = vsel %vm4888, %v11339, 0.0
  %v11635 = vsel %vm4889, %v11341, 0.0
  %v11636 = vsel %vm4890, %v11344, 0.0
  %v11637 = vsel %vm4891, %v11346, 0.0
  %v11638 = vsel %vm4892, %v11349, 0.0
  %v11639 = vsel %vm4893, %v11351, 0.0
  %v11652 = vunpack.c.l.b16 %v11033
  %v11653 = vunpack.c.l.b16 %v11034
  %v11654 = vunpack.c.l.b16 %v11035
  %v11655 = vunpack.c.l.b16 %v11036
  %v11656 = vunpack.c.l.b16 %v11037
  %v11657 = vunpack.c.l.b16 %v11038
  %v11658 = vunpack.c.l.b16 %v11039
  %v11659 = vunpack.c.l.b16 %v11040
  %v11660 = vunpack.c.l.b16 %v11041
  %v11661 = vunpack.c.l.b16 %v11042
  %v11662 = vunpack.c.l.b16 %v11043
  %v11663 = vunpack.c.l.b16 %v11044
  %v11664 = vpack.c.b16 %v11653, %v11652
  %v11665 = vpack.c.b16 %v11655, %v11654
  %v11666 = vpack.c.b16 %v11657, %v11656
  %v11667 = vpack.c.b16 %v11659, %v11658
  %v11668 = vpack.c.b16 %v11661, %v11660
  %v11669 = vpack.c.b16 %v11663, %v11662
  %11676 = vmatpush.bf16.msra.mxu0 0
  %11677 = vmatpush.bf16.msra.mxu0 0
  %11678 = vmatpush.bf16.msra.mxu0 %v11669
  %11679 = vmatpush.bf16.msra.mxu0 %v11668
  %11680 = vmatpush.bf16.msra.mxu0 %v11667
  %11681 = vmatpush.bf16.msra.mxu0 %v11666
  %11682 = vmatpush.bf16.msra.mxu0 %v11665
  %11683 = vmatpush.bf16.msra.mxu0 %v11664
  %11684 = vmatmul.bf16.gmra.mxu0 %v11094
  %v11685 = vpop.f32.mrf.mxu0
  %v11686 = vadd.f32 %v11576, %v11685
  %v11687 = vpop.f32.mrf.mxu0
  %v11688 = vadd.f32 %v11577, %v11687
  %11689 = vmatmul.bf16.gmra.mxu0 %v11097
  %v11690 = vpop.f32.mrf.mxu0
  %v11691 = vadd.f32 %v11578, %v11690
  %v11692 = vpop.f32.mrf.mxu0
  %v11693 = vadd.f32 %v11579, %v11692
  %11694 = vmatmul.bf16.gmra.mxu0 %v11100
  %v11695 = vpop.f32.mrf.mxu0
  %v11696 = vadd.f32 %v11580, %v11695
  %v11697 = vpop.f32.mrf.mxu0
  %v11698 = vadd.f32 %v11581, %v11697
  %11699 = vmatmul.bf16.gmra.mxu0 %v11103
  %v11700 = vpop.f32.mrf.mxu0
  %v11701 = vadd.f32 %v11582, %v11700
  %v11702 = vpop.f32.mrf.mxu0
  %v11703 = vadd.f32 %v11583, %v11702
  %11704 = vmatmul.bf16.gmra.mxu0 %v11106
  %v11705 = vpop.f32.mrf.mxu0
  %v11706 = vadd.f32 %v11584, %v11705
  %v11707 = vpop.f32.mrf.mxu0
  %v11708 = vadd.f32 %v11585, %v11707
  %11709 = vmatmul.bf16.gmra.mxu0 %v11109
  %v11710 = vpop.f32.mrf.mxu0
  %v11711 = vadd.f32 %v11586, %v11710
  %v11712 = vpop.f32.mrf.mxu0
  %v11713 = vadd.f32 %v11587, %v11712
  %11714 = vmatmul.bf16.gmra.mxu0 %v11112
  %v11715 = vpop.f32.mrf.mxu0
  %v11716 = vadd.f32 %v11588, %v11715
  %v11717 = vpop.f32.mrf.mxu0
  %v11718 = vadd.f32 %v11589, %v11717
  %11719 = vmatmul.bf16.gmra.mxu0 %v11115
  %v11720 = vpop.f32.mrf.mxu0
  %v11721 = vadd.f32 %v11590, %v11720
  %v11722 = vpop.f32.mrf.mxu0
  %v11723 = vadd.f32 %v11591, %v11722
  %11724 = vmatmul.bf16.gmra.mxu0 %v11118
  %v11725 = vpop.f32.mrf.mxu0
  %v11726 = vadd.f32 %v11592, %v11725
  %v11727 = vpop.f32.mrf.mxu0
  %v11728 = vadd.f32 %v11593, %v11727
  %11729 = vmatmul.bf16.gmra.mxu0 %v11121
  %v11730 = vpop.f32.mrf.mxu0
  %v11731 = vadd.f32 %v11594, %v11730
  %v11732 = vpop.f32.mrf.mxu0
  %v11733 = vadd.f32 %v11595, %v11732
  %11734 = vmatmul.bf16.gmra.mxu0 %v11124
  %v11735 = vpop.f32.mrf.mxu0
  %v11736 = vadd.f32 %v11596, %v11735
  %v11737 = vpop.f32.mrf.mxu0
  %v11738 = vadd.f32 %v11597, %v11737
  %11739 = vmatmul.bf16.gmra.mxu0 %v11127
  %v11740 = vpop.f32.mrf.mxu0
  %v11741 = vadd.f32 %v11598, %v11740
  %v11742 = vpop.f32.mrf.mxu0
  %v11743 = vadd.f32 %v11599, %v11742
  %11744 = vmatmul.bf16.gmra.mxu0 %v11130
  %v11745 = vpop.f32.mrf.mxu0
  %v11746 = vadd.f32 %v11600, %v11745
  %v11747 = vpop.f32.mrf.mxu0
  %v11748 = vadd.f32 %v11601, %v11747
  %11749 = vmatmul.bf16.gmra.mxu0 %v11133
  %v11750 = vpop.f32.mrf.mxu0
  %v11751 = vadd.f32 %v11602, %v11750
  %v11752 = vpop.f32.mrf.mxu0
  %v11753 = vadd.f32 %v11603, %v11752
  %11754 = vmatmul.bf16.gmra.mxu0 %v11136
  %v11755 = vpop.f32.mrf.mxu0
  %v11756 = vadd.f32 %v11604, %v11755
  %v11757 = vpop.f32.mrf.mxu0
  %v11758 = vadd.f32 %v11605, %v11757
  %11759 = vmatmul.bf16.gmra.mxu0 %v11139
  %v11760 = vpop.f32.mrf.mxu0
  %v11761 = vadd.f32 %v11606, %v11760
  %v11762 = vpop.f32.mrf.mxu0
  %v11763 = vadd.f32 %v11607, %v11762
  %11764 = vmatmul.bf16.gmra.mxu0 %v11142
  %v11765 = vpop.f32.mrf.mxu0
  %v11766 = vadd.f32 %v11608, %v11765
  %v11767 = vpop.f32.mrf.mxu0
  %v11768 = vadd.f32 %v11609, %v11767
  %11769 = vmatmul.bf16.gmra.mxu0 %v11145
  %v11770 = vpop.f32.mrf.mxu0
  %v11771 = vadd.f32 %v11610, %v11770
  %v11772 = vpop.f32.mrf.mxu0
  %v11773 = vadd.f32 %v11611, %v11772
  %11774 = vmatmul.bf16.gmra.mxu0 %v11148
  %v11775 = vpop.f32.mrf.mxu0
  %v11776 = vadd.f32 %v11612, %v11775
  %v11777 = vpop.f32.mrf.mxu0
  %v11778 = vadd.f32 %v11613, %v11777
  %11779 = vmatmul.bf16.gmra.mxu0 %v11151
  %v11780 = vpop.f32.mrf.mxu0
  %v11781 = vadd.f32 %v11614, %v11780
  %v11782 = vpop.f32.mrf.mxu0
  %v11783 = vadd.f32 %v11615, %v11782
  %11784 = vmatmul.bf16.gmra.mxu0 %v11154
  %v11785 = vpop.f32.mrf.mxu0
  %v11786 = vadd.f32 %v11616, %v11785
  %v11787 = vpop.f32.mrf.mxu0
  %v11788 = vadd.f32 %v11617, %v11787
  %11789 = vmatmul.bf16.gmra.mxu0 %v11157
  %v11790 = vpop.f32.mrf.mxu0
  %v11791 = vadd.f32 %v11618, %v11790
  %v11792 = vpop.f32.mrf.mxu0
  %v11793 = vadd.f32 %v11619, %v11792
  %11794 = vmatmul.bf16.gmra.mxu0 %v11160
  %v11795 = vpop.f32.mrf.mxu0
  %v11796 = vadd.f32 %v11620, %v11795
  %v11797 = vpop.f32.mrf.mxu0
  %v11798 = vadd.f32 %v11621, %v11797
  %11799 = vmatmul.bf16.gmra.mxu0 %v11163
  %v11800 = vpop.f32.mrf.mxu0
  %v11801 = vadd.f32 %v11622, %v11800
  %v11802 = vpop.f32.mrf.mxu0
  %v11803 = vadd.f32 %v11623, %v11802
  %11804 = vmatmul.bf16.gmra.mxu0 %v11166
  %v11805 = vpop.f32.mrf.mxu0
  %v11806 = vadd.f32 %v11624, %v11805
  %v11807 = vpop.f32.mrf.mxu0
  %v11808 = vadd.f32 %v11625, %v11807
  %11809 = vmatmul.bf16.gmra.mxu0 %v11169
  %v11810 = vpop.f32.mrf.mxu0
  %v11811 = vadd.f32 %v11626, %v11810
  %v11812 = vpop.f32.mrf.mxu0
  %v11813 = vadd.f32 %v11627, %v11812
  %11814 = vmatmul.bf16.gmra.mxu0 %v11172
  %v11815 = vpop.f32.mrf.mxu0
  %v11816 = vadd.f32 %v11628, %v11815
  %v11817 = vpop.f32.mrf.mxu0
  %v11818 = vadd.f32 %v11629, %v11817
  %11819 = vmatmul.bf16.gmra.mxu0 %v11175
  %v11820 = vpop.f32.mrf.mxu0
  %v11821 = vadd.f32 %v11630, %v11820
  %v11822 = vpop.f32.mrf.mxu0
  %v11823 = vadd.f32 %v11631, %v11822
  %11824 = vmatmul.bf16.gmra.mxu0 %v11178
  %v11825 = vpop.f32.mrf.mxu0
  %v11826 = vadd.f32 %v11632, %v11825
  %v11827 = vpop.f32.mrf.mxu0
  %v11828 = vadd.f32 %v11633, %v11827
  %11829 = vmatmul.bf16.gmra.mxu0 %v11181
  %v11830 = vpop.f32.mrf.mxu0
  %v11831 = vadd.f32 %v11634, %v11830
  %v11832 = vpop.f32.mrf.mxu0
  %v11833 = vadd.f32 %v11635, %v11832
  %11834 = vmatmul.bf16.gmra.mxu0 %v11184
  %v11835 = vpop.f32.mrf.mxu0
  %v11836 = vadd.f32 %v11636, %v11835
  %v11837 = vpop.f32.mrf.mxu0
  %v11838 = vadd.f32 %v11637, %v11837
  %11839 = vmatmul.bf16.gmra.mxu0 %v11187
  %v11840 = vpop.f32.mrf.mxu0
  %v11841 = vadd.f32 %v11638, %v11840
  %v11842 = vpop.f32.mrf.mxu0
  %v11843 = vadd.f32 %v11639, %v11842
  %11844 = vdwg.mxu0
  %v11845 = vsel %vm5199, %v11422, 0.0
  %v11846 = vsel %vm5200, %v11424, 0.0
  %v11847 = vsel %vm5201, %v11427, 0.0
  %v11848 = vsel %vm5202, %v11429, 0.0
  %v11849 = vsel %vm5203, %v11432, 0.0
  %v11850 = vsel %vm5204, %v11434, 0.0
  %v11851 = vsel %vm5205, %v11437, 0.0
  %v11852 = vsel %vm5206, %v11439, 0.0
  %v11853 = vsel %vm5207, %v11442, 0.0
  %v11854 = vsel %vm5208, %v11444, 0.0
  %v11855 = vsel %vm5209, %v11447, 0.0
  %v11856 = vsel %vm5210, %v11449, 0.0
  %v11857 = vsel %vm5211, %v11452, 0.0
  %v11858 = vsel %vm5212, %v11454, 0.0
  %v11859 = vsel %vm5213, %v11457, 0.0
  %v11860 = vsel %vm5214, %v11459, 0.0
  %v11861 = vsel %vm5215, %v11462, 0.0
  %v11862 = vsel %vm5216, %v11464, 0.0
  %v11863 = vsel %vm5217, %v11467, 0.0
  %v11864 = vsel %vm5218, %v11469, 0.0
  %v11865 = vsel %vm5219, %v11472, 0.0
  %v11866 = vsel %vm5220, %v11474, 0.0
  %v11867 = vsel %vm5221, %v11477, 0.0
  %v11868 = vsel %vm5222, %v11479, 0.0
  %v11869 = vsel %vm5223, %v11482, 0.0
  %v11870 = vsel %vm5224, %v11484, 0.0
  %v11871 = vsel %vm5225, %v11487, 0.0
  %v11872 = vsel %vm5226, %v11489, 0.0
  %v11873 = vsel %vm5227, %v11492, 0.0
  %v11874 = vsel %vm5228, %v11494, 0.0
  %v11875 = vsel %vm5229, %v11497, 0.0
  %v11876 = vsel %vm5230, %v11499, 0.0
  %v11877 = vsel %vm5231, %v11502, 0.0
  %v11878 = vsel %vm5232, %v11504, 0.0
  %v11879 = vsel %vm5233, %v11507, 0.0
  %v11880 = vsel %vm5234, %v11509, 0.0
  %v11881 = vsel %vm5235, %v11512, 0.0
  %v11882 = vsel %vm5236, %v11514, 0.0
  %v11883 = vsel %vm5237, %v11517, 0.0
  %v11884 = vsel %vm5238, %v11519, 0.0
  %v11885 = vsel %vm5239, %v11522, 0.0
  %v11886 = vsel %vm5240, %v11524, 0.0
  %v11887 = vsel %vm5241, %v11527, 0.0
  %v11888 = vsel %vm5242, %v11529, 0.0
  %v11889 = vsel %vm5243, %v11532, 0.0
  %v11890 = vsel %vm5244, %v11534, 0.0
  %v11891 = vsel %vm5245, %v11537, 0.0
  %v11892 = vsel %vm5246, %v11539, 0.0
  %v11893 = vsel %vm5247, %v11542, 0.0
  %v11894 = vsel %vm5248, %v11544, 0.0
  %v11895 = vsel %vm5249, %v11547, 0.0
  %v11896 = vsel %vm5250, %v11549, 0.0
  %v11897 = vsel %vm5251, %v11552, 0.0
  %v11898 = vsel %vm5252, %v11554, 0.0
  %v11899 = vsel %vm5253, %v11557, 0.0
  %v11900 = vsel %vm5254, %v11559, 0.0
  %v11901 = vsel %vm5255, %v11562, 0.0
  %v11902 = vsel %vm5256, %v11564, 0.0
  %v11903 = vsel %vm5257, %v11567, 0.0
  %v11904 = vsel %vm5258, %v11569, 0.0
  %v11905 = vsel %vm5259, %v11572, 0.0
  %v11906 = vsel %vm5260, %v11574, 0.0
  %v11907 = vsel %vm5261, %v11417, 0.0
  %v11908 = vsel %vm5262, %v11419, 0.0
  %v11909 = vadd.f32 %v11686, %v11845
  %v11910 = vadd.f32 %v11688, %v11846
  %v11911 = vadd.f32 %v11691, %v11847
  %v11912 = vadd.f32 %v11693, %v11848
  %v11913 = vadd.f32 %v11696, %v11849
  %v11914 = vadd.f32 %v11698, %v11850
  %v11915 = vadd.f32 %v11701, %v11851
  %v11916 = vadd.f32 %v11703, %v11852
  %v11917 = vadd.f32 %v11706, %v11853
  %v11918 = vadd.f32 %v11708, %v11854
  %v11919 = vadd.f32 %v11711, %v11855
  %v11920 = vadd.f32 %v11713, %v11856
  %v11921 = vadd.f32 %v11716, %v11857
  %v11922 = vadd.f32 %v11718, %v11858
  %v11923 = vadd.f32 %v11721, %v11859
  %v11924 = vadd.f32 %v11723, %v11860
  %v11925 = vadd.f32 %v11726, %v11861
  %v11926 = vadd.f32 %v11728, %v11862
  %v11927 = vadd.f32 %v11731, %v11863
  %v11928 = vadd.f32 %v11733, %v11864
  %v11929 = vadd.f32 %v11736, %v11865
  %v11930 = vadd.f32 %v11738, %v11866
  %v11931 = vadd.f32 %v11741, %v11867
  %v11932 = vadd.f32 %v11743, %v11868
  %v11933 = vadd.f32 %v11746, %v11869
  %v11934 = vadd.f32 %v11748, %v11870
  %v11935 = vadd.f32 %v11751, %v11871
  %v11936 = vadd.f32 %v11753, %v11872
  %v11937 = vadd.f32 %v11756, %v11873
  %v11938 = vadd.f32 %v11758, %v11874
  %v11939 = vadd.f32 %v11761, %v11875
  %v11940 = vadd.f32 %v11763, %v11876
  %v11941 = vadd.f32 %v11766, %v11877
  %v11942 = vadd.f32 %v11768, %v11878
  %v11943 = vadd.f32 %v11771, %v11879
  %v11944 = vadd.f32 %v11773, %v11880
  %v11945 = vadd.f32 %v11776, %v11881
  %v11946 = vadd.f32 %v11778, %v11882
  %v11947 = vadd.f32 %v11781, %v11883
  %v11948 = vadd.f32 %v11783, %v11884
  %v11949 = vadd.f32 %v11786, %v11885
  %v11950 = vadd.f32 %v11788, %v11886
  %v11951 = vadd.f32 %v11791, %v11887
  %v11952 = vadd.f32 %v11793, %v11888
  %v11953 = vadd.f32 %v11796, %v11889
  %v11954 = vadd.f32 %v11798, %v11890
  %v11955 = vadd.f32 %v11801, %v11891
  %v11956 = vadd.f32 %v11803, %v11892
  %v11957 = vadd.f32 %v11806, %v11893
  %v11958 = vadd.f32 %v11808, %v11894
  %v11959 = vadd.f32 %v11811, %v11895
  %v11960 = vadd.f32 %v11813, %v11896
  %v11961 = vadd.f32 %v11816, %v11897
  %v11962 = vadd.f32 %v11818, %v11898
  %v11963 = vadd.f32 %v11821, %v11899
  %v11964 = vadd.f32 %v11823, %v11900
  %v11965 = vadd.f32 %v11826, %v11901
  %v11966 = vadd.f32 %v11828, %v11902
  %v11967 = vadd.f32 %v11831, %v11903
  %v11968 = vadd.f32 %v11833, %v11904
  %v11969 = vadd.f32 %v11836, %v11905
  %v11970 = vadd.f32 %v11838, %v11906
  %v11971 = vadd.f32 %v11841, %v11907
  %v11972 = vadd.f32 %v11843, %v11908
  %v11973 = vld [vmem:[%s12] sm:$0x1]
  %v11975 = vperm.slane %v11973, 0
  %v11977 = vadd.f32 %v11909, %v11975
  %v11978 = vadd.f32 %v11910, %v11975
  %v11979 = vadd.f32 %v11911, %v11975
  %v11980 = vadd.f32 %v11912, %v11975
  %v11981 = vadd.f32 %v11913, %v11975
  %v11982 = vadd.f32 %v11914, %v11975
  %v11983 = vadd.f32 %v11915, %v11975
  %v11984 = vadd.f32 %v11916, %v11975
  %v11985 = vadd.f32 %v11917, %v11975
  %v11986 = vadd.f32 %v11918, %v11975
  %v11987 = vadd.f32 %v11919, %v11975
  %v11988 = vadd.f32 %v11920, %v11975
  %v11989 = vadd.f32 %v11921, %v11975
  %v11990 = vadd.f32 %v11922, %v11975
  %v11991 = vadd.f32 %v11923, %v11975
  %v11992 = vadd.f32 %v11924, %v11975
  %v11993 = vadd.f32 %v11925, %v11975
  %v11994 = vadd.f32 %v11926, %v11975
  %v11995 = vadd.f32 %v11927, %v11975
  %v11996 = vadd.f32 %v11928, %v11975
  %v11997 = vadd.f32 %v11929, %v11975
  %v11998 = vadd.f32 %v11930, %v11975
  %v11999 = vadd.f32 %v11931, %v11975
  %v12000 = vadd.f32 %v11932, %v11975
  %v12001 = vadd.f32 %v11933, %v11975
  %v12002 = vadd.f32 %v11934, %v11975
  %v12003 = vadd.f32 %v11935, %v11975
  %v12004 = vadd.f32 %v11936, %v11975
  %v12005 = vadd.f32 %v11937, %v11975
  %v12006 = vadd.f32 %v11938, %v11975
  %v12007 = vadd.f32 %v11939, %v11975
  %v12008 = vadd.f32 %v11940, %v11975
  %v12009 = vadd.f32 %v11941, %v11975
  %v12010 = vadd.f32 %v11942, %v11975
  %v12011 = vadd.f32 %v11943, %v11975
  %v12012 = vadd.f32 %v11944, %v11975
  %v12013 = vadd.f32 %v11945, %v11975
  %v12014 = vadd.f32 %v11946, %v11975
  %v12015 = vadd.f32 %v11947, %v11975
  %v12016 = vadd.f32 %v11948, %v11975
  %v12017 = vadd.f32 %v11949, %v11975
  %v12018 = vadd.f32 %v11950, %v11975
  %v12019 = vadd.f32 %v11951, %v11975
  %v12020 = vadd.f32 %v11952, %v11975
  %v12021 = vadd.f32 %v11953, %v11975
  %v12022 = vadd.f32 %v11954, %v11975
  %v12023 = vadd.f32 %v11955, %v11975
  %v12024 = vadd.f32 %v11956, %v11975
  %v12025 = vadd.f32 %v11957, %v11975
  %v12026 = vadd.f32 %v11958, %v11975
  %v12027 = vadd.f32 %v11959, %v11975
  %v12028 = vadd.f32 %v11960, %v11975
  %v12029 = vadd.f32 %v11961, %v11975
  %v12030 = vadd.f32 %v11962, %v11975
  %v12031 = vadd.f32 %v11963, %v11975
  %v12032 = vadd.f32 %v11964, %v11975
  %v12033 = vadd.f32 %v11965, %v11975
  %v12034 = vadd.f32 %v11966, %v11975
  %v12035 = vadd.f32 %v11967, %v11975
  %v12036 = vadd.f32 %v11968, %v11975
  %v12037 = vadd.f32 %v11969, %v11975
  %v12038 = vadd.f32 %v11970, %v11975
  %v12039 = vadd.f32 %v11971, %v11975
  %v12040 = vadd.f32 %v11972, %v11975
  %v12041 = vsub.f32 %v11977, %v109
  %v12042 = vsub.f32 %v11978, %v110
  %v12043 = vsub.f32 %v11979, %v111
  %v12044 = vsub.f32 %v11980, %v112
  %v12045 = vsub.f32 %v11981, %v113
  %v12046 = vsub.f32 %v11982, %v114
  %v12047 = vsub.f32 %v11983, %v115
  %v12048 = vsub.f32 %v11984, %v116
  %v12049 = vsub.f32 %v11985, %v117
  %v12050 = vsub.f32 %v11986, %v118
  %v12051 = vsub.f32 %v11987, %v119
  %v12052 = vsub.f32 %v11988, %v120
  %v12053 = vsub.f32 %v11989, %v121
  %v12054 = vsub.f32 %v11990, %v122
  %v12055 = vsub.f32 %v11991, %v123
  %v12056 = vsub.f32 %v11992, %v124
  %v12057 = vsub.f32 %v11993, %v125
  %v12058 = vsub.f32 %v11994, %v126
  %v12059 = vsub.f32 %v11995, %v127
  %v12060 = vsub.f32 %v11996, %v128
  %v12061 = vsub.f32 %v11997, %v129
  %v12062 = vsub.f32 %v11998, %v130
  %v12063 = vsub.f32 %v11999, %v131
  %v12064 = vsub.f32 %v12000, %v132
  %v12065 = vsub.f32 %v12001, %v133
  %v12066 = vsub.f32 %v12002, %v134
  %v12067 = vsub.f32 %v12003, %v135
  %v12068 = vsub.f32 %v12004, %v136
  %v12069 = vsub.f32 %v12005, %v137
  %v12070 = vsub.f32 %v12006, %v138
  %v12071 = vsub.f32 %v12007, %v139
  %v12072 = vsub.f32 %v12008, %v140
  %v12073 = vsub.f32 %v12009, %v141
  %v12074 = vsub.f32 %v12010, %v142
  %v12075 = vsub.f32 %v12011, %v143
  %v12076 = vsub.f32 %v12012, %v144
  %v12077 = vsub.f32 %v12013, %v145
  %v12078 = vsub.f32 %v12014, %v146
  %v12079 = vsub.f32 %v12015, %v147
  %v12080 = vsub.f32 %v12016, %v148
  %v12081 = vsub.f32 %v12017, %v149
  %v12082 = vsub.f32 %v12018, %v150
  %v12083 = vsub.f32 %v12019, %v151
  %v12084 = vsub.f32 %v12020, %v152
  %v12085 = vsub.f32 %v12021, %v153
  %v12086 = vsub.f32 %v12022, %v154
  %v12087 = vsub.f32 %v12023, %v155
  %v12088 = vsub.f32 %v12024, %v156
  %v12089 = vsub.f32 %v12025, %v157
  %v12090 = vsub.f32 %v12026, %v158
  %v12091 = vsub.f32 %v12027, %v159
  %v12092 = vsub.f32 %v12028, %v160
  %v12093 = vsub.f32 %v12029, %v161
  %v12094 = vsub.f32 %v12030, %v162
  %v12095 = vsub.f32 %v12031, %v163
  %v12096 = vsub.f32 %v12032, %v164
  %v12097 = vsub.f32 %v12033, %v165
  %v12098 = vsub.f32 %v12034, %v166
  %v12099 = vsub.f32 %v12035, %v167
  %v12100 = vsub.f32 %v12036, %v168
  %v12101 = vsub.f32 %v12037, %v169
  %v12102 = vsub.f32 %v12038, %v170
  %v12103 = vsub.f32 %v12039, %v171
  %v12104 = vsub.f32 %v12040, %v172
  %v12105 = vmul.f32 %v12041, %v12041
  %v12106 = vmul.f32 %v12042, %v12042
  %v12107 = vmul.f32 %v12043, %v12043
  %v12108 = vmul.f32 %v12044, %v12044
  %v12109 = vmul.f32 %v12045, %v12045
  %v12110 = vmul.f32 %v12046, %v12046
  %v12111 = vmul.f32 %v12047, %v12047
  %v12112 = vmul.f32 %v12048, %v12048
  %v12113 = vmul.f32 %v12049, %v12049
  %v12114 = vmul.f32 %v12050, %v12050
  %v12115 = vmul.f32 %v12051, %v12051
  %v12116 = vmul.f32 %v12052, %v12052
  %v12117 = vmul.f32 %v12053, %v12053
  %v12118 = vmul.f32 %v12054, %v12054
  %v12119 = vmul.f32 %v12055, %v12055
  %v12120 = vmul.f32 %v12056, %v12056
  %v12121 = vmul.f32 %v12057, %v12057
  %v12122 = vmul.f32 %v12058, %v12058
  %v12123 = vmul.f32 %v12059, %v12059
  %v12124 = vmul.f32 %v12060, %v12060
  %v12125 = vmul.f32 %v12061, %v12061
  %v12126 = vmul.f32 %v12062, %v12062
  %v12127 = vmul.f32 %v12063, %v12063
  %v12128 = vmul.f32 %v12064, %v12064
  %v12129 = vmul.f32 %v12065, %v12065
  %v12130 = vmul.f32 %v12066, %v12066
  %v12131 = vmul.f32 %v12067, %v12067
  %v12132 = vmul.f32 %v12068, %v12068
  %v12133 = vmul.f32 %v12069, %v12069
  %v12134 = vmul.f32 %v12070, %v12070
  %v12135 = vmul.f32 %v12071, %v12071
  %v12136 = vmul.f32 %v12072, %v12072
  %v12137 = vmul.f32 %v12073, %v12073
  %v12138 = vmul.f32 %v12074, %v12074
  %v12139 = vmul.f32 %v12075, %v12075
  %v12140 = vmul.f32 %v12076, %v12076
  %v12141 = vmul.f32 %v12077, %v12077
  %v12142 = vmul.f32 %v12078, %v12078
  %v12143 = vmul.f32 %v12079, %v12079
  %v12144 = vmul.f32 %v12080, %v12080
  %v12145 = vmul.f32 %v12081, %v12081
  %v12146 = vmul.f32 %v12082, %v12082
  %v12147 = vmul.f32 %v12083, %v12083
  %v12148 = vmul.f32 %v12084, %v12084
  %v12149 = vmul.f32 %v12085, %v12085
  %v12150 = vmul.f32 %v12086, %v12086
  %v12151 = vmul.f32 %v12087, %v12087
  %v12152 = vmul.f32 %v12088, %v12088
  %v12153 = vmul.f32 %v12089, %v12089
  %v12154 = vmul.f32 %v12090, %v12090
  %v12155 = vmul.f32 %v12091, %v12091
  %v12156 = vmul.f32 %v12092, %v12092
  %v12157 = vmul.f32 %v12093, %v12093
  %v12158 = vmul.f32 %v12094, %v12094
  %v12159 = vmul.f32 %v12095, %v12095
  %v12160 = vmul.f32 %v12096, %v12096
  %v12161 = vmul.f32 %v12097, %v12097
  %v12162 = vmul.f32 %v12098, %v12098
  %v12163 = vmul.f32 %v12099, %v12099
  %v12164 = vmul.f32 %v12100, %v12100
  %v12165 = vmul.f32 %v12101, %v12101
  %v12166 = vmul.f32 %v12102, %v12102
  %v12167 = vmul.f32 %v12103, %v12103
  %v12168 = vmul.f32 %v12104, %v12104
  %v12169 = vsel %vm4144, %v12105, 0.0
  %v12170 = vsel %vm4144, %v12106, 0.0
  %v12171 = vadd.f32 %v12169, %v12170
  %v12172 = vsel %vm4144, %v12107, 0.0
  %v12173 = vadd.f32 %v12171, %v12172
  %v12174 = vsel %vm4144, %v12108, 0.0
  %v12175 = vadd.f32 %v12173, %v12174
  %v12176 = vsel %vm4144, %v12109, 0.0
  %v12177 = vadd.f32 %v12175, %v12176
  %v12178 = vsel %vm4144, %v12110, 0.0
  %v12179 = vadd.f32 %v12177, %v12178
  %v12180 = vsel %vm4144, %v12111, 0.0
  %v12181 = vadd.f32 %v12179, %v12180
  %v12182 = vsel %vm4144, %v12112, 0.0
  %v12183 = vadd.f32 %v12181, %v12182
  %v12184 = vsel %vm4144, %v12113, 0.0
  %v12185 = vadd.f32 %v12183, %v12184
  %v12186 = vsel %vm4144, %v12114, 0.0
  %v12187 = vadd.f32 %v12185, %v12186
  %v12188 = vsel %vm4144, %v12115, 0.0
  %v12189 = vadd.f32 %v12187, %v12188
  %v12190 = vsel %vm4144, %v12116, 0.0
  %v12191 = vadd.f32 %v12189, %v12190
  %v12192 = vsel %vm4144, %v12117, 0.0
  %v12193 = vadd.f32 %v12191, %v12192
  %v12194 = vsel %vm4144, %v12118, 0.0
  %v12195 = vadd.f32 %v12193, %v12194
  %v12196 = vsel %vm4144, %v12119, 0.0
  %v12197 = vadd.f32 %v12195, %v12196
  %v12198 = vsel %vm4144, %v12120, 0.0
  %v12199 = vadd.f32 %v12197, %v12198
  %v12200 = vsel %vm4144, %v12121, 0.0
  %v12201 = vadd.f32 %v12199, %v12200
  %v12202 = vsel %vm4144, %v12122, 0.0
  %v12203 = vadd.f32 %v12201, %v12202
  %v12204 = vsel %vm4144, %v12123, 0.0
  %v12205 = vadd.f32 %v12203, %v12204
  %v12206 = vsel %vm4144, %v12124, 0.0
  %v12207 = vadd.f32 %v12205, %v12206
  %v12208 = vsel %vm4144, %v12125, 0.0
  %v12209 = vadd.f32 %v12207, %v12208
  %v12210 = vsel %vm4144, %v12126, 0.0
  %v12211 = vadd.f32 %v12209, %v12210
  %v12212 = vsel %vm4144, %v12127, 0.0
  %v12213 = vadd.f32 %v12211, %v12212
  %v12214 = vsel %vm4144, %v12128, 0.0
  %v12215 = vadd.f32 %v12213, %v12214
  %v12216 = vsel %vm4144, %v12129, 0.0
  %v12217 = vadd.f32 %v12215, %v12216
  %v12218 = vsel %vm4144, %v12130, 0.0
  %v12219 = vadd.f32 %v12217, %v12218
  %v12220 = vsel %vm4144, %v12131, 0.0
  %v12221 = vadd.f32 %v12219, %v12220
  %v12222 = vsel %vm4144, %v12132, 0.0
  %v12223 = vadd.f32 %v12221, %v12222
  %v12224 = vsel %vm4144, %v12133, 0.0
  %v12225 = vadd.f32 %v12223, %v12224
  %v12226 = vsel %vm4144, %v12134, 0.0
  %v12227 = vadd.f32 %v12225, %v12226
  %v12228 = vsel %vm4144, %v12135, 0.0
  %v12229 = vadd.f32 %v12227, %v12228
  %v12230 = vsel %vm4144, %v12136, 0.0
  %v12231 = vadd.f32 %v12229, %v12230
  %v12232 = vsel %vm4144, %v12137, 0.0
  %v12233 = vadd.f32 %v12231, %v12232
  %v12234 = vsel %vm4144, %v12138, 0.0
  %v12235 = vadd.f32 %v12233, %v12234
  %v12236 = vsel %vm4144, %v12139, 0.0
  %v12237 = vadd.f32 %v12235, %v12236
  %v12238 = vsel %vm4144, %v12140, 0.0
  %v12239 = vadd.f32 %v12237, %v12238
  %v12240 = vsel %vm4144, %v12141, 0.0
  %v12241 = vadd.f32 %v12239, %v12240
  %v12242 = vsel %vm4144, %v12142, 0.0
  %v12243 = vadd.f32 %v12241, %v12242
  %v12244 = vsel %vm4144, %v12143, 0.0
  %v12245 = vadd.f32 %v12243, %v12244
  %v12246 = vsel %vm4144, %v12144, 0.0
  %v12247 = vadd.f32 %v12245, %v12246
  %v12248 = vsel %vm4144, %v12145, 0.0
  %v12249 = vadd.f32 %v12247, %v12248
  %v12250 = vsel %vm4144, %v12146, 0.0
  %v12251 = vadd.f32 %v12249, %v12250
  %v12252 = vsel %vm4144, %v12147, 0.0
  %v12253 = vadd.f32 %v12251, %v12252
  %v12254 = vsel %vm4144, %v12148, 0.0
  %v12255 = vadd.f32 %v12253, %v12254
  %v12256 = vsel %vm4144, %v12149, 0.0
  %v12257 = vadd.f32 %v12255, %v12256
  %v12258 = vsel %vm4144, %v12150, 0.0
  %v12259 = vadd.f32 %v12257, %v12258
  %v12260 = vsel %vm4144, %v12151, 0.0
  %v12261 = vadd.f32 %v12259, %v12260
  %v12262 = vsel %vm4144, %v12152, 0.0
  %v12263 = vadd.f32 %v12261, %v12262
  %v12264 = vsel %vm4144, %v12153, 0.0
  %v12265 = vadd.f32 %v12263, %v12264
  %v12266 = vsel %vm4144, %v12154, 0.0
  %v12267 = vadd.f32 %v12265, %v12266
  %v12268 = vsel %vm4144, %v12155, 0.0
  %v12269 = vadd.f32 %v12267, %v12268
  %v12270 = vsel %vm4144, %v12156, 0.0
  %v12271 = vadd.f32 %v12269, %v12270
  %v12272 = vsel %vm4144, %v12157, 0.0
  %v12273 = vadd.f32 %v12271, %v12272
  %v12274 = vsel %vm4144, %v12158, 0.0
  %v12275 = vadd.f32 %v12273, %v12274
  %v12276 = vsel %vm4144, %v12159, 0.0
  %v12277 = vadd.f32 %v12275, %v12276
  %v12278 = vsel %vm4144, %v12160, 0.0
  %v12279 = vadd.f32 %v12277, %v12278
  %v12280 = vsel %vm4144, %v12161, 0.0
  %v12281 = vadd.f32 %v12279, %v12280
  %v12282 = vsel %vm4144, %v12162, 0.0
  %v12283 = vadd.f32 %v12281, %v12282
  %v12284 = vsel %vm4144, %v12163, 0.0
  %v12285 = vadd.f32 %v12283, %v12284
  %v12286 = vsel %vm4144, %v12164, 0.0
  %v12287 = vadd.f32 %v12285, %v12286
  %v12288 = vsel %vm4144, %v12165, 0.0
  %v12289 = vadd.f32 %v12287, %v12288
  %v12290 = vsel %vm4144, %v12166, 0.0
  %v12291 = vadd.f32 %v12289, %v12290
  %v12292 = vsel %vm4144, %v12167, 0.0
  %v12293 = vadd.f32 %v12291, %v12292
  %v12294 = vsel %vm4144, %v12168, 0.0
  %v12295 = vadd.f32 %v12293, %v12294
  %v12296 = vrot.slane %v12295, 4
  %v12297 = vadd.f32 %v12295, %v12296
  %v12298 = vrot.slane %v12297, 2
  %v12299 = vadd.f32 %v12297, %v12298
  %v12300 = vrot.slane %v12299, 1
  %v12301 = vadd.f32 %v12299, %v12300
  %v12302 = vsel %vm4144, %v12301, 0.0
  %12303 = vst [vmem:[%s13] sm:$0x1] %v12302
  // Predicated region
  $region54: #{unet_density_forward.21} parent=0 // pred_check
    _
  $region55: #{unet_density_forward.21} parent=0 // pred_check_branch
    %12305 = sbr.rel (0) target = $region57
  $region56: #{unet_density_forward.21} parent=0 // pred_region
    _
  $region57: #{unet_density_forward.21} parent=0 // pred_fallthru
    _
  // Predicated region
  $region58: #{unet_density_forward.21} parent=0 // pred_check
    _
  $region59: #{unet_density_forward.21} parent=0 // pred_check_branch
    %12307 = sbr.rel (0) target = $region61
  $region60: #{unet_density_forward.21} parent=0 // pred_region
    _
  $region61: #{unet_density_forward.21} parent=0 // pred_fallthru
    _

</llo_original>
